<compile_context>
chip_gen: v7x
topology: tpu7x:2x2x1
jax: 0.10.0
libtpu: 0.0.40
codegen_flags: <defaults>
</compile_context>

<pallas_src>
import functools

import jax
import jax.numpy as jnp
import numpy as np
from jax.experimental import pallas as pl
from jax.experimental.pallas import tpu as pltpu

LKRELU_NUM = 0.1   # LeakyReLU negative slope (module's LkReLU_num)
DROP_NUM = 0.2     # Dropout prob (module's Drop_num) -- identity in eval mode


def _round_up(x, m):
    return (x + m - 1) // m * m


def _leaky(x, leak):
    return jnp.where(x >= 0, x, leak * x)


def _double_conv_kernel(x_ref, w1_ref, b1_ref, w2_ref, b2_ref, o_ref,
                        xpad_ref, hpad_ref, *, leak):
    # x_ref   : (H, W, Cin)        NHWC image (batch dim squeezed by BlockSpec)
    # w1_ref  : (3, 3, Cin, Cp)    first conv weights, Cout padded to Cp lanes
    # b1_ref  : (1, Cp)
    # w2_ref  : (3, 3, Cp, Cp)     second conv weights (in & out padded to Cp)
    # b2_ref  : (1, Cp)
    # o_ref   : (H*W, Cp)          lane-dense output slab
    # xpad_ref: (H+2, W+2, Cin)    VMEM scratch, zero halo for conv1
    # hpad_ref: (H+2, W+2, Cp)     VMEM scratch, zero halo for conv2
    H, W, Cin = x_ref.shape
    HW, Cp = o_ref.shape

    # Zero halos every step (scratch persists across grid steps / cores, but
    # re-zeroing is cheap and keeps correctness independent of core sharding).
    xpad_ref[...] = jnp.zeros_like(xpad_ref)
    hpad_ref[...] = jnp.zeros_like(hpad_ref)
    xpad_ref[1:H + 1, 1:W + 1, :] = x_ref[...].astype(jnp.float32)

    # ---- conv1: 9 taps, each a (H*W, Cin) @ (Cin, Cp) MXU matmul ----
    acc = jnp.zeros((HW, Cp), jnp.float32)
    for dy in range(3):
        for dx in range(3):
            patch = xpad_ref[dy:dy + H, dx:dx + W, :].reshape(HW, Cin)
            acc = acc + jnp.dot(patch, w1_ref[dy, dx],
                                preferred_element_type=jnp.float32)
    h = _leaky(acc + b1_ref[...], leak)            # padded channels stay 0
    hpad_ref[1:H + 1, 1:W + 1, :] = h.reshape(H, W, Cp)

    # ---- conv2: 9 taps, each a (H*W, Cp) @ (Cp, Cp) MXU matmul ----
    acc = jnp.zeros((HW, Cp), jnp.float32)
    for dy in range(3):
        for dx in range(3):
            patch = hpad_ref[dy:dy + H, dx:dx + W, :].reshape(HW, Cp)
            acc = acc + jnp.dot(patch, w2_ref[dy, dx],
                                preferred_element_type=jnp.float32)
    y = _leaky(acc + b2_ref[...], leak)
    # Dropout(0.2) is identity in eval mode.
    o_ref[...] = y.astype(o_ref.dtype)             # (H*W, Cp) lane-dense store


def double_convolution(x_nchw, params):
    """Forward pass of DoubleConvolution (eval mode). Input/output are NCHW."""
    w1, b1, w2, b2 = params                        # HWIO weights
    N, Cin, H, W = x_nchw.shape
    Cout = w1.shape[-1]
    Cp = _round_up(Cout, 128)                      # lane-dense channel padding

    # Boundary-only layout glue (tiny tensors / fused by XLA with the slice).
    x = jnp.transpose(x_nchw, (0, 2, 3, 1))        # NCHW -> NHWC
    w1p = jnp.pad(w1, ((0, 0), (0, 0), (0, 0), (0, Cp - Cout)))
    b1p = jnp.pad(b1, (0, Cp - Cout)).reshape(1, Cp)
    w2p = jnp.pad(w2, ((0, 0), (0, 0), (0, Cp - Cout), (0, Cp - Cout)))
    b2p = jnp.pad(b2, (0, Cp - Cout)).reshape(1, Cp)

    kernel = functools.partial(_double_conv_kernel, leak=LKRELU_NUM)
    out = pl.pallas_call(
        kernel,
        out_shape=jax.ShapeDtypeStruct((N, H * W, Cp), x.dtype),
        grid=(N,),
        in_specs=[
            pl.BlockSpec((None, H, W, Cin), lambda n: (n, 0, 0, 0)),
            pl.BlockSpec((3, 3, Cin, Cp), lambda n: (0, 0, 0, 0)),
            pl.BlockSpec((1, Cp), lambda n: (0, 0)),
            pl.BlockSpec((3, 3, Cp, Cp), lambda n: (0, 0, 0, 0)),
            pl.BlockSpec((1, Cp), lambda n: (0, 0)),
        ],
        out_specs=pl.BlockSpec((None, H * W, Cp), lambda n: (n, 0, 0)),
        scratch_shapes=[
            pltpu.VMEM((H + 2, W + 2, Cin), jnp.float32),
            pltpu.VMEM((H + 2, W + 2, Cp), jnp.float32),
        ],
        compiler_params=pltpu.CompilerParams(
            dimension_semantics=("parallel",),
            vmem_limit_bytes=32 * 1024 * 1024),
    )(x, w1p, b1p, w2p, b2p)

    y = out.reshape(N, H, W, Cp)[..., :Cout]       # drop padded lanes
    return jnp.transpose(y, (0, 3, 1, 2))          # NHWC -> NCHW


def init_params(key, in_channels, out_channels):
    """Deterministic init mimicking torch Conv2d's uniform(-1/sqrt(fan_in), ...)."""
    k1, k2, k3, k4 = jax.random.split(key, 4)
    bound1 = 1.0 / np.sqrt(in_channels * 9)
    w1 = jax.random.uniform(k1, (3, 3, in_channels, out_channels), jnp.float32,
                            -bound1, bound1)
    b1 = jax.random.uniform(k2, (out_channels,), jnp.float32, -bound1, bound1)
    bound2 = 1.0 / np.sqrt(out_channels * 9)
    w2 = jax.random.uniform(k3, (3, 3, out_channels, out_channels), jnp.float32,
                            -bound2, bound2)
    b2 = jax.random.uniform(k4, (out_channels,), jnp.float32, -bound2, bound2)
    return w1, b1, w2, b2


def _ref_forward(x_nchw, params):
    """Pure-JAX reference (same semantics) for a correctness sanity check."""
    w1, b1, w2, b2 = params
    x = jnp.transpose(x_nchw, (0, 2, 3, 1))
    dn1 = jax.lax.conv_dimension_numbers(x.shape, w1.shape, ('NHWC', 'HWIO', 'NHWC'))
    h = jax.lax.conv_general_dilated(x, w1, (1, 1), 'SAME', dimension_numbers=dn1,
                                     precision=jax.lax.Precision.HIGHEST) + b1
    h = jnp.where(h >= 0, h, LKRELU_NUM * h)
    dn2 = jax.lax.conv_dimension_numbers(h.shape, w2.shape, ('NHWC', 'HWIO', 'NHWC'))
    y = jax.lax.conv_general_dilated(h, w2, (1, 1), 'SAME', dimension_numbers=dn2,
                                     precision=jax.lax.Precision.HIGHEST) + b2
    y = jnp.where(y >= 0, y, LKRELU_NUM * y)
    return jnp.transpose(y, (0, 3, 1, 2))


if __name__ == "__main__":
    key = jax.random.PRNGKey(0)
    kx, kp = jax.random.split(key)
    in_channels, out_channels = 4, 8
    x = jax.random.normal(kx, (2, in_channels, 16, 16), jnp.float32)  # NCHW
    params = init_params(kp, in_channels, out_channels)

    out = jax.jit(double_convolution)(x, params)
    out = jax.block_until_ready(out)
    assert out.shape == (2, out_channels, 16, 16) and out.dtype == jnp.float32

    ref = _ref_forward(x, params)
    np.testing.assert_allclose(np.asarray(out), np.asarray(ref), rtol=1e-2, atol=1e-2)
    print("KERNEL_OK")
</pallas_src>

<mosaic_0001>
module attributes {stable_mosaic.version = 11 : i64} {
  func.func @_double_conv_kernel(%arg0: i32, %arg1: memref<1x16x16x4xf32, #tpu.memory_space<vmem>>, %arg2: memref<3x3x4x128xf32, #tpu.memory_space<vmem>>, %arg3: memref<1x128xf32, #tpu.memory_space<vmem>>, %arg4: memref<3x3x128x128xf32, #tpu.memory_space<vmem>>, %arg5: memref<1x128xf32, #tpu.memory_space<vmem>>, %arg6: memref<1x256x128xf32, #tpu.memory_space<vmem>>, %arg7: memref<18x18x4xf32, #tpu.memory_space<vmem>>, %arg8: memref<18x18x128xf32, #tpu.memory_space<vmem>>) attributes {dimension_semantics = [#tpu.dimension_semantics<parallel>], iteration_bounds = array<i64: 2>, scalar_prefetch = 0 : i64, scratch_operands = 2 : i64, tpu.core_type = #tpu.core_type<tc>, window_params = [{transform_indices = @transform_0, window_bounds = array<i64: 1, 16, 16, 4>}, {pipeline_mode = #tpu.pipeline_mode<synchronous>, transform_indices = @transform_1, window_bounds = array<i64: 3, 3, 4, 128>}, {pipeline_mode = #tpu.pipeline_mode<synchronous>, transform_indices = @transform_2, window_bounds = array<i64: 1, 128>}, {pipeline_mode = #tpu.pipeline_mode<synchronous>, transform_indices = @transform_3, window_bounds = array<i64: 3, 3, 128, 128>}, {pipeline_mode = #tpu.pipeline_mode<synchronous>, transform_indices = @transform_4, window_bounds = array<i64: 1, 128>}, {transform_indices = @transform_5, window_bounds = array<i64: 1, 256, 128>}]} {
    %cst = arith.constant 0.000000e+00 : f32
    %0 = vector.broadcast %cst : f32 to vector<18x18x4xf32>
    %c0 = arith.constant 0 : index
    %c0_0 = arith.constant 0 : index
    %c0_1 = arith.constant 0 : index
    %1 = vector.load %arg7[%c0, %c0_0, %c0_1] : memref<18x18x4xf32, #tpu.memory_space<vmem>>, vector<18x18x4xf32>
    tpu.vector_store %arg7[%c0, %c0_0, %c0_1], %0 {strides = array<i32>} : memref<18x18x4xf32, #tpu.memory_space<vmem>>, vector<18x18x4xf32>,
    %cst_2 = arith.constant 0.000000e+00 : f32
    %2 = vector.broadcast %cst_2 : f32 to vector<18x18x128xf32>
    %c0_3 = arith.constant 0 : index
    %c0_4 = arith.constant 0 : index
    %c0_5 = arith.constant 0 : index
    %3 = vector.load %arg8[%c0_3, %c0_4, %c0_5] : memref<18x18x128xf32, #tpu.memory_space<vmem>>, vector<18x18x128xf32>
    tpu.vector_store %arg8[%c0_3, %c0_4, %c0_5], %2 {strides = array<i32>} : memref<18x18x128xf32, #tpu.memory_space<vmem>>, vector<18x18x128xf32>,
    %c0_6 = arith.constant 0 : index
    %c0_7 = arith.constant 0 : index
    %c0_8 = arith.constant 0 : index
    %c0_9 = arith.constant 0 : index
    %4 = vector.load %arg1[%c0_6, %c0_7, %c0_8, %c0_9] : memref<1x16x16x4xf32, #tpu.memory_space<vmem>>, vector<1x16x16x4xf32>
    %5 = vector.shape_cast %4 : vector<1x16x16x4xf32> to vector<16x16x4xf32>
    %c1 = arith.constant 1 : index
    %c1_10 = arith.constant 1 : index
    %c0_11 = arith.constant 0 : index
    %6 = vector.load %arg7[%c1, %c1_10, %c0_11] : memref<18x18x4xf32, #tpu.memory_space<vmem>>, vector<16x16x4xf32>
    tpu.vector_store %arg7[%c1, %c1_10, %c0_11], %5 {strides = array<i32>} : memref<18x18x4xf32, #tpu.memory_space<vmem>>, vector<16x16x4xf32>,
    %cst_12 = arith.constant 0.000000e+00 : f32
    %7 = vector.broadcast %cst_12 : f32 to vector<256x128xf32>
    %c0_13 = arith.constant 0 : index
    %c0_14 = arith.constant 0 : index
    %c0_15 = arith.constant 0 : index
    %8 = vector.load %arg7[%c0_13, %c0_14, %c0_15] : memref<18x18x4xf32, #tpu.memory_space<vmem>>, vector<16x16x4xf32>
    %9 = vector.shape_cast %8 : vector<16x16x4xf32> to vector<256x4xf32>
    %c0_16 = arith.constant 0 : index
    %c0_17 = arith.constant 0 : index
    %c0_18 = arith.constant 0 : index
    %c0_19 = arith.constant 0 : index
    %10 = vector.load %arg2[%c0_16, %c0_17, %c0_18, %c0_19] : memref<3x3x4x128xf32, #tpu.memory_space<vmem>>, vector<1x1x4x128xf32>
    %11 = vector.shape_cast %10 : vector<1x1x4x128xf32> to vector<4x128xf32>
    %cst_20 = arith.constant dense<0.000000e+00> : vector<256x128xf32>
    %12 = tpu.matmul %9, %11, %cst_20 {dimension_numbers = #tpu.dot_dimension_numbers<[1], [0], [0], [1], [0, 0, 1, 1], [], []>} : vector<256x4xf32>, vector<4x128xf32>, vector<256x128xf32> -> vector<256x128xf32>
    %13 = arith.addf %7, %12 : vector<256x128xf32>
    %c0_21 = arith.constant 0 : index
    %c1_22 = arith.constant 1 : index
    %c0_23 = arith.constant 0 : index
    %14 = vector.load %arg7[%c0_21, %c1_22, %c0_23] : memref<18x18x4xf32, #tpu.memory_space<vmem>>, vector<16x16x4xf32>
    %15 = vector.shape_cast %14 : vector<16x16x4xf32> to vector<256x4xf32>
    %c0_24 = arith.constant 0 : index
    %c1_25 = arith.constant 1 : index
    %c0_26 = arith.constant 0 : index
    %c0_27 = arith.constant 0 : index
    %16 = vector.load %arg2[%c0_24, %c1_25, %c0_26, %c0_27] : memref<3x3x4x128xf32, #tpu.memory_space<vmem>>, vector<1x1x4x128xf32>
    %17 = vector.shape_cast %16 : vector<1x1x4x128xf32> to vector<4x128xf32>
    %cst_28 = arith.constant dense<0.000000e+00> : vector<256x128xf32>
    %18 = tpu.matmul %15, %17, %cst_28 {dimension_numbers = #tpu.dot_dimension_numbers<[1], [0], [0], [1], [0, 0, 1, 1], [], []>} : vector<256x4xf32>, vector<4x128xf32>, vector<256x128xf32> -> vector<256x128xf32>
    %19 = arith.addf %13, %18 : vector<256x128xf32>
    %c0_29 = arith.constant 0 : index
    %c2 = arith.constant 2 : index
    %c0_30 = arith.constant 0 : index
    %20 = vector.load %arg7[%c0_29, %c2, %c0_30] : memref<18x18x4xf32, #tpu.memory_space<vmem>>, vector<16x16x4xf32>
    %21 = vector.shape_cast %20 : vector<16x16x4xf32> to vector<256x4xf32>
    %c0_31 = arith.constant 0 : index
    %c2_32 = arith.constant 2 : index
    %c0_33 = arith.constant 0 : index
    %c0_34 = arith.constant 0 : index
    %22 = vector.load %arg2[%c0_31, %c2_32, %c0_33, %c0_34] : memref<3x3x4x128xf32, #tpu.memory_space<vmem>>, vector<1x1x4x128xf32>
    %23 = vector.shape_cast %22 : vector<1x1x4x128xf32> to vector<4x128xf32>
    %cst_35 = arith.constant dense<0.000000e+00> : vector<256x128xf32>
    %24 = tpu.matmul %21, %23, %cst_35 {dimension_numbers = #tpu.dot_dimension_numbers<[1], [0], [0], [1], [0, 0, 1, 1], [], []>} : vector<256x4xf32>, vector<4x128xf32>, vector<256x128xf32> -> vector<256x128xf32>
    %25 = arith.addf %19, %24 : vector<256x128xf32>
    %c1_36 = arith.constant 1 : index
    %c0_37 = arith.constant 0 : index
    %c0_38 = arith.constant 0 : index
    %26 = vector.load %arg7[%c1_36, %c0_37, %c0_38] : memref<18x18x4xf32, #tpu.memory_space<vmem>>, vector<16x16x4xf32>
    %27 = vector.shape_cast %26 : vector<16x16x4xf32> to vector<256x4xf32>
    %c1_39 = arith.constant 1 : index
    %c0_40 = arith.constant 0 : index
    %c0_41 = arith.constant 0 : index
    %c0_42 = arith.constant 0 : index
    %28 = vector.load %arg2[%c1_39, %c0_40, %c0_41, %c0_42] : memref<3x3x4x128xf32, #tpu.memory_space<vmem>>, vector<1x1x4x128xf32>
    %29 = vector.shape_cast %28 : vector<1x1x4x128xf32> to vector<4x128xf32>
    %cst_43 = arith.constant dense<0.000000e+00> : vector<256x128xf32>
    %30 = tpu.matmul %27, %29, %cst_43 {dimension_numbers = #tpu.dot_dimension_numbers<[1], [0], [0], [1], [0, 0, 1, 1], [], []>} : vector<256x4xf32>, vector<4x128xf32>, vector<256x128xf32> -> vector<256x128xf32>
    %31 = arith.addf %25, %30 : vector<256x128xf32>
    %c1_44 = arith.constant 1 : index
    %c1_45 = arith.constant 1 : index
    %c0_46 = arith.constant 0 : index
    %32 = vector.load %arg7[%c1_44, %c1_45, %c0_46] : memref<18x18x4xf32, #tpu.memory_space<vmem>>, vector<16x16x4xf32>
    %33 = vector.shape_cast %32 : vector<16x16x4xf32> to vector<256x4xf32>
    %c1_47 = arith.constant 1 : index
    %c1_48 = arith.constant 1 : index
    %c0_49 = arith.constant 0 : index
    %c0_50 = arith.constant 0 : index
    %34 = vector.load %arg2[%c1_47, %c1_48, %c0_49, %c0_50] : memref<3x3x4x128xf32, #tpu.memory_space<vmem>>, vector<1x1x4x128xf32>
    %35 = vector.shape_cast %34 : vector<1x1x4x128xf32> to vector<4x128xf32>
    %cst_51 = arith.constant dense<0.000000e+00> : vector<256x128xf32>
    %36 = tpu.matmul %33, %35, %cst_51 {dimension_numbers = #tpu.dot_dimension_numbers<[1], [0], [0], [1], [0, 0, 1, 1], [], []>} : vector<256x4xf32>, vector<4x128xf32>, vector<256x128xf32> -> vector<256x128xf32>
    %37 = arith.addf %31, %36 : vector<256x128xf32>
    %c1_52 = arith.constant 1 : index
    %c2_53 = arith.constant 2 : index
    %c0_54 = arith.constant 0 : index
    %38 = vector.load %arg7[%c1_52, %c2_53, %c0_54] : memref<18x18x4xf32, #tpu.memory_space<vmem>>, vector<16x16x4xf32>
    %39 = vector.shape_cast %38 : vector<16x16x4xf32> to vector<256x4xf32>
    %c1_55 = arith.constant 1 : index
    %c2_56 = arith.constant 2 : index
    %c0_57 = arith.constant 0 : index
    %c0_58 = arith.constant 0 : index
    %40 = vector.load %arg2[%c1_55, %c2_56, %c0_57, %c0_58] : memref<3x3x4x128xf32, #tpu.memory_space<vmem>>, vector<1x1x4x128xf32>
    %41 = vector.shape_cast %40 : vector<1x1x4x128xf32> to vector<4x128xf32>
    %cst_59 = arith.constant dense<0.000000e+00> : vector<256x128xf32>
    %42 = tpu.matmul %39, %41, %cst_59 {dimension_numbers = #tpu.dot_dimension_numbers<[1], [0], [0], [1], [0, 0, 1, 1], [], []>} : vector<256x4xf32>, vector<4x128xf32>, vector<256x128xf32> -> vector<256x128xf32>
    %43 = arith.addf %37, %42 : vector<256x128xf32>
    %c2_60 = arith.constant 2 : index
    %c0_61 = arith.constant 0 : index
    %c0_62 = arith.constant 0 : index
    %44 = vector.load %arg7[%c2_60, %c0_61, %c0_62] : memref<18x18x4xf32, #tpu.memory_space<vmem>>, vector<16x16x4xf32>
    %45 = vector.shape_cast %44 : vector<16x16x4xf32> to vector<256x4xf32>
    %c2_63 = arith.constant 2 : index
    %c0_64 = arith.constant 0 : index
    %c0_65 = arith.constant 0 : index
    %c0_66 = arith.constant 0 : index
    %46 = vector.load %arg2[%c2_63, %c0_64, %c0_65, %c0_66] : memref<3x3x4x128xf32, #tpu.memory_space<vmem>>, vector<1x1x4x128xf32>
    %47 = vector.shape_cast %46 : vector<1x1x4x128xf32> to vector<4x128xf32>
    %cst_67 = arith.constant dense<0.000000e+00> : vector<256x128xf32>
    %48 = tpu.matmul %45, %47, %cst_67 {dimension_numbers = #tpu.dot_dimension_numbers<[1], [0], [0], [1], [0, 0, 1, 1], [], []>} : vector<256x4xf32>, vector<4x128xf32>, vector<256x128xf32> -> vector<256x128xf32>
    %49 = arith.addf %43, %48 : vector<256x128xf32>
    %c2_68 = arith.constant 2 : index
    %c1_69 = arith.constant 1 : index
    %c0_70 = arith.constant 0 : index
    %50 = vector.load %arg7[%c2_68, %c1_69, %c0_70] : memref<18x18x4xf32, #tpu.memory_space<vmem>>, vector<16x16x4xf32>
    %51 = vector.shape_cast %50 : vector<16x16x4xf32> to vector<256x4xf32>
    %c2_71 = arith.constant 2 : index
    %c1_72 = arith.constant 1 : index
    %c0_73 = arith.constant 0 : index
    %c0_74 = arith.constant 0 : index
    %52 = vector.load %arg2[%c2_71, %c1_72, %c0_73, %c0_74] : memref<3x3x4x128xf32, #tpu.memory_space<vmem>>, vector<1x1x4x128xf32>
    %53 = vector.shape_cast %52 : vector<1x1x4x128xf32> to vector<4x128xf32>
    %cst_75 = arith.constant dense<0.000000e+00> : vector<256x128xf32>
    %54 = tpu.matmul %51, %53, %cst_75 {dimension_numbers = #tpu.dot_dimension_numbers<[1], [0], [0], [1], [0, 0, 1, 1], [], []>} : vector<256x4xf32>, vector<4x128xf32>, vector<256x128xf32> -> vector<256x128xf32>
    %55 = arith.addf %49, %54 : vector<256x128xf32>
    %c2_76 = arith.constant 2 : index
    %c2_77 = arith.constant 2 : index
    %c0_78 = arith.constant 0 : index
    %56 = vector.load %arg7[%c2_76, %c2_77, %c0_78] : memref<18x18x4xf32, #tpu.memory_space<vmem>>, vector<16x16x4xf32>
    %57 = vector.shape_cast %56 : vector<16x16x4xf32> to vector<256x4xf32>
    %c2_79 = arith.constant 2 : index
    %c2_80 = arith.constant 2 : index
    %c0_81 = arith.constant 0 : index
    %c0_82 = arith.constant 0 : index
    %58 = vector.load %arg2[%c2_79, %c2_80, %c0_81, %c0_82] : memref<3x3x4x128xf32, #tpu.memory_space<vmem>>, vector<1x1x4x128xf32>
    %59 = vector.shape_cast %58 : vector<1x1x4x128xf32> to vector<4x128xf32>
    %cst_83 = arith.constant dense<0.000000e+00> : vector<256x128xf32>
    %60 = tpu.matmul %57, %59, %cst_83 {dimension_numbers = #tpu.dot_dimension_numbers<[1], [0], [0], [1], [0, 0, 1, 1], [], []>} : vector<256x4xf32>, vector<4x128xf32>, vector<256x128xf32> -> vector<256x128xf32>
    %61 = arith.addf %55, %60 : vector<256x128xf32>
    %c0_84 = arith.constant 0 : index
    %c0_85 = arith.constant 0 : index
    %62 = vector.load %arg3[%c0_84, %c0_85] : memref<1x128xf32, #tpu.memory_space<vmem>>, vector<1x128xf32>
    %63 = vector.broadcast %62 : vector<1x128xf32> to vector<256x128xf32>
    %64 = arith.addf %61, %63 : vector<256x128xf32>
    %cst_86 = arith.constant 0.000000e+00 : f32
    %65 = vector.broadcast %cst_86 : f32 to vector<256x128xf32>
    %66 = arith.cmpf oge, %64, %65 : vector<256x128xf32>
    %cst_87 = arith.constant 1.000000e-01 : f32
    %67 = vector.broadcast %cst_87 : f32 to vector<256x128xf32>
    %68 = arith.mulf %67, %64 : vector<256x128xf32>
    %69 = arith.select %66, %64, %68 : vector<256x128xi1>, vector<256x128xf32>
    %70 = vector.shape_cast %69 : vector<256x128xf32> to vector<16x16x128xf32>
    %c1_88 = arith.constant 1 : index
    %c1_89 = arith.constant 1 : index
    %c0_90 = arith.constant 0 : index
    %71 = vector.load %arg8[%c1_88, %c1_89, %c0_90] : memref<18x18x128xf32, #tpu.memory_space<vmem>>, vector<16x16x128xf32>
    tpu.vector_store %arg8[%c1_88, %c1_89, %c0_90], %70 {strides = array<i32>} : memref<18x18x128xf32, #tpu.memory_space<vmem>>, vector<16x16x128xf32>,
    %cst_91 = arith.constant 0.000000e+00 : f32
    %72 = vector.broadcast %cst_91 : f32 to vector<256x128xf32>
    %c0_92 = arith.constant 0 : index
    %c0_93 = arith.constant 0 : index
    %c0_94 = arith.constant 0 : index
    %73 = vector.load %arg8[%c0_92, %c0_93, %c0_94] : memref<18x18x128xf32, #tpu.memory_space<vmem>>, vector<16x16x128xf32>
    %74 = vector.shape_cast %73 : vector<16x16x128xf32> to vector<256x128xf32>
    %c0_95 = arith.constant 0 : index
    %c0_96 = arith.constant 0 : index
    %c0_97 = arith.constant 0 : index
    %c0_98 = arith.constant 0 : index
    %75 = vector.load %arg4[%c0_95, %c0_96, %c0_97, %c0_98] : memref<3x3x128x128xf32, #tpu.memory_space<vmem>>, vector<1x1x128x128xf32>
    %76 = vector.shape_cast %75 : vector<1x1x128x128xf32> to vector<128x128xf32>
    %cst_99 = arith.constant dense<0.000000e+00> : vector<256x128xf32>
    %77 = tpu.matmul %74, %76, %cst_99 {dimension_numbers = #tpu.dot_dimension_numbers<[1], [0], [0], [1], [0, 0, 1, 1], [], []>} : vector<256x128xf32>, vector<128x128xf32>, vector<256x128xf32> -> vector<256x128xf32>
    %78 = arith.addf %72, %77 : vector<256x128xf32>
    %c0_100 = arith.constant 0 : index
    %c1_101 = arith.constant 1 : index
    %c0_102 = arith.constant 0 : index
    %79 = vector.load %arg8[%c0_100, %c1_101, %c0_102] : memref<18x18x128xf32, #tpu.memory_space<vmem>>, vector<16x16x128xf32>
    %80 = vector.shape_cast %79 : vector<16x16x128xf32> to vector<256x128xf32>
    %c0_103 = arith.constant 0 : index
    %c1_104 = arith.constant 1 : index
    %c0_105 = arith.constant 0 : index
    %c0_106 = arith.constant 0 : index
    %81 = vector.load %arg4[%c0_103, %c1_104, %c0_105, %c0_106] : memref<3x3x128x128xf32, #tpu.memory_space<vmem>>, vector<1x1x128x128xf32>
    %82 = vector.shape_cast %81 : vector<1x1x128x128xf32> to vector<128x128xf32>
    %cst_107 = arith.constant dense<0.000000e+00> : vector<256x128xf32>
    %83 = tpu.matmul %80, %82, %cst_107 {dimension_numbers = #tpu.dot_dimension_numbers<[1], [0], [0], [1], [0, 0, 1, 1], [], []>} : vector<256x128xf32>, vector<128x128xf32>, vector<256x128xf32> -> vector<256x128xf32>
    %84 = arith.addf %78, %83 : vector<256x128xf32>
    %c0_108 = arith.constant 0 : index
    %c2_109 = arith.constant 2 : index
    %c0_110 = arith.constant 0 : index
    %85 = vector.load %arg8[%c0_108, %c2_109, %c0_110] : memref<18x18x128xf32, #tpu.memory_space<vmem>>, vector<16x16x128xf32>
    %86 = vector.shape_cast %85 : vector<16x16x128xf32> to vector<256x128xf32>
    %c0_111 = arith.constant 0 : index
    %c2_112 = arith.constant 2 : index
    %c0_113 = arith.constant 0 : index
    %c0_114 = arith.constant 0 : index
    %87 = vector.load %arg4[%c0_111, %c2_112, %c0_113, %c0_114] : memref<3x3x128x128xf32, #tpu.memory_space<vmem>>, vector<1x1x128x128xf32>
    %88 = vector.shape_cast %87 : vector<1x1x128x128xf32> to vector<128x128xf32>
    %cst_115 = arith.constant dense<0.000000e+00> : vector<256x128xf32>
    %89 = tpu.matmul %86, %88, %cst_115 {dimension_numbers = #tpu.dot_dimension_numbers<[1], [0], [0], [1], [0, 0, 1, 1], [], []>} : vector<256x128xf32>, vector<128x128xf32>, vector<256x128xf32> -> vector<256x128xf32>
    %90 = arith.addf %84, %89 : vector<256x128xf32>
    %c1_116 = arith.constant 1 : index
    %c0_117 = arith.constant 0 : index
    %c0_118 = arith.constant 0 : index
    %91 = vector.load %arg8[%c1_116, %c0_117, %c0_118] : memref<18x18x128xf32, #tpu.memory_space<vmem>>, vector<16x16x128xf32>
    %92 = vector.shape_cast %91 : vector<16x16x128xf32> to vector<256x128xf32>
    %c1_119 = arith.constant 1 : index
    %c0_120 = arith.constant 0 : index
    %c0_121 = arith.constant 0 : index
    %c0_122 = arith.constant 0 : index
    %93 = vector.load %arg4[%c1_119, %c0_120, %c0_121, %c0_122] : memref<3x3x128x128xf32, #tpu.memory_space<vmem>>, vector<1x1x128x128xf32>
    %94 = vector.shape_cast %93 : vector<1x1x128x128xf32> to vector<128x128xf32>
    %cst_123 = arith.constant dense<0.000000e+00> : vector<256x128xf32>
    %95 = tpu.matmul %92, %94, %cst_123 {dimension_numbers = #tpu.dot_dimension_numbers<[1], [0], [0], [1], [0, 0, 1, 1], [], []>} : vector<256x128xf32>, vector<128x128xf32>, vector<256x128xf32> -> vector<256x128xf32>
    %96 = arith.addf %90, %95 : vector<256x128xf32>
    %c1_124 = arith.constant 1 : index
    %c1_125 = arith.constant 1 : index
    %c0_126 = arith.constant 0 : index
    %97 = vector.load %arg8[%c1_124, %c1_125, %c0_126] : memref<18x18x128xf32, #tpu.memory_space<vmem>>, vector<16x16x128xf32>
    %98 = vector.shape_cast %97 : vector<16x16x128xf32> to vector<256x128xf32>
    %c1_127 = arith.constant 1 : index
    %c1_128 = arith.constant 1 : index
    %c0_129 = arith.constant 0 : index
    %c0_130 = arith.constant 0 : index
    %99 = vector.load %arg4[%c1_127, %c1_128, %c0_129, %c0_130] : memref<3x3x128x128xf32, #tpu.memory_space<vmem>>, vector<1x1x128x128xf32>
    %100 = vector.shape_cast %99 : vector<1x1x128x128xf32> to vector<128x128xf32>
    %cst_131 = arith.constant dense<0.000000e+00> : vector<256x128xf32>
    %101 = tpu.matmul %98, %100, %cst_131 {dimension_numbers = #tpu.dot_dimension_numbers<[1], [0], [0], [1], [0, 0, 1, 1], [], []>} : vector<256x128xf32>, vector<128x128xf32>, vector<256x128xf32> -> vector<256x128xf32>
    %102 = arith.addf %96, %101 : vector<256x128xf32>
    %c1_132 = arith.constant 1 : index
    %c2_133 = arith.constant 2 : index
    %c0_134 = arith.constant 0 : index
    %103 = vector.load %arg8[%c1_132, %c2_133, %c0_134] : memref<18x18x128xf32, #tpu.memory_space<vmem>>, vector<16x16x128xf32>
    %104 = vector.shape_cast %103 : vector<16x16x128xf32> to vector<256x128xf32>
    %c1_135 = arith.constant 1 : index
    %c2_136 = arith.constant 2 : index
    %c0_137 = arith.constant 0 : index
    %c0_138 = arith.constant 0 : index
    %105 = vector.load %arg4[%c1_135, %c2_136, %c0_137, %c0_138] : memref<3x3x128x128xf32, #tpu.memory_space<vmem>>, vector<1x1x128x128xf32>
    %106 = vector.shape_cast %105 : vector<1x1x128x128xf32> to vector<128x128xf32>
    %cst_139 = arith.constant dense<0.000000e+00> : vector<256x128xf32>
    %107 = tpu.matmul %104, %106, %cst_139 {dimension_numbers = #tpu.dot_dimension_numbers<[1], [0], [0], [1], [0, 0, 1, 1], [], []>} : vector<256x128xf32>, vector<128x128xf32>, vector<256x128xf32> -> vector<256x128xf32>
    %108 = arith.addf %102, %107 : vector<256x128xf32>
    %c2_140 = arith.constant 2 : index
    %c0_141 = arith.constant 0 : index
    %c0_142 = arith.constant 0 : index
    %109 = vector.load %arg8[%c2_140, %c0_141, %c0_142] : memref<18x18x128xf32, #tpu.memory_space<vmem>>, vector<16x16x128xf32>
    %110 = vector.shape_cast %109 : vector<16x16x128xf32> to vector<256x128xf32>
    %c2_143 = arith.constant 2 : index
    %c0_144 = arith.constant 0 : index
    %c0_145 = arith.constant 0 : index
    %c0_146 = arith.constant 0 : index
    %111 = vector.load %arg4[%c2_143, %c0_144, %c0_145, %c0_146] : memref<3x3x128x128xf32, #tpu.memory_space<vmem>>, vector<1x1x128x128xf32>
    %112 = vector.shape_cast %111 : vector<1x1x128x128xf32> to vector<128x128xf32>
    %cst_147 = arith.constant dense<0.000000e+00> : vector<256x128xf32>
    %113 = tpu.matmul %110, %112, %cst_147 {dimension_numbers = #tpu.dot_dimension_numbers<[1], [0], [0], [1], [0, 0, 1, 1], [], []>} : vector<256x128xf32>, vector<128x128xf32>, vector<256x128xf32> -> vector<256x128xf32>
    %114 = arith.addf %108, %113 : vector<256x128xf32>
    %c2_148 = arith.constant 2 : index
    %c1_149 = arith.constant 1 : index
    %c0_150 = arith.constant 0 : index
    %115 = vector.load %arg8[%c2_148, %c1_149, %c0_150] : memref<18x18x128xf32, #tpu.memory_space<vmem>>, vector<16x16x128xf32>
    %116 = vector.shape_cast %115 : vector<16x16x128xf32> to vector<256x128xf32>
    %c2_151 = arith.constant 2 : index
    %c1_152 = arith.constant 1 : index
    %c0_153 = arith.constant 0 : index
    %c0_154 = arith.constant 0 : index
    %117 = vector.load %arg4[%c2_151, %c1_152, %c0_153, %c0_154] : memref<3x3x128x128xf32, #tpu.memory_space<vmem>>, vector<1x1x128x128xf32>
    %118 = vector.shape_cast %117 : vector<1x1x128x128xf32> to vector<128x128xf32>
    %cst_155 = arith.constant dense<0.000000e+00> : vector<256x128xf32>
    %119 = tpu.matmul %116, %118, %cst_155 {dimension_numbers = #tpu.dot_dimension_numbers<[1], [0], [0], [1], [0, 0, 1, 1], [], []>} : vector<256x128xf32>, vector<128x128xf32>, vector<256x128xf32> -> vector<256x128xf32>
    %120 = arith.addf %114, %119 : vector<256x128xf32>
    %c2_156 = arith.constant 2 : index
    %c2_157 = arith.constant 2 : index
    %c0_158 = arith.constant 0 : index
    %121 = vector.load %arg8[%c2_156, %c2_157, %c0_158] : memref<18x18x128xf32, #tpu.memory_space<vmem>>, vector<16x16x128xf32>
    %122 = vector.shape_cast %121 : vector<16x16x128xf32> to vector<256x128xf32>
    %c2_159 = arith.constant 2 : index
    %c2_160 = arith.constant 2 : index
    %c0_161 = arith.constant 0 : index
    %c0_162 = arith.constant 0 : index
    %123 = vector.load %arg4[%c2_159, %c2_160, %c0_161, %c0_162] : memref<3x3x128x128xf32, #tpu.memory_space<vmem>>, vector<1x1x128x128xf32>
    %124 = vector.shape_cast %123 : vector<1x1x128x128xf32> to vector<128x128xf32>
    %cst_163 = arith.constant dense<0.000000e+00> : vector<256x128xf32>
    %125 = tpu.matmul %122, %124, %cst_163 {dimension_numbers = #tpu.dot_dimension_numbers<[1], [0], [0], [1], [0, 0, 1, 1], [], []>} : vector<256x128xf32>, vector<128x128xf32>, vector<256x128xf32> -> vector<256x128xf32>
    %126 = arith.addf %120, %125 : vector<256x128xf32>
    %c0_164 = arith.constant 0 : index
    %c0_165 = arith.constant 0 : index
    %127 = vector.load %arg5[%c0_164, %c0_165] : memref<1x128xf32, #tpu.memory_space<vmem>>, vector<1x128xf32>
    %128 = vector.broadcast %127 : vector<1x128xf32> to vector<256x128xf32>
    %129 = arith.addf %126, %128 : vector<256x128xf32>
    %cst_166 = arith.constant 0.000000e+00 : f32
    %130 = vector.broadcast %cst_166 : f32 to vector<256x128xf32>
    %131 = arith.cmpf oge, %129, %130 : vector<256x128xf32>
    %cst_167 = arith.constant 1.000000e-01 : f32
    %132 = vector.broadcast %cst_167 : f32 to vector<256x128xf32>
    %133 = arith.mulf %132, %129 : vector<256x128xf32>
    %134 = arith.select %131, %129, %133 : vector<256x128xi1>, vector<256x128xf32>
    %c0_168 = arith.constant 0 : index
    %c0_169 = arith.constant 0 : index
    %c0_170 = arith.constant 0 : index
    %135 = vector.load %arg6[%c0_168, %c0_169, %c0_170] : memref<1x256x128xf32, #tpu.memory_space<vmem>>, vector<1x256x128xf32>
    %136 = vector.shape_cast %135 : vector<1x256x128xf32> to vector<256x128xf32>
    %137 = vector.shape_cast %134 : vector<256x128xf32> to vector<1x256x128xf32>
    tpu.vector_store %arg6[%c0_168, %c0_169, %c0_170], %137 {strides = array<i32>} : memref<1x256x128xf32, #tpu.memory_space<vmem>>, vector<1x256x128xf32>,
    return
  }
  func.func @transform_0(%arg0: i32) -> (i32, i32, i32, i32) {
    %c0_i32 = arith.constant 0 : i32
    %c0_i32_0 = arith.constant 0 : i32
    %c0_i32_1 = arith.constant 0 : i32
    %c0_i32_2 = arith.constant 0 : i32
    return %arg0, %c0_i32, %c0_i32_0, %c0_i32_1 : i32, i32, i32, i32
  }
  func.func @transform_1(%arg0: i32) -> (i32, i32, i32, i32) {
    %c0_i32 = arith.constant 0 : i32
    %c0_i32_0 = arith.constant 0 : i32
    %c0_i32_1 = arith.constant 0 : i32
    %c0_i32_2 = arith.constant 0 : i32
    %c0_i32_3 = arith.constant 0 : i32
    return %c0_i32, %c0_i32_0, %c0_i32_1, %c0_i32_2 : i32, i32, i32, i32
  }
  func.func @transform_2(%arg0: i32) -> (i32, i32) {
    %c0_i32 = arith.constant 0 : i32
    %c0_i32_0 = arith.constant 0 : i32
    %c0_i32_1 = arith.constant 0 : i32
    return %c0_i32, %c0_i32_0 : i32, i32
  }
  func.func @transform_3(%arg0: i32) -> (i32, i32, i32, i32) {
    %c0_i32 = arith.constant 0 : i32
    %c0_i32_0 = arith.constant 0 : i32
    %c0_i32_1 = arith.constant 0 : i32
    %c0_i32_2 = arith.constant 0 : i32
    %c0_i32_3 = arith.constant 0 : i32
    return %c0_i32, %c0_i32_0, %c0_i32_1, %c0_i32_2 : i32, i32, i32, i32
  }
  func.func @transform_4(%arg0: i32) -> (i32, i32) {
    %c0_i32 = arith.constant 0 : i32
    %c0_i32_0 = arith.constant 0 : i32
    %c0_i32_1 = arith.constant 0 : i32
    return %c0_i32, %c0_i32_0 : i32, i32
  }
  func.func @transform_5(%arg0: i32) -> (i32, i32, i32) {
    %c0_i32 = arith.constant 0 : i32
    %c0_i32_0 = arith.constant 0 : i32
    %c0_i32_1 = arith.constant 0 : i32
    return %arg0, %c0_i32, %c0_i32_0 : i32, i32, i32
  }
}

</mosaic_0001>

<llo_original>
// kernel: double_convolution.1
$region0: #{double_convolution.1}
  #allocation0 [shape = 'u32[]', space=smem, size = 0x4, offset = 0x4, fixed_abs, tag = 'smem constant byte address 0x4 - core index']
  #allocation1 [shape = 'u32[144,128]{1,0:T(1,128)}', space=vmem, size = 0x12000, scoped, tag = 'internal scratch']
  #allocation2 [shape = 'f32[18,18,4]{2,1,0:T(8,128)}', space=vmem, size = 0x36000, scoped, tag = 'scratch operand']
  #allocation3 [shape = 'f32[18,18,128]{2,1,0:T(8,128)}', space=vmem, size = 0x36000, scoped, tag = 'scratch operand']
  %s0 = inlined_call_operand.vmem [shape: f32[2,16,16,4], index: 0, kind: input, shape index: {}]
  %s1 = inlined_call_operand.vmem [shape: f32[3,3,4,128], index: 1, kind: input, shape index: {}]
  %s2 = inlined_call_operand.vmem [shape: f32[1,128], index: 2, kind: input, shape index: {}]
  %s3 = inlined_call_operand.vmem [shape: f32[3,3,128,128], index: 3, kind: input, shape index: {}]
  %s4 = inlined_call_operand.vmem [shape: f32[1,128], index: 4, kind: input, shape index: {}]
  %s5 = inlined_call_operand.vmem [shape: f32[2,256,128], index: 5, kind: output, shape index: {}]
  %s6 = sld [smem:[#allocation0]]
  $region53: #{double_convolution.1} parent=0
    _
  %s8 = ssub.s32 1, %s6
  %s9 = scalar_select 0, %s8, %s6
  loop: start=0, step=1, limit=4
  $region2: #{double_convolution.1} parent=0 // loop_pre_header
    _
  $region3: #{double_convolution.1} parent=0 // loop_header
    %s11 = sphi 0, %s15
    %p12 = scmp.ge.s32.totalorder %s11, 4
    %s21 = sphi 0, %s23
    %s24 = sphi 0, %s21
    %s25 = sphi 0, %s24
    %s41 = sphi 0, %s25
    %s45 = sphi 0, %s45
    %s47 = sphi 0, %s45
    %s48 = sphi 0, %s47
    %s62 = sphi 0, %s48
    %s66 = sphi 0, %s66
    %s68 = sphi 0, %s66
    %s69 = sphi 0, %s68
    %s83 = sphi 0, %s69
    %s87 = sphi 0, %s87
    %s89 = sphi 0, %s87
    %s90 = sphi 0, %s89
    %s104 = sphi 0, %s90
    %s108 = sphi 0, %s108
    %s110 = sphi 0, %s108
    %s111 = sphi 0, %s110
    %s125 = sphi 0, %s111
    %s131 = sphi 0, %s133
    %s134 = sphi 0, %s131
    %s135 = sphi 0, %s134
    %s151 = sphi 0, %s135
  $region4: #{double_convolution.1} parent=0 // loop_header_branch
    %14 = sbr.rel (%p12) target = $region8
  $region5: #{double_convolution.1} parent=0 // loop_body
    %s16 = ssub.s32 %s11, 1
    %s17 = ssub.s32 %s11, 2
    %s18 = sadd.s32 %s11, 1
    %s19 = ssub.s32 %s11, %s18
    %p20 = scmp.eq.s32.totalorder %s19, 0
    %s22 = sadd.s32 %s21, 1
    %s23 = scalar_select %p20, %s21, %s22
    %p26 = pneg %p20
    %p27 = scmp.eq.s32.totalorder %s11, 1
    %p28 = por %p26, %p27
    %p29 = scmp.ne.s32.totalorder %s21, %s24
    %p30 = scmp.eq.s32.totalorder %s11, 0
    %p31 = por %p29, %p30
    %p32 = scmp.ne.s32.totalorder %s21, %s24
    %p33 = scmp.eq.s32.totalorder %s16, 1
    %p34 = por %p32, %p33
    %p35 = scmp.ne.s32.totalorder %s24, %s25
    %p36 = scmp.eq.s32.totalorder %s16, 0
    %p37 = por %p35, %p36
    %p38 = scmp.ne.s32.totalorder %s24, %s25
    %p39 = scmp.eq.s32.totalorder %s17, 1
    %p40 = por %p38, %p39
    %p42 = scmp.ne.s32.totalorder %s25, %s41
    %p43 = scmp.eq.s32.totalorder %s17, 0
    %p44 = por %p42, %p43
    %s46 = sadd.s32 %s45, 1
    %p49 = scmp.eq.s32.totalorder %s11, 1
    %p50 = scmp.ne.s32.totalorder %s45, %s47
    %p51 = scmp.eq.s32.totalorder %s11, 0
    %p52 = por %p50, %p51
    %p53 = scmp.ne.s32.totalorder %s45, %s47
    %p54 = scmp.eq.s32.totalorder %s16, 1
    %p55 = por %p53, %p54
    %p56 = scmp.ne.s32.totalorder %s47, %s48
    %p57 = scmp.eq.s32.totalorder %s16, 0
    %p58 = por %p56, %p57
    %p59 = scmp.ne.s32.totalorder %s47, %s48
    %p60 = scmp.eq.s32.totalorder %s17, 1
    %p61 = por %p59, %p60
    %p63 = scmp.ne.s32.totalorder %s48, %s62
    %p64 = scmp.eq.s32.totalorder %s17, 0
    %p65 = por %p63, %p64
    %s67 = sadd.s32 %s66, 1
    %p70 = scmp.eq.s32.totalorder %s11, 1
    %p71 = scmp.ne.s32.totalorder %s66, %s68
    %p72 = scmp.eq.s32.totalorder %s11, 0
    %p73 = por %p71, %p72
    %p74 = scmp.ne.s32.totalorder %s66, %s68
    %p75 = scmp.eq.s32.totalorder %s16, 1
    %p76 = por %p74, %p75
    %p77 = scmp.ne.s32.totalorder %s68, %s69
    %p78 = scmp.eq.s32.totalorder %s16, 0
    %p79 = por %p77, %p78
    %p80 = scmp.ne.s32.totalorder %s68, %s69
    %p81 = scmp.eq.s32.totalorder %s17, 1
    %p82 = por %p80, %p81
    %p84 = scmp.ne.s32.totalorder %s69, %s83
    %p85 = scmp.eq.s32.totalorder %s17, 0
    %p86 = por %p84, %p85
    %s88 = sadd.s32 %s87, 1
    %p91 = scmp.eq.s32.totalorder %s11, 1
    %p92 = scmp.ne.s32.totalorder %s87, %s89
    %p93 = scmp.eq.s32.totalorder %s11, 0
    %p94 = por %p92, %p93
    %p95 = scmp.ne.s32.totalorder %s87, %s89
    %p96 = scmp.eq.s32.totalorder %s16, 1
    %p97 = por %p95, %p96
    %p98 = scmp.ne.s32.totalorder %s89, %s90
    %p99 = scmp.eq.s32.totalorder %s16, 0
    %p100 = por %p98, %p99
    %p101 = scmp.ne.s32.totalorder %s89, %s90
    %p102 = scmp.eq.s32.totalorder %s17, 1
    %p103 = por %p101, %p102
    %p105 = scmp.ne.s32.totalorder %s90, %s104
    %p106 = scmp.eq.s32.totalorder %s17, 0
    %p107 = por %p105, %p106
    %s109 = sadd.s32 %s108, 1
    %p112 = scmp.eq.s32.totalorder %s11, 1
    %p113 = scmp.ne.s32.totalorder %s108, %s110
    %p114 = scmp.eq.s32.totalorder %s11, 0
    %p115 = por %p113, %p114
    %p116 = scmp.ne.s32.totalorder %s108, %s110
    %p117 = scmp.eq.s32.totalorder %s16, 1
    %p118 = por %p116, %p117
    %p119 = scmp.ne.s32.totalorder %s110, %s111
    %p120 = scmp.eq.s32.totalorder %s16, 0
    %p121 = por %p119, %p120
    %p122 = scmp.ne.s32.totalorder %s110, %s111
    %p123 = scmp.eq.s32.totalorder %s17, 1
    %p124 = por %p122, %p123
    %p126 = scmp.ne.s32.totalorder %s111, %s125
    %p127 = scmp.eq.s32.totalorder %s17, 0
    %p128 = por %p126, %p127
    %s129 = ssub.s32 %s11, %s18
    %p130 = scmp.eq.s32.totalorder %s129, 0
    %s132 = sadd.s32 %s131, 1
    %s133 = scalar_select %p130, %s131, %s132
    %p136 = pneg %p130
    %p137 = scmp.eq.s32.totalorder %s11, 1
    %p138 = por %p136, %p137
    %p139 = scmp.ne.s32.totalorder %s131, %s134
    %p140 = scmp.eq.s32.totalorder %s11, 0
    %p141 = por %p139, %p140
    %p142 = scmp.ne.s32.totalorder %s131, %s134
    %p143 = scmp.eq.s32.totalorder %s16, 1
    %p144 = por %p142, %p143
    %p145 = scmp.ne.s32.totalorder %s134, %s135
    %p146 = scmp.eq.s32.totalorder %s16, 0
    %p147 = por %p145, %p146
    %p148 = scmp.ne.s32.totalorder %s134, %s135
    %p149 = scmp.eq.s32.totalorder %s17, 1
    %p150 = por %p148, %p149
    %p152 = scmp.ne.s32.totalorder %s135, %s151
    %p153 = scmp.eq.s32.totalorder %s17, 0
    %p154 = por %p152, %p153
    %p155 = scmp.le.s32.totalorder 1, %s11
    %p156 = scmp.lt.s32.totalorder %s11, 3
    %p157 = pnand %p155, %p156
    %p158 = pneg %p157
    // Predicated region
    $region9: #{double_convolution.1} parent=5 // pred_check
      _
    $region10: #{double_convolution.1} parent=5 // pred_check_branch
      %160 = sbr.rel (%p157) target = $region12
    $region11: #{double_convolution.1} parent=5 // pred_region
      %s161 = ssub.s32 %s11, 1
      // Predicated region
      $region13: #{double_convolution.1} parent=11 // pred_check
        %p162 = pneg %p58
      $region14: #{double_convolution.1} parent=11 // pred_check_branch
        %164 = sbr.rel (%p162) target = $region16
      $region15: #{double_convolution.1} parent=11 // pred_region
        _
      $region16: #{double_convolution.1} parent=11 // pred_fallthru
        _
      // Predicated region
      $region17: #{double_convolution.1} parent=11 // pred_check
        %p165 = pneg %p79
      $region18: #{double_convolution.1} parent=11 // pred_check_branch
        %167 = sbr.rel (%p165) target = $region20
      $region19: #{double_convolution.1} parent=11 // pred_region
        _
      $region20: #{double_convolution.1} parent=11 // pred_fallthru
        _
      // Predicated region
      $region21: #{double_convolution.1} parent=11 // pred_check
        %p168 = pneg %p100
      $region22: #{double_convolution.1} parent=11 // pred_check_branch
        %170 = sbr.rel (%p168) target = $region24
      $region23: #{double_convolution.1} parent=11 // pred_region
        _
      $region24: #{double_convolution.1} parent=11 // pred_fallthru
        _
      // Predicated region
      $region25: #{double_convolution.1} parent=11 // pred_check
        %p171 = pneg %p121
      $region26: #{double_convolution.1} parent=11 // pred_check_branch
        %173 = sbr.rel (%p171) target = $region28
      $region27: #{double_convolution.1} parent=11 // pred_region
        _
      $region28: #{double_convolution.1} parent=11 // pred_fallthru
        _
    $region12: #{double_convolution.1} parent=5 // pred_fallthru
      _
    %p174 = scmp.lt.s32.totalorder %s11, 2
    // Predicated region
    $region29: #{double_convolution.1} parent=5 // pred_check
      %p175 = pneg %p174
    $region30: #{double_convolution.1} parent=5 // pred_check_branch
      %177 = sbr.rel (%p175) target = $region32
    $region31: #{double_convolution.1} parent=5 // pred_region
      // Predicated region
      $region33: #{double_convolution.1} parent=31 // pred_check
        %p178 = pneg %p31
      $region34: #{double_convolution.1} parent=31 // pred_check_branch
        %180 = sbr.rel (%p178) target = $region36
      $region35: #{double_convolution.1} parent=31 // pred_region
        %p181 = scmp.lt.s32.totalorder %s11, 1
        %s182 = scalar_select %p181, %s11, 1
        %s183 = smul.addr %s182, 32
        %s184 = smul.addr %s183, 8
        %s185 = scalar_lea.vmem %s0, %s184
      $region36: #{double_convolution.1} parent=31 // pred_fallthru
        _
    $region32: #{double_convolution.1} parent=5 // pred_fallthru
      _
    %p186 = scmp.le.s32.totalorder 1, %s11
    %p187 = scmp.lt.s32.totalorder %s11, 3
    %p188 = pnand %p186, %p187
    %p189 = pneg %p188
    // Predicated region
    $region37: #{double_convolution.1} parent=5 // pred_check
      _
    $region38: #{double_convolution.1} parent=5 // pred_check_branch
      %191 = sbr.rel (%p188) target = $region40
    $region39: #{double_convolution.1} parent=5 // pred_region
      %s192 = ssub.s32 %s11, 1
      %p193 = scmp.lt.s32.totalorder %s16, 1
      %s194 = scalar_select %p193, %s16, 1
      %s195 = smul.addr %s194, 32
      %s196 = smul.addr %s195, 8
      %s197 = scalar_lea.vmem %s0, %s196
      %p198 = pneg %p37
      %p199 = pneg %p34
      %p200 = pneg %p58
      %p201 = pneg %p55
      %p202 = pneg %p79
      %p203 = pneg %p76
      %p204 = pneg %p100
      %p205 = pneg %p97
      %p206 = pneg %p121
      %p207 = pneg %p118
      %p208 = pneg %p147
      %p209 = pneg %p144
      %p210 = scmp.lt.s32.totalorder %s16, 1
      %s211 = scalar_select %p210, %s16, 1
      %s212 = smul.addr %s211, 32
      %s213 = smul.addr %s212, 8
      %s214 = scalar_lea.vmem %s5, %s213
      %p215 = scmp.lt.s32.totalorder %s16, 1
      %s216 = scalar_select %p215, %s16, 1
      %s217 = smul.addr %s216, 32
      %s218 = smul.addr %s217, 8
      %s219 = scalar_lea.vmem %s0, %s218
      %p220 = scmp.lt.s32.totalorder %s16, 1
      %s221 = scalar_select %p220, %s16, 1
      %s222 = smul.addr %s221, 32
      %s223 = smul.addr %s222, 8
      %s224 = scalar_lea.vmem %s5, %s223
      %vm225 = vcmask 31744
      %226 = vst.msk [vmem:[#allocation2] sm:$0xff] %vm225, 0.0
      %227 = vst.msk [vmem:[#allocation2 + $0x8] sm:$0xff] %vm225, 0.0
      %vm228 = vcmask 25600
      %229 = vst.msk [vmem:[#allocation2 + $0x10] sm:$0x3] %vm228, 0.0
      %230 = vst.msk [vmem:[#allocation2 + $0x18] sm:$0xff] %vm225, 0.0
      %231 = vst.msk [vmem:[#allocation2 + $0x20] sm:$0xff] %vm225, 0.0
      %232 = vst.msk [vmem:[#allocation2 + $0x28] sm:$0x3] %vm228, 0.0
      %233 = vst.msk [vmem:[#allocation2 + $0x30] sm:$0xff] %vm225, 0.0
      %234 = vst.msk [vmem:[#allocation2 + $0x38] sm:$0xff] %vm225, 0.0
      %235 = vst.msk [vmem:[#allocation2 + $0x40] sm:$0x3] %vm228, 0.0
      %236 = vst.msk [vmem:[#allocation2 + $0x48] sm:$0xff] %vm225, 0.0
      %237 = vst.msk [vmem:[#allocation2 + $0x50] sm:$0xff] %vm225, 0.0
      %238 = vst.msk [vmem:[#allocation2 + $0x58] sm:$0x3] %vm228, 0.0
      %239 = vst.msk [vmem:[#allocation2 + $0x60] sm:$0xff] %vm225, 0.0
      %240 = vst.msk [vmem:[#allocation2 + $0x68] sm:$0xff] %vm225, 0.0
      %241 = vst.msk [vmem:[#allocation2 + $0x70] sm:$0x3] %vm228, 0.0
      %242 = vst.msk [vmem:[#allocation2 + $0x78] sm:$0xff] %vm225, 0.0
      %243 = vst.msk [vmem:[#allocation2 + $0x80] sm:$0xff] %vm225, 0.0
      %244 = vst.msk [vmem:[#allocation2 + $0x88] sm:$0x3] %vm228, 0.0
      %245 = vst.msk [vmem:[#allocation2 + $0x90] sm:$0xff] %vm225, 0.0
      %246 = vst.msk [vmem:[#allocation2 + $0x98] sm:$0xff] %vm225, 0.0
      %247 = vst.msk [vmem:[#allocation2 + $0xa0] sm:$0x3] %vm228, 0.0
      %248 = vst.msk [vmem:[#allocation2 + $0xa8] sm:$0xff] %vm225, 0.0
      %249 = vst.msk [vmem:[#allocation2 + $0xb0] sm:$0xff] %vm225, 0.0
      %250 = vst.msk [vmem:[#allocation2 + $0xb8] sm:$0x3] %vm228, 0.0
      %251 = vst.msk [vmem:[#allocation2 + $0xc0] sm:$0xff] %vm225, 0.0
      %252 = vst.msk [vmem:[#allocation2 + $0xc8] sm:$0xff] %vm225, 0.0
      %253 = vst.msk [vmem:[#allocation2 + $0xd0] sm:$0x3] %vm228, 0.0
      %254 = vst.msk [vmem:[#allocation2 + $0xd8] sm:$0xff] %vm225, 0.0
      %255 = vst.msk [vmem:[#allocation2 + $0xe0] sm:$0xff] %vm225, 0.0
      %256 = vst.msk [vmem:[#allocation2 + $0xe8] sm:$0x3] %vm228, 0.0
      %257 = vst.msk [vmem:[#allocation2 + $0xf0] sm:$0xff] %vm225, 0.0
      %258 = vst.msk [vmem:[#allocation2 + $0xf8] sm:$0xff] %vm225, 0.0
      %259 = vst.msk [vmem:[#allocation2 + $0x100] sm:$0x3] %vm228, 0.0
      %260 = vst.msk [vmem:[#allocation2 + $0x108] sm:$0xff] %vm225, 0.0
      %261 = vst.msk [vmem:[#allocation2 + $0x110] sm:$0xff] %vm225, 0.0
      %262 = vst.msk [vmem:[#allocation2 + $0x118] sm:$0x3] %vm228, 0.0
      %263 = vst.msk [vmem:[#allocation2 + $0x120] sm:$0xff] %vm225, 0.0
      %264 = vst.msk [vmem:[#allocation2 + $0x128] sm:$0xff] %vm225, 0.0
      %265 = vst.msk [vmem:[#allocation2 + $0x130] sm:$0x3] %vm228, 0.0
      %266 = vst.msk [vmem:[#allocation2 + $0x138] sm:$0xff] %vm225, 0.0
      %267 = vst.msk [vmem:[#allocation2 + $0x140] sm:$0xff] %vm225, 0.0
      %268 = vst.msk [vmem:[#allocation2 + $0x148] sm:$0x3] %vm228, 0.0
      %269 = vst.msk [vmem:[#allocation2 + $0x150] sm:$0xff] %vm225, 0.0
      %270 = vst.msk [vmem:[#allocation2 + $0x158] sm:$0xff] %vm225, 0.0
      %271 = vst.msk [vmem:[#allocation2 + $0x160] sm:$0x3] %vm228, 0.0
      %272 = vst.msk [vmem:[#allocation2 + $0x168] sm:$0xff] %vm225, 0.0
      %273 = vst.msk [vmem:[#allocation2 + $0x170] sm:$0xff] %vm225, 0.0
      %274 = vst.msk [vmem:[#allocation2 + $0x178] sm:$0x3] %vm228, 0.0
      %275 = vst.msk [vmem:[#allocation2 + $0x180] sm:$0xff] %vm225, 0.0
      %276 = vst.msk [vmem:[#allocation2 + $0x188] sm:$0xff] %vm225, 0.0
      %277 = vst.msk [vmem:[#allocation2 + $0x190] sm:$0x3] %vm228, 0.0
      %278 = vst.msk [vmem:[#allocation2 + $0x198] sm:$0xff] %vm225, 0.0
      %279 = vst.msk [vmem:[#allocation2 + $0x1a0] sm:$0xff] %vm225, 0.0
      %280 = vst.msk [vmem:[#allocation2 + $0x1a8] sm:$0x3] %vm228, 0.0
      %281 = vst [vmem:[#allocation3] sm:$0xff] 0.0
      %282 = vst [vmem:[#allocation3 + $0x8] sm:$0xff] 0.0
      %283 = vst [vmem:[#allocation3 + $0x10] sm:$0x3] 0.0
      %284 = vst [vmem:[#allocation3 + $0x18] sm:$0xff] 0.0
      %285 = vst [vmem:[#allocation3 + $0x20] sm:$0xff] 0.0
      %286 = vst [vmem:[#allocation3 + $0x28] sm:$0x3] 0.0
      %287 = vst [vmem:[#allocation3 + $0x30] sm:$0xff] 0.0
      %288 = vst [vmem:[#allocation3 + $0x38] sm:$0xff] 0.0
      %289 = vst [vmem:[#allocation3 + $0x40] sm:$0x3] 0.0
      %290 = vst [vmem:[#allocation3 + $0x48] sm:$0xff] 0.0
      %291 = vst [vmem:[#allocation3 + $0x50] sm:$0xff] 0.0
      %292 = vst [vmem:[#allocation3 + $0x58] sm:$0x3] 0.0
      %293 = vst [vmem:[#allocation3 + $0x60] sm:$0xff] 0.0
      %294 = vst [vmem:[#allocation3 + $0x68] sm:$0xff] 0.0
      %295 = vst [vmem:[#allocation3 + $0x70] sm:$0x3] 0.0
      %296 = vst [vmem:[#allocation3 + $0x78] sm:$0xff] 0.0
      %297 = vst [vmem:[#allocation3 + $0x80] sm:$0xff] 0.0
      %298 = vst [vmem:[#allocation3 + $0x88] sm:$0x3] 0.0
      %299 = vst [vmem:[#allocation3 + $0x90] sm:$0xff] 0.0
      %300 = vst [vmem:[#allocation3 + $0x98] sm:$0xff] 0.0
      %301 = vst [vmem:[#allocation3 + $0xa0] sm:$0x3] 0.0
      %302 = vst [vmem:[#allocation3 + $0xa8] sm:$0xff] 0.0
      %303 = vst [vmem:[#allocation3 + $0xb0] sm:$0xff] 0.0
      %304 = vst [vmem:[#allocation3 + $0xb8] sm:$0x3] 0.0
      %305 = vst [vmem:[#allocation3 + $0xc0] sm:$0xff] 0.0
      %306 = vst [vmem:[#allocation3 + $0xc8] sm:$0xff] 0.0
      %307 = vst [vmem:[#allocation3 + $0xd0] sm:$0x3] 0.0
      %308 = vst [vmem:[#allocation3 + $0xd8] sm:$0xff] 0.0
      %309 = vst [vmem:[#allocation3 + $0xe0] sm:$0xff] 0.0
      %310 = vst [vmem:[#allocation3 + $0xe8] sm:$0x3] 0.0
      %311 = vst [vmem:[#allocation3 + $0xf0] sm:$0xff] 0.0
      %312 = vst [vmem:[#allocation3 + $0xf8] sm:$0xff] 0.0
      %313 = vst [vmem:[#allocation3 + $0x100] sm:$0x3] 0.0
      %314 = vst [vmem:[#allocation3 + $0x108] sm:$0xff] 0.0
      %315 = vst [vmem:[#allocation3 + $0x110] sm:$0xff] 0.0
      %316 = vst [vmem:[#allocation3 + $0x118] sm:$0x3] 0.0
      %317 = vst [vmem:[#allocation3 + $0x120] sm:$0xff] 0.0
      %318 = vst [vmem:[#allocation3 + $0x128] sm:$0xff] 0.0
      %319 = vst [vmem:[#allocation3 + $0x130] sm:$0x3] 0.0
      %320 = vst [vmem:[#allocation3 + $0x138] sm:$0xff] 0.0
      %321 = vst [vmem:[#allocation3 + $0x140] sm:$0xff] 0.0
      %322 = vst [vmem:[#allocation3 + $0x148] sm:$0x3] 0.0
      %323 = vst [vmem:[#allocation3 + $0x150] sm:$0xff] 0.0
      %324 = vst [vmem:[#allocation3 + $0x158] sm:$0xff] 0.0
      %325 = vst [vmem:[#allocation3 + $0x160] sm:$0x3] 0.0
      %326 = vst [vmem:[#allocation3 + $0x168] sm:$0xff] 0.0
      %327 = vst [vmem:[#allocation3 + $0x170] sm:$0xff] 0.0
      %328 = vst [vmem:[#allocation3 + $0x178] sm:$0x3] 0.0
      %329 = vst [vmem:[#allocation3 + $0x180] sm:$0xff] 0.0
      %330 = vst [vmem:[#allocation3 + $0x188] sm:$0xff] 0.0
      %331 = vst [vmem:[#allocation3 + $0x190] sm:$0x3] 0.0
      %332 = vst [vmem:[#allocation3 + $0x198] sm:$0xff] 0.0
      %333 = vst [vmem:[#allocation3 + $0x1a0] sm:$0xff] 0.0
      %334 = vst [vmem:[#allocation3 + $0x1a8] sm:$0x3] 0.0
      %v335 = vld [vmem:[%s219] sm:$0xff]
      %v336 = vld [vmem:[%s219 + $0x8] sm:$0xff]
      %v337 = vld [vmem:[%s219 + $0x10] sm:$0xff]
      %v338 = vld [vmem:[%s219 + $0x18] sm:$0xff]
      %v339 = vld [vmem:[%s219 + $0x20] sm:$0xff]
      %v340 = vld [vmem:[%s219 + $0x28] sm:$0xff]
      %v341 = vld [vmem:[%s219 + $0x30] sm:$0xff]
      %v342 = vld [vmem:[%s219 + $0x38] sm:$0xff]
      %v343 = vld [vmem:[%s219 + $0x40] sm:$0xff]
      %v344 = vld [vmem:[%s219 + $0x48] sm:$0xff]
      %v345 = vld [vmem:[%s219 + $0x50] sm:$0xff]
      %v346 = vld [vmem:[%s219 + $0x58] sm:$0xff]
      %v347 = vld [vmem:[%s219 + $0x60] sm:$0xff]
      %v348 = vld [vmem:[%s219 + $0x68] sm:$0xff]
      %v349 = vld [vmem:[%s219 + $0x70] sm:$0xff]
      %v350 = vld [vmem:[%s219 + $0x78] sm:$0xff]
      %v351 = vld [vmem:[%s219 + $0x80] sm:$0xff]
      %v352 = vld [vmem:[%s219 + $0x88] sm:$0xff]
      %v353 = vld [vmem:[%s219 + $0x90] sm:$0xff]
      %v354 = vld [vmem:[%s219 + $0x98] sm:$0xff]
      %v355 = vld [vmem:[%s219 + $0xa0] sm:$0xff]
      %v356 = vld [vmem:[%s219 + $0xa8] sm:$0xff]
      %v357 = vld [vmem:[%s219 + $0xb0] sm:$0xff]
      %v358 = vld [vmem:[%s219 + $0xb8] sm:$0xff]
      %v359 = vld [vmem:[%s219 + $0xc0] sm:$0xff]
      %v360 = vld [vmem:[%s219 + $0xc8] sm:$0xff]
      %v361 = vld [vmem:[%s219 + $0xd0] sm:$0xff]
      %v362 = vld [vmem:[%s219 + $0xd8] sm:$0xff]
      %v363 = vld [vmem:[%s219 + $0xe0] sm:$0xff]
      %v364 = vld [vmem:[%s219 + $0xe8] sm:$0xff]
      %v365 = vld [vmem:[%s219 + $0xf0] sm:$0xff]
      %v366 = vld [vmem:[%s219 + $0xf8] sm:$0xff]
      %s367 = scalar_lea.vmem [#allocation2], 24
      %368 = vst.msk [vmem:[%s367 + $0x1] sm:$0xff] %vm225, %v335
      %369 = vst.msk [vmem:[%s367 + $0x9] sm:$0xff] %vm225, %v336
      %370 = vst.msk [vmem:[%s367 + $0x19] sm:$0xff] %vm225, %v337
      %371 = vst.msk [vmem:[%s367 + $0x21] sm:$0xff] %vm225, %v338
      %372 = vst.msk [vmem:[%s367 + $0x31] sm:$0xff] %vm225, %v339
      %373 = vst.msk [vmem:[%s367 + $0x39] sm:$0xff] %vm225, %v340
      %374 = vst.msk [vmem:[%s367 + $0x49] sm:$0xff] %vm225, %v341
      %375 = vst.msk [vmem:[%s367 + $0x51] sm:$0xff] %vm225, %v342
      %376 = vst.msk [vmem:[%s367 + $0x61] sm:$0xff] %vm225, %v343
      %377 = vst.msk [vmem:[%s367 + $0x69] sm:$0xff] %vm225, %v344
      %378 = vst.msk [vmem:[%s367 + $0x79] sm:$0xff] %vm225, %v345
      %379 = vst.msk [vmem:[%s367 + $0x81] sm:$0xff] %vm225, %v346
      %380 = vst.msk [vmem:[%s367 + $0x91] sm:$0xff] %vm225, %v347
      %381 = vst.msk [vmem:[%s367 + $0x99] sm:$0xff] %vm225, %v348
      %382 = vst.msk [vmem:[%s367 + $0xa9] sm:$0xff] %vm225, %v349
      %383 = vst.msk [vmem:[%s367 + $0xb1] sm:$0xff] %vm225, %v350
      %384 = vst.msk [vmem:[%s367 + $0xc1] sm:$0xff] %vm225, %v351
      %385 = vst.msk [vmem:[%s367 + $0xc9] sm:$0xff] %vm225, %v352
      %386 = vst.msk [vmem:[%s367 + $0xd9] sm:$0xff] %vm225, %v353
      %387 = vst.msk [vmem:[%s367 + $0xe1] sm:$0xff] %vm225, %v354
      %388 = vst.msk [vmem:[%s367 + $0xf1] sm:$0xff] %vm225, %v355
      %389 = vst.msk [vmem:[%s367 + $0xf9] sm:$0xff] %vm225, %v356
      %390 = vst.msk [vmem:[%s367 + $0x109] sm:$0xff] %vm225, %v357
      %391 = vst.msk [vmem:[%s367 + $0x111] sm:$0xff] %vm225, %v358
      %392 = vst.msk [vmem:[%s367 + $0x121] sm:$0xff] %vm225, %v359
      %393 = vst.msk [vmem:[%s367 + $0x129] sm:$0xff] %vm225, %v360
      %394 = vst.msk [vmem:[%s367 + $0x139] sm:$0xff] %vm225, %v361
      %395 = vst.msk [vmem:[%s367 + $0x141] sm:$0xff] %vm225, %v362
      %396 = vst.msk [vmem:[%s367 + $0x151] sm:$0xff] %vm225, %v363
      %397 = vst.msk [vmem:[%s367 + $0x159] sm:$0xff] %vm225, %v364
      %398 = vst.msk [vmem:[%s367 + $0x169] sm:$0xff] %vm225, %v365
      %399 = vst.msk [vmem:[%s367 + $0x171] sm:$0xff] %vm225, %v366
      %v400 = vld [vmem:[#allocation2] sm:$0xff]
      %v401 = vld [vmem:[#allocation2 + $0x8] sm:$0xff]
      %v402 = vld [vmem:[#allocation2 + $0x18] sm:$0xff]
      %v403 = vld [vmem:[#allocation2 + $0x20] sm:$0xff]
      %v404 = vld [vmem:[#allocation2 + $0x30] sm:$0xff]
      %v405 = vld [vmem:[#allocation2 + $0x38] sm:$0xff]
      %v406 = vld [vmem:[#allocation2 + $0x48] sm:$0xff]
      %v407 = vld [vmem:[#allocation2 + $0x50] sm:$0xff]
      %v408 = vld [vmem:[#allocation2 + $0x60] sm:$0xff]
      %v409 = vld [vmem:[#allocation2 + $0x68] sm:$0xff]
      %v410 = vld [vmem:[#allocation2 + $0x78] sm:$0xff]
      %v411 = vld [vmem:[#allocation2 + $0x80] sm:$0xff]
      %v412 = vld [vmem:[#allocation2 + $0x90] sm:$0xff]
      %v413 = vld [vmem:[#allocation2 + $0x98] sm:$0xff]
      %v414 = vld [vmem:[#allocation2 + $0xa8] sm:$0xff]
      %v415 = vld [vmem:[#allocation2 + $0xb0] sm:$0xff]
      %v416 = vld [vmem:[#allocation2 + $0xc0] sm:$0xff]
      %v417 = vld [vmem:[#allocation2 + $0xc8] sm:$0xff]
      %v418 = vld [vmem:[#allocation2 + $0xd8] sm:$0xff]
      %v419 = vld [vmem:[#allocation2 + $0xe0] sm:$0xff]
      %v420 = vld [vmem:[#allocation2 + $0xf0] sm:$0xff]
      %v421 = vld [vmem:[#allocation2 + $0xf8] sm:$0xff]
      %v422 = vld [vmem:[#allocation2 + $0x108] sm:$0xff]
      %v423 = vld [vmem:[#allocation2 + $0x110] sm:$0xff]
      %v424 = vld [vmem:[#allocation2 + $0x120] sm:$0xff]
      %v425 = vld [vmem:[#allocation2 + $0x128] sm:$0xff]
      %v426 = vld [vmem:[#allocation2 + $0x138] sm:$0xff]
      %v427 = vld [vmem:[#allocation2 + $0x140] sm:$0xff]
      %v428 = vld [vmem:[#allocation2 + $0x150] sm:$0xff]
      %v429 = vld [vmem:[#allocation2 + $0x158] sm:$0xff]
      %v430 = vld [vmem:[#allocation2 + $0x168] sm:$0xff]
      %v431 = vld [vmem:[#allocation2 + $0x170] sm:$0xff]
      %v432 = vld [vmem:[%s1] sm:$0xf]
      %v433 = vld [vmem:[#allocation2 + $0x1] sm:$0xff]
      %v434 = vld [vmem:[#allocation2 + $0x9] sm:$0xff]
      %v435 = vld [vmem:[#allocation2 + $0x19] sm:$0xff]
      %v436 = vld [vmem:[#allocation2 + $0x21] sm:$0xff]
      %v437 = vld [vmem:[#allocation2 + $0x31] sm:$0xff]
      %v438 = vld [vmem:[#allocation2 + $0x39] sm:$0xff]
      %v439 = vld [vmem:[#allocation2 + $0x49] sm:$0xff]
      %v440 = vld [vmem:[#allocation2 + $0x51] sm:$0xff]
      %v441 = vld [vmem:[#allocation2 + $0x61] sm:$0xff]
      %v442 = vld [vmem:[#allocation2 + $0x69] sm:$0xff]
      %v443 = vld [vmem:[#allocation2 + $0x79] sm:$0xff]
      %v444 = vld [vmem:[#allocation2 + $0x81] sm:$0xff]
      %v445 = vld [vmem:[#allocation2 + $0x91] sm:$0xff]
      %v446 = vld [vmem:[#allocation2 + $0x99] sm:$0xff]
      %v447 = vld [vmem:[#allocation2 + $0xa9] sm:$0xff]
      %v448 = vld [vmem:[#allocation2 + $0xb1] sm:$0xff]
      %v449 = vld [vmem:[#allocation2 + $0xc1] sm:$0xff]
      %v450 = vld [vmem:[#allocation2 + $0xc9] sm:$0xff]
      %v451 = vld [vmem:[#allocation2 + $0xd9] sm:$0xff]
      %v452 = vld [vmem:[#allocation2 + $0xe1] sm:$0xff]
      %v453 = vld [vmem:[#allocation2 + $0xf1] sm:$0xff]
      %v454 = vld [vmem:[#allocation2 + $0xf9] sm:$0xff]
      %v455 = vld [vmem:[#allocation2 + $0x109] sm:$0xff]
      %v456 = vld [vmem:[#allocation2 + $0x111] sm:$0xff]
      %v457 = vld [vmem:[#allocation2 + $0x121] sm:$0xff]
      %v458 = vld [vmem:[#allocation2 + $0x129] sm:$0xff]
      %v459 = vld [vmem:[#allocation2 + $0x139] sm:$0xff]
      %v460 = vld [vmem:[#allocation2 + $0x141] sm:$0xff]
      %v461 = vld [vmem:[#allocation2 + $0x151] sm:$0xff]
      %v462 = vld [vmem:[#allocation2 + $0x159] sm:$0xff]
      %v463 = vld [vmem:[#allocation2 + $0x169] sm:$0xff]
      %v464 = vld [vmem:[#allocation2 + $0x171] sm:$0xff]
      %s465 = scalar_lea.vmem %s1, 4
      %v466 = vld [vmem:[%s465] sm:$0xf]
      %v468 = vsel %vm225, %v433, 0
      %v471 = vsel %vm225, %v434, 0
      %v474 = vsel %vm225, %v435, 0
      %v477 = vsel %vm225, %v436, 0
      %v480 = vsel %vm225, %v437, 0
      %v483 = vsel %vm225, %v438, 0
      %v486 = vsel %vm225, %v439, 0
      %v489 = vsel %vm225, %v440, 0
      %v492 = vsel %vm225, %v441, 0
      %v495 = vsel %vm225, %v442, 0
      %v498 = vsel %vm225, %v443, 0
      %v501 = vsel %vm225, %v444, 0
      %v504 = vsel %vm225, %v445, 0
      %v507 = vsel %vm225, %v446, 0
      %v510 = vsel %vm225, %v447, 0
      %v513 = vsel %vm225, %v448, 0
      %v516 = vsel %vm225, %v449, 0
      %v519 = vsel %vm225, %v450, 0
      %v522 = vsel %vm225, %v451, 0
      %v525 = vsel %vm225, %v452, 0
      %v528 = vsel %vm225, %v453, 0
      %v531 = vsel %vm225, %v454, 0
      %v534 = vsel %vm225, %v455, 0
      %v537 = vsel %vm225, %v456, 0
      %v540 = vsel %vm225, %v457, 0
      %v543 = vsel %vm225, %v458, 0
      %v546 = vsel %vm225, %v459, 0
      %v549 = vsel %vm225, %v460, 0
      %v552 = vsel %vm225, %v461, 0
      %v555 = vsel %vm225, %v462, 0
      %v558 = vsel %vm225, %v463, 0
      %v561 = vsel %vm225, %v464, 0
      %vm563 = vcmask 1043456
      %v565 = vsel %vm563, %v466, 0
      %567 = vmatprep.subr.mxu0 0.0
      %568 = vmatpush1.msra.mxu0 %v565
      %569 = vmatprep.subr.mxu0 0.0
      %570 = vmatpush1.msra.mxu0 0.0
      %571 = vmatprep.subr.mxu0 0.0
      %572 = vmatpush1.msra.mxu0 0.0
      %573 = vmatprep.subr.mxu0 0.0
      %574 = vmatpush1.msra.mxu0 0.0
      %575 = vmatprep.subr.mxu0 0.0
      %576 = vmatpush1.msra.mxu0 0.0
      %577 = vmatprep.subr.mxu0 0.0
      %578 = vmatpush1.msra.mxu0 0.0
      %579 = vmatprep.subr.mxu0 0.0
      %580 = vmatpush1.msra.mxu0 0.0
      %581 = vmatprep.subr.mxu0 0.0
      %582 = vmatpush1.msra.mxu0 0.0
      %583 = vmatprep.subr.mxu0 0.0
      %584 = vmatpush1.msra.mxu0 0.0
      %585 = vmatprep.subr.mxu0 0.0
      %586 = vmatpush1.msra.mxu0 0.0
      %587 = vmatprep.subr.mxu0 0.0
      %588 = vmatpush1.msra.mxu0 0.0
      %589 = vmatprep.subr.mxu0 0.0
      %590 = vmatpush1.msra.mxu0 0.0
      %591 = vmatprep.subr.mxu0 0.0
      %592 = vmatpush1.msra.mxu0 0.0
      %593 = vmatprep.subr.mxu0 0.0
      %594 = vmatpush1.msra.mxu0 0.0
      %595 = vmatprep.subr.mxu0 0.0
      %596 = vmatpush1.msra.mxu0 0.0
      %597 = vmatprep.subr.mxu0 0.0
      %598 = vmatpush1.msra.mxu0 0.0
      %599 = vmatprep.subr.mxu0 0.0
      %600 = vmatpush1.msra.mxu0 0.0
      %601 = vmatprep.subr.mxu0 0.0
      %602 = vmatpush1.msra.mxu0 0.0
      %603 = vmatprep.subr.mxu0 0.0
      %604 = vmatpush1.msra.mxu0 0.0
      %605 = vmatprep.subr.mxu0 0.0
      %606 = vmatpush1.msra.mxu0 0.0
      %607 = vmatprep.subr.mxu0 0.0
      %608 = vmatpush1.msra.mxu0 0.0
      %609 = vmatprep.subr.mxu0 0.0
      %610 = vmatpush1.msra.mxu0 0.0
      %611 = vmatprep.subr.mxu0 0.0
      %612 = vmatpush1.msra.mxu0 0.0
      %613 = vmatprep.subr.mxu0 0.0
      %614 = vmatpush1.msra.mxu0 0.0
      %615 = vmatprep.subr.mxu0 0.0
      %616 = vmatpush1.msra.mxu0 0.0
      %617 = vmatprep.subr.mxu0 0.0
      %618 = vmatpush1.msra.mxu0 0.0
      %619 = vmatprep.subr.mxu0 0.0
      %620 = vmatpush1.msra.mxu0 0.0
      %621 = vmatprep.subr.mxu0 0.0
      %622 = vmatpush1.msra.mxu0 0.0
      %623 = vmatprep.subr.mxu0 0.0
      %624 = vmatpush1.msra.mxu0 0.0
      %625 = vmatprep.subr.mxu0 0.0
      %626 = vmatpush1.msra.mxu0 0.0
      %627 = vmatprep.subr.mxu0 0.0
      %628 = vmatpush1.msra.mxu0 0.0
      %629 = vmatprep.subr.mxu0 0.0
      %630 = vmatpush1.msra.mxu0 0.0
      %631 = vmatprep.mubr.f32.mxu0 0.0
      %632 = vmatmul.mubr.f32.gmra.mrb[0].mxu0 %v468
      %v633 = vpop.f32.mrb[0].mxu0
      %v634 = vadd.f32 0.0, %v633
      %v635 = vpop.f32.mrb[0].mxu0
      %636 = vmatprep.mubr.f32.mxu0 0.0
      %637 = vmatmul.mubr.f32.gmra.mrb[0].mxu0 %v471
      %v638 = vpop.f32.mrb[0].mxu0
      %v639 = vadd.f32 0.0, %v638
      %v640 = vpop.f32.mrb[0].mxu0
      %641 = vmatprep.mubr.f32.mxu0 0.0
      %642 = vmatmul.mubr.f32.gmra.mrb[0].mxu0 %v474
      %v643 = vpop.f32.mrb[0].mxu0
      %v644 = vadd.f32 0.0, %v643
      %v645 = vpop.f32.mrb[0].mxu0
      %646 = vmatprep.mubr.f32.mxu0 0.0
      %647 = vmatmul.mubr.f32.gmra.mrb[0].mxu0 %v477
      %v648 = vpop.f32.mrb[0].mxu0
      %v649 = vadd.f32 0.0, %v648
      %v650 = vpop.f32.mrb[0].mxu0
      %651 = vmatprep.mubr.f32.mxu0 0.0
      %652 = vmatmul.mubr.f32.gmra.mrb[0].mxu0 %v480
      %v653 = vpop.f32.mrb[0].mxu0
      %v654 = vadd.f32 0.0, %v653
      %v655 = vpop.f32.mrb[0].mxu0
      %656 = vmatprep.mubr.f32.mxu0 0.0
      %657 = vmatmul.mubr.f32.gmra.mrb[0].mxu0 %v483
      %v658 = vpop.f32.mrb[0].mxu0
      %v659 = vadd.f32 0.0, %v658
      %v660 = vpop.f32.mrb[0].mxu0
      %661 = vmatprep.mubr.f32.mxu0 0.0
      %662 = vmatmul.mubr.f32.gmra.mrb[0].mxu0 %v486
      %v663 = vpop.f32.mrb[0].mxu0
      %v664 = vadd.f32 0.0, %v663
      %v665 = vpop.f32.mrb[0].mxu0
      %666 = vmatprep.mubr.f32.mxu0 0.0
      %667 = vmatmul.mubr.f32.gmra.mrb[0].mxu0 %v489
      %v668 = vpop.f32.mrb[0].mxu0
      %v669 = vadd.f32 0.0, %v668
      %v670 = vpop.f32.mrb[0].mxu0
      %671 = vmatprep.mubr.f32.mxu0 0.0
      %672 = vmatmul.mubr.f32.gmra.mrb[0].mxu0 %v492
      %v673 = vpop.f32.mrb[0].mxu0
      %v674 = vadd.f32 0.0, %v673
      %v675 = vpop.f32.mrb[0].mxu0
      %676 = vmatprep.mubr.f32.mxu0 0.0
      %677 = vmatmul.mubr.f32.gmra.mrb[0].mxu0 %v495
      %v678 = vpop.f32.mrb[0].mxu0
      %v679 = vadd.f32 0.0, %v678
      %v680 = vpop.f32.mrb[0].mxu0
      %681 = vmatprep.mubr.f32.mxu0 0.0
      %682 = vmatmul.mubr.f32.gmra.mrb[0].mxu0 %v498
      %v683 = vpop.f32.mrb[0].mxu0
      %v684 = vadd.f32 0.0, %v683
      %v685 = vpop.f32.mrb[0].mxu0
      %686 = vmatprep.mubr.f32.mxu0 0.0
      %687 = vmatmul.mubr.f32.gmra.mrb[0].mxu0 %v501
      %v688 = vpop.f32.mrb[0].mxu0
      %v689 = vadd.f32 0.0, %v688
      %v690 = vpop.f32.mrb[0].mxu0
      %691 = vmatprep.mubr.f32.mxu0 0.0
      %692 = vmatmul.mubr.f32.gmra.mrb[0].mxu0 %v504
      %v693 = vpop.f32.mrb[0].mxu0
      %v694 = vadd.f32 0.0, %v693
      %v695 = vpop.f32.mrb[0].mxu0
      %696 = vmatprep.mubr.f32.mxu0 0.0
      %697 = vmatmul.mubr.f32.gmra.mrb[0].mxu0 %v507
      %v698 = vpop.f32.mrb[0].mxu0
      %v699 = vadd.f32 0.0, %v698
      %v700 = vpop.f32.mrb[0].mxu0
      %701 = vmatprep.mubr.f32.mxu0 0.0
      %702 = vmatmul.mubr.f32.gmra.mrb[0].mxu0 %v510
      %v703 = vpop.f32.mrb[0].mxu0
      %v704 = vadd.f32 0.0, %v703
      %v705 = vpop.f32.mrb[0].mxu0
      %706 = vmatprep.mubr.f32.mxu0 0.0
      %707 = vmatmul.mubr.f32.gmra.mrb[0].mxu0 %v513
      %v708 = vpop.f32.mrb[0].mxu0
      %v709 = vadd.f32 0.0, %v708
      %v710 = vpop.f32.mrb[0].mxu0
      %711 = vmatprep.mubr.f32.mxu0 0.0
      %712 = vmatmul.mubr.f32.gmra.mrb[0].mxu0 %v516
      %v713 = vpop.f32.mrb[0].mxu0
      %v714 = vadd.f32 0.0, %v713
      %v715 = vpop.f32.mrb[0].mxu0
      %716 = vmatprep.mubr.f32.mxu0 0.0
      %717 = vmatmul.mubr.f32.gmra.mrb[0].mxu0 %v519
      %v718 = vpop.f32.mrb[0].mxu0
      %v719 = vadd.f32 0.0, %v718
      %v720 = vpop.f32.mrb[0].mxu0
      %721 = vmatprep.mubr.f32.mxu0 0.0
      %722 = vmatmul.mubr.f32.gmra.mrb[0].mxu0 %v522
      %v723 = vpop.f32.mrb[0].mxu0
      %v724 = vadd.f32 0.0, %v723
      %v725 = vpop.f32.mrb[0].mxu0
      %726 = vmatprep.mubr.f32.mxu0 0.0
      %727 = vmatmul.mubr.f32.gmra.mrb[0].mxu0 %v525
      %v728 = vpop.f32.mrb[0].mxu0
      %v729 = vadd.f32 0.0, %v728
      %v730 = vpop.f32.mrb[0].mxu0
      %731 = vmatprep.mubr.f32.mxu0 0.0
      %732 = vmatmul.mubr.f32.gmra.mrb[0].mxu0 %v528
      %v733 = vpop.f32.mrb[0].mxu0
      %v734 = vadd.f32 0.0, %v733
      %v735 = vpop.f32.mrb[0].mxu0
      %736 = vmatprep.mubr.f32.mxu0 0.0
      %737 = vmatmul.mubr.f32.gmra.mrb[0].mxu0 %v531
      %v738 = vpop.f32.mrb[0].mxu0
      %v739 = vadd.f32 0.0, %v738
      %v740 = vpop.f32.mrb[0].mxu0
      %741 = vmatprep.mubr.f32.mxu0 0.0
      %742 = vmatmul.mubr.f32.gmra.mrb[0].mxu0 %v534
      %v743 = vpop.f32.mrb[0].mxu0
      %v744 = vadd.f32 0.0, %v743
      %v745 = vpop.f32.mrb[0].mxu0
      %746 = vmatprep.mubr.f32.mxu0 0.0
      %747 = vmatmul.mubr.f32.gmra.mrb[0].mxu0 %v537
      %v748 = vpop.f32.mrb[0].mxu0
      %v749 = vadd.f32 0.0, %v748
      %v750 = vpop.f32.mrb[0].mxu0
      %751 = vmatprep.mubr.f32.mxu0 0.0
      %752 = vmatmul.mubr.f32.gmra.mrb[0].mxu0 %v540
      %v753 = vpop.f32.mrb[0].mxu0
      %v754 = vadd.f32 0.0, %v753
      %v755 = vpop.f32.mrb[0].mxu0
      %756 = vmatprep.mubr.f32.mxu0 0.0
      %757 = vmatmul.mubr.f32.gmra.mrb[0].mxu0 %v543
      %v758 = vpop.f32.mrb[0].mxu0
      %v759 = vadd.f32 0.0, %v758
      %v760 = vpop.f32.mrb[0].mxu0
      %761 = vmatprep.mubr.f32.mxu0 0.0
      %762 = vmatmul.mubr.f32.gmra.mrb[0].mxu0 %v546
      %v763 = vpop.f32.mrb[0].mxu0
      %v764 = vadd.f32 0.0, %v763
      %v765 = vpop.f32.mrb[0].mxu0
      %766 = vmatprep.mubr.f32.mxu0 0.0
      %767 = vmatmul.mubr.f32.gmra.mrb[0].mxu0 %v549
      %v768 = vpop.f32.mrb[0].mxu0
      %v769 = vadd.f32 0.0, %v768
      %v770 = vpop.f32.mrb[0].mxu0
      %771 = vmatprep.mubr.f32.mxu0 0.0
      %772 = vmatmul.mubr.f32.gmra.mrb[0].mxu0 %v552
      %v773 = vpop.f32.mrb[0].mxu0
      %v774 = vadd.f32 0.0, %v773
      %v775 = vpop.f32.mrb[0].mxu0
      %776 = vmatprep.mubr.f32.mxu0 0.0
      %777 = vmatmul.mubr.f32.gmra.mrb[0].mxu0 %v555
      %v778 = vpop.f32.mrb[0].mxu0
      %v779 = vadd.f32 0.0, %v778
      %v780 = vpop.f32.mrb[0].mxu0
      %781 = vmatprep.mubr.f32.mxu0 0.0
      %782 = vmatmul.mubr.f32.gmra.mrb[0].mxu0 %v558
      %v783 = vpop.f32.mrb[0].mxu0
      %v784 = vadd.f32 0.0, %v783
      %v785 = vpop.f32.mrb[0].mxu0
      %786 = vmatprep.mubr.f32.mxu0 0.0
      %787 = vmatmul.mubr.f32.gmra.mrb[0].mxu0 %v561
      %v788 = vpop.f32.mrb[0].mxu0
      %v789 = vadd.f32 0.0, %v788
      %v790 = vpop.f32.mrb[0].mxu0
      %791 = vdwg.mxu0
      %v793 = vsel %vm225, %v400, 0
      %v796 = vsel %vm225, %v401, 0
      %v799 = vsel %vm225, %v402, 0
      %v802 = vsel %vm225, %v403, 0
      %v805 = vsel %vm225, %v404, 0
      %v808 = vsel %vm225, %v405, 0
      %v811 = vsel %vm225, %v406, 0
      %v814 = vsel %vm225, %v407, 0
      %v817 = vsel %vm225, %v408, 0
      %v820 = vsel %vm225, %v409, 0
      %v823 = vsel %vm225, %v410, 0
      %v826 = vsel %vm225, %v411, 0
      %v829 = vsel %vm225, %v412, 0
      %v832 = vsel %vm225, %v413, 0
      %v835 = vsel %vm225, %v414, 0
      %v838 = vsel %vm225, %v415, 0
      %v841 = vsel %vm225, %v416, 0
      %v844 = vsel %vm225, %v417, 0
      %v847 = vsel %vm225, %v418, 0
      %v850 = vsel %vm225, %v419, 0
      %v853 = vsel %vm225, %v420, 0
      %v856 = vsel %vm225, %v421, 0
      %v859 = vsel %vm225, %v422, 0
      %v862 = vsel %vm225, %v423, 0
      %v865 = vsel %vm225, %v424, 0
      %v868 = vsel %vm225, %v425, 0
      %v871 = vsel %vm225, %v426, 0
      %v874 = vsel %vm225, %v427, 0
      %v877 = vsel %vm225, %v428, 0
      %v880 = vsel %vm225, %v429, 0
      %v883 = vsel %vm225, %v430, 0
      %v886 = vsel %vm225, %v431, 0
      %v889 = vsel %vm563, %v432, 0
      %891 = vmatprep.subr.mxu0 0.0
      %892 = vmatpush1.msra.mxu0 %v889
      %893 = vmatprep.subr.mxu0 0.0
      %894 = vmatpush1.msra.mxu0 0.0
      %895 = vmatprep.subr.mxu0 0.0
      %896 = vmatpush1.msra.mxu0 0.0
      %897 = vmatprep.subr.mxu0 0.0
      %898 = vmatpush1.msra.mxu0 0.0
      %899 = vmatprep.subr.mxu0 0.0
      %900 = vmatpush1.msra.mxu0 0.0
      %901 = vmatprep.subr.mxu0 0.0
      %902 = vmatpush1.msra.mxu0 0.0
      %903 = vmatprep.subr.mxu0 0.0
      %904 = vmatpush1.msra.mxu0 0.0
      %905 = vmatprep.subr.mxu0 0.0
      %906 = vmatpush1.msra.mxu0 0.0
      %907 = vmatprep.subr.mxu0 0.0
      %908 = vmatpush1.msra.mxu0 0.0
      %909 = vmatprep.subr.mxu0 0.0
      %910 = vmatpush1.msra.mxu0 0.0
      %911 = vmatprep.subr.mxu0 0.0
      %912 = vmatpush1.msra.mxu0 0.0
      %913 = vmatprep.subr.mxu0 0.0
      %914 = vmatpush1.msra.mxu0 0.0
      %915 = vmatprep.subr.mxu0 0.0
      %916 = vmatpush1.msra.mxu0 0.0
      %917 = vmatprep.subr.mxu0 0.0
      %918 = vmatpush1.msra.mxu0 0.0
      %919 = vmatprep.subr.mxu0 0.0
      %920 = vmatpush1.msra.mxu0 0.0
      %921 = vmatprep.subr.mxu0 0.0
      %922 = vmatpush1.msra.mxu0 0.0
      %923 = vmatprep.subr.mxu0 0.0
      %924 = vmatpush1.msra.mxu0 0.0
      %925 = vmatprep.subr.mxu0 0.0
      %926 = vmatpush1.msra.mxu0 0.0
      %927 = vmatprep.subr.mxu0 0.0
      %928 = vmatpush1.msra.mxu0 0.0
      %929 = vmatprep.subr.mxu0 0.0
      %930 = vmatpush1.msra.mxu0 0.0
      %931 = vmatprep.subr.mxu0 0.0
      %932 = vmatpush1.msra.mxu0 0.0
      %933 = vmatprep.subr.mxu0 0.0
      %934 = vmatpush1.msra.mxu0 0.0
      %935 = vmatprep.subr.mxu0 0.0
      %936 = vmatpush1.msra.mxu0 0.0
      %937 = vmatprep.subr.mxu0 0.0
      %938 = vmatpush1.msra.mxu0 0.0
      %939 = vmatprep.subr.mxu0 0.0
      %940 = vmatpush1.msra.mxu0 0.0
      %941 = vmatprep.subr.mxu0 0.0
      %942 = vmatpush1.msra.mxu0 0.0
      %943 = vmatprep.subr.mxu0 0.0
      %944 = vmatpush1.msra.mxu0 0.0
      %945 = vmatprep.subr.mxu0 0.0
      %946 = vmatpush1.msra.mxu0 0.0
      %947 = vmatprep.subr.mxu0 0.0
      %948 = vmatpush1.msra.mxu0 0.0
      %949 = vmatprep.subr.mxu0 0.0
      %950 = vmatpush1.msra.mxu0 0.0
      %951 = vmatprep.subr.mxu0 0.0
      %952 = vmatpush1.msra.mxu0 0.0
      %953 = vmatprep.subr.mxu0 0.0
      %954 = vmatpush1.msra.mxu0 0.0
      %955 = vmatprep.mubr.f32.mxu0 0.0
      %956 = vmatmul.mubr.f32.gmra.mrb[0].mxu0 %v793
      %v957 = vpop.f32.mrb[0].mxu0
      %v958 = vadd.f32 %v634, %v957
      %v959 = vpop.f32.mrb[0].mxu0
      %960 = vmatprep.mubr.f32.mxu0 0.0
      %961 = vmatmul.mubr.f32.gmra.mrb[0].mxu0 %v796
      %v962 = vpop.f32.mrb[0].mxu0
      %v963 = vadd.f32 %v639, %v962
      %v964 = vpop.f32.mrb[0].mxu0
      %965 = vmatprep.mubr.f32.mxu0 0.0
      %966 = vmatmul.mubr.f32.gmra.mrb[0].mxu0 %v799
      %v967 = vpop.f32.mrb[0].mxu0
      %v968 = vadd.f32 %v644, %v967
      %v969 = vpop.f32.mrb[0].mxu0
      %970 = vmatprep.mubr.f32.mxu0 0.0
      %971 = vmatmul.mubr.f32.gmra.mrb[0].mxu0 %v802
      %v972 = vpop.f32.mrb[0].mxu0
      %v973 = vadd.f32 %v649, %v972
      %v974 = vpop.f32.mrb[0].mxu0
      %975 = vmatprep.mubr.f32.mxu0 0.0
      %976 = vmatmul.mubr.f32.gmra.mrb[0].mxu0 %v805
      %v977 = vpop.f32.mrb[0].mxu0
      %v978 = vadd.f32 %v654, %v977
      %v979 = vpop.f32.mrb[0].mxu0
      %980 = vmatprep.mubr.f32.mxu0 0.0
      %981 = vmatmul.mubr.f32.gmra.mrb[0].mxu0 %v808
      %v982 = vpop.f32.mrb[0].mxu0
      %v983 = vadd.f32 %v659, %v982
      %v984 = vpop.f32.mrb[0].mxu0
      %985 = vmatprep.mubr.f32.mxu0 0.0
      %986 = vmatmul.mubr.f32.gmra.mrb[0].mxu0 %v811
      %v987 = vpop.f32.mrb[0].mxu0
      %v988 = vadd.f32 %v664, %v987
      %v989 = vpop.f32.mrb[0].mxu0
      %990 = vmatprep.mubr.f32.mxu0 0.0
      %991 = vmatmul.mubr.f32.gmra.mrb[0].mxu0 %v814
      %v992 = vpop.f32.mrb[0].mxu0
      %v993 = vadd.f32 %v669, %v992
      %v994 = vpop.f32.mrb[0].mxu0
      %995 = vmatprep.mubr.f32.mxu0 0.0
      %996 = vmatmul.mubr.f32.gmra.mrb[0].mxu0 %v817
      %v997 = vpop.f32.mrb[0].mxu0
      %v998 = vadd.f32 %v674, %v997
      %v999 = vpop.f32.mrb[0].mxu0
      %1000 = vmatprep.mubr.f32.mxu0 0.0
      %1001 = vmatmul.mubr.f32.gmra.mrb[0].mxu0 %v820
      %v1002 = vpop.f32.mrb[0].mxu0
      %v1003 = vadd.f32 %v679, %v1002
      %v1004 = vpop.f32.mrb[0].mxu0
      %1005 = vmatprep.mubr.f32.mxu0 0.0
      %1006 = vmatmul.mubr.f32.gmra.mrb[0].mxu0 %v823
      %v1007 = vpop.f32.mrb[0].mxu0
      %v1008 = vadd.f32 %v684, %v1007
      %v1009 = vpop.f32.mrb[0].mxu0
      %1010 = vmatprep.mubr.f32.mxu0 0.0
      %1011 = vmatmul.mubr.f32.gmra.mrb[0].mxu0 %v826
      %v1012 = vpop.f32.mrb[0].mxu0
      %v1013 = vadd.f32 %v689, %v1012
      %v1014 = vpop.f32.mrb[0].mxu0
      %1015 = vmatprep.mubr.f32.mxu0 0.0
      %1016 = vmatmul.mubr.f32.gmra.mrb[0].mxu0 %v829
      %v1017 = vpop.f32.mrb[0].mxu0
      %v1018 = vadd.f32 %v694, %v1017
      %v1019 = vpop.f32.mrb[0].mxu0
      %1020 = vmatprep.mubr.f32.mxu0 0.0
      %1021 = vmatmul.mubr.f32.gmra.mrb[0].mxu0 %v832
      %v1022 = vpop.f32.mrb[0].mxu0
      %v1023 = vadd.f32 %v699, %v1022
      %v1024 = vpop.f32.mrb[0].mxu0
      %1025 = vmatprep.mubr.f32.mxu0 0.0
      %1026 = vmatmul.mubr.f32.gmra.mrb[0].mxu0 %v835
      %v1027 = vpop.f32.mrb[0].mxu0
      %v1028 = vadd.f32 %v704, %v1027
      %v1029 = vpop.f32.mrb[0].mxu0
      %1030 = vmatprep.mubr.f32.mxu0 0.0
      %1031 = vmatmul.mubr.f32.gmra.mrb[0].mxu0 %v838
      %v1032 = vpop.f32.mrb[0].mxu0
      %v1033 = vadd.f32 %v709, %v1032
      %v1034 = vpop.f32.mrb[0].mxu0
      %1035 = vmatprep.mubr.f32.mxu0 0.0
      %1036 = vmatmul.mubr.f32.gmra.mrb[0].mxu0 %v841
      %v1037 = vpop.f32.mrb[0].mxu0
      %v1038 = vadd.f32 %v714, %v1037
      %v1039 = vpop.f32.mrb[0].mxu0
      %1040 = vmatprep.mubr.f32.mxu0 0.0
      %1041 = vmatmul.mubr.f32.gmra.mrb[0].mxu0 %v844
      %v1042 = vpop.f32.mrb[0].mxu0
      %v1043 = vadd.f32 %v719, %v1042
      %v1044 = vpop.f32.mrb[0].mxu0
      %1045 = vmatprep.mubr.f32.mxu0 0.0
      %1046 = vmatmul.mubr.f32.gmra.mrb[0].mxu0 %v847
      %v1047 = vpop.f32.mrb[0].mxu0
      %v1048 = vadd.f32 %v724, %v1047
      %v1049 = vpop.f32.mrb[0].mxu0
      %1050 = vmatprep.mubr.f32.mxu0 0.0
      %1051 = vmatmul.mubr.f32.gmra.mrb[0].mxu0 %v850
      %v1052 = vpop.f32.mrb[0].mxu0
      %v1053 = vadd.f32 %v729, %v1052
      %v1054 = vpop.f32.mrb[0].mxu0
      %1055 = vmatprep.mubr.f32.mxu0 0.0
      %1056 = vmatmul.mubr.f32.gmra.mrb[0].mxu0 %v853
      %v1057 = vpop.f32.mrb[0].mxu0
      %v1058 = vadd.f32 %v734, %v1057
      %v1059 = vpop.f32.mrb[0].mxu0
      %1060 = vmatprep.mubr.f32.mxu0 0.0
      %1061 = vmatmul.mubr.f32.gmra.mrb[0].mxu0 %v856
      %v1062 = vpop.f32.mrb[0].mxu0
      %v1063 = vadd.f32 %v739, %v1062
      %v1064 = vpop.f32.mrb[0].mxu0
      %1065 = vmatprep.mubr.f32.mxu0 0.0
      %1066 = vmatmul.mubr.f32.gmra.mrb[0].mxu0 %v859
      %v1067 = vpop.f32.mrb[0].mxu0
      %v1068 = vadd.f32 %v744, %v1067
      %v1069 = vpop.f32.mrb[0].mxu0
      %1070 = vmatprep.mubr.f32.mxu0 0.0
      %1071 = vmatmul.mubr.f32.gmra.mrb[0].mxu0 %v862
      %v1072 = vpop.f32.mrb[0].mxu0
      %v1073 = vadd.f32 %v749, %v1072
      %v1074 = vpop.f32.mrb[0].mxu0
      %1075 = vmatprep.mubr.f32.mxu0 0.0
      %1076 = vmatmul.mubr.f32.gmra.mrb[0].mxu0 %v865
      %v1077 = vpop.f32.mrb[0].mxu0
      %v1078 = vadd.f32 %v754, %v1077
      %v1079 = vpop.f32.mrb[0].mxu0
      %1080 = vmatprep.mubr.f32.mxu0 0.0
      %1081 = vmatmul.mubr.f32.gmra.mrb[0].mxu0 %v868
      %v1082 = vpop.f32.mrb[0].mxu0
      %v1083 = vadd.f32 %v759, %v1082
      %v1084 = vpop.f32.mrb[0].mxu0
      %1085 = vmatprep.mubr.f32.mxu0 0.0
      %1086 = vmatmul.mubr.f32.gmra.mrb[0].mxu0 %v871
      %v1087 = vpop.f32.mrb[0].mxu0
      %v1088 = vadd.f32 %v764, %v1087
      %v1089 = vpop.f32.mrb[0].mxu0
      %1090 = vmatprep.mubr.f32.mxu0 0.0
      %1091 = vmatmul.mubr.f32.gmra.mrb[0].mxu0 %v874
      %v1092 = vpop.f32.mrb[0].mxu0
      %v1093 = vadd.f32 %v769, %v1092
      %v1094 = vpop.f32.mrb[0].mxu0
      %1095 = vmatprep.mubr.f32.mxu0 0.0
      %1096 = vmatmul.mubr.f32.gmra.mrb[0].mxu0 %v877
      %v1097 = vpop.f32.mrb[0].mxu0
      %v1098 = vadd.f32 %v774, %v1097
      %v1099 = vpop.f32.mrb[0].mxu0
      %1100 = vmatprep.mubr.f32.mxu0 0.0
      %1101 = vmatmul.mubr.f32.gmra.mrb[0].mxu0 %v880
      %v1102 = vpop.f32.mrb[0].mxu0
      %v1103 = vadd.f32 %v779, %v1102
      %v1104 = vpop.f32.mrb[0].mxu0
      %1105 = vmatprep.mubr.f32.mxu0 0.0
      %1106 = vmatmul.mubr.f32.gmra.mrb[0].mxu0 %v883
      %v1107 = vpop.f32.mrb[0].mxu0
      %v1108 = vadd.f32 %v784, %v1107
      %v1109 = vpop.f32.mrb[0].mxu0
      %1110 = vmatprep.mubr.f32.mxu0 0.0
      %1111 = vmatmul.mubr.f32.gmra.mrb[0].mxu0 %v886
      %v1112 = vpop.f32.mrb[0].mxu0
      %v1113 = vadd.f32 %v789, %v1112
      %v1114 = vpop.f32.mrb[0].mxu0
      %1115 = vdwg.mxu0
      %v1116 = vld [vmem:[#allocation2 + $0x2] sm:$0xff]
      %v1117 = vld [vmem:[#allocation2 + $0xa] sm:$0xff]
      %v1118 = vld [vmem:[#allocation2 + $0x1a] sm:$0xff]
      %v1119 = vld [vmem:[#allocation2 + $0x22] sm:$0xff]
      %v1120 = vld [vmem:[#allocation2 + $0x32] sm:$0xff]
      %v1121 = vld [vmem:[#allocation2 + $0x3a] sm:$0xff]
      %v1122 = vld [vmem:[#allocation2 + $0x4a] sm:$0xff]
      %v1123 = vld [vmem:[#allocation2 + $0x52] sm:$0xff]
      %v1124 = vld [vmem:[#allocation2 + $0x62] sm:$0xff]
      %v1125 = vld [vmem:[#allocation2 + $0x6a] sm:$0xff]
      %v1126 = vld [vmem:[#allocation2 + $0x7a] sm:$0xff]
      %v1127 = vld [vmem:[#allocation2 + $0x82] sm:$0xff]
      %v1128 = vld [vmem:[#allocation2 + $0x92] sm:$0xff]
      %v1129 = vld [vmem:[#allocation2 + $0x9a] sm:$0xff]
      %v1130 = vld [vmem:[#allocation2 + $0xaa] sm:$0xff]
      %v1131 = vld [vmem:[#allocation2 + $0xb2] sm:$0xff]
      %v1132 = vld [vmem:[#allocation2 + $0xc2] sm:$0xff]
      %v1133 = vld [vmem:[#allocation2 + $0xca] sm:$0xff]
      %v1134 = vld [vmem:[#allocation2 + $0xda] sm:$0xff]
      %v1135 = vld [vmem:[#allocation2 + $0xe2] sm:$0xff]
      %v1136 = vld [vmem:[#allocation2 + $0xf2] sm:$0xff]
      %v1137 = vld [vmem:[#allocation2 + $0xfa] sm:$0xff]
      %v1138 = vld [vmem:[#allocation2 + $0x10a] sm:$0xff]
      %v1139 = vld [vmem:[#allocation2 + $0x112] sm:$0xff]
      %v1140 = vld [vmem:[#allocation2 + $0x122] sm:$0xff]
      %v1141 = vld [vmem:[#allocation2 + $0x12a] sm:$0xff]
      %v1142 = vld [vmem:[#allocation2 + $0x13a] sm:$0xff]
      %v1143 = vld [vmem:[#allocation2 + $0x142] sm:$0xff]
      %v1144 = vld [vmem:[#allocation2 + $0x152] sm:$0xff]
      %v1145 = vld [vmem:[#allocation2 + $0x15a] sm:$0xff]
      %v1146 = vld [vmem:[#allocation2 + $0x16a] sm:$0xff]
      %v1147 = vld [vmem:[#allocation2 + $0x172] sm:$0xff]
      %s1148 = scalar_lea.vmem %s1, 8
      %v1149 = vld [vmem:[%s1148] sm:$0xf]
      %v1151 = vsel %vm225, %v1116, 0
      %v1154 = vsel %vm225, %v1117, 0
      %v1157 = vsel %vm225, %v1118, 0
      %v1160 = vsel %vm225, %v1119, 0
      %v1163 = vsel %vm225, %v1120, 0
      %v1166 = vsel %vm225, %v1121, 0
      %v1169 = vsel %vm225, %v1122, 0
      %v1172 = vsel %vm225, %v1123, 0
      %v1175 = vsel %vm225, %v1124, 0
      %v1178 = vsel %vm225, %v1125, 0
      %v1181 = vsel %vm225, %v1126, 0
      %v1184 = vsel %vm225, %v1127, 0
      %v1187 = vsel %vm225, %v1128, 0
      %v1190 = vsel %vm225, %v1129, 0
      %v1193 = vsel %vm225, %v1130, 0
      %v1196 = vsel %vm225, %v1131, 0
      %v1199 = vsel %vm225, %v1132, 0
      %v1202 = vsel %vm225, %v1133, 0
      %v1205 = vsel %vm225, %v1134, 0
      %v1208 = vsel %vm225, %v1135, 0
      %v1211 = vsel %vm225, %v1136, 0
      %v1214 = vsel %vm225, %v1137, 0
      %v1217 = vsel %vm225, %v1138, 0
      %v1220 = vsel %vm225, %v1139, 0
      %v1223 = vsel %vm225, %v1140, 0
      %v1226 = vsel %vm225, %v1141, 0
      %v1229 = vsel %vm225, %v1142, 0
      %v1232 = vsel %vm225, %v1143, 0
      %v1235 = vsel %vm225, %v1144, 0
      %v1238 = vsel %vm225, %v1145, 0
      %v1241 = vsel %vm225, %v1146, 0
      %v1244 = vsel %vm225, %v1147, 0
      %v1247 = vsel %vm563, %v1149, 0
      %1249 = vmatprep.subr.mxu0 0.0
      %1250 = vmatpush1.msra.mxu0 %v1247
      %1251 = vmatprep.subr.mxu0 0.0
      %1252 = vmatpush1.msra.mxu0 0.0
      %1253 = vmatprep.subr.mxu0 0.0
      %1254 = vmatpush1.msra.mxu0 0.0
      %1255 = vmatprep.subr.mxu0 0.0
      %1256 = vmatpush1.msra.mxu0 0.0
      %1257 = vmatprep.subr.mxu0 0.0
      %1258 = vmatpush1.msra.mxu0 0.0
      %1259 = vmatprep.subr.mxu0 0.0
      %1260 = vmatpush1.msra.mxu0 0.0
      %1261 = vmatprep.subr.mxu0 0.0
      %1262 = vmatpush1.msra.mxu0 0.0
      %1263 = vmatprep.subr.mxu0 0.0
      %1264 = vmatpush1.msra.mxu0 0.0
      %1265 = vmatprep.subr.mxu0 0.0
      %1266 = vmatpush1.msra.mxu0 0.0
      %1267 = vmatprep.subr.mxu0 0.0
      %1268 = vmatpush1.msra.mxu0 0.0
      %1269 = vmatprep.subr.mxu0 0.0
      %1270 = vmatpush1.msra.mxu0 0.0
      %1271 = vmatprep.subr.mxu0 0.0
      %1272 = vmatpush1.msra.mxu0 0.0
      %1273 = vmatprep.subr.mxu0 0.0
      %1274 = vmatpush1.msra.mxu0 0.0
      %1275 = vmatprep.subr.mxu0 0.0
      %1276 = vmatpush1.msra.mxu0 0.0
      %1277 = vmatprep.subr.mxu0 0.0
      %1278 = vmatpush1.msra.mxu0 0.0
      %1279 = vmatprep.subr.mxu0 0.0
      %1280 = vmatpush1.msra.mxu0 0.0
      %1281 = vmatprep.subr.mxu0 0.0
      %1282 = vmatpush1.msra.mxu0 0.0
      %1283 = vmatprep.subr.mxu0 0.0
      %1284 = vmatpush1.msra.mxu0 0.0
      %1285 = vmatprep.subr.mxu0 0.0
      %1286 = vmatpush1.msra.mxu0 0.0
      %1287 = vmatprep.subr.mxu0 0.0
      %1288 = vmatpush1.msra.mxu0 0.0
      %1289 = vmatprep.subr.mxu0 0.0
      %1290 = vmatpush1.msra.mxu0 0.0
      %1291 = vmatprep.subr.mxu0 0.0
      %1292 = vmatpush1.msra.mxu0 0.0
      %1293 = vmatprep.subr.mxu0 0.0
      %1294 = vmatpush1.msra.mxu0 0.0
      %1295 = vmatprep.subr.mxu0 0.0
      %1296 = vmatpush1.msra.mxu0 0.0
      %1297 = vmatprep.subr.mxu0 0.0
      %1298 = vmatpush1.msra.mxu0 0.0
      %1299 = vmatprep.subr.mxu0 0.0
      %1300 = vmatpush1.msra.mxu0 0.0
      %1301 = vmatprep.subr.mxu0 0.0
      %1302 = vmatpush1.msra.mxu0 0.0
      %1303 = vmatprep.subr.mxu0 0.0
      %1304 = vmatpush1.msra.mxu0 0.0
      %1305 = vmatprep.subr.mxu0 0.0
      %1306 = vmatpush1.msra.mxu0 0.0
      %1307 = vmatprep.subr.mxu0 0.0
      %1308 = vmatpush1.msra.mxu0 0.0
      %1309 = vmatprep.subr.mxu0 0.0
      %1310 = vmatpush1.msra.mxu0 0.0
      %1311 = vmatprep.subr.mxu0 0.0
      %1312 = vmatpush1.msra.mxu0 0.0
      %1313 = vmatprep.mubr.f32.mxu0 0.0
      %1314 = vmatmul.mubr.f32.gmra.mrb[0].mxu0 %v1151
      %v1315 = vpop.f32.mrb[0].mxu0
      %v1316 = vadd.f32 0.0, %v1315
      %v1317 = vpop.f32.mrb[0].mxu0
      %1318 = vmatprep.mubr.f32.mxu0 0.0
      %1319 = vmatmul.mubr.f32.gmra.mrb[0].mxu0 %v1154
      %v1320 = vpop.f32.mrb[0].mxu0
      %v1321 = vadd.f32 0.0, %v1320
      %v1322 = vpop.f32.mrb[0].mxu0
      %1323 = vmatprep.mubr.f32.mxu0 0.0
      %1324 = vmatmul.mubr.f32.gmra.mrb[0].mxu0 %v1157
      %v1325 = vpop.f32.mrb[0].mxu0
      %v1326 = vadd.f32 0.0, %v1325
      %v1327 = vpop.f32.mrb[0].mxu0
      %1328 = vmatprep.mubr.f32.mxu0 0.0
      %1329 = vmatmul.mubr.f32.gmra.mrb[0].mxu0 %v1160
      %v1330 = vpop.f32.mrb[0].mxu0
      %v1331 = vadd.f32 0.0, %v1330
      %v1332 = vpop.f32.mrb[0].mxu0
      %1333 = vmatprep.mubr.f32.mxu0 0.0
      %1334 = vmatmul.mubr.f32.gmra.mrb[0].mxu0 %v1163
      %v1335 = vpop.f32.mrb[0].mxu0
      %v1336 = vadd.f32 0.0, %v1335
      %v1337 = vpop.f32.mrb[0].mxu0
      %1338 = vmatprep.mubr.f32.mxu0 0.0
      %1339 = vmatmul.mubr.f32.gmra.mrb[0].mxu0 %v1166
      %v1340 = vpop.f32.mrb[0].mxu0
      %v1341 = vadd.f32 0.0, %v1340
      %v1342 = vpop.f32.mrb[0].mxu0
      %1343 = vmatprep.mubr.f32.mxu0 0.0
      %1344 = vmatmul.mubr.f32.gmra.mrb[0].mxu0 %v1169
      %v1345 = vpop.f32.mrb[0].mxu0
      %v1346 = vadd.f32 0.0, %v1345
      %v1347 = vpop.f32.mrb[0].mxu0
      %1348 = vmatprep.mubr.f32.mxu0 0.0
      %1349 = vmatmul.mubr.f32.gmra.mrb[0].mxu0 %v1172
      %v1350 = vpop.f32.mrb[0].mxu0
      %v1351 = vadd.f32 0.0, %v1350
      %v1352 = vpop.f32.mrb[0].mxu0
      %1353 = vmatprep.mubr.f32.mxu0 0.0
      %1354 = vmatmul.mubr.f32.gmra.mrb[0].mxu0 %v1175
      %v1355 = vpop.f32.mrb[0].mxu0
      %v1356 = vadd.f32 0.0, %v1355
      %v1357 = vpop.f32.mrb[0].mxu0
      %1358 = vmatprep.mubr.f32.mxu0 0.0
      %1359 = vmatmul.mubr.f32.gmra.mrb[0].mxu0 %v1178
      %v1360 = vpop.f32.mrb[0].mxu0
      %v1361 = vadd.f32 0.0, %v1360
      %v1362 = vpop.f32.mrb[0].mxu0
      %1363 = vmatprep.mubr.f32.mxu0 0.0
      %1364 = vmatmul.mubr.f32.gmra.mrb[0].mxu0 %v1181
      %v1365 = vpop.f32.mrb[0].mxu0
      %v1366 = vadd.f32 0.0, %v1365
      %v1367 = vpop.f32.mrb[0].mxu0
      %1368 = vmatprep.mubr.f32.mxu0 0.0
      %1369 = vmatmul.mubr.f32.gmra.mrb[0].mxu0 %v1184
      %v1370 = vpop.f32.mrb[0].mxu0
      %v1371 = vadd.f32 0.0, %v1370
      %v1372 = vpop.f32.mrb[0].mxu0
      %1373 = vmatprep.mubr.f32.mxu0 0.0
      %1374 = vmatmul.mubr.f32.gmra.mrb[0].mxu0 %v1187
      %v1375 = vpop.f32.mrb[0].mxu0
      %v1376 = vadd.f32 0.0, %v1375
      %v1377 = vpop.f32.mrb[0].mxu0
      %1378 = vmatprep.mubr.f32.mxu0 0.0
      %1379 = vmatmul.mubr.f32.gmra.mrb[0].mxu0 %v1190
      %v1380 = vpop.f32.mrb[0].mxu0
      %v1381 = vadd.f32 0.0, %v1380
      %v1382 = vpop.f32.mrb[0].mxu0
      %1383 = vmatprep.mubr.f32.mxu0 0.0
      %1384 = vmatmul.mubr.f32.gmra.mrb[0].mxu0 %v1193
      %v1385 = vpop.f32.mrb[0].mxu0
      %v1386 = vadd.f32 0.0, %v1385
      %v1387 = vpop.f32.mrb[0].mxu0
      %1388 = vmatprep.mubr.f32.mxu0 0.0
      %1389 = vmatmul.mubr.f32.gmra.mrb[0].mxu0 %v1196
      %v1390 = vpop.f32.mrb[0].mxu0
      %v1391 = vadd.f32 0.0, %v1390
      %v1392 = vpop.f32.mrb[0].mxu0
      %1393 = vmatprep.mubr.f32.mxu0 0.0
      %1394 = vmatmul.mubr.f32.gmra.mrb[0].mxu0 %v1199
      %v1395 = vpop.f32.mrb[0].mxu0
      %v1396 = vadd.f32 0.0, %v1395
      %v1397 = vpop.f32.mrb[0].mxu0
      %1398 = vmatprep.mubr.f32.mxu0 0.0
      %1399 = vmatmul.mubr.f32.gmra.mrb[0].mxu0 %v1202
      %v1400 = vpop.f32.mrb[0].mxu0
      %v1401 = vadd.f32 0.0, %v1400
      %v1402 = vpop.f32.mrb[0].mxu0
      %1403 = vmatprep.mubr.f32.mxu0 0.0
      %1404 = vmatmul.mubr.f32.gmra.mrb[0].mxu0 %v1205
      %v1405 = vpop.f32.mrb[0].mxu0
      %v1406 = vadd.f32 0.0, %v1405
      %v1407 = vpop.f32.mrb[0].mxu0
      %1408 = vmatprep.mubr.f32.mxu0 0.0
      %1409 = vmatmul.mubr.f32.gmra.mrb[0].mxu0 %v1208
      %v1410 = vpop.f32.mrb[0].mxu0
      %v1411 = vadd.f32 0.0, %v1410
      %v1412 = vpop.f32.mrb[0].mxu0
      %1413 = vmatprep.mubr.f32.mxu0 0.0
      %1414 = vmatmul.mubr.f32.gmra.mrb[0].mxu0 %v1211
      %v1415 = vpop.f32.mrb[0].mxu0
      %v1416 = vadd.f32 0.0, %v1415
      %v1417 = vpop.f32.mrb[0].mxu0
      %1418 = vmatprep.mubr.f32.mxu0 0.0
      %1419 = vmatmul.mubr.f32.gmra.mrb[0].mxu0 %v1214
      %v1420 = vpop.f32.mrb[0].mxu0
      %v1421 = vadd.f32 0.0, %v1420
      %v1422 = vpop.f32.mrb[0].mxu0
      %1423 = vmatprep.mubr.f32.mxu0 0.0
      %1424 = vmatmul.mubr.f32.gmra.mrb[0].mxu0 %v1217
      %v1425 = vpop.f32.mrb[0].mxu0
      %v1426 = vadd.f32 0.0, %v1425
      %v1427 = vpop.f32.mrb[0].mxu0
      %1428 = vmatprep.mubr.f32.mxu0 0.0
      %1429 = vmatmul.mubr.f32.gmra.mrb[0].mxu0 %v1220
      %v1430 = vpop.f32.mrb[0].mxu0
      %v1431 = vadd.f32 0.0, %v1430
      %v1432 = vpop.f32.mrb[0].mxu0
      %1433 = vmatprep.mubr.f32.mxu0 0.0
      %1434 = vmatmul.mubr.f32.gmra.mrb[0].mxu0 %v1223
      %v1435 = vpop.f32.mrb[0].mxu0
      %v1436 = vadd.f32 0.0, %v1435
      %v1437 = vpop.f32.mrb[0].mxu0
      %1438 = vmatprep.mubr.f32.mxu0 0.0
      %1439 = vmatmul.mubr.f32.gmra.mrb[0].mxu0 %v1226
      %v1440 = vpop.f32.mrb[0].mxu0
      %v1441 = vadd.f32 0.0, %v1440
      %v1442 = vpop.f32.mrb[0].mxu0
      %1443 = vmatprep.mubr.f32.mxu0 0.0
      %1444 = vmatmul.mubr.f32.gmra.mrb[0].mxu0 %v1229
      %v1445 = vpop.f32.mrb[0].mxu0
      %v1446 = vadd.f32 0.0, %v1445
      %v1447 = vpop.f32.mrb[0].mxu0
      %1448 = vmatprep.mubr.f32.mxu0 0.0
      %1449 = vmatmul.mubr.f32.gmra.mrb[0].mxu0 %v1232
      %v1450 = vpop.f32.mrb[0].mxu0
      %v1451 = vadd.f32 0.0, %v1450
      %v1452 = vpop.f32.mrb[0].mxu0
      %1453 = vmatprep.mubr.f32.mxu0 0.0
      %1454 = vmatmul.mubr.f32.gmra.mrb[0].mxu0 %v1235
      %v1455 = vpop.f32.mrb[0].mxu0
      %v1456 = vadd.f32 0.0, %v1455
      %v1457 = vpop.f32.mrb[0].mxu0
      %1458 = vmatprep.mubr.f32.mxu0 0.0
      %1459 = vmatmul.mubr.f32.gmra.mrb[0].mxu0 %v1238
      %v1460 = vpop.f32.mrb[0].mxu0
      %v1461 = vadd.f32 0.0, %v1460
      %v1462 = vpop.f32.mrb[0].mxu0
      %1463 = vmatprep.mubr.f32.mxu0 0.0
      %1464 = vmatmul.mubr.f32.gmra.mrb[0].mxu0 %v1241
      %v1465 = vpop.f32.mrb[0].mxu0
      %v1466 = vadd.f32 0.0, %v1465
      %v1467 = vpop.f32.mrb[0].mxu0
      %1468 = vmatprep.mubr.f32.mxu0 0.0
      %1469 = vmatmul.mubr.f32.gmra.mrb[0].mxu0 %v1244
      %v1470 = vpop.f32.mrb[0].mxu0
      %v1471 = vadd.f32 0.0, %v1470
      %v1472 = vpop.f32.mrb[0].mxu0
      %1473 = vdwg.mxu0
      %v1474 = vadd.f32 %v958, %v1316
      %v1475 = vadd.f32 %v963, %v1321
      %v1476 = vadd.f32 %v968, %v1326
      %v1477 = vadd.f32 %v973, %v1331
      %v1478 = vadd.f32 %v978, %v1336
      %v1479 = vadd.f32 %v983, %v1341
      %v1480 = vadd.f32 %v988, %v1346
      %v1481 = vadd.f32 %v993, %v1351
      %v1482 = vadd.f32 %v998, %v1356
      %v1483 = vadd.f32 %v1003, %v1361
      %v1484 = vadd.f32 %v1008, %v1366
      %v1485 = vadd.f32 %v1013, %v1371
      %v1486 = vadd.f32 %v1018, %v1376
      %v1487 = vadd.f32 %v1023, %v1381
      %v1488 = vadd.f32 %v1028, %v1386
      %v1489 = vadd.f32 %v1033, %v1391
      %v1490 = vadd.f32 %v1038, %v1396
      %v1491 = vadd.f32 %v1043, %v1401
      %v1492 = vadd.f32 %v1048, %v1406
      %v1493 = vadd.f32 %v1053, %v1411
      %v1494 = vadd.f32 %v1058, %v1416
      %v1495 = vadd.f32 %v1063, %v1421
      %v1496 = vadd.f32 %v1068, %v1426
      %v1497 = vadd.f32 %v1073, %v1431
      %v1498 = vadd.f32 %v1078, %v1436
      %v1499 = vadd.f32 %v1083, %v1441
      %v1500 = vadd.f32 %v1088, %v1446
      %v1501 = vadd.f32 %v1093, %v1451
      %v1502 = vadd.f32 %v1098, %v1456
      %v1503 = vadd.f32 %v1103, %v1461
      %v1504 = vadd.f32 %v1108, %v1466
      %v1505 = vadd.f32 %v1113, %v1471
      %v1506 = vld [vmem:[%s367] sm:$0xff]
      %v1507 = vld [vmem:[%s367 + $0x8] sm:$0xff]
      %v1508 = vld [vmem:[%s367 + $0x18] sm:$0xff]
      %v1509 = vld [vmem:[%s367 + $0x20] sm:$0xff]
      %v1510 = vld [vmem:[%s367 + $0x30] sm:$0xff]
      %v1511 = vld [vmem:[%s367 + $0x38] sm:$0xff]
      %v1512 = vld [vmem:[%s367 + $0x48] sm:$0xff]
      %v1513 = vld [vmem:[%s367 + $0x50] sm:$0xff]
      %v1514 = vld [vmem:[%s367 + $0x60] sm:$0xff]
      %v1515 = vld [vmem:[%s367 + $0x68] sm:$0xff]
      %v1516 = vld [vmem:[%s367 + $0x78] sm:$0xff]
      %v1517 = vld [vmem:[%s367 + $0x80] sm:$0xff]
      %v1518 = vld [vmem:[%s367 + $0x90] sm:$0xff]
      %v1519 = vld [vmem:[%s367 + $0x98] sm:$0xff]
      %v1520 = vld [vmem:[%s367 + $0xa8] sm:$0xff]
      %v1521 = vld [vmem:[%s367 + $0xb0] sm:$0xff]
      %v1522 = vld [vmem:[%s367 + $0xc0] sm:$0xff]
      %v1523 = vld [vmem:[%s367 + $0xc8] sm:$0xff]
      %v1524 = vld [vmem:[%s367 + $0xd8] sm:$0xff]
      %v1525 = vld [vmem:[%s367 + $0xe0] sm:$0xff]
      %v1526 = vld [vmem:[%s367 + $0xf0] sm:$0xff]
      %v1527 = vld [vmem:[%s367 + $0xf8] sm:$0xff]
      %v1528 = vld [vmem:[%s367 + $0x108] sm:$0xff]
      %v1529 = vld [vmem:[%s367 + $0x110] sm:$0xff]
      %v1530 = vld [vmem:[%s367 + $0x120] sm:$0xff]
      %v1531 = vld [vmem:[%s367 + $0x128] sm:$0xff]
      %v1532 = vld [vmem:[%s367 + $0x138] sm:$0xff]
      %v1533 = vld [vmem:[%s367 + $0x140] sm:$0xff]
      %v1534 = vld [vmem:[%s367 + $0x150] sm:$0xff]
      %v1535 = vld [vmem:[%s367 + $0x158] sm:$0xff]
      %v1536 = vld [vmem:[%s367 + $0x168] sm:$0xff]
      %v1537 = vld [vmem:[%s367 + $0x170] sm:$0xff]
      %s1538 = scalar_lea.vmem %s1, 12
      %v1539 = vld [vmem:[%s1538] sm:$0xf]
      %v1541 = vsel %vm225, %v1506, 0
      %v1544 = vsel %vm225, %v1507, 0
      %v1547 = vsel %vm225, %v1508, 0
      %v1550 = vsel %vm225, %v1509, 0
      %v1553 = vsel %vm225, %v1510, 0
      %v1556 = vsel %vm225, %v1511, 0
      %v1559 = vsel %vm225, %v1512, 0
      %v1562 = vsel %vm225, %v1513, 0
      %v1565 = vsel %vm225, %v1514, 0
      %v1568 = vsel %vm225, %v1515, 0
      %v1571 = vsel %vm225, %v1516, 0
      %v1574 = vsel %vm225, %v1517, 0
      %v1577 = vsel %vm225, %v1518, 0
      %v1580 = vsel %vm225, %v1519, 0
      %v1583 = vsel %vm225, %v1520, 0
      %v1586 = vsel %vm225, %v1521, 0
      %v1589 = vsel %vm225, %v1522, 0
      %v1592 = vsel %vm225, %v1523, 0
      %v1595 = vsel %vm225, %v1524, 0
      %v1598 = vsel %vm225, %v1525, 0
      %v1601 = vsel %vm225, %v1526, 0
      %v1604 = vsel %vm225, %v1527, 0
      %v1607 = vsel %vm225, %v1528, 0
      %v1610 = vsel %vm225, %v1529, 0
      %v1613 = vsel %vm225, %v1530, 0
      %v1616 = vsel %vm225, %v1531, 0
      %v1619 = vsel %vm225, %v1532, 0
      %v1622 = vsel %vm225, %v1533, 0
      %v1625 = vsel %vm225, %v1534, 0
      %v1628 = vsel %vm225, %v1535, 0
      %v1631 = vsel %vm225, %v1536, 0
      %v1634 = vsel %vm225, %v1537, 0
      %v1637 = vsel %vm563, %v1539, 0
      %1639 = vmatprep.subr.mxu0 0.0
      %1640 = vmatpush1.msra.mxu0 %v1637
      %1641 = vmatprep.subr.mxu0 0.0
      %1642 = vmatpush1.msra.mxu0 0.0
      %1643 = vmatprep.subr.mxu0 0.0
      %1644 = vmatpush1.msra.mxu0 0.0
      %1645 = vmatprep.subr.mxu0 0.0
      %1646 = vmatpush1.msra.mxu0 0.0
      %1647 = vmatprep.subr.mxu0 0.0
      %1648 = vmatpush1.msra.mxu0 0.0
      %1649 = vmatprep.subr.mxu0 0.0
      %1650 = vmatpush1.msra.mxu0 0.0
      %1651 = vmatprep.subr.mxu0 0.0
      %1652 = vmatpush1.msra.mxu0 0.0
      %1653 = vmatprep.subr.mxu0 0.0
      %1654 = vmatpush1.msra.mxu0 0.0
      %1655 = vmatprep.subr.mxu0 0.0
      %1656 = vmatpush1.msra.mxu0 0.0
      %1657 = vmatprep.subr.mxu0 0.0
      %1658 = vmatpush1.msra.mxu0 0.0
      %1659 = vmatprep.subr.mxu0 0.0
      %1660 = vmatpush1.msra.mxu0 0.0
      %1661 = vmatprep.subr.mxu0 0.0
      %1662 = vmatpush1.msra.mxu0 0.0
      %1663 = vmatprep.subr.mxu0 0.0
      %1664 = vmatpush1.msra.mxu0 0.0
      %1665 = vmatprep.subr.mxu0 0.0
      %1666 = vmatpush1.msra.mxu0 0.0
      %1667 = vmatprep.subr.mxu0 0.0
      %1668 = vmatpush1.msra.mxu0 0.0
      %1669 = vmatprep.subr.mxu0 0.0
      %1670 = vmatpush1.msra.mxu0 0.0
      %1671 = vmatprep.subr.mxu0 0.0
      %1672 = vmatpush1.msra.mxu0 0.0
      %1673 = vmatprep.subr.mxu0 0.0
      %1674 = vmatpush1.msra.mxu0 0.0
      %1675 = vmatprep.subr.mxu0 0.0
      %1676 = vmatpush1.msra.mxu0 0.0
      %1677 = vmatprep.subr.mxu0 0.0
      %1678 = vmatpush1.msra.mxu0 0.0
      %1679 = vmatprep.subr.mxu0 0.0
      %1680 = vmatpush1.msra.mxu0 0.0
      %1681 = vmatprep.subr.mxu0 0.0
      %1682 = vmatpush1.msra.mxu0 0.0
      %1683 = vmatprep.subr.mxu0 0.0
      %1684 = vmatpush1.msra.mxu0 0.0
      %1685 = vmatprep.subr.mxu0 0.0
      %1686 = vmatpush1.msra.mxu0 0.0
      %1687 = vmatprep.subr.mxu0 0.0
      %1688 = vmatpush1.msra.mxu0 0.0
      %1689 = vmatprep.subr.mxu0 0.0
      %1690 = vmatpush1.msra.mxu0 0.0
      %1691 = vmatprep.subr.mxu0 0.0
      %1692 = vmatpush1.msra.mxu0 0.0
      %1693 = vmatprep.subr.mxu0 0.0
      %1694 = vmatpush1.msra.mxu0 0.0
      %1695 = vmatprep.subr.mxu0 0.0
      %1696 = vmatpush1.msra.mxu0 0.0
      %1697 = vmatprep.subr.mxu0 0.0
      %1698 = vmatpush1.msra.mxu0 0.0
      %1699 = vmatprep.subr.mxu0 0.0
      %1700 = vmatpush1.msra.mxu0 0.0
      %1701 = vmatprep.subr.mxu0 0.0
      %1702 = vmatpush1.msra.mxu0 0.0
      %1703 = vmatprep.mubr.f32.mxu0 0.0
      %1704 = vmatmul.mubr.f32.gmra.mrb[0].mxu0 %v1541
      %v1705 = vpop.f32.mrb[0].mxu0
      %v1706 = vadd.f32 0.0, %v1705
      %v1707 = vpop.f32.mrb[0].mxu0
      %1708 = vmatprep.mubr.f32.mxu0 0.0
      %1709 = vmatmul.mubr.f32.gmra.mrb[0].mxu0 %v1544
      %v1710 = vpop.f32.mrb[0].mxu0
      %v1711 = vadd.f32 0.0, %v1710
      %v1712 = vpop.f32.mrb[0].mxu0
      %1713 = vmatprep.mubr.f32.mxu0 0.0
      %1714 = vmatmul.mubr.f32.gmra.mrb[0].mxu0 %v1547
      %v1715 = vpop.f32.mrb[0].mxu0
      %v1716 = vadd.f32 0.0, %v1715
      %v1717 = vpop.f32.mrb[0].mxu0
      %1718 = vmatprep.mubr.f32.mxu0 0.0
      %1719 = vmatmul.mubr.f32.gmra.mrb[0].mxu0 %v1550
      %v1720 = vpop.f32.mrb[0].mxu0
      %v1721 = vadd.f32 0.0, %v1720
      %v1722 = vpop.f32.mrb[0].mxu0
      %1723 = vmatprep.mubr.f32.mxu0 0.0
      %1724 = vmatmul.mubr.f32.gmra.mrb[0].mxu0 %v1553
      %v1725 = vpop.f32.mrb[0].mxu0
      %v1726 = vadd.f32 0.0, %v1725
      %v1727 = vpop.f32.mrb[0].mxu0
      %1728 = vmatprep.mubr.f32.mxu0 0.0
      %1729 = vmatmul.mubr.f32.gmra.mrb[0].mxu0 %v1556
      %v1730 = vpop.f32.mrb[0].mxu0
      %v1731 = vadd.f32 0.0, %v1730
      %v1732 = vpop.f32.mrb[0].mxu0
      %1733 = vmatprep.mubr.f32.mxu0 0.0
      %1734 = vmatmul.mubr.f32.gmra.mrb[0].mxu0 %v1559
      %v1735 = vpop.f32.mrb[0].mxu0
      %v1736 = vadd.f32 0.0, %v1735
      %v1737 = vpop.f32.mrb[0].mxu0
      %1738 = vmatprep.mubr.f32.mxu0 0.0
      %1739 = vmatmul.mubr.f32.gmra.mrb[0].mxu0 %v1562
      %v1740 = vpop.f32.mrb[0].mxu0
      %v1741 = vadd.f32 0.0, %v1740
      %v1742 = vpop.f32.mrb[0].mxu0
      %1743 = vmatprep.mubr.f32.mxu0 0.0
      %1744 = vmatmul.mubr.f32.gmra.mrb[0].mxu0 %v1565
      %v1745 = vpop.f32.mrb[0].mxu0
      %v1746 = vadd.f32 0.0, %v1745
      %v1747 = vpop.f32.mrb[0].mxu0
      %1748 = vmatprep.mubr.f32.mxu0 0.0
      %1749 = vmatmul.mubr.f32.gmra.mrb[0].mxu0 %v1568
      %v1750 = vpop.f32.mrb[0].mxu0
      %v1751 = vadd.f32 0.0, %v1750
      %v1752 = vpop.f32.mrb[0].mxu0
      %1753 = vmatprep.mubr.f32.mxu0 0.0
      %1754 = vmatmul.mubr.f32.gmra.mrb[0].mxu0 %v1571
      %v1755 = vpop.f32.mrb[0].mxu0
      %v1756 = vadd.f32 0.0, %v1755
      %v1757 = vpop.f32.mrb[0].mxu0
      %1758 = vmatprep.mubr.f32.mxu0 0.0
      %1759 = vmatmul.mubr.f32.gmra.mrb[0].mxu0 %v1574
      %v1760 = vpop.f32.mrb[0].mxu0
      %v1761 = vadd.f32 0.0, %v1760
      %v1762 = vpop.f32.mrb[0].mxu0
      %1763 = vmatprep.mubr.f32.mxu0 0.0
      %1764 = vmatmul.mubr.f32.gmra.mrb[0].mxu0 %v1577
      %v1765 = vpop.f32.mrb[0].mxu0
      %v1766 = vadd.f32 0.0, %v1765
      %v1767 = vpop.f32.mrb[0].mxu0
      %1768 = vmatprep.mubr.f32.mxu0 0.0
      %1769 = vmatmul.mubr.f32.gmra.mrb[0].mxu0 %v1580
      %v1770 = vpop.f32.mrb[0].mxu0
      %v1771 = vadd.f32 0.0, %v1770
      %v1772 = vpop.f32.mrb[0].mxu0
      %1773 = vmatprep.mubr.f32.mxu0 0.0
      %1774 = vmatmul.mubr.f32.gmra.mrb[0].mxu0 %v1583
      %v1775 = vpop.f32.mrb[0].mxu0
      %v1776 = vadd.f32 0.0, %v1775
      %v1777 = vpop.f32.mrb[0].mxu0
      %1778 = vmatprep.mubr.f32.mxu0 0.0
      %1779 = vmatmul.mubr.f32.gmra.mrb[0].mxu0 %v1586
      %v1780 = vpop.f32.mrb[0].mxu0
      %v1781 = vadd.f32 0.0, %v1780
      %v1782 = vpop.f32.mrb[0].mxu0
      %1783 = vmatprep.mubr.f32.mxu0 0.0
      %1784 = vmatmul.mubr.f32.gmra.mrb[0].mxu0 %v1589
      %v1785 = vpop.f32.mrb[0].mxu0
      %v1786 = vadd.f32 0.0, %v1785
      %v1787 = vpop.f32.mrb[0].mxu0
      %1788 = vmatprep.mubr.f32.mxu0 0.0
      %1789 = vmatmul.mubr.f32.gmra.mrb[0].mxu0 %v1592
      %v1790 = vpop.f32.mrb[0].mxu0
      %v1791 = vadd.f32 0.0, %v1790
      %v1792 = vpop.f32.mrb[0].mxu0
      %1793 = vmatprep.mubr.f32.mxu0 0.0
      %1794 = vmatmul.mubr.f32.gmra.mrb[0].mxu0 %v1595
      %v1795 = vpop.f32.mrb[0].mxu0
      %v1796 = vadd.f32 0.0, %v1795
      %v1797 = vpop.f32.mrb[0].mxu0
      %1798 = vmatprep.mubr.f32.mxu0 0.0
      %1799 = vmatmul.mubr.f32.gmra.mrb[0].mxu0 %v1598
      %v1800 = vpop.f32.mrb[0].mxu0
      %v1801 = vadd.f32 0.0, %v1800
      %v1802 = vpop.f32.mrb[0].mxu0
      %1803 = vmatprep.mubr.f32.mxu0 0.0
      %1804 = vmatmul.mubr.f32.gmra.mrb[0].mxu0 %v1601
      %v1805 = vpop.f32.mrb[0].mxu0
      %v1806 = vadd.f32 0.0, %v1805
      %v1807 = vpop.f32.mrb[0].mxu0
      %1808 = vmatprep.mubr.f32.mxu0 0.0
      %1809 = vmatmul.mubr.f32.gmra.mrb[0].mxu0 %v1604
      %v1810 = vpop.f32.mrb[0].mxu0
      %v1811 = vadd.f32 0.0, %v1810
      %v1812 = vpop.f32.mrb[0].mxu0
      %1813 = vmatprep.mubr.f32.mxu0 0.0
      %1814 = vmatmul.mubr.f32.gmra.mrb[0].mxu0 %v1607
      %v1815 = vpop.f32.mrb[0].mxu0
      %v1816 = vadd.f32 0.0, %v1815
      %v1817 = vpop.f32.mrb[0].mxu0
      %1818 = vmatprep.mubr.f32.mxu0 0.0
      %1819 = vmatmul.mubr.f32.gmra.mrb[0].mxu0 %v1610
      %v1820 = vpop.f32.mrb[0].mxu0
      %v1821 = vadd.f32 0.0, %v1820
      %v1822 = vpop.f32.mrb[0].mxu0
      %1823 = vmatprep.mubr.f32.mxu0 0.0
      %1824 = vmatmul.mubr.f32.gmra.mrb[0].mxu0 %v1613
      %v1825 = vpop.f32.mrb[0].mxu0
      %v1826 = vadd.f32 0.0, %v1825
      %v1827 = vpop.f32.mrb[0].mxu0
      %1828 = vmatprep.mubr.f32.mxu0 0.0
      %1829 = vmatmul.mubr.f32.gmra.mrb[0].mxu0 %v1616
      %v1830 = vpop.f32.mrb[0].mxu0
      %v1831 = vadd.f32 0.0, %v1830
      %v1832 = vpop.f32.mrb[0].mxu0
      %1833 = vmatprep.mubr.f32.mxu0 0.0
      %1834 = vmatmul.mubr.f32.gmra.mrb[0].mxu0 %v1619
      %v1835 = vpop.f32.mrb[0].mxu0
      %v1836 = vadd.f32 0.0, %v1835
      %v1837 = vpop.f32.mrb[0].mxu0
      %1838 = vmatprep.mubr.f32.mxu0 0.0
      %1839 = vmatmul.mubr.f32.gmra.mrb[0].mxu0 %v1622
      %v1840 = vpop.f32.mrb[0].mxu0
      %v1841 = vadd.f32 0.0, %v1840
      %v1842 = vpop.f32.mrb[0].mxu0
      %1843 = vmatprep.mubr.f32.mxu0 0.0
      %1844 = vmatmul.mubr.f32.gmra.mrb[0].mxu0 %v1625
      %v1845 = vpop.f32.mrb[0].mxu0
      %v1846 = vadd.f32 0.0, %v1845
      %v1847 = vpop.f32.mrb[0].mxu0
      %1848 = vmatprep.mubr.f32.mxu0 0.0
      %1849 = vmatmul.mubr.f32.gmra.mrb[0].mxu0 %v1628
      %v1850 = vpop.f32.mrb[0].mxu0
      %v1851 = vadd.f32 0.0, %v1850
      %v1852 = vpop.f32.mrb[0].mxu0
      %1853 = vmatprep.mubr.f32.mxu0 0.0
      %1854 = vmatmul.mubr.f32.gmra.mrb[0].mxu0 %v1631
      %v1855 = vpop.f32.mrb[0].mxu0
      %v1856 = vadd.f32 0.0, %v1855
      %v1857 = vpop.f32.mrb[0].mxu0
      %1858 = vmatprep.mubr.f32.mxu0 0.0
      %1859 = vmatmul.mubr.f32.gmra.mrb[0].mxu0 %v1634
      %v1860 = vpop.f32.mrb[0].mxu0
      %v1861 = vadd.f32 0.0, %v1860
      %v1862 = vpop.f32.mrb[0].mxu0
      %1863 = vdwg.mxu0
      %v1864 = vadd.f32 %v1474, %v1706
      %v1865 = vadd.f32 %v1475, %v1711
      %v1866 = vadd.f32 %v1476, %v1716
      %v1867 = vadd.f32 %v1477, %v1721
      %v1868 = vadd.f32 %v1478, %v1726
      %v1869 = vadd.f32 %v1479, %v1731
      %v1870 = vadd.f32 %v1480, %v1736
      %v1871 = vadd.f32 %v1481, %v1741
      %v1872 = vadd.f32 %v1482, %v1746
      %v1873 = vadd.f32 %v1483, %v1751
      %v1874 = vadd.f32 %v1484, %v1756
      %v1875 = vadd.f32 %v1485, %v1761
      %v1876 = vadd.f32 %v1486, %v1766
      %v1877 = vadd.f32 %v1487, %v1771
      %v1878 = vadd.f32 %v1488, %v1776
      %v1879 = vadd.f32 %v1489, %v1781
      %v1880 = vadd.f32 %v1490, %v1786
      %v1881 = vadd.f32 %v1491, %v1791
      %v1882 = vadd.f32 %v1492, %v1796
      %v1883 = vadd.f32 %v1493, %v1801
      %v1884 = vadd.f32 %v1494, %v1806
      %v1885 = vadd.f32 %v1495, %v1811
      %v1886 = vadd.f32 %v1496, %v1816
      %v1887 = vadd.f32 %v1497, %v1821
      %v1888 = vadd.f32 %v1498, %v1826
      %v1889 = vadd.f32 %v1499, %v1831
      %v1890 = vadd.f32 %v1500, %v1836
      %v1891 = vadd.f32 %v1501, %v1841
      %v1892 = vadd.f32 %v1502, %v1846
      %v1893 = vadd.f32 %v1503, %v1851
      %v1894 = vadd.f32 %v1504, %v1856
      %v1895 = vadd.f32 %v1505, %v1861
      %v1896 = vld [vmem:[%s367 + $0x1] sm:$0xff]
      %v1897 = vld [vmem:[%s367 + $0x9] sm:$0xff]
      %v1898 = vld [vmem:[%s367 + $0x19] sm:$0xff]
      %v1899 = vld [vmem:[%s367 + $0x21] sm:$0xff]
      %v1900 = vld [vmem:[%s367 + $0x31] sm:$0xff]
      %v1901 = vld [vmem:[%s367 + $0x39] sm:$0xff]
      %v1902 = vld [vmem:[%s367 + $0x49] sm:$0xff]
      %v1903 = vld [vmem:[%s367 + $0x51] sm:$0xff]
      %v1904 = vld [vmem:[%s367 + $0x61] sm:$0xff]
      %v1905 = vld [vmem:[%s367 + $0x69] sm:$0xff]
      %v1906 = vld [vmem:[%s367 + $0x79] sm:$0xff]
      %v1907 = vld [vmem:[%s367 + $0x81] sm:$0xff]
      %v1908 = vld [vmem:[%s367 + $0x91] sm:$0xff]
      %v1909 = vld [vmem:[%s367 + $0x99] sm:$0xff]
      %v1910 = vld [vmem:[%s367 + $0xa9] sm:$0xff]
      %v1911 = vld [vmem:[%s367 + $0xb1] sm:$0xff]
      %v1912 = vld [vmem:[%s367 + $0xc1] sm:$0xff]
      %v1913 = vld [vmem:[%s367 + $0xc9] sm:$0xff]
      %v1914 = vld [vmem:[%s367 + $0xd9] sm:$0xff]
      %v1915 = vld [vmem:[%s367 + $0xe1] sm:$0xff]
      %v1916 = vld [vmem:[%s367 + $0xf1] sm:$0xff]
      %v1917 = vld [vmem:[%s367 + $0xf9] sm:$0xff]
      %v1918 = vld [vmem:[%s367 + $0x109] sm:$0xff]
      %v1919 = vld [vmem:[%s367 + $0x111] sm:$0xff]
      %v1920 = vld [vmem:[%s367 + $0x121] sm:$0xff]
      %v1921 = vld [vmem:[%s367 + $0x129] sm:$0xff]
      %v1922 = vld [vmem:[%s367 + $0x139] sm:$0xff]
      %v1923 = vld [vmem:[%s367 + $0x141] sm:$0xff]
      %v1924 = vld [vmem:[%s367 + $0x151] sm:$0xff]
      %v1925 = vld [vmem:[%s367 + $0x159] sm:$0xff]
      %v1926 = vld [vmem:[%s367 + $0x169] sm:$0xff]
      %v1927 = vld [vmem:[%s367 + $0x171] sm:$0xff]
      %s1928 = scalar_lea.vmem %s1, 16
      %v1929 = vld [vmem:[%s1928] sm:$0xf]
      %v1931 = vsel %vm225, %v1896, 0
      %v1934 = vsel %vm225, %v1897, 0
      %v1937 = vsel %vm225, %v1898, 0
      %v1940 = vsel %vm225, %v1899, 0
      %v1943 = vsel %vm225, %v1900, 0
      %v1946 = vsel %vm225, %v1901, 0
      %v1949 = vsel %vm225, %v1902, 0
      %v1952 = vsel %vm225, %v1903, 0
      %v1955 = vsel %vm225, %v1904, 0
      %v1958 = vsel %vm225, %v1905, 0
      %v1961 = vsel %vm225, %v1906, 0
      %v1964 = vsel %vm225, %v1907, 0
      %v1967 = vsel %vm225, %v1908, 0
      %v1970 = vsel %vm225, %v1909, 0
      %v1973 = vsel %vm225, %v1910, 0
      %v1976 = vsel %vm225, %v1911, 0
      %v1979 = vsel %vm225, %v1912, 0
      %v1982 = vsel %vm225, %v1913, 0
      %v1985 = vsel %vm225, %v1914, 0
      %v1988 = vsel %vm225, %v1915, 0
      %v1991 = vsel %vm225, %v1916, 0
      %v1994 = vsel %vm225, %v1917, 0
      %v1997 = vsel %vm225, %v1918, 0
      %v2000 = vsel %vm225, %v1919, 0
      %v2003 = vsel %vm225, %v1920, 0
      %v2006 = vsel %vm225, %v1921, 0
      %v2009 = vsel %vm225, %v1922, 0
      %v2012 = vsel %vm225, %v1923, 0
      %v2015 = vsel %vm225, %v1924, 0
      %v2018 = vsel %vm225, %v1925, 0
      %v2021 = vsel %vm225, %v1926, 0
      %v2024 = vsel %vm225, %v1927, 0
      %v2027 = vsel %vm563, %v1929, 0
      %2029 = vmatprep.subr.mxu0 0.0
      %2030 = vmatpush1.msra.mxu0 %v2027
      %2031 = vmatprep.subr.mxu0 0.0
      %2032 = vmatpush1.msra.mxu0 0.0
      %2033 = vmatprep.subr.mxu0 0.0
      %2034 = vmatpush1.msra.mxu0 0.0
      %2035 = vmatprep.subr.mxu0 0.0
      %2036 = vmatpush1.msra.mxu0 0.0
      %2037 = vmatprep.subr.mxu0 0.0
      %2038 = vmatpush1.msra.mxu0 0.0
      %2039 = vmatprep.subr.mxu0 0.0
      %2040 = vmatpush1.msra.mxu0 0.0
      %2041 = vmatprep.subr.mxu0 0.0
      %2042 = vmatpush1.msra.mxu0 0.0
      %2043 = vmatprep.subr.mxu0 0.0
      %2044 = vmatpush1.msra.mxu0 0.0
      %2045 = vmatprep.subr.mxu0 0.0
      %2046 = vmatpush1.msra.mxu0 0.0
      %2047 = vmatprep.subr.mxu0 0.0
      %2048 = vmatpush1.msra.mxu0 0.0
      %2049 = vmatprep.subr.mxu0 0.0
      %2050 = vmatpush1.msra.mxu0 0.0
      %2051 = vmatprep.subr.mxu0 0.0
      %2052 = vmatpush1.msra.mxu0 0.0
      %2053 = vmatprep.subr.mxu0 0.0
      %2054 = vmatpush1.msra.mxu0 0.0
      %2055 = vmatprep.subr.mxu0 0.0
      %2056 = vmatpush1.msra.mxu0 0.0
      %2057 = vmatprep.subr.mxu0 0.0
      %2058 = vmatpush1.msra.mxu0 0.0
      %2059 = vmatprep.subr.mxu0 0.0
      %2060 = vmatpush1.msra.mxu0 0.0
      %2061 = vmatprep.subr.mxu0 0.0
      %2062 = vmatpush1.msra.mxu0 0.0
      %2063 = vmatprep.subr.mxu0 0.0
      %2064 = vmatpush1.msra.mxu0 0.0
      %2065 = vmatprep.subr.mxu0 0.0
      %2066 = vmatpush1.msra.mxu0 0.0
      %2067 = vmatprep.subr.mxu0 0.0
      %2068 = vmatpush1.msra.mxu0 0.0
      %2069 = vmatprep.subr.mxu0 0.0
      %2070 = vmatpush1.msra.mxu0 0.0
      %2071 = vmatprep.subr.mxu0 0.0
      %2072 = vmatpush1.msra.mxu0 0.0
      %2073 = vmatprep.subr.mxu0 0.0
      %2074 = vmatpush1.msra.mxu0 0.0
      %2075 = vmatprep.subr.mxu0 0.0
      %2076 = vmatpush1.msra.mxu0 0.0
      %2077 = vmatprep.subr.mxu0 0.0
      %2078 = vmatpush1.msra.mxu0 0.0
      %2079 = vmatprep.subr.mxu0 0.0
      %2080 = vmatpush1.msra.mxu0 0.0
      %2081 = vmatprep.subr.mxu0 0.0
      %2082 = vmatpush1.msra.mxu0 0.0
      %2083 = vmatprep.subr.mxu0 0.0
      %2084 = vmatpush1.msra.mxu0 0.0
      %2085 = vmatprep.subr.mxu0 0.0
      %2086 = vmatpush1.msra.mxu0 0.0
      %2087 = vmatprep.subr.mxu0 0.0
      %2088 = vmatpush1.msra.mxu0 0.0
      %2089 = vmatprep.subr.mxu0 0.0
      %2090 = vmatpush1.msra.mxu0 0.0
      %2091 = vmatprep.subr.mxu0 0.0
      %2092 = vmatpush1.msra.mxu0 0.0
      %2093 = vmatprep.mubr.f32.mxu0 0.0
      %2094 = vmatmul.mubr.f32.gmra.mrb[0].mxu0 %v1931
      %v2095 = vpop.f32.mrb[0].mxu0
      %v2096 = vadd.f32 0.0, %v2095
      %v2097 = vpop.f32.mrb[0].mxu0
      %2098 = vmatprep.mubr.f32.mxu0 0.0
      %2099 = vmatmul.mubr.f32.gmra.mrb[0].mxu0 %v1934
      %v2100 = vpop.f32.mrb[0].mxu0
      %v2101 = vadd.f32 0.0, %v2100
      %v2102 = vpop.f32.mrb[0].mxu0
      %2103 = vmatprep.mubr.f32.mxu0 0.0
      %2104 = vmatmul.mubr.f32.gmra.mrb[0].mxu0 %v1937
      %v2105 = vpop.f32.mrb[0].mxu0
      %v2106 = vadd.f32 0.0, %v2105
      %v2107 = vpop.f32.mrb[0].mxu0
      %2108 = vmatprep.mubr.f32.mxu0 0.0
      %2109 = vmatmul.mubr.f32.gmra.mrb[0].mxu0 %v1940
      %v2110 = vpop.f32.mrb[0].mxu0
      %v2111 = vadd.f32 0.0, %v2110
      %v2112 = vpop.f32.mrb[0].mxu0
      %2113 = vmatprep.mubr.f32.mxu0 0.0
      %2114 = vmatmul.mubr.f32.gmra.mrb[0].mxu0 %v1943
      %v2115 = vpop.f32.mrb[0].mxu0
      %v2116 = vadd.f32 0.0, %v2115
      %v2117 = vpop.f32.mrb[0].mxu0
      %2118 = vmatprep.mubr.f32.mxu0 0.0
      %2119 = vmatmul.mubr.f32.gmra.mrb[0].mxu0 %v1946
      %v2120 = vpop.f32.mrb[0].mxu0
      %v2121 = vadd.f32 0.0, %v2120
      %v2122 = vpop.f32.mrb[0].mxu0
      %2123 = vmatprep.mubr.f32.mxu0 0.0
      %2124 = vmatmul.mubr.f32.gmra.mrb[0].mxu0 %v1949
      %v2125 = vpop.f32.mrb[0].mxu0
      %v2126 = vadd.f32 0.0, %v2125
      %v2127 = vpop.f32.mrb[0].mxu0
      %2128 = vmatprep.mubr.f32.mxu0 0.0
      %2129 = vmatmul.mubr.f32.gmra.mrb[0].mxu0 %v1952
      %v2130 = vpop.f32.mrb[0].mxu0
      %v2131 = vadd.f32 0.0, %v2130
      %v2132 = vpop.f32.mrb[0].mxu0
      %2133 = vmatprep.mubr.f32.mxu0 0.0
      %2134 = vmatmul.mubr.f32.gmra.mrb[0].mxu0 %v1955
      %v2135 = vpop.f32.mrb[0].mxu0
      %v2136 = vadd.f32 0.0, %v2135
      %v2137 = vpop.f32.mrb[0].mxu0
      %2138 = vmatprep.mubr.f32.mxu0 0.0
      %2139 = vmatmul.mubr.f32.gmra.mrb[0].mxu0 %v1958
      %v2140 = vpop.f32.mrb[0].mxu0
      %v2141 = vadd.f32 0.0, %v2140
      %v2142 = vpop.f32.mrb[0].mxu0
      %2143 = vmatprep.mubr.f32.mxu0 0.0
      %2144 = vmatmul.mubr.f32.gmra.mrb[0].mxu0 %v1961
      %v2145 = vpop.f32.mrb[0].mxu0
      %v2146 = vadd.f32 0.0, %v2145
      %v2147 = vpop.f32.mrb[0].mxu0
      %2148 = vmatprep.mubr.f32.mxu0 0.0
      %2149 = vmatmul.mubr.f32.gmra.mrb[0].mxu0 %v1964
      %v2150 = vpop.f32.mrb[0].mxu0
      %v2151 = vadd.f32 0.0, %v2150
      %v2152 = vpop.f32.mrb[0].mxu0
      %2153 = vmatprep.mubr.f32.mxu0 0.0
      %2154 = vmatmul.mubr.f32.gmra.mrb[0].mxu0 %v1967
      %v2155 = vpop.f32.mrb[0].mxu0
      %v2156 = vadd.f32 0.0, %v2155
      %v2157 = vpop.f32.mrb[0].mxu0
      %2158 = vmatprep.mubr.f32.mxu0 0.0
      %2159 = vmatmul.mubr.f32.gmra.mrb[0].mxu0 %v1970
      %v2160 = vpop.f32.mrb[0].mxu0
      %v2161 = vadd.f32 0.0, %v2160
      %v2162 = vpop.f32.mrb[0].mxu0
      %2163 = vmatprep.mubr.f32.mxu0 0.0
      %2164 = vmatmul.mubr.f32.gmra.mrb[0].mxu0 %v1973
      %v2165 = vpop.f32.mrb[0].mxu0
      %v2166 = vadd.f32 0.0, %v2165
      %v2167 = vpop.f32.mrb[0].mxu0
      %2168 = vmatprep.mubr.f32.mxu0 0.0
      %2169 = vmatmul.mubr.f32.gmra.mrb[0].mxu0 %v1976
      %v2170 = vpop.f32.mrb[0].mxu0
      %v2171 = vadd.f32 0.0, %v2170
      %v2172 = vpop.f32.mrb[0].mxu0
      %2173 = vmatprep.mubr.f32.mxu0 0.0
      %2174 = vmatmul.mubr.f32.gmra.mrb[0].mxu0 %v1979
      %v2175 = vpop.f32.mrb[0].mxu0
      %v2176 = vadd.f32 0.0, %v2175
      %v2177 = vpop.f32.mrb[0].mxu0
      %2178 = vmatprep.mubr.f32.mxu0 0.0
      %2179 = vmatmul.mubr.f32.gmra.mrb[0].mxu0 %v1982
      %v2180 = vpop.f32.mrb[0].mxu0
      %v2181 = vadd.f32 0.0, %v2180
      %v2182 = vpop.f32.mrb[0].mxu0
      %2183 = vmatprep.mubr.f32.mxu0 0.0
      %2184 = vmatmul.mubr.f32.gmra.mrb[0].mxu0 %v1985
      %v2185 = vpop.f32.mrb[0].mxu0
      %v2186 = vadd.f32 0.0, %v2185
      %v2187 = vpop.f32.mrb[0].mxu0
      %2188 = vmatprep.mubr.f32.mxu0 0.0
      %2189 = vmatmul.mubr.f32.gmra.mrb[0].mxu0 %v1988
      %v2190 = vpop.f32.mrb[0].mxu0
      %v2191 = vadd.f32 0.0, %v2190
      %v2192 = vpop.f32.mrb[0].mxu0
      %2193 = vmatprep.mubr.f32.mxu0 0.0
      %2194 = vmatmul.mubr.f32.gmra.mrb[0].mxu0 %v1991
      %v2195 = vpop.f32.mrb[0].mxu0
      %v2196 = vadd.f32 0.0, %v2195
      %v2197 = vpop.f32.mrb[0].mxu0
      %2198 = vmatprep.mubr.f32.mxu0 0.0
      %2199 = vmatmul.mubr.f32.gmra.mrb[0].mxu0 %v1994
      %v2200 = vpop.f32.mrb[0].mxu0
      %v2201 = vadd.f32 0.0, %v2200
      %v2202 = vpop.f32.mrb[0].mxu0
      %2203 = vmatprep.mubr.f32.mxu0 0.0
      %2204 = vmatmul.mubr.f32.gmra.mrb[0].mxu0 %v1997
      %v2205 = vpop.f32.mrb[0].mxu0
      %v2206 = vadd.f32 0.0, %v2205
      %v2207 = vpop.f32.mrb[0].mxu0
      %2208 = vmatprep.mubr.f32.mxu0 0.0
      %2209 = vmatmul.mubr.f32.gmra.mrb[0].mxu0 %v2000
      %v2210 = vpop.f32.mrb[0].mxu0
      %v2211 = vadd.f32 0.0, %v2210
      %v2212 = vpop.f32.mrb[0].mxu0
      %2213 = vmatprep.mubr.f32.mxu0 0.0
      %2214 = vmatmul.mubr.f32.gmra.mrb[0].mxu0 %v2003
      %v2215 = vpop.f32.mrb[0].mxu0
      %v2216 = vadd.f32 0.0, %v2215
      %v2217 = vpop.f32.mrb[0].mxu0
      %2218 = vmatprep.mubr.f32.mxu0 0.0
      %2219 = vmatmul.mubr.f32.gmra.mrb[0].mxu0 %v2006
      %v2220 = vpop.f32.mrb[0].mxu0
      %v2221 = vadd.f32 0.0, %v2220
      %v2222 = vpop.f32.mrb[0].mxu0
      %2223 = vmatprep.mubr.f32.mxu0 0.0
      %2224 = vmatmul.mubr.f32.gmra.mrb[0].mxu0 %v2009
      %v2225 = vpop.f32.mrb[0].mxu0
      %v2226 = vadd.f32 0.0, %v2225
      %v2227 = vpop.f32.mrb[0].mxu0
      %2228 = vmatprep.mubr.f32.mxu0 0.0
      %2229 = vmatmul.mubr.f32.gmra.mrb[0].mxu0 %v2012
      %v2230 = vpop.f32.mrb[0].mxu0
      %v2231 = vadd.f32 0.0, %v2230
      %v2232 = vpop.f32.mrb[0].mxu0
      %2233 = vmatprep.mubr.f32.mxu0 0.0
      %2234 = vmatmul.mubr.f32.gmra.mrb[0].mxu0 %v2015
      %v2235 = vpop.f32.mrb[0].mxu0
      %v2236 = vadd.f32 0.0, %v2235
      %v2237 = vpop.f32.mrb[0].mxu0
      %2238 = vmatprep.mubr.f32.mxu0 0.0
      %2239 = vmatmul.mubr.f32.gmra.mrb[0].mxu0 %v2018
      %v2240 = vpop.f32.mrb[0].mxu0
      %v2241 = vadd.f32 0.0, %v2240
      %v2242 = vpop.f32.mrb[0].mxu0
      %2243 = vmatprep.mubr.f32.mxu0 0.0
      %2244 = vmatmul.mubr.f32.gmra.mrb[0].mxu0 %v2021
      %v2245 = vpop.f32.mrb[0].mxu0
      %v2246 = vadd.f32 0.0, %v2245
      %v2247 = vpop.f32.mrb[0].mxu0
      %2248 = vmatprep.mubr.f32.mxu0 0.0
      %2249 = vmatmul.mubr.f32.gmra.mrb[0].mxu0 %v2024
      %v2250 = vpop.f32.mrb[0].mxu0
      %v2251 = vadd.f32 0.0, %v2250
      %v2252 = vpop.f32.mrb[0].mxu0
      %2253 = vdwg.mxu0
      %v2254 = vadd.f32 %v1864, %v2096
      %v2255 = vadd.f32 %v1865, %v2101
      %v2256 = vadd.f32 %v1866, %v2106
      %v2257 = vadd.f32 %v1867, %v2111
      %v2258 = vadd.f32 %v1868, %v2116
      %v2259 = vadd.f32 %v1869, %v2121
      %v2260 = vadd.f32 %v1870, %v2126
      %v2261 = vadd.f32 %v1871, %v2131
      %v2262 = vadd.f32 %v1872, %v2136
      %v2263 = vadd.f32 %v1873, %v2141
      %v2264 = vadd.f32 %v1874, %v2146
      %v2265 = vadd.f32 %v1875, %v2151
      %v2266 = vadd.f32 %v1876, %v2156
      %v2267 = vadd.f32 %v1877, %v2161
      %v2268 = vadd.f32 %v1878, %v2166
      %v2269 = vadd.f32 %v1879, %v2171
      %v2270 = vadd.f32 %v1880, %v2176
      %v2271 = vadd.f32 %v1881, %v2181
      %v2272 = vadd.f32 %v1882, %v2186
      %v2273 = vadd.f32 %v1883, %v2191
      %v2274 = vadd.f32 %v1884, %v2196
      %v2275 = vadd.f32 %v1885, %v2201
      %v2276 = vadd.f32 %v1886, %v2206
      %v2277 = vadd.f32 %v1887, %v2211
      %v2278 = vadd.f32 %v1888, %v2216
      %v2279 = vadd.f32 %v1889, %v2221
      %v2280 = vadd.f32 %v1890, %v2226
      %v2281 = vadd.f32 %v1891, %v2231
      %v2282 = vadd.f32 %v1892, %v2236
      %v2283 = vadd.f32 %v1893, %v2241
      %v2284 = vadd.f32 %v1894, %v2246
      %v2285 = vadd.f32 %v1895, %v2251
      %v2286 = vld [vmem:[%s367 + $0x2] sm:$0xff]
      %v2287 = vld [vmem:[%s367 + $0xa] sm:$0xff]
      %v2288 = vld [vmem:[%s367 + $0x1a] sm:$0xff]
      %v2289 = vld [vmem:[%s367 + $0x22] sm:$0xff]
      %v2290 = vld [vmem:[%s367 + $0x32] sm:$0xff]
      %v2291 = vld [vmem:[%s367 + $0x3a] sm:$0xff]
      %v2292 = vld [vmem:[%s367 + $0x4a] sm:$0xff]
      %v2293 = vld [vmem:[%s367 + $0x52] sm:$0xff]
      %v2294 = vld [vmem:[%s367 + $0x62] sm:$0xff]
      %v2295 = vld [vmem:[%s367 + $0x6a] sm:$0xff]
      %v2296 = vld [vmem:[%s367 + $0x7a] sm:$0xff]
      %v2297 = vld [vmem:[%s367 + $0x82] sm:$0xff]
      %v2298 = vld [vmem:[%s367 + $0x92] sm:$0xff]
      %v2299 = vld [vmem:[%s367 + $0x9a] sm:$0xff]
      %v2300 = vld [vmem:[%s367 + $0xaa] sm:$0xff]
      %v2301 = vld [vmem:[%s367 + $0xb2] sm:$0xff]
      %v2302 = vld [vmem:[%s367 + $0xc2] sm:$0xff]
      %v2303 = vld [vmem:[%s367 + $0xca] sm:$0xff]
      %v2304 = vld [vmem:[%s367 + $0xda] sm:$0xff]
      %v2305 = vld [vmem:[%s367 + $0xe2] sm:$0xff]
      %v2306 = vld [vmem:[%s367 + $0xf2] sm:$0xff]
      %v2307 = vld [vmem:[%s367 + $0xfa] sm:$0xff]
      %v2308 = vld [vmem:[%s367 + $0x10a] sm:$0xff]
      %v2309 = vld [vmem:[%s367 + $0x112] sm:$0xff]
      %v2310 = vld [vmem:[%s367 + $0x122] sm:$0xff]
      %v2311 = vld [vmem:[%s367 + $0x12a] sm:$0xff]
      %v2312 = vld [vmem:[%s367 + $0x13a] sm:$0xff]
      %v2313 = vld [vmem:[%s367 + $0x142] sm:$0xff]
      %v2314 = vld [vmem:[%s367 + $0x152] sm:$0xff]
      %v2315 = vld [vmem:[%s367 + $0x15a] sm:$0xff]
      %v2316 = vld [vmem:[%s367 + $0x16a] sm:$0xff]
      %v2317 = vld [vmem:[%s367 + $0x172] sm:$0xff]
      %s2318 = scalar_lea.vmem %s1, 20
      %v2319 = vld [vmem:[%s2318] sm:$0xf]
      %v2321 = vsel %vm225, %v2286, 0
      %v2324 = vsel %vm225, %v2287, 0
      %v2327 = vsel %vm225, %v2288, 0
      %v2330 = vsel %vm225, %v2289, 0
      %v2333 = vsel %vm225, %v2290, 0
      %v2336 = vsel %vm225, %v2291, 0
      %v2339 = vsel %vm225, %v2292, 0
      %v2342 = vsel %vm225, %v2293, 0
      %v2345 = vsel %vm225, %v2294, 0
      %v2348 = vsel %vm225, %v2295, 0
      %v2351 = vsel %vm225, %v2296, 0
      %v2354 = vsel %vm225, %v2297, 0
      %v2357 = vsel %vm225, %v2298, 0
      %v2360 = vsel %vm225, %v2299, 0
      %v2363 = vsel %vm225, %v2300, 0
      %v2366 = vsel %vm225, %v2301, 0
      %v2369 = vsel %vm225, %v2302, 0
      %v2372 = vsel %vm225, %v2303, 0
      %v2375 = vsel %vm225, %v2304, 0
      %v2378 = vsel %vm225, %v2305, 0
      %v2381 = vsel %vm225, %v2306, 0
      %v2384 = vsel %vm225, %v2307, 0
      %v2387 = vsel %vm225, %v2308, 0
      %v2390 = vsel %vm225, %v2309, 0
      %v2393 = vsel %vm225, %v2310, 0
      %v2396 = vsel %vm225, %v2311, 0
      %v2399 = vsel %vm225, %v2312, 0
      %v2402 = vsel %vm225, %v2313, 0
      %v2405 = vsel %vm225, %v2314, 0
      %v2408 = vsel %vm225, %v2315, 0
      %v2411 = vsel %vm225, %v2316, 0
      %v2414 = vsel %vm225, %v2317, 0
      %v2417 = vsel %vm563, %v2319, 0
      %2419 = vmatprep.subr.mxu0 0.0
      %2420 = vmatpush1.msra.mxu0 %v2417
      %2421 = vmatprep.subr.mxu0 0.0
      %2422 = vmatpush1.msra.mxu0 0.0
      %2423 = vmatprep.subr.mxu0 0.0
      %2424 = vmatpush1.msra.mxu0 0.0
      %2425 = vmatprep.subr.mxu0 0.0
      %2426 = vmatpush1.msra.mxu0 0.0
      %2427 = vmatprep.subr.mxu0 0.0
      %2428 = vmatpush1.msra.mxu0 0.0
      %2429 = vmatprep.subr.mxu0 0.0
      %2430 = vmatpush1.msra.mxu0 0.0
      %2431 = vmatprep.subr.mxu0 0.0
      %2432 = vmatpush1.msra.mxu0 0.0
      %2433 = vmatprep.subr.mxu0 0.0
      %2434 = vmatpush1.msra.mxu0 0.0
      %2435 = vmatprep.subr.mxu0 0.0
      %2436 = vmatpush1.msra.mxu0 0.0
      %2437 = vmatprep.subr.mxu0 0.0
      %2438 = vmatpush1.msra.mxu0 0.0
      %2439 = vmatprep.subr.mxu0 0.0
      %2440 = vmatpush1.msra.mxu0 0.0
      %2441 = vmatprep.subr.mxu0 0.0
      %2442 = vmatpush1.msra.mxu0 0.0
      %2443 = vmatprep.subr.mxu0 0.0
      %2444 = vmatpush1.msra.mxu0 0.0
      %2445 = vmatprep.subr.mxu0 0.0
      %2446 = vmatpush1.msra.mxu0 0.0
      %2447 = vmatprep.subr.mxu0 0.0
      %2448 = vmatpush1.msra.mxu0 0.0
      %2449 = vmatprep.subr.mxu0 0.0
      %2450 = vmatpush1.msra.mxu0 0.0
      %2451 = vmatprep.subr.mxu0 0.0
      %2452 = vmatpush1.msra.mxu0 0.0
      %2453 = vmatprep.subr.mxu0 0.0
      %2454 = vmatpush1.msra.mxu0 0.0
      %2455 = vmatprep.subr.mxu0 0.0
      %2456 = vmatpush1.msra.mxu0 0.0
      %2457 = vmatprep.subr.mxu0 0.0
      %2458 = vmatpush1.msra.mxu0 0.0
      %2459 = vmatprep.subr.mxu0 0.0
      %2460 = vmatpush1.msra.mxu0 0.0
      %2461 = vmatprep.subr.mxu0 0.0
      %2462 = vmatpush1.msra.mxu0 0.0
      %2463 = vmatprep.subr.mxu0 0.0
      %2464 = vmatpush1.msra.mxu0 0.0
      %2465 = vmatprep.subr.mxu0 0.0
      %2466 = vmatpush1.msra.mxu0 0.0
      %2467 = vmatprep.subr.mxu0 0.0
      %2468 = vmatpush1.msra.mxu0 0.0
      %2469 = vmatprep.subr.mxu0 0.0
      %2470 = vmatpush1.msra.mxu0 0.0
      %2471 = vmatprep.subr.mxu0 0.0
      %2472 = vmatpush1.msra.mxu0 0.0
      %2473 = vmatprep.subr.mxu0 0.0
      %2474 = vmatpush1.msra.mxu0 0.0
      %2475 = vmatprep.subr.mxu0 0.0
      %2476 = vmatpush1.msra.mxu0 0.0
      %2477 = vmatprep.subr.mxu0 0.0
      %2478 = vmatpush1.msra.mxu0 0.0
      %2479 = vmatprep.subr.mxu0 0.0
      %2480 = vmatpush1.msra.mxu0 0.0
      %2481 = vmatprep.subr.mxu0 0.0
      %2482 = vmatpush1.msra.mxu0 0.0
      %2483 = vmatprep.mubr.f32.mxu0 0.0
      %2484 = vmatmul.mubr.f32.gmra.mrb[0].mxu0 %v2321
      %v2485 = vpop.f32.mrb[0].mxu0
      %v2486 = vadd.f32 0.0, %v2485
      %v2487 = vpop.f32.mrb[0].mxu0
      %2488 = vmatprep.mubr.f32.mxu0 0.0
      %2489 = vmatmul.mubr.f32.gmra.mrb[0].mxu0 %v2324
      %v2490 = vpop.f32.mrb[0].mxu0
      %v2491 = vadd.f32 0.0, %v2490
      %v2492 = vpop.f32.mrb[0].mxu0
      %2493 = vmatprep.mubr.f32.mxu0 0.0
      %2494 = vmatmul.mubr.f32.gmra.mrb[0].mxu0 %v2327
      %v2495 = vpop.f32.mrb[0].mxu0
      %v2496 = vadd.f32 0.0, %v2495
      %v2497 = vpop.f32.mrb[0].mxu0
      %2498 = vmatprep.mubr.f32.mxu0 0.0
      %2499 = vmatmul.mubr.f32.gmra.mrb[0].mxu0 %v2330
      %v2500 = vpop.f32.mrb[0].mxu0
      %v2501 = vadd.f32 0.0, %v2500
      %v2502 = vpop.f32.mrb[0].mxu0
      %2503 = vmatprep.mubr.f32.mxu0 0.0
      %2504 = vmatmul.mubr.f32.gmra.mrb[0].mxu0 %v2333
      %v2505 = vpop.f32.mrb[0].mxu0
      %v2506 = vadd.f32 0.0, %v2505
      %v2507 = vpop.f32.mrb[0].mxu0
      %2508 = vmatprep.mubr.f32.mxu0 0.0
      %2509 = vmatmul.mubr.f32.gmra.mrb[0].mxu0 %v2336
      %v2510 = vpop.f32.mrb[0].mxu0
      %v2511 = vadd.f32 0.0, %v2510
      %v2512 = vpop.f32.mrb[0].mxu0
      %2513 = vmatprep.mubr.f32.mxu0 0.0
      %2514 = vmatmul.mubr.f32.gmra.mrb[0].mxu0 %v2339
      %v2515 = vpop.f32.mrb[0].mxu0
      %v2516 = vadd.f32 0.0, %v2515
      %v2517 = vpop.f32.mrb[0].mxu0
      %2518 = vmatprep.mubr.f32.mxu0 0.0
      %2519 = vmatmul.mubr.f32.gmra.mrb[0].mxu0 %v2342
      %v2520 = vpop.f32.mrb[0].mxu0
      %v2521 = vadd.f32 0.0, %v2520
      %v2522 = vpop.f32.mrb[0].mxu0
      %2523 = vmatprep.mubr.f32.mxu0 0.0
      %2524 = vmatmul.mubr.f32.gmra.mrb[0].mxu0 %v2345
      %v2525 = vpop.f32.mrb[0].mxu0
      %v2526 = vadd.f32 0.0, %v2525
      %v2527 = vpop.f32.mrb[0].mxu0
      %2528 = vmatprep.mubr.f32.mxu0 0.0
      %2529 = vmatmul.mubr.f32.gmra.mrb[0].mxu0 %v2348
      %v2530 = vpop.f32.mrb[0].mxu0
      %v2531 = vadd.f32 0.0, %v2530
      %v2532 = vpop.f32.mrb[0].mxu0
      %2533 = vmatprep.mubr.f32.mxu0 0.0
      %2534 = vmatmul.mubr.f32.gmra.mrb[0].mxu0 %v2351
      %v2535 = vpop.f32.mrb[0].mxu0
      %v2536 = vadd.f32 0.0, %v2535
      %v2537 = vpop.f32.mrb[0].mxu0
      %2538 = vmatprep.mubr.f32.mxu0 0.0
      %2539 = vmatmul.mubr.f32.gmra.mrb[0].mxu0 %v2354
      %v2540 = vpop.f32.mrb[0].mxu0
      %v2541 = vadd.f32 0.0, %v2540
      %v2542 = vpop.f32.mrb[0].mxu0
      %2543 = vmatprep.mubr.f32.mxu0 0.0
      %2544 = vmatmul.mubr.f32.gmra.mrb[0].mxu0 %v2357
      %v2545 = vpop.f32.mrb[0].mxu0
      %v2546 = vadd.f32 0.0, %v2545
      %v2547 = vpop.f32.mrb[0].mxu0
      %2548 = vmatprep.mubr.f32.mxu0 0.0
      %2549 = vmatmul.mubr.f32.gmra.mrb[0].mxu0 %v2360
      %v2550 = vpop.f32.mrb[0].mxu0
      %v2551 = vadd.f32 0.0, %v2550
      %v2552 = vpop.f32.mrb[0].mxu0
      %2553 = vmatprep.mubr.f32.mxu0 0.0
      %2554 = vmatmul.mubr.f32.gmra.mrb[0].mxu0 %v2363
      %v2555 = vpop.f32.mrb[0].mxu0
      %v2556 = vadd.f32 0.0, %v2555
      %v2557 = vpop.f32.mrb[0].mxu0
      %2558 = vmatprep.mubr.f32.mxu0 0.0
      %2559 = vmatmul.mubr.f32.gmra.mrb[0].mxu0 %v2366
      %v2560 = vpop.f32.mrb[0].mxu0
      %v2561 = vadd.f32 0.0, %v2560
      %v2562 = vpop.f32.mrb[0].mxu0
      %2563 = vmatprep.mubr.f32.mxu0 0.0
      %2564 = vmatmul.mubr.f32.gmra.mrb[0].mxu0 %v2369
      %v2565 = vpop.f32.mrb[0].mxu0
      %v2566 = vadd.f32 0.0, %v2565
      %v2567 = vpop.f32.mrb[0].mxu0
      %2568 = vmatprep.mubr.f32.mxu0 0.0
      %2569 = vmatmul.mubr.f32.gmra.mrb[0].mxu0 %v2372
      %v2570 = vpop.f32.mrb[0].mxu0
      %v2571 = vadd.f32 0.0, %v2570
      %v2572 = vpop.f32.mrb[0].mxu0
      %2573 = vmatprep.mubr.f32.mxu0 0.0
      %2574 = vmatmul.mubr.f32.gmra.mrb[0].mxu0 %v2375
      %v2575 = vpop.f32.mrb[0].mxu0
      %v2576 = vadd.f32 0.0, %v2575
      %v2577 = vpop.f32.mrb[0].mxu0
      %2578 = vmatprep.mubr.f32.mxu0 0.0
      %2579 = vmatmul.mubr.f32.gmra.mrb[0].mxu0 %v2378
      %v2580 = vpop.f32.mrb[0].mxu0
      %v2581 = vadd.f32 0.0, %v2580
      %v2582 = vpop.f32.mrb[0].mxu0
      %2583 = vmatprep.mubr.f32.mxu0 0.0
      %2584 = vmatmul.mubr.f32.gmra.mrb[0].mxu0 %v2381
      %v2585 = vpop.f32.mrb[0].mxu0
      %v2586 = vadd.f32 0.0, %v2585
      %v2587 = vpop.f32.mrb[0].mxu0
      %2588 = vmatprep.mubr.f32.mxu0 0.0
      %2589 = vmatmul.mubr.f32.gmra.mrb[0].mxu0 %v2384
      %v2590 = vpop.f32.mrb[0].mxu0
      %v2591 = vadd.f32 0.0, %v2590
      %v2592 = vpop.f32.mrb[0].mxu0
      %2593 = vmatprep.mubr.f32.mxu0 0.0
      %2594 = vmatmul.mubr.f32.gmra.mrb[0].mxu0 %v2387
      %v2595 = vpop.f32.mrb[0].mxu0
      %v2596 = vadd.f32 0.0, %v2595
      %v2597 = vpop.f32.mrb[0].mxu0
      %2598 = vmatprep.mubr.f32.mxu0 0.0
      %2599 = vmatmul.mubr.f32.gmra.mrb[0].mxu0 %v2390
      %v2600 = vpop.f32.mrb[0].mxu0
      %v2601 = vadd.f32 0.0, %v2600
      %v2602 = vpop.f32.mrb[0].mxu0
      %2603 = vmatprep.mubr.f32.mxu0 0.0
      %2604 = vmatmul.mubr.f32.gmra.mrb[0].mxu0 %v2393
      %v2605 = vpop.f32.mrb[0].mxu0
      %v2606 = vadd.f32 0.0, %v2605
      %v2607 = vpop.f32.mrb[0].mxu0
      %2608 = vmatprep.mubr.f32.mxu0 0.0
      %2609 = vmatmul.mubr.f32.gmra.mrb[0].mxu0 %v2396
      %v2610 = vpop.f32.mrb[0].mxu0
      %v2611 = vadd.f32 0.0, %v2610
      %v2612 = vpop.f32.mrb[0].mxu0
      %2613 = vmatprep.mubr.f32.mxu0 0.0
      %2614 = vmatmul.mubr.f32.gmra.mrb[0].mxu0 %v2399
      %v2615 = vpop.f32.mrb[0].mxu0
      %v2616 = vadd.f32 0.0, %v2615
      %v2617 = vpop.f32.mrb[0].mxu0
      %2618 = vmatprep.mubr.f32.mxu0 0.0
      %2619 = vmatmul.mubr.f32.gmra.mrb[0].mxu0 %v2402
      %v2620 = vpop.f32.mrb[0].mxu0
      %v2621 = vadd.f32 0.0, %v2620
      %v2622 = vpop.f32.mrb[0].mxu0
      %2623 = vmatprep.mubr.f32.mxu0 0.0
      %2624 = vmatmul.mubr.f32.gmra.mrb[0].mxu0 %v2405
      %v2625 = vpop.f32.mrb[0].mxu0
      %v2626 = vadd.f32 0.0, %v2625
      %v2627 = vpop.f32.mrb[0].mxu0
      %2628 = vmatprep.mubr.f32.mxu0 0.0
      %2629 = vmatmul.mubr.f32.gmra.mrb[0].mxu0 %v2408
      %v2630 = vpop.f32.mrb[0].mxu0
      %v2631 = vadd.f32 0.0, %v2630
      %v2632 = vpop.f32.mrb[0].mxu0
      %2633 = vmatprep.mubr.f32.mxu0 0.0
      %2634 = vmatmul.mubr.f32.gmra.mrb[0].mxu0 %v2411
      %v2635 = vpop.f32.mrb[0].mxu0
      %v2636 = vadd.f32 0.0, %v2635
      %v2637 = vpop.f32.mrb[0].mxu0
      %2638 = vmatprep.mubr.f32.mxu0 0.0
      %2639 = vmatmul.mubr.f32.gmra.mrb[0].mxu0 %v2414
      %v2640 = vpop.f32.mrb[0].mxu0
      %v2641 = vadd.f32 0.0, %v2640
      %v2642 = vpop.f32.mrb[0].mxu0
      %2643 = vdwg.mxu0
      %v2644 = vadd.f32 %v2254, %v2486
      %v2645 = vadd.f32 %v2255, %v2491
      %v2646 = vadd.f32 %v2256, %v2496
      %v2647 = vadd.f32 %v2257, %v2501
      %v2648 = vadd.f32 %v2258, %v2506
      %v2649 = vadd.f32 %v2259, %v2511
      %v2650 = vadd.f32 %v2260, %v2516
      %v2651 = vadd.f32 %v2261, %v2521
      %v2652 = vadd.f32 %v2262, %v2526
      %v2653 = vadd.f32 %v2263, %v2531
      %v2654 = vadd.f32 %v2264, %v2536
      %v2655 = vadd.f32 %v2265, %v2541
      %v2656 = vadd.f32 %v2266, %v2546
      %v2657 = vadd.f32 %v2267, %v2551
      %v2658 = vadd.f32 %v2268, %v2556
      %v2659 = vadd.f32 %v2269, %v2561
      %v2660 = vadd.f32 %v2270, %v2566
      %v2661 = vadd.f32 %v2271, %v2571
      %v2662 = vadd.f32 %v2272, %v2576
      %v2663 = vadd.f32 %v2273, %v2581
      %v2664 = vadd.f32 %v2274, %v2586
      %v2665 = vadd.f32 %v2275, %v2591
      %v2666 = vadd.f32 %v2276, %v2596
      %v2667 = vadd.f32 %v2277, %v2601
      %v2668 = vadd.f32 %v2278, %v2606
      %v2669 = vadd.f32 %v2279, %v2611
      %v2670 = vadd.f32 %v2280, %v2616
      %v2671 = vadd.f32 %v2281, %v2621
      %v2672 = vadd.f32 %v2282, %v2626
      %v2673 = vadd.f32 %v2283, %v2631
      %v2674 = vadd.f32 %v2284, %v2636
      %v2675 = vadd.f32 %v2285, %v2641
      %s2676 = scalar_lea.vmem [#allocation2], 48
      %v2677 = vld [vmem:[%s2676] sm:$0xff]
      %v2678 = vld [vmem:[%s2676 + $0x8] sm:$0xff]
      %v2679 = vld [vmem:[%s2676 + $0x18] sm:$0xff]
      %v2680 = vld [vmem:[%s2676 + $0x20] sm:$0xff]
      %v2681 = vld [vmem:[%s2676 + $0x30] sm:$0xff]
      %v2682 = vld [vmem:[%s2676 + $0x38] sm:$0xff]
      %v2683 = vld [vmem:[%s2676 + $0x48] sm:$0xff]
      %v2684 = vld [vmem:[%s2676 + $0x50] sm:$0xff]
      %v2685 = vld [vmem:[%s2676 + $0x60] sm:$0xff]
      %v2686 = vld [vmem:[%s2676 + $0x68] sm:$0xff]
      %v2687 = vld [vmem:[%s2676 + $0x78] sm:$0xff]
      %v2688 = vld [vmem:[%s2676 + $0x80] sm:$0xff]
      %v2689 = vld [vmem:[%s2676 + $0x90] sm:$0xff]
      %v2690 = vld [vmem:[%s2676 + $0x98] sm:$0xff]
      %v2691 = vld [vmem:[%s2676 + $0xa8] sm:$0xff]
      %v2692 = vld [vmem:[%s2676 + $0xb0] sm:$0xff]
      %v2693 = vld [vmem:[%s2676 + $0xc0] sm:$0xff]
      %v2694 = vld [vmem:[%s2676 + $0xc8] sm:$0xff]
      %v2695 = vld [vmem:[%s2676 + $0xd8] sm:$0xff]
      %v2696 = vld [vmem:[%s2676 + $0xe0] sm:$0xff]
      %v2697 = vld [vmem:[%s2676 + $0xf0] sm:$0xff]
      %v2698 = vld [vmem:[%s2676 + $0xf8] sm:$0xff]
      %v2699 = vld [vmem:[%s2676 + $0x108] sm:$0xff]
      %v2700 = vld [vmem:[%s2676 + $0x110] sm:$0xff]
      %v2701 = vld [vmem:[%s2676 + $0x120] sm:$0xff]
      %v2702 = vld [vmem:[%s2676 + $0x128] sm:$0xff]
      %v2703 = vld [vmem:[%s2676 + $0x138] sm:$0xff]
      %v2704 = vld [vmem:[%s2676 + $0x140] sm:$0xff]
      %v2705 = vld [vmem:[%s2676 + $0x150] sm:$0xff]
      %v2706 = vld [vmem:[%s2676 + $0x158] sm:$0xff]
      %v2707 = vld [vmem:[%s2676 + $0x168] sm:$0xff]
      %v2708 = vld [vmem:[%s2676 + $0x170] sm:$0xff]
      %s2709 = scalar_lea.vmem %s1, 24
      %v2710 = vld [vmem:[%s2709] sm:$0xf]
      %v2712 = vsel %vm225, %v2677, 0
      %v2715 = vsel %vm225, %v2678, 0
      %v2718 = vsel %vm225, %v2679, 0
      %v2721 = vsel %vm225, %v2680, 0
      %v2724 = vsel %vm225, %v2681, 0
      %v2727 = vsel %vm225, %v2682, 0
      %v2730 = vsel %vm225, %v2683, 0
      %v2733 = vsel %vm225, %v2684, 0
      %v2736 = vsel %vm225, %v2685, 0
      %v2739 = vsel %vm225, %v2686, 0
      %v2742 = vsel %vm225, %v2687, 0
      %v2745 = vsel %vm225, %v2688, 0
      %v2748 = vsel %vm225, %v2689, 0
      %v2751 = vsel %vm225, %v2690, 0
      %v2754 = vsel %vm225, %v2691, 0
      %v2757 = vsel %vm225, %v2692, 0
      %v2760 = vsel %vm225, %v2693, 0
      %v2763 = vsel %vm225, %v2694, 0
      %v2766 = vsel %vm225, %v2695, 0
      %v2769 = vsel %vm225, %v2696, 0
      %v2772 = vsel %vm225, %v2697, 0
      %v2775 = vsel %vm225, %v2698, 0
      %v2778 = vsel %vm225, %v2699, 0
      %v2781 = vsel %vm225, %v2700, 0
      %v2784 = vsel %vm225, %v2701, 0
      %v2787 = vsel %vm225, %v2702, 0
      %v2790 = vsel %vm225, %v2703, 0
      %v2793 = vsel %vm225, %v2704, 0
      %v2796 = vsel %vm225, %v2705, 0
      %v2799 = vsel %vm225, %v2706, 0
      %v2802 = vsel %vm225, %v2707, 0
      %v2805 = vsel %vm225, %v2708, 0
      %v2808 = vsel %vm563, %v2710, 0
      %2810 = vmatprep.subr.mxu0 0.0
      %2811 = vmatpush1.msra.mxu0 %v2808
      %2812 = vmatprep.subr.mxu0 0.0
      %2813 = vmatpush1.msra.mxu0 0.0
      %2814 = vmatprep.subr.mxu0 0.0
      %2815 = vmatpush1.msra.mxu0 0.0
      %2816 = vmatprep.subr.mxu0 0.0
      %2817 = vmatpush1.msra.mxu0 0.0
      %2818 = vmatprep.subr.mxu0 0.0
      %2819 = vmatpush1.msra.mxu0 0.0
      %2820 = vmatprep.subr.mxu0 0.0
      %2821 = vmatpush1.msra.mxu0 0.0
      %2822 = vmatprep.subr.mxu0 0.0
      %2823 = vmatpush1.msra.mxu0 0.0
      %2824 = vmatprep.subr.mxu0 0.0
      %2825 = vmatpush1.msra.mxu0 0.0
      %2826 = vmatprep.subr.mxu0 0.0
      %2827 = vmatpush1.msra.mxu0 0.0
      %2828 = vmatprep.subr.mxu0 0.0
      %2829 = vmatpush1.msra.mxu0 0.0
      %2830 = vmatprep.subr.mxu0 0.0
      %2831 = vmatpush1.msra.mxu0 0.0
      %2832 = vmatprep.subr.mxu0 0.0
      %2833 = vmatpush1.msra.mxu0 0.0
      %2834 = vmatprep.subr.mxu0 0.0
      %2835 = vmatpush1.msra.mxu0 0.0
      %2836 = vmatprep.subr.mxu0 0.0
      %2837 = vmatpush1.msra.mxu0 0.0
      %2838 = vmatprep.subr.mxu0 0.0
      %2839 = vmatpush1.msra.mxu0 0.0
      %2840 = vmatprep.subr.mxu0 0.0
      %2841 = vmatpush1.msra.mxu0 0.0
      %2842 = vmatprep.subr.mxu0 0.0
      %2843 = vmatpush1.msra.mxu0 0.0
      %2844 = vmatprep.subr.mxu0 0.0
      %2845 = vmatpush1.msra.mxu0 0.0
      %2846 = vmatprep.subr.mxu0 0.0
      %2847 = vmatpush1.msra.mxu0 0.0
      %2848 = vmatprep.subr.mxu0 0.0
      %2849 = vmatpush1.msra.mxu0 0.0
      %2850 = vmatprep.subr.mxu0 0.0
      %2851 = vmatpush1.msra.mxu0 0.0
      %2852 = vmatprep.subr.mxu0 0.0
      %2853 = vmatpush1.msra.mxu0 0.0
      %2854 = vmatprep.subr.mxu0 0.0
      %2855 = vmatpush1.msra.mxu0 0.0
      %2856 = vmatprep.subr.mxu0 0.0
      %2857 = vmatpush1.msra.mxu0 0.0
      %2858 = vmatprep.subr.mxu0 0.0
      %2859 = vmatpush1.msra.mxu0 0.0
      %2860 = vmatprep.subr.mxu0 0.0
      %2861 = vmatpush1.msra.mxu0 0.0
      %2862 = vmatprep.subr.mxu0 0.0
      %2863 = vmatpush1.msra.mxu0 0.0
      %2864 = vmatprep.subr.mxu0 0.0
      %2865 = vmatpush1.msra.mxu0 0.0
      %2866 = vmatprep.subr.mxu0 0.0
      %2867 = vmatpush1.msra.mxu0 0.0
      %2868 = vmatprep.subr.mxu0 0.0
      %2869 = vmatpush1.msra.mxu0 0.0
      %2870 = vmatprep.subr.mxu0 0.0
      %2871 = vmatpush1.msra.mxu0 0.0
      %2872 = vmatprep.subr.mxu0 0.0
      %2873 = vmatpush1.msra.mxu0 0.0
      %2874 = vmatprep.mubr.f32.mxu0 0.0
      %2875 = vmatmul.mubr.f32.gmra.mrb[0].mxu0 %v2712
      %v2876 = vpop.f32.mrb[0].mxu0
      %v2877 = vadd.f32 0.0, %v2876
      %v2878 = vpop.f32.mrb[0].mxu0
      %2879 = vmatprep.mubr.f32.mxu0 0.0
      %2880 = vmatmul.mubr.f32.gmra.mrb[0].mxu0 %v2715
      %v2881 = vpop.f32.mrb[0].mxu0
      %v2882 = vadd.f32 0.0, %v2881
      %v2883 = vpop.f32.mrb[0].mxu0
      %2884 = vmatprep.mubr.f32.mxu0 0.0
      %2885 = vmatmul.mubr.f32.gmra.mrb[0].mxu0 %v2718
      %v2886 = vpop.f32.mrb[0].mxu0
      %v2887 = vadd.f32 0.0, %v2886
      %v2888 = vpop.f32.mrb[0].mxu0
      %2889 = vmatprep.mubr.f32.mxu0 0.0
      %2890 = vmatmul.mubr.f32.gmra.mrb[0].mxu0 %v2721
      %v2891 = vpop.f32.mrb[0].mxu0
      %v2892 = vadd.f32 0.0, %v2891
      %v2893 = vpop.f32.mrb[0].mxu0
      %2894 = vmatprep.mubr.f32.mxu0 0.0
      %2895 = vmatmul.mubr.f32.gmra.mrb[0].mxu0 %v2724
      %v2896 = vpop.f32.mrb[0].mxu0
      %v2897 = vadd.f32 0.0, %v2896
      %v2898 = vpop.f32.mrb[0].mxu0
      %2899 = vmatprep.mubr.f32.mxu0 0.0
      %2900 = vmatmul.mubr.f32.gmra.mrb[0].mxu0 %v2727
      %v2901 = vpop.f32.mrb[0].mxu0
      %v2902 = vadd.f32 0.0, %v2901
      %v2903 = vpop.f32.mrb[0].mxu0
      %2904 = vmatprep.mubr.f32.mxu0 0.0
      %2905 = vmatmul.mubr.f32.gmra.mrb[0].mxu0 %v2730
      %v2906 = vpop.f32.mrb[0].mxu0
      %v2907 = vadd.f32 0.0, %v2906
      %v2908 = vpop.f32.mrb[0].mxu0
      %2909 = vmatprep.mubr.f32.mxu0 0.0
      %2910 = vmatmul.mubr.f32.gmra.mrb[0].mxu0 %v2733
      %v2911 = vpop.f32.mrb[0].mxu0
      %v2912 = vadd.f32 0.0, %v2911
      %v2913 = vpop.f32.mrb[0].mxu0
      %2914 = vmatprep.mubr.f32.mxu0 0.0
      %2915 = vmatmul.mubr.f32.gmra.mrb[0].mxu0 %v2736
      %v2916 = vpop.f32.mrb[0].mxu0
      %v2917 = vadd.f32 0.0, %v2916
      %v2918 = vpop.f32.mrb[0].mxu0
      %2919 = vmatprep.mubr.f32.mxu0 0.0
      %2920 = vmatmul.mubr.f32.gmra.mrb[0].mxu0 %v2739
      %v2921 = vpop.f32.mrb[0].mxu0
      %v2922 = vadd.f32 0.0, %v2921
      %v2923 = vpop.f32.mrb[0].mxu0
      %2924 = vmatprep.mubr.f32.mxu0 0.0
      %2925 = vmatmul.mubr.f32.gmra.mrb[0].mxu0 %v2742
      %v2926 = vpop.f32.mrb[0].mxu0
      %v2927 = vadd.f32 0.0, %v2926
      %v2928 = vpop.f32.mrb[0].mxu0
      %2929 = vmatprep.mubr.f32.mxu0 0.0
      %2930 = vmatmul.mubr.f32.gmra.mrb[0].mxu0 %v2745
      %v2931 = vpop.f32.mrb[0].mxu0
      %v2932 = vadd.f32 0.0, %v2931
      %v2933 = vpop.f32.mrb[0].mxu0
      %2934 = vmatprep.mubr.f32.mxu0 0.0
      %2935 = vmatmul.mubr.f32.gmra.mrb[0].mxu0 %v2748
      %v2936 = vpop.f32.mrb[0].mxu0
      %v2937 = vadd.f32 0.0, %v2936
      %v2938 = vpop.f32.mrb[0].mxu0
      %2939 = vmatprep.mubr.f32.mxu0 0.0
      %2940 = vmatmul.mubr.f32.gmra.mrb[0].mxu0 %v2751
      %v2941 = vpop.f32.mrb[0].mxu0
      %v2942 = vadd.f32 0.0, %v2941
      %v2943 = vpop.f32.mrb[0].mxu0
      %2944 = vmatprep.mubr.f32.mxu0 0.0
      %2945 = vmatmul.mubr.f32.gmra.mrb[0].mxu0 %v2754
      %v2946 = vpop.f32.mrb[0].mxu0
      %v2947 = vadd.f32 0.0, %v2946
      %v2948 = vpop.f32.mrb[0].mxu0
      %2949 = vmatprep.mubr.f32.mxu0 0.0
      %2950 = vmatmul.mubr.f32.gmra.mrb[0].mxu0 %v2757
      %v2951 = vpop.f32.mrb[0].mxu0
      %v2952 = vadd.f32 0.0, %v2951
      %v2953 = vpop.f32.mrb[0].mxu0
      %2954 = vmatprep.mubr.f32.mxu0 0.0
      %2955 = vmatmul.mubr.f32.gmra.mrb[0].mxu0 %v2760
      %v2956 = vpop.f32.mrb[0].mxu0
      %v2957 = vadd.f32 0.0, %v2956
      %v2958 = vpop.f32.mrb[0].mxu0
      %2959 = vmatprep.mubr.f32.mxu0 0.0
      %2960 = vmatmul.mubr.f32.gmra.mrb[0].mxu0 %v2763
      %v2961 = vpop.f32.mrb[0].mxu0
      %v2962 = vadd.f32 0.0, %v2961
      %v2963 = vpop.f32.mrb[0].mxu0
      %2964 = vmatprep.mubr.f32.mxu0 0.0
      %2965 = vmatmul.mubr.f32.gmra.mrb[0].mxu0 %v2766
      %v2966 = vpop.f32.mrb[0].mxu0
      %v2967 = vadd.f32 0.0, %v2966
      %v2968 = vpop.f32.mrb[0].mxu0
      %2969 = vmatprep.mubr.f32.mxu0 0.0
      %2970 = vmatmul.mubr.f32.gmra.mrb[0].mxu0 %v2769
      %v2971 = vpop.f32.mrb[0].mxu0
      %v2972 = vadd.f32 0.0, %v2971
      %v2973 = vpop.f32.mrb[0].mxu0
      %2974 = vmatprep.mubr.f32.mxu0 0.0
      %2975 = vmatmul.mubr.f32.gmra.mrb[0].mxu0 %v2772
      %v2976 = vpop.f32.mrb[0].mxu0
      %v2977 = vadd.f32 0.0, %v2976
      %v2978 = vpop.f32.mrb[0].mxu0
      %2979 = vmatprep.mubr.f32.mxu0 0.0
      %2980 = vmatmul.mubr.f32.gmra.mrb[0].mxu0 %v2775
      %v2981 = vpop.f32.mrb[0].mxu0
      %v2982 = vadd.f32 0.0, %v2981
      %v2983 = vpop.f32.mrb[0].mxu0
      %2984 = vmatprep.mubr.f32.mxu0 0.0
      %2985 = vmatmul.mubr.f32.gmra.mrb[0].mxu0 %v2778
      %v2986 = vpop.f32.mrb[0].mxu0
      %v2987 = vadd.f32 0.0, %v2986
      %v2988 = vpop.f32.mrb[0].mxu0
      %2989 = vmatprep.mubr.f32.mxu0 0.0
      %2990 = vmatmul.mubr.f32.gmra.mrb[0].mxu0 %v2781
      %v2991 = vpop.f32.mrb[0].mxu0
      %v2992 = vadd.f32 0.0, %v2991
      %v2993 = vpop.f32.mrb[0].mxu0
      %2994 = vmatprep.mubr.f32.mxu0 0.0
      %2995 = vmatmul.mubr.f32.gmra.mrb[0].mxu0 %v2784
      %v2996 = vpop.f32.mrb[0].mxu0
      %v2997 = vadd.f32 0.0, %v2996
      %v2998 = vpop.f32.mrb[0].mxu0
      %2999 = vmatprep.mubr.f32.mxu0 0.0
      %3000 = vmatmul.mubr.f32.gmra.mrb[0].mxu0 %v2787
      %v3001 = vpop.f32.mrb[0].mxu0
      %v3002 = vadd.f32 0.0, %v3001
      %v3003 = vpop.f32.mrb[0].mxu0
      %3004 = vmatprep.mubr.f32.mxu0 0.0
      %3005 = vmatmul.mubr.f32.gmra.mrb[0].mxu0 %v2790
      %v3006 = vpop.f32.mrb[0].mxu0
      %v3007 = vadd.f32 0.0, %v3006
      %v3008 = vpop.f32.mrb[0].mxu0
      %3009 = vmatprep.mubr.f32.mxu0 0.0
      %3010 = vmatmul.mubr.f32.gmra.mrb[0].mxu0 %v2793
      %v3011 = vpop.f32.mrb[0].mxu0
      %v3012 = vadd.f32 0.0, %v3011
      %v3013 = vpop.f32.mrb[0].mxu0
      %3014 = vmatprep.mubr.f32.mxu0 0.0
      %3015 = vmatmul.mubr.f32.gmra.mrb[0].mxu0 %v2796
      %v3016 = vpop.f32.mrb[0].mxu0
      %v3017 = vadd.f32 0.0, %v3016
      %v3018 = vpop.f32.mrb[0].mxu0
      %3019 = vmatprep.mubr.f32.mxu0 0.0
      %3020 = vmatmul.mubr.f32.gmra.mrb[0].mxu0 %v2799
      %v3021 = vpop.f32.mrb[0].mxu0
      %v3022 = vadd.f32 0.0, %v3021
      %v3023 = vpop.f32.mrb[0].mxu0
      %3024 = vmatprep.mubr.f32.mxu0 0.0
      %3025 = vmatmul.mubr.f32.gmra.mrb[0].mxu0 %v2802
      %v3026 = vpop.f32.mrb[0].mxu0
      %v3027 = vadd.f32 0.0, %v3026
      %v3028 = vpop.f32.mrb[0].mxu0
      %3029 = vmatprep.mubr.f32.mxu0 0.0
      %3030 = vmatmul.mubr.f32.gmra.mrb[0].mxu0 %v2805
      %v3031 = vpop.f32.mrb[0].mxu0
      %v3032 = vadd.f32 0.0, %v3031
      %v3033 = vpop.f32.mrb[0].mxu0
      %3034 = vdwg.mxu0
      %v3035 = vadd.f32 %v2644, %v2877
      %v3036 = vadd.f32 %v2645, %v2882
      %v3037 = vadd.f32 %v2646, %v2887
      %v3038 = vadd.f32 %v2647, %v2892
      %v3039 = vadd.f32 %v2648, %v2897
      %v3040 = vadd.f32 %v2649, %v2902
      %v3041 = vadd.f32 %v2650, %v2907
      %v3042 = vadd.f32 %v2651, %v2912
      %v3043 = vadd.f32 %v2652, %v2917
      %v3044 = vadd.f32 %v2653, %v2922
      %v3045 = vadd.f32 %v2654, %v2927
      %v3046 = vadd.f32 %v2655, %v2932
      %v3047 = vadd.f32 %v2656, %v2937
      %v3048 = vadd.f32 %v2657, %v2942
      %v3049 = vadd.f32 %v2658, %v2947
      %v3050 = vadd.f32 %v2659, %v2952
      %v3051 = vadd.f32 %v2660, %v2957
      %v3052 = vadd.f32 %v2661, %v2962
      %v3053 = vadd.f32 %v2662, %v2967
      %v3054 = vadd.f32 %v2663, %v2972
      %v3055 = vadd.f32 %v2664, %v2977
      %v3056 = vadd.f32 %v2665, %v2982
      %v3057 = vadd.f32 %v2666, %v2987
      %v3058 = vadd.f32 %v2667, %v2992
      %v3059 = vadd.f32 %v2668, %v2997
      %v3060 = vadd.f32 %v2669, %v3002
      %v3061 = vadd.f32 %v2670, %v3007
      %v3062 = vadd.f32 %v2671, %v3012
      %v3063 = vadd.f32 %v2672, %v3017
      %v3064 = vadd.f32 %v2673, %v3022
      %v3065 = vadd.f32 %v2674, %v3027
      %v3066 = vadd.f32 %v2675, %v3032
      %v3067 = vld [vmem:[%s2676 + $0x1] sm:$0xff]
      %v3068 = vld [vmem:[%s2676 + $0x9] sm:$0xff]
      %v3069 = vld [vmem:[%s2676 + $0x19] sm:$0xff]
      %v3070 = vld [vmem:[%s2676 + $0x21] sm:$0xff]
      %v3071 = vld [vmem:[%s2676 + $0x31] sm:$0xff]
      %v3072 = vld [vmem:[%s2676 + $0x39] sm:$0xff]
      %v3073 = vld [vmem:[%s2676 + $0x49] sm:$0xff]
      %v3074 = vld [vmem:[%s2676 + $0x51] sm:$0xff]
      %v3075 = vld [vmem:[%s2676 + $0x61] sm:$0xff]
      %v3076 = vld [vmem:[%s2676 + $0x69] sm:$0xff]
      %v3077 = vld [vmem:[%s2676 + $0x79] sm:$0xff]
      %v3078 = vld [vmem:[%s2676 + $0x81] sm:$0xff]
      %v3079 = vld [vmem:[%s2676 + $0x91] sm:$0xff]
      %v3080 = vld [vmem:[%s2676 + $0x99] sm:$0xff]
      %v3081 = vld [vmem:[%s2676 + $0xa9] sm:$0xff]
      %v3082 = vld [vmem:[%s2676 + $0xb1] sm:$0xff]
      %v3083 = vld [vmem:[%s2676 + $0xc1] sm:$0xff]
      %v3084 = vld [vmem:[%s2676 + $0xc9] sm:$0xff]
      %v3085 = vld [vmem:[%s2676 + $0xd9] sm:$0xff]
      %v3086 = vld [vmem:[%s2676 + $0xe1] sm:$0xff]
      %v3087 = vld [vmem:[%s2676 + $0xf1] sm:$0xff]
      %v3088 = vld [vmem:[%s2676 + $0xf9] sm:$0xff]
      %v3089 = vld [vmem:[%s2676 + $0x109] sm:$0xff]
      %v3090 = vld [vmem:[%s2676 + $0x111] sm:$0xff]
      %v3091 = vld [vmem:[%s2676 + $0x121] sm:$0xff]
      %v3092 = vld [vmem:[%s2676 + $0x129] sm:$0xff]
      %v3093 = vld [vmem:[%s2676 + $0x139] sm:$0xff]
      %v3094 = vld [vmem:[%s2676 + $0x141] sm:$0xff]
      %v3095 = vld [vmem:[%s2676 + $0x151] sm:$0xff]
      %v3096 = vld [vmem:[%s2676 + $0x159] sm:$0xff]
      %v3097 = vld [vmem:[%s2676 + $0x169] sm:$0xff]
      %v3098 = vld [vmem:[%s2676 + $0x171] sm:$0xff]
      %s3099 = scalar_lea.vmem %s1, 28
      %v3100 = vld [vmem:[%s3099] sm:$0xf]
      %v3102 = vsel %vm225, %v3067, 0
      %v3105 = vsel %vm225, %v3068, 0
      %v3108 = vsel %vm225, %v3069, 0
      %v3111 = vsel %vm225, %v3070, 0
      %v3114 = vsel %vm225, %v3071, 0
      %v3117 = vsel %vm225, %v3072, 0
      %v3120 = vsel %vm225, %v3073, 0
      %v3123 = vsel %vm225, %v3074, 0
      %v3126 = vsel %vm225, %v3075, 0
      %v3129 = vsel %vm225, %v3076, 0
      %v3132 = vsel %vm225, %v3077, 0
      %v3135 = vsel %vm225, %v3078, 0
      %v3138 = vsel %vm225, %v3079, 0
      %v3141 = vsel %vm225, %v3080, 0
      %v3144 = vsel %vm225, %v3081, 0
      %v3147 = vsel %vm225, %v3082, 0
      %v3150 = vsel %vm225, %v3083, 0
      %v3153 = vsel %vm225, %v3084, 0
      %v3156 = vsel %vm225, %v3085, 0
      %v3159 = vsel %vm225, %v3086, 0
      %v3162 = vsel %vm225, %v3087, 0
      %v3165 = vsel %vm225, %v3088, 0
      %v3168 = vsel %vm225, %v3089, 0
      %v3171 = vsel %vm225, %v3090, 0
      %v3174 = vsel %vm225, %v3091, 0
      %v3177 = vsel %vm225, %v3092, 0
      %v3180 = vsel %vm225, %v3093, 0
      %v3183 = vsel %vm225, %v3094, 0
      %v3186 = vsel %vm225, %v3095, 0
      %v3189 = vsel %vm225, %v3096, 0
      %v3192 = vsel %vm225, %v3097, 0
      %v3195 = vsel %vm225, %v3098, 0
      %v3198 = vsel %vm563, %v3100, 0
      %3200 = vmatprep.subr.mxu0 0.0
      %3201 = vmatpush1.msra.mxu0 %v3198
      %3202 = vmatprep.subr.mxu0 0.0
      %3203 = vmatpush1.msra.mxu0 0.0
      %3204 = vmatprep.subr.mxu0 0.0
      %3205 = vmatpush1.msra.mxu0 0.0
      %3206 = vmatprep.subr.mxu0 0.0
      %3207 = vmatpush1.msra.mxu0 0.0
      %3208 = vmatprep.subr.mxu0 0.0
      %3209 = vmatpush1.msra.mxu0 0.0
      %3210 = vmatprep.subr.mxu0 0.0
      %3211 = vmatpush1.msra.mxu0 0.0
      %3212 = vmatprep.subr.mxu0 0.0
      %3213 = vmatpush1.msra.mxu0 0.0
      %3214 = vmatprep.subr.mxu0 0.0
      %3215 = vmatpush1.msra.mxu0 0.0
      %3216 = vmatprep.subr.mxu0 0.0
      %3217 = vmatpush1.msra.mxu0 0.0
      %3218 = vmatprep.subr.mxu0 0.0
      %3219 = vmatpush1.msra.mxu0 0.0
      %3220 = vmatprep.subr.mxu0 0.0
      %3221 = vmatpush1.msra.mxu0 0.0
      %3222 = vmatprep.subr.mxu0 0.0
      %3223 = vmatpush1.msra.mxu0 0.0
      %3224 = vmatprep.subr.mxu0 0.0
      %3225 = vmatpush1.msra.mxu0 0.0
      %3226 = vmatprep.subr.mxu0 0.0
      %3227 = vmatpush1.msra.mxu0 0.0
      %3228 = vmatprep.subr.mxu0 0.0
      %3229 = vmatpush1.msra.mxu0 0.0
      %3230 = vmatprep.subr.mxu0 0.0
      %3231 = vmatpush1.msra.mxu0 0.0
      %3232 = vmatprep.subr.mxu0 0.0
      %3233 = vmatpush1.msra.mxu0 0.0
      %3234 = vmatprep.subr.mxu0 0.0
      %3235 = vmatpush1.msra.mxu0 0.0
      %3236 = vmatprep.subr.mxu0 0.0
      %3237 = vmatpush1.msra.mxu0 0.0
      %3238 = vmatprep.subr.mxu0 0.0
      %3239 = vmatpush1.msra.mxu0 0.0
      %3240 = vmatprep.subr.mxu0 0.0
      %3241 = vmatpush1.msra.mxu0 0.0
      %3242 = vmatprep.subr.mxu0 0.0
      %3243 = vmatpush1.msra.mxu0 0.0
      %3244 = vmatprep.subr.mxu0 0.0
      %3245 = vmatpush1.msra.mxu0 0.0
      %3246 = vmatprep.subr.mxu0 0.0
      %3247 = vmatpush1.msra.mxu0 0.0
      %3248 = vmatprep.subr.mxu0 0.0
      %3249 = vmatpush1.msra.mxu0 0.0
      %3250 = vmatprep.subr.mxu0 0.0
      %3251 = vmatpush1.msra.mxu0 0.0
      %3252 = vmatprep.subr.mxu0 0.0
      %3253 = vmatpush1.msra.mxu0 0.0
      %3254 = vmatprep.subr.mxu0 0.0
      %3255 = vmatpush1.msra.mxu0 0.0
      %3256 = vmatprep.subr.mxu0 0.0
      %3257 = vmatpush1.msra.mxu0 0.0
      %3258 = vmatprep.subr.mxu0 0.0
      %3259 = vmatpush1.msra.mxu0 0.0
      %3260 = vmatprep.subr.mxu0 0.0
      %3261 = vmatpush1.msra.mxu0 0.0
      %3262 = vmatprep.subr.mxu0 0.0
      %3263 = vmatpush1.msra.mxu0 0.0
      %3264 = vmatprep.mubr.f32.mxu0 0.0
      %3265 = vmatmul.mubr.f32.gmra.mrb[0].mxu0 %v3102
      %v3266 = vpop.f32.mrb[0].mxu0
      %v3267 = vadd.f32 0.0, %v3266
      %v3268 = vpop.f32.mrb[0].mxu0
      %3269 = vmatprep.mubr.f32.mxu0 0.0
      %3270 = vmatmul.mubr.f32.gmra.mrb[0].mxu0 %v3105
      %v3271 = vpop.f32.mrb[0].mxu0
      %v3272 = vadd.f32 0.0, %v3271
      %v3273 = vpop.f32.mrb[0].mxu0
      %3274 = vmatprep.mubr.f32.mxu0 0.0
      %3275 = vmatmul.mubr.f32.gmra.mrb[0].mxu0 %v3108
      %v3276 = vpop.f32.mrb[0].mxu0
      %v3277 = vadd.f32 0.0, %v3276
      %v3278 = vpop.f32.mrb[0].mxu0
      %3279 = vmatprep.mubr.f32.mxu0 0.0
      %3280 = vmatmul.mubr.f32.gmra.mrb[0].mxu0 %v3111
      %v3281 = vpop.f32.mrb[0].mxu0
      %v3282 = vadd.f32 0.0, %v3281
      %v3283 = vpop.f32.mrb[0].mxu0
      %3284 = vmatprep.mubr.f32.mxu0 0.0
      %3285 = vmatmul.mubr.f32.gmra.mrb[0].mxu0 %v3114
      %v3286 = vpop.f32.mrb[0].mxu0
      %v3287 = vadd.f32 0.0, %v3286
      %v3288 = vpop.f32.mrb[0].mxu0
      %3289 = vmatprep.mubr.f32.mxu0 0.0
      %3290 = vmatmul.mubr.f32.gmra.mrb[0].mxu0 %v3117
      %v3291 = vpop.f32.mrb[0].mxu0
      %v3292 = vadd.f32 0.0, %v3291
      %v3293 = vpop.f32.mrb[0].mxu0
      %3294 = vmatprep.mubr.f32.mxu0 0.0
      %3295 = vmatmul.mubr.f32.gmra.mrb[0].mxu0 %v3120
      %v3296 = vpop.f32.mrb[0].mxu0
      %v3297 = vadd.f32 0.0, %v3296
      %v3298 = vpop.f32.mrb[0].mxu0
      %3299 = vmatprep.mubr.f32.mxu0 0.0
      %3300 = vmatmul.mubr.f32.gmra.mrb[0].mxu0 %v3123
      %v3301 = vpop.f32.mrb[0].mxu0
      %v3302 = vadd.f32 0.0, %v3301
      %v3303 = vpop.f32.mrb[0].mxu0
      %3304 = vmatprep.mubr.f32.mxu0 0.0
      %3305 = vmatmul.mubr.f32.gmra.mrb[0].mxu0 %v3126
      %v3306 = vpop.f32.mrb[0].mxu0
      %v3307 = vadd.f32 0.0, %v3306
      %v3308 = vpop.f32.mrb[0].mxu0
      %3309 = vmatprep.mubr.f32.mxu0 0.0
      %3310 = vmatmul.mubr.f32.gmra.mrb[0].mxu0 %v3129
      %v3311 = vpop.f32.mrb[0].mxu0
      %v3312 = vadd.f32 0.0, %v3311
      %v3313 = vpop.f32.mrb[0].mxu0
      %3314 = vmatprep.mubr.f32.mxu0 0.0
      %3315 = vmatmul.mubr.f32.gmra.mrb[0].mxu0 %v3132
      %v3316 = vpop.f32.mrb[0].mxu0
      %v3317 = vadd.f32 0.0, %v3316
      %v3318 = vpop.f32.mrb[0].mxu0
      %3319 = vmatprep.mubr.f32.mxu0 0.0
      %3320 = vmatmul.mubr.f32.gmra.mrb[0].mxu0 %v3135
      %v3321 = vpop.f32.mrb[0].mxu0
      %v3322 = vadd.f32 0.0, %v3321
      %v3323 = vpop.f32.mrb[0].mxu0
      %3324 = vmatprep.mubr.f32.mxu0 0.0
      %3325 = vmatmul.mubr.f32.gmra.mrb[0].mxu0 %v3138
      %v3326 = vpop.f32.mrb[0].mxu0
      %v3327 = vadd.f32 0.0, %v3326
      %v3328 = vpop.f32.mrb[0].mxu0
      %3329 = vmatprep.mubr.f32.mxu0 0.0
      %3330 = vmatmul.mubr.f32.gmra.mrb[0].mxu0 %v3141
      %v3331 = vpop.f32.mrb[0].mxu0
      %v3332 = vadd.f32 0.0, %v3331
      %v3333 = vpop.f32.mrb[0].mxu0
      %3334 = vmatprep.mubr.f32.mxu0 0.0
      %3335 = vmatmul.mubr.f32.gmra.mrb[0].mxu0 %v3144
      %v3336 = vpop.f32.mrb[0].mxu0
      %v3337 = vadd.f32 0.0, %v3336
      %v3338 = vpop.f32.mrb[0].mxu0
      %3339 = vmatprep.mubr.f32.mxu0 0.0
      %3340 = vmatmul.mubr.f32.gmra.mrb[0].mxu0 %v3147
      %v3341 = vpop.f32.mrb[0].mxu0
      %v3342 = vadd.f32 0.0, %v3341
      %v3343 = vpop.f32.mrb[0].mxu0
      %3344 = vmatprep.mubr.f32.mxu0 0.0
      %3345 = vmatmul.mubr.f32.gmra.mrb[0].mxu0 %v3150
      %v3346 = vpop.f32.mrb[0].mxu0
      %v3347 = vadd.f32 0.0, %v3346
      %v3348 = vpop.f32.mrb[0].mxu0
      %3349 = vmatprep.mubr.f32.mxu0 0.0
      %3350 = vmatmul.mubr.f32.gmra.mrb[0].mxu0 %v3153
      %v3351 = vpop.f32.mrb[0].mxu0
      %v3352 = vadd.f32 0.0, %v3351
      %v3353 = vpop.f32.mrb[0].mxu0
      %3354 = vmatprep.mubr.f32.mxu0 0.0
      %3355 = vmatmul.mubr.f32.gmra.mrb[0].mxu0 %v3156
      %v3356 = vpop.f32.mrb[0].mxu0
      %v3357 = vadd.f32 0.0, %v3356
      %v3358 = vpop.f32.mrb[0].mxu0
      %3359 = vmatprep.mubr.f32.mxu0 0.0
      %3360 = vmatmul.mubr.f32.gmra.mrb[0].mxu0 %v3159
      %v3361 = vpop.f32.mrb[0].mxu0
      %v3362 = vadd.f32 0.0, %v3361
      %v3363 = vpop.f32.mrb[0].mxu0
      %3364 = vmatprep.mubr.f32.mxu0 0.0
      %3365 = vmatmul.mubr.f32.gmra.mrb[0].mxu0 %v3162
      %v3366 = vpop.f32.mrb[0].mxu0
      %v3367 = vadd.f32 0.0, %v3366
      %v3368 = vpop.f32.mrb[0].mxu0
      %3369 = vmatprep.mubr.f32.mxu0 0.0
      %3370 = vmatmul.mubr.f32.gmra.mrb[0].mxu0 %v3165
      %v3371 = vpop.f32.mrb[0].mxu0
      %v3372 = vadd.f32 0.0, %v3371
      %v3373 = vpop.f32.mrb[0].mxu0
      %3374 = vmatprep.mubr.f32.mxu0 0.0
      %3375 = vmatmul.mubr.f32.gmra.mrb[0].mxu0 %v3168
      %v3376 = vpop.f32.mrb[0].mxu0
      %v3377 = vadd.f32 0.0, %v3376
      %v3378 = vpop.f32.mrb[0].mxu0
      %3379 = vmatprep.mubr.f32.mxu0 0.0
      %3380 = vmatmul.mubr.f32.gmra.mrb[0].mxu0 %v3171
      %v3381 = vpop.f32.mrb[0].mxu0
      %v3382 = vadd.f32 0.0, %v3381
      %v3383 = vpop.f32.mrb[0].mxu0
      %3384 = vmatprep.mubr.f32.mxu0 0.0
      %3385 = vmatmul.mubr.f32.gmra.mrb[0].mxu0 %v3174
      %v3386 = vpop.f32.mrb[0].mxu0
      %v3387 = vadd.f32 0.0, %v3386
      %v3388 = vpop.f32.mrb[0].mxu0
      %3389 = vmatprep.mubr.f32.mxu0 0.0
      %3390 = vmatmul.mubr.f32.gmra.mrb[0].mxu0 %v3177
      %v3391 = vpop.f32.mrb[0].mxu0
      %v3392 = vadd.f32 0.0, %v3391
      %v3393 = vpop.f32.mrb[0].mxu0
      %3394 = vmatprep.mubr.f32.mxu0 0.0
      %3395 = vmatmul.mubr.f32.gmra.mrb[0].mxu0 %v3180
      %v3396 = vpop.f32.mrb[0].mxu0
      %v3397 = vadd.f32 0.0, %v3396
      %v3398 = vpop.f32.mrb[0].mxu0
      %3399 = vmatprep.mubr.f32.mxu0 0.0
      %3400 = vmatmul.mubr.f32.gmra.mrb[0].mxu0 %v3183
      %v3401 = vpop.f32.mrb[0].mxu0
      %v3402 = vadd.f32 0.0, %v3401
      %v3403 = vpop.f32.mrb[0].mxu0
      %3404 = vmatprep.mubr.f32.mxu0 0.0
      %3405 = vmatmul.mubr.f32.gmra.mrb[0].mxu0 %v3186
      %v3406 = vpop.f32.mrb[0].mxu0
      %v3407 = vadd.f32 0.0, %v3406
      %v3408 = vpop.f32.mrb[0].mxu0
      %3409 = vmatprep.mubr.f32.mxu0 0.0
      %3410 = vmatmul.mubr.f32.gmra.mrb[0].mxu0 %v3189
      %v3411 = vpop.f32.mrb[0].mxu0
      %v3412 = vadd.f32 0.0, %v3411
      %v3413 = vpop.f32.mrb[0].mxu0
      %3414 = vmatprep.mubr.f32.mxu0 0.0
      %3415 = vmatmul.mubr.f32.gmra.mrb[0].mxu0 %v3192
      %v3416 = vpop.f32.mrb[0].mxu0
      %v3417 = vadd.f32 0.0, %v3416
      %v3418 = vpop.f32.mrb[0].mxu0
      %3419 = vmatprep.mubr.f32.mxu0 0.0
      %3420 = vmatmul.mubr.f32.gmra.mrb[0].mxu0 %v3195
      %v3421 = vpop.f32.mrb[0].mxu0
      %v3422 = vadd.f32 0.0, %v3421
      %v3423 = vpop.f32.mrb[0].mxu0
      %3424 = vdwg.mxu0
      %v3425 = vadd.f32 %v3035, %v3267
      %v3426 = vadd.f32 %v3036, %v3272
      %v3427 = vadd.f32 %v3037, %v3277
      %v3428 = vadd.f32 %v3038, %v3282
      %v3429 = vadd.f32 %v3039, %v3287
      %v3430 = vadd.f32 %v3040, %v3292
      %v3431 = vadd.f32 %v3041, %v3297
      %v3432 = vadd.f32 %v3042, %v3302
      %v3433 = vadd.f32 %v3043, %v3307
      %v3434 = vadd.f32 %v3044, %v3312
      %v3435 = vadd.f32 %v3045, %v3317
      %v3436 = vadd.f32 %v3046, %v3322
      %v3437 = vadd.f32 %v3047, %v3327
      %v3438 = vadd.f32 %v3048, %v3332
      %v3439 = vadd.f32 %v3049, %v3337
      %v3440 = vadd.f32 %v3050, %v3342
      %v3441 = vadd.f32 %v3051, %v3347
      %v3442 = vadd.f32 %v3052, %v3352
      %v3443 = vadd.f32 %v3053, %v3357
      %v3444 = vadd.f32 %v3054, %v3362
      %v3445 = vadd.f32 %v3055, %v3367
      %v3446 = vadd.f32 %v3056, %v3372
      %v3447 = vadd.f32 %v3057, %v3377
      %v3448 = vadd.f32 %v3058, %v3382
      %v3449 = vadd.f32 %v3059, %v3387
      %v3450 = vadd.f32 %v3060, %v3392
      %v3451 = vadd.f32 %v3061, %v3397
      %v3452 = vadd.f32 %v3062, %v3402
      %v3453 = vadd.f32 %v3063, %v3407
      %v3454 = vadd.f32 %v3064, %v3412
      %v3455 = vadd.f32 %v3065, %v3417
      %v3456 = vadd.f32 %v3066, %v3422
      %v3457 = vld [vmem:[%s2676 + $0x2] sm:$0xff]
      %v3458 = vld [vmem:[%s2676 + $0xa] sm:$0xff]
      %v3459 = vld [vmem:[%s2676 + $0x1a] sm:$0xff]
      %v3460 = vld [vmem:[%s2676 + $0x22] sm:$0xff]
      %v3461 = vld [vmem:[%s2676 + $0x32] sm:$0xff]
      %v3462 = vld [vmem:[%s2676 + $0x3a] sm:$0xff]
      %v3463 = vld [vmem:[%s2676 + $0x4a] sm:$0xff]
      %v3464 = vld [vmem:[%s2676 + $0x52] sm:$0xff]
      %v3465 = vld [vmem:[%s2676 + $0x62] sm:$0xff]
      %v3466 = vld [vmem:[%s2676 + $0x6a] sm:$0xff]
      %v3467 = vld [vmem:[%s2676 + $0x7a] sm:$0xff]
      %v3468 = vld [vmem:[%s2676 + $0x82] sm:$0xff]
      %v3469 = vld [vmem:[%s2676 + $0x92] sm:$0xff]
      %v3470 = vld [vmem:[%s2676 + $0x9a] sm:$0xff]
      %v3471 = vld [vmem:[%s2676 + $0xaa] sm:$0xff]
      %v3472 = vld [vmem:[%s2676 + $0xb2] sm:$0xff]
      %v3473 = vld [vmem:[%s2676 + $0xc2] sm:$0xff]
      %v3474 = vld [vmem:[%s2676 + $0xca] sm:$0xff]
      %v3475 = vld [vmem:[%s2676 + $0xda] sm:$0xff]
      %v3476 = vld [vmem:[%s2676 + $0xe2] sm:$0xff]
      %v3477 = vld [vmem:[%s2676 + $0xf2] sm:$0xff]
      %v3478 = vld [vmem:[%s2676 + $0xfa] sm:$0xff]
      %v3479 = vld [vmem:[%s2676 + $0x10a] sm:$0xff]
      %v3480 = vld [vmem:[%s2676 + $0x112] sm:$0xff]
      %v3481 = vld [vmem:[%s2676 + $0x122] sm:$0xff]
      %v3482 = vld [vmem:[%s2676 + $0x12a] sm:$0xff]
      %v3483 = vld [vmem:[%s2676 + $0x13a] sm:$0xff]
      %v3484 = vld [vmem:[%s2676 + $0x142] sm:$0xff]
      %v3485 = vld [vmem:[%s2676 + $0x152] sm:$0xff]
      %v3486 = vld [vmem:[%s2676 + $0x15a] sm:$0xff]
      %v3487 = vld [vmem:[%s2676 + $0x16a] sm:$0xff]
      %v3488 = vld [vmem:[%s2676 + $0x172] sm:$0xff]
      %s3489 = scalar_lea.vmem %s1, 32
      %v3490 = vld [vmem:[%s3489] sm:$0xf]
      %v3492 = vsel %vm225, %v3457, 0
      %v3495 = vsel %vm225, %v3458, 0
      %v3498 = vsel %vm225, %v3459, 0
      %v3501 = vsel %vm225, %v3460, 0
      %v3504 = vsel %vm225, %v3461, 0
      %v3507 = vsel %vm225, %v3462, 0
      %v3510 = vsel %vm225, %v3463, 0
      %v3513 = vsel %vm225, %v3464, 0
      %v3516 = vsel %vm225, %v3465, 0
      %v3519 = vsel %vm225, %v3466, 0
      %v3522 = vsel %vm225, %v3467, 0
      %v3525 = vsel %vm225, %v3468, 0
      %v3528 = vsel %vm225, %v3469, 0
      %v3531 = vsel %vm225, %v3470, 0
      %v3534 = vsel %vm225, %v3471, 0
      %v3537 = vsel %vm225, %v3472, 0
      %v3540 = vsel %vm225, %v3473, 0
      %v3543 = vsel %vm225, %v3474, 0
      %v3546 = vsel %vm225, %v3475, 0
      %v3549 = vsel %vm225, %v3476, 0
      %v3552 = vsel %vm225, %v3477, 0
      %v3555 = vsel %vm225, %v3478, 0
      %v3558 = vsel %vm225, %v3479, 0
      %v3561 = vsel %vm225, %v3480, 0
      %v3564 = vsel %vm225, %v3481, 0
      %v3567 = vsel %vm225, %v3482, 0
      %v3570 = vsel %vm225, %v3483, 0
      %v3573 = vsel %vm225, %v3484, 0
      %v3576 = vsel %vm225, %v3485, 0
      %v3579 = vsel %vm225, %v3486, 0
      %v3582 = vsel %vm225, %v3487, 0
      %v3585 = vsel %vm225, %v3488, 0
      %v3588 = vsel %vm563, %v3490, 0
      %3590 = vmatprep.subr.mxu0 0.0
      %3591 = vmatpush1.msra.mxu0 %v3588
      %3592 = vmatprep.subr.mxu0 0.0
      %3593 = vmatpush1.msra.mxu0 0.0
      %3594 = vmatprep.subr.mxu0 0.0
      %3595 = vmatpush1.msra.mxu0 0.0
      %3596 = vmatprep.subr.mxu0 0.0
      %3597 = vmatpush1.msra.mxu0 0.0
      %3598 = vmatprep.subr.mxu0 0.0
      %3599 = vmatpush1.msra.mxu0 0.0
      %3600 = vmatprep.subr.mxu0 0.0
      %3601 = vmatpush1.msra.mxu0 0.0
      %3602 = vmatprep.subr.mxu0 0.0
      %3603 = vmatpush1.msra.mxu0 0.0
      %3604 = vmatprep.subr.mxu0 0.0
      %3605 = vmatpush1.msra.mxu0 0.0
      %3606 = vmatprep.subr.mxu0 0.0
      %3607 = vmatpush1.msra.mxu0 0.0
      %3608 = vmatprep.subr.mxu0 0.0
      %3609 = vmatpush1.msra.mxu0 0.0
      %3610 = vmatprep.subr.mxu0 0.0
      %3611 = vmatpush1.msra.mxu0 0.0
      %3612 = vmatprep.subr.mxu0 0.0
      %3613 = vmatpush1.msra.mxu0 0.0
      %3614 = vmatprep.subr.mxu0 0.0
      %3615 = vmatpush1.msra.mxu0 0.0
      %3616 = vmatprep.subr.mxu0 0.0
      %3617 = vmatpush1.msra.mxu0 0.0
      %3618 = vmatprep.subr.mxu0 0.0
      %3619 = vmatpush1.msra.mxu0 0.0
      %3620 = vmatprep.subr.mxu0 0.0
      %3621 = vmatpush1.msra.mxu0 0.0
      %3622 = vmatprep.subr.mxu0 0.0
      %3623 = vmatpush1.msra.mxu0 0.0
      %3624 = vmatprep.subr.mxu0 0.0
      %3625 = vmatpush1.msra.mxu0 0.0
      %3626 = vmatprep.subr.mxu0 0.0
      %3627 = vmatpush1.msra.mxu0 0.0
      %3628 = vmatprep.subr.mxu0 0.0
      %3629 = vmatpush1.msra.mxu0 0.0
      %3630 = vmatprep.subr.mxu0 0.0
      %3631 = vmatpush1.msra.mxu0 0.0
      %3632 = vmatprep.subr.mxu0 0.0
      %3633 = vmatpush1.msra.mxu0 0.0
      %3634 = vmatprep.subr.mxu0 0.0
      %3635 = vmatpush1.msra.mxu0 0.0
      %3636 = vmatprep.subr.mxu0 0.0
      %3637 = vmatpush1.msra.mxu0 0.0
      %3638 = vmatprep.subr.mxu0 0.0
      %3639 = vmatpush1.msra.mxu0 0.0
      %3640 = vmatprep.subr.mxu0 0.0
      %3641 = vmatpush1.msra.mxu0 0.0
      %3642 = vmatprep.subr.mxu0 0.0
      %3643 = vmatpush1.msra.mxu0 0.0
      %3644 = vmatprep.subr.mxu0 0.0
      %3645 = vmatpush1.msra.mxu0 0.0
      %3646 = vmatprep.subr.mxu0 0.0
      %3647 = vmatpush1.msra.mxu0 0.0
      %3648 = vmatprep.subr.mxu0 0.0
      %3649 = vmatpush1.msra.mxu0 0.0
      %3650 = vmatprep.subr.mxu0 0.0
      %3651 = vmatpush1.msra.mxu0 0.0
      %3652 = vmatprep.subr.mxu0 0.0
      %3653 = vmatpush1.msra.mxu0 0.0
      %3654 = vmatprep.mubr.f32.mxu0 0.0
      %3655 = vmatmul.mubr.f32.gmra.mrb[0].mxu0 %v3492
      %v3656 = vpop.f32.mrb[0].mxu0
      %v3657 = vadd.f32 0.0, %v3656
      %v3658 = vpop.f32.mrb[0].mxu0
      %3659 = vmatprep.mubr.f32.mxu0 0.0
      %3660 = vmatmul.mubr.f32.gmra.mrb[0].mxu0 %v3495
      %v3661 = vpop.f32.mrb[0].mxu0
      %v3662 = vadd.f32 0.0, %v3661
      %v3663 = vpop.f32.mrb[0].mxu0
      %3664 = vmatprep.mubr.f32.mxu0 0.0
      %3665 = vmatmul.mubr.f32.gmra.mrb[0].mxu0 %v3498
      %v3666 = vpop.f32.mrb[0].mxu0
      %v3667 = vadd.f32 0.0, %v3666
      %v3668 = vpop.f32.mrb[0].mxu0
      %3669 = vmatprep.mubr.f32.mxu0 0.0
      %3670 = vmatmul.mubr.f32.gmra.mrb[0].mxu0 %v3501
      %v3671 = vpop.f32.mrb[0].mxu0
      %v3672 = vadd.f32 0.0, %v3671
      %v3673 = vpop.f32.mrb[0].mxu0
      %3674 = vmatprep.mubr.f32.mxu0 0.0
      %3675 = vmatmul.mubr.f32.gmra.mrb[0].mxu0 %v3504
      %v3676 = vpop.f32.mrb[0].mxu0
      %v3677 = vadd.f32 0.0, %v3676
      %v3678 = vpop.f32.mrb[0].mxu0
      %3679 = vmatprep.mubr.f32.mxu0 0.0
      %3680 = vmatmul.mubr.f32.gmra.mrb[0].mxu0 %v3507
      %v3681 = vpop.f32.mrb[0].mxu0
      %v3682 = vadd.f32 0.0, %v3681
      %v3683 = vpop.f32.mrb[0].mxu0
      %3684 = vmatprep.mubr.f32.mxu0 0.0
      %3685 = vmatmul.mubr.f32.gmra.mrb[0].mxu0 %v3510
      %v3686 = vpop.f32.mrb[0].mxu0
      %v3687 = vadd.f32 0.0, %v3686
      %v3688 = vpop.f32.mrb[0].mxu0
      %3689 = vmatprep.mubr.f32.mxu0 0.0
      %3690 = vmatmul.mubr.f32.gmra.mrb[0].mxu0 %v3513
      %v3691 = vpop.f32.mrb[0].mxu0
      %v3692 = vadd.f32 0.0, %v3691
      %v3693 = vpop.f32.mrb[0].mxu0
      %3694 = vmatprep.mubr.f32.mxu0 0.0
      %3695 = vmatmul.mubr.f32.gmra.mrb[0].mxu0 %v3516
      %v3696 = vpop.f32.mrb[0].mxu0
      %v3697 = vadd.f32 0.0, %v3696
      %v3698 = vpop.f32.mrb[0].mxu0
      %3699 = vmatprep.mubr.f32.mxu0 0.0
      %3700 = vmatmul.mubr.f32.gmra.mrb[0].mxu0 %v3519
      %v3701 = vpop.f32.mrb[0].mxu0
      %v3702 = vadd.f32 0.0, %v3701
      %v3703 = vpop.f32.mrb[0].mxu0
      %3704 = vmatprep.mubr.f32.mxu0 0.0
      %3705 = vmatmul.mubr.f32.gmra.mrb[0].mxu0 %v3522
      %v3706 = vpop.f32.mrb[0].mxu0
      %v3707 = vadd.f32 0.0, %v3706
      %v3708 = vpop.f32.mrb[0].mxu0
      %3709 = vmatprep.mubr.f32.mxu0 0.0
      %3710 = vmatmul.mubr.f32.gmra.mrb[0].mxu0 %v3525
      %v3711 = vpop.f32.mrb[0].mxu0
      %v3712 = vadd.f32 0.0, %v3711
      %v3713 = vpop.f32.mrb[0].mxu0
      %3714 = vmatprep.mubr.f32.mxu0 0.0
      %3715 = vmatmul.mubr.f32.gmra.mrb[0].mxu0 %v3528
      %v3716 = vpop.f32.mrb[0].mxu0
      %v3717 = vadd.f32 0.0, %v3716
      %v3718 = vpop.f32.mrb[0].mxu0
      %3719 = vmatprep.mubr.f32.mxu0 0.0
      %3720 = vmatmul.mubr.f32.gmra.mrb[0].mxu0 %v3531
      %v3721 = vpop.f32.mrb[0].mxu0
      %v3722 = vadd.f32 0.0, %v3721
      %v3723 = vpop.f32.mrb[0].mxu0
      %3724 = vmatprep.mubr.f32.mxu0 0.0
      %3725 = vmatmul.mubr.f32.gmra.mrb[0].mxu0 %v3534
      %v3726 = vpop.f32.mrb[0].mxu0
      %v3727 = vadd.f32 0.0, %v3726
      %v3728 = vpop.f32.mrb[0].mxu0
      %3729 = vmatprep.mubr.f32.mxu0 0.0
      %3730 = vmatmul.mubr.f32.gmra.mrb[0].mxu0 %v3537
      %v3731 = vpop.f32.mrb[0].mxu0
      %v3732 = vadd.f32 0.0, %v3731
      %v3733 = vpop.f32.mrb[0].mxu0
      %3734 = vmatprep.mubr.f32.mxu0 0.0
      %3735 = vmatmul.mubr.f32.gmra.mrb[0].mxu0 %v3540
      %v3736 = vpop.f32.mrb[0].mxu0
      %v3737 = vadd.f32 0.0, %v3736
      %v3738 = vpop.f32.mrb[0].mxu0
      %3739 = vmatprep.mubr.f32.mxu0 0.0
      %3740 = vmatmul.mubr.f32.gmra.mrb[0].mxu0 %v3543
      %v3741 = vpop.f32.mrb[0].mxu0
      %v3742 = vadd.f32 0.0, %v3741
      %v3743 = vpop.f32.mrb[0].mxu0
      %3744 = vmatprep.mubr.f32.mxu0 0.0
      %3745 = vmatmul.mubr.f32.gmra.mrb[0].mxu0 %v3546
      %v3746 = vpop.f32.mrb[0].mxu0
      %v3747 = vadd.f32 0.0, %v3746
      %v3748 = vpop.f32.mrb[0].mxu0
      %3749 = vmatprep.mubr.f32.mxu0 0.0
      %3750 = vmatmul.mubr.f32.gmra.mrb[0].mxu0 %v3549
      %v3751 = vpop.f32.mrb[0].mxu0
      %v3752 = vadd.f32 0.0, %v3751
      %v3753 = vpop.f32.mrb[0].mxu0
      %3754 = vmatprep.mubr.f32.mxu0 0.0
      %3755 = vmatmul.mubr.f32.gmra.mrb[0].mxu0 %v3552
      %v3756 = vpop.f32.mrb[0].mxu0
      %v3757 = vadd.f32 0.0, %v3756
      %v3758 = vpop.f32.mrb[0].mxu0
      %3759 = vmatprep.mubr.f32.mxu0 0.0
      %3760 = vmatmul.mubr.f32.gmra.mrb[0].mxu0 %v3555
      %v3761 = vpop.f32.mrb[0].mxu0
      %v3762 = vadd.f32 0.0, %v3761
      %v3763 = vpop.f32.mrb[0].mxu0
      %3764 = vmatprep.mubr.f32.mxu0 0.0
      %3765 = vmatmul.mubr.f32.gmra.mrb[0].mxu0 %v3558
      %v3766 = vpop.f32.mrb[0].mxu0
      %v3767 = vadd.f32 0.0, %v3766
      %v3768 = vpop.f32.mrb[0].mxu0
      %3769 = vmatprep.mubr.f32.mxu0 0.0
      %3770 = vmatmul.mubr.f32.gmra.mrb[0].mxu0 %v3561
      %v3771 = vpop.f32.mrb[0].mxu0
      %v3772 = vadd.f32 0.0, %v3771
      %v3773 = vpop.f32.mrb[0].mxu0
      %3774 = vmatprep.mubr.f32.mxu0 0.0
      %3775 = vmatmul.mubr.f32.gmra.mrb[0].mxu0 %v3564
      %v3776 = vpop.f32.mrb[0].mxu0
      %v3777 = vadd.f32 0.0, %v3776
      %v3778 = vpop.f32.mrb[0].mxu0
      %3779 = vmatprep.mubr.f32.mxu0 0.0
      %3780 = vmatmul.mubr.f32.gmra.mrb[0].mxu0 %v3567
      %v3781 = vpop.f32.mrb[0].mxu0
      %v3782 = vadd.f32 0.0, %v3781
      %v3783 = vpop.f32.mrb[0].mxu0
      %3784 = vmatprep.mubr.f32.mxu0 0.0
      %3785 = vmatmul.mubr.f32.gmra.mrb[0].mxu0 %v3570
      %v3786 = vpop.f32.mrb[0].mxu0
      %v3787 = vadd.f32 0.0, %v3786
      %v3788 = vpop.f32.mrb[0].mxu0
      %3789 = vmatprep.mubr.f32.mxu0 0.0
      %3790 = vmatmul.mubr.f32.gmra.mrb[0].mxu0 %v3573
      %v3791 = vpop.f32.mrb[0].mxu0
      %v3792 = vadd.f32 0.0, %v3791
      %v3793 = vpop.f32.mrb[0].mxu0
      %3794 = vmatprep.mubr.f32.mxu0 0.0
      %3795 = vmatmul.mubr.f32.gmra.mrb[0].mxu0 %v3576
      %v3796 = vpop.f32.mrb[0].mxu0
      %v3797 = vadd.f32 0.0, %v3796
      %v3798 = vpop.f32.mrb[0].mxu0
      %3799 = vmatprep.mubr.f32.mxu0 0.0
      %3800 = vmatmul.mubr.f32.gmra.mrb[0].mxu0 %v3579
      %v3801 = vpop.f32.mrb[0].mxu0
      %v3802 = vadd.f32 0.0, %v3801
      %v3803 = vpop.f32.mrb[0].mxu0
      %3804 = vmatprep.mubr.f32.mxu0 0.0
      %3805 = vmatmul.mubr.f32.gmra.mrb[0].mxu0 %v3582
      %v3806 = vpop.f32.mrb[0].mxu0
      %v3807 = vadd.f32 0.0, %v3806
      %v3808 = vpop.f32.mrb[0].mxu0
      %3809 = vmatprep.mubr.f32.mxu0 0.0
      %3810 = vmatmul.mubr.f32.gmra.mrb[0].mxu0 %v3585
      %v3811 = vpop.f32.mrb[0].mxu0
      %v3812 = vadd.f32 0.0, %v3811
      %v3813 = vpop.f32.mrb[0].mxu0
      %3814 = vdwg.mxu0
      %v3815 = vadd.f32 %v3425, %v3657
      %v3816 = vadd.f32 %v3426, %v3662
      %v3817 = vadd.f32 %v3427, %v3667
      %v3818 = vadd.f32 %v3428, %v3672
      %v3819 = vadd.f32 %v3429, %v3677
      %v3820 = vadd.f32 %v3430, %v3682
      %v3821 = vadd.f32 %v3431, %v3687
      %v3822 = vadd.f32 %v3432, %v3692
      %v3823 = vadd.f32 %v3433, %v3697
      %v3824 = vadd.f32 %v3434, %v3702
      %v3825 = vadd.f32 %v3435, %v3707
      %v3826 = vadd.f32 %v3436, %v3712
      %v3827 = vadd.f32 %v3437, %v3717
      %v3828 = vadd.f32 %v3438, %v3722
      %v3829 = vadd.f32 %v3439, %v3727
      %v3830 = vadd.f32 %v3440, %v3732
      %v3831 = vadd.f32 %v3441, %v3737
      %v3832 = vadd.f32 %v3442, %v3742
      %v3833 = vadd.f32 %v3443, %v3747
      %v3834 = vadd.f32 %v3444, %v3752
      %v3835 = vadd.f32 %v3445, %v3757
      %v3836 = vadd.f32 %v3446, %v3762
      %v3837 = vadd.f32 %v3447, %v3767
      %v3838 = vadd.f32 %v3448, %v3772
      %v3839 = vadd.f32 %v3449, %v3777
      %v3840 = vadd.f32 %v3450, %v3782
      %v3841 = vadd.f32 %v3451, %v3787
      %v3842 = vadd.f32 %v3452, %v3792
      %v3843 = vadd.f32 %v3453, %v3797
      %v3844 = vadd.f32 %v3454, %v3802
      %v3845 = vadd.f32 %v3455, %v3807
      %v3846 = vadd.f32 %v3456, %v3812
      %v3847 = vld [vmem:[%s2] sm:$0x1]
      %v3849 = vlaneseq
      %v3850 = vshrl.u32 %v3849, 7
      %v3851 = vsub.s32 0, %v3850
      %v3852 = vrot.slane %v3847, %v3851
      %v3854 = vadd.f32 %v3815, %v3852
      %v3855 = vadd.f32 %v3816, %v3852
      %v3856 = vadd.f32 %v3817, %v3852
      %v3857 = vadd.f32 %v3818, %v3852
      %v3858 = vadd.f32 %v3819, %v3852
      %v3859 = vadd.f32 %v3820, %v3852
      %v3860 = vadd.f32 %v3821, %v3852
      %v3861 = vadd.f32 %v3822, %v3852
      %v3862 = vadd.f32 %v3823, %v3852
      %v3863 = vadd.f32 %v3824, %v3852
      %v3864 = vadd.f32 %v3825, %v3852
      %v3865 = vadd.f32 %v3826, %v3852
      %v3866 = vadd.f32 %v3827, %v3852
      %v3867 = vadd.f32 %v3828, %v3852
      %v3868 = vadd.f32 %v3829, %v3852
      %v3869 = vadd.f32 %v3830, %v3852
      %v3870 = vadd.f32 %v3831, %v3852
      %v3871 = vadd.f32 %v3832, %v3852
      %v3872 = vadd.f32 %v3833, %v3852
      %v3873 = vadd.f32 %v3834, %v3852
      %v3874 = vadd.f32 %v3835, %v3852
      %v3875 = vadd.f32 %v3836, %v3852
      %v3876 = vadd.f32 %v3837, %v3852
      %v3877 = vadd.f32 %v3838, %v3852
      %v3878 = vadd.f32 %v3839, %v3852
      %v3879 = vadd.f32 %v3840, %v3852
      %v3880 = vadd.f32 %v3841, %v3852
      %v3881 = vadd.f32 %v3842, %v3852
      %v3882 = vadd.f32 %v3843, %v3852
      %v3883 = vadd.f32 %v3844, %v3852
      %v3884 = vadd.f32 %v3845, %v3852
      %v3885 = vadd.f32 %v3846, %v3852
      %vm3886 = vcmp.ge.f32.partialorder %v3854, 0.0
      %vm3887 = vcmp.ge.f32.partialorder %v3855, 0.0
      %vm3888 = vcmp.ge.f32.partialorder %v3856, 0.0
      %vm3889 = vcmp.ge.f32.partialorder %v3857, 0.0
      %vm3890 = vcmp.ge.f32.partialorder %v3858, 0.0
      %vm3891 = vcmp.ge.f32.partialorder %v3859, 0.0
      %vm3892 = vcmp.ge.f32.partialorder %v3860, 0.0
      %vm3893 = vcmp.ge.f32.partialorder %v3861, 0.0
      %vm3894 = vcmp.ge.f32.partialorder %v3862, 0.0
      %vm3895 = vcmp.ge.f32.partialorder %v3863, 0.0
      %vm3896 = vcmp.ge.f32.partialorder %v3864, 0.0
      %vm3897 = vcmp.ge.f32.partialorder %v3865, 0.0
      %vm3898 = vcmp.ge.f32.partialorder %v3866, 0.0
      %vm3899 = vcmp.ge.f32.partialorder %v3867, 0.0
      %vm3900 = vcmp.ge.f32.partialorder %v3868, 0.0
      %vm3901 = vcmp.ge.f32.partialorder %v3869, 0.0
      %vm3902 = vcmp.ge.f32.partialorder %v3870, 0.0
      %vm3903 = vcmp.ge.f32.partialorder %v3871, 0.0
      %vm3904 = vcmp.ge.f32.partialorder %v3872, 0.0
      %vm3905 = vcmp.ge.f32.partialorder %v3873, 0.0
      %vm3906 = vcmp.ge.f32.partialorder %v3874, 0.0
      %vm3907 = vcmp.ge.f32.partialorder %v3875, 0.0
      %vm3908 = vcmp.ge.f32.partialorder %v3876, 0.0
      %vm3909 = vcmp.ge.f32.partialorder %v3877, 0.0
      %vm3910 = vcmp.ge.f32.partialorder %v3878, 0.0
      %vm3911 = vcmp.ge.f32.partialorder %v3879, 0.0
      %vm3912 = vcmp.ge.f32.partialorder %v3880, 0.0
      %vm3913 = vcmp.ge.f32.partialorder %v3881, 0.0
      %vm3914 = vcmp.ge.f32.partialorder %v3882, 0.0
      %vm3915 = vcmp.ge.f32.partialorder %v3883, 0.0
      %vm3916 = vcmp.ge.f32.partialorder %v3884, 0.0
      %vm3917 = vcmp.ge.f32.partialorder %v3885, 0.0
      %v3918 = vmul.f32 %v3854, 0.1
      %v3919 = vmul.f32 %v3855, 0.1
      %v3920 = vmul.f32 %v3856, 0.1
      %v3921 = vmul.f32 %v3857, 0.1
      %v3922 = vmul.f32 %v3858, 0.1
      %v3923 = vmul.f32 %v3859, 0.1
      %v3924 = vmul.f32 %v3860, 0.1
      %v3925 = vmul.f32 %v3861, 0.1
      %v3926 = vmul.f32 %v3862, 0.1
      %v3927 = vmul.f32 %v3863, 0.1
      %v3928 = vmul.f32 %v3864, 0.1
      %v3929 = vmul.f32 %v3865, 0.1
      %v3930 = vmul.f32 %v3866, 0.1
      %v3931 = vmul.f32 %v3867, 0.1
      %v3932 = vmul.f32 %v3868, 0.1
      %v3933 = vmul.f32 %v3869, 0.1
      %v3934 = vmul.f32 %v3870, 0.1
      %v3935 = vmul.f32 %v3871, 0.1
      %v3936 = vmul.f32 %v3872, 0.1
      %v3937 = vmul.f32 %v3873, 0.1
      %v3938 = vmul.f32 %v3874, 0.1
      %v3939 = vmul.f32 %v3875, 0.1
      %v3940 = vmul.f32 %v3876, 0.1
      %v3941 = vmul.f32 %v3877, 0.1
      %v3942 = vmul.f32 %v3878, 0.1
      %v3943 = vmul.f32 %v3879, 0.1
      %v3944 = vmul.f32 %v3880, 0.1
      %v3945 = vmul.f32 %v3881, 0.1
      %v3946 = vmul.f32 %v3882, 0.1
      %v3947 = vmul.f32 %v3883, 0.1
      %v3948 = vmul.f32 %v3884, 0.1
      %v3949 = vmul.f32 %v3885, 0.1
      %v3950 = vsel %vm3886, %v3854, %v3918
      %v3951 = vsel %vm3887, %v3855, %v3919
      %v3952 = vsel %vm3888, %v3856, %v3920
      %v3953 = vsel %vm3889, %v3857, %v3921
      %v3954 = vsel %vm3890, %v3858, %v3922
      %v3955 = vsel %vm3891, %v3859, %v3923
      %v3956 = vsel %vm3892, %v3860, %v3924
      %v3957 = vsel %vm3893, %v3861, %v3925
      %v3958 = vsel %vm3894, %v3862, %v3926
      %v3959 = vsel %vm3895, %v3863, %v3927
      %v3960 = vsel %vm3896, %v3864, %v3928
      %v3961 = vsel %vm3897, %v3865, %v3929
      %v3962 = vsel %vm3898, %v3866, %v3930
      %v3963 = vsel %vm3899, %v3867, %v3931
      %v3964 = vsel %vm3900, %v3868, %v3932
      %v3965 = vsel %vm3901, %v3869, %v3933
      %v3966 = vsel %vm3902, %v3870, %v3934
      %v3967 = vsel %vm3903, %v3871, %v3935
      %v3968 = vsel %vm3904, %v3872, %v3936
      %v3969 = vsel %vm3905, %v3873, %v3937
      %v3970 = vsel %vm3906, %v3874, %v3938
      %v3971 = vsel %vm3907, %v3875, %v3939
      %v3972 = vsel %vm3908, %v3876, %v3940
      %v3973 = vsel %vm3909, %v3877, %v3941
      %v3974 = vsel %vm3910, %v3878, %v3942
      %v3975 = vsel %vm3911, %v3879, %v3943
      %v3976 = vsel %vm3912, %v3880, %v3944
      %v3977 = vsel %vm3913, %v3881, %v3945
      %v3978 = vsel %vm3914, %v3882, %v3946
      %v3979 = vsel %vm3915, %v3883, %v3947
      %v3980 = vsel %vm3916, %v3884, %v3948
      %v3981 = vsel %vm3917, %v3885, %v3949
      %s3982 = scalar_lea.vmem [#allocation3], 24
      %3983 = vst [vmem:[%s3982 + $0x1] sm:$0xff] %v3950
      %3984 = vst [vmem:[%s3982 + $0x9] sm:$0xff] %v3951
      %3985 = vst [vmem:[%s3982 + $0x19] sm:$0xff] %v3952
      %3986 = vst [vmem:[%s3982 + $0x21] sm:$0xff] %v3953
      %3987 = vst [vmem:[%s3982 + $0x31] sm:$0xff] %v3954
      %3988 = vst [vmem:[%s3982 + $0x39] sm:$0xff] %v3955
      %3989 = vst [vmem:[%s3982 + $0x49] sm:$0xff] %v3956
      %3990 = vst [vmem:[%s3982 + $0x51] sm:$0xff] %v3957
      %3991 = vst [vmem:[%s3982 + $0x61] sm:$0xff] %v3958
      %3992 = vst [vmem:[%s3982 + $0x69] sm:$0xff] %v3959
      %3993 = vst [vmem:[%s3982 + $0x79] sm:$0xff] %v3960
      %3994 = vst [vmem:[%s3982 + $0x81] sm:$0xff] %v3961
      %3995 = vst [vmem:[%s3982 + $0x91] sm:$0xff] %v3962
      %3996 = vst [vmem:[%s3982 + $0x99] sm:$0xff] %v3963
      %3997 = vst [vmem:[%s3982 + $0xa9] sm:$0xff] %v3964
      %3998 = vst [vmem:[%s3982 + $0xb1] sm:$0xff] %v3965
      %3999 = vst [vmem:[%s3982 + $0xc1] sm:$0xff] %v3966
      %4000 = vst [vmem:[%s3982 + $0xc9] sm:$0xff] %v3967
      %4001 = vst [vmem:[%s3982 + $0xd9] sm:$0xff] %v3968
      %4002 = vst [vmem:[%s3982 + $0xe1] sm:$0xff] %v3969
      %4003 = vst [vmem:[%s3982 + $0xf1] sm:$0xff] %v3970
      %4004 = vst [vmem:[%s3982 + $0xf9] sm:$0xff] %v3971
      %4005 = vst [vmem:[%s3982 + $0x109] sm:$0xff] %v3972
      %4006 = vst [vmem:[%s3982 + $0x111] sm:$0xff] %v3973
      %4007 = vst [vmem:[%s3982 + $0x121] sm:$0xff] %v3974
      %4008 = vst [vmem:[%s3982 + $0x129] sm:$0xff] %v3975
      %4009 = vst [vmem:[%s3982 + $0x139] sm:$0xff] %v3976
      %4010 = vst [vmem:[%s3982 + $0x141] sm:$0xff] %v3977
      %4011 = vst [vmem:[%s3982 + $0x151] sm:$0xff] %v3978
      %4012 = vst [vmem:[%s3982 + $0x159] sm:$0xff] %v3979
      %4013 = vst [vmem:[%s3982 + $0x169] sm:$0xff] %v3980
      %4014 = vst [vmem:[%s3982 + $0x171] sm:$0xff] %v3981
      %v4015 = vld [vmem:[#allocation3] sm:$0xff]
      %v4016 = vld [vmem:[#allocation3 + $0x8] sm:$0xff]
      %v4017 = vld [vmem:[#allocation3 + $0x18] sm:$0xff]
      %v4018 = vld [vmem:[#allocation3 + $0x20] sm:$0xff]
      %v4019 = vld [vmem:[#allocation3 + $0x30] sm:$0xff]
      %v4020 = vld [vmem:[#allocation3 + $0x38] sm:$0xff]
      %v4021 = vld [vmem:[#allocation3 + $0x48] sm:$0xff]
      %v4022 = vld [vmem:[#allocation3 + $0x50] sm:$0xff]
      %v4023 = vld [vmem:[#allocation3 + $0x60] sm:$0xff]
      %v4024 = vld [vmem:[#allocation3 + $0x68] sm:$0xff]
      %v4025 = vld [vmem:[#allocation3 + $0x78] sm:$0xff]
      %v4026 = vld [vmem:[#allocation3 + $0x80] sm:$0xff]
      %v4027 = vld [vmem:[#allocation3 + $0x90] sm:$0xff]
      %v4028 = vld [vmem:[#allocation3 + $0x98] sm:$0xff]
      %v4029 = vld [vmem:[#allocation3 + $0xa8] sm:$0xff]
      %v4030 = vld [vmem:[#allocation3 + $0xb0] sm:$0xff]
      %v4031 = vld [vmem:[#allocation3 + $0xc0] sm:$0xff]
      %v4032 = vld [vmem:[#allocation3 + $0xc8] sm:$0xff]
      %v4033 = vld [vmem:[#allocation3 + $0xd8] sm:$0xff]
      %v4034 = vld [vmem:[#allocation3 + $0xe0] sm:$0xff]
      %v4035 = vld [vmem:[#allocation3 + $0xf0] sm:$0xff]
      %v4036 = vld [vmem:[#allocation3 + $0xf8] sm:$0xff]
      %v4037 = vld [vmem:[#allocation3 + $0x108] sm:$0xff]
      %v4038 = vld [vmem:[#allocation3 + $0x110] sm:$0xff]
      %v4039 = vld [vmem:[#allocation3 + $0x120] sm:$0xff]
      %v4040 = vld [vmem:[#allocation3 + $0x128] sm:$0xff]
      %v4041 = vld [vmem:[#allocation3 + $0x138] sm:$0xff]
      %v4042 = vld [vmem:[#allocation3 + $0x140] sm:$0xff]
      %v4043 = vld [vmem:[#allocation3 + $0x150] sm:$0xff]
      %v4044 = vld [vmem:[#allocation3 + $0x158] sm:$0xff]
      %v4045 = vld [vmem:[#allocation3 + $0x168] sm:$0xff]
      %v4046 = vld [vmem:[#allocation3 + $0x170] sm:$0xff]
      %v4047 = vld [vmem:[%s3] sm:$0xff]
      %v4048 = vld [vmem:[%s3 + $0x8] sm:$0xff]
      %v4049 = vld [vmem:[%s3 + $0x10] sm:$0xff]
      %v4050 = vld [vmem:[%s3 + $0x18] sm:$0xff]
      %v4051 = vld [vmem:[%s3 + $0x20] sm:$0xff]
      %v4052 = vld [vmem:[%s3 + $0x28] sm:$0xff]
      %v4053 = vld [vmem:[%s3 + $0x30] sm:$0xff]
      %v4054 = vld [vmem:[%s3 + $0x38] sm:$0xff]
      %v4055 = vld [vmem:[%s3 + $0x40] sm:$0xff]
      %v4056 = vld [vmem:[%s3 + $0x48] sm:$0xff]
      %v4057 = vld [vmem:[%s3 + $0x50] sm:$0xff]
      %v4058 = vld [vmem:[%s3 + $0x58] sm:$0xff]
      %v4059 = vld [vmem:[%s3 + $0x60] sm:$0xff]
      %v4060 = vld [vmem:[%s3 + $0x68] sm:$0xff]
      %v4061 = vld [vmem:[%s3 + $0x70] sm:$0xff]
      %v4062 = vld [vmem:[%s3 + $0x78] sm:$0xff]
      %v4063 = vld [vmem:[#allocation3 + $0x1] sm:$0xff]
      %v4064 = vld [vmem:[#allocation3 + $0x9] sm:$0xff]
      %v4065 = vld [vmem:[#allocation3 + $0x19] sm:$0xff]
      %v4066 = vld [vmem:[#allocation3 + $0x21] sm:$0xff]
      %v4067 = vld [vmem:[#allocation3 + $0x31] sm:$0xff]
      %v4068 = vld [vmem:[#allocation3 + $0x39] sm:$0xff]
      %v4069 = vld [vmem:[#allocation3 + $0x49] sm:$0xff]
      %v4070 = vld [vmem:[#allocation3 + $0x51] sm:$0xff]
      %v4071 = vld [vmem:[#allocation3 + $0x61] sm:$0xff]
      %v4072 = vld [vmem:[#allocation3 + $0x69] sm:$0xff]
      %v4073 = vld [vmem:[#allocation3 + $0x79] sm:$0xff]
      %v4074 = vld [vmem:[#allocation3 + $0x81] sm:$0xff]
      %v4075 = vld [vmem:[#allocation3 + $0x91] sm:$0xff]
      %v4076 = vld [vmem:[#allocation3 + $0x99] sm:$0xff]
      %v4077 = vld [vmem:[#allocation3 + $0xa9] sm:$0xff]
      %v4078 = vld [vmem:[#allocation3 + $0xb1] sm:$0xff]
      %v4079 = vld [vmem:[#allocation3 + $0xc1] sm:$0xff]
      %v4080 = vld [vmem:[#allocation3 + $0xc9] sm:$0xff]
      %v4081 = vld [vmem:[#allocation3 + $0xd9] sm:$0xff]
      %v4082 = vld [vmem:[#allocation3 + $0xe1] sm:$0xff]
      %v4083 = vld [vmem:[#allocation3 + $0xf1] sm:$0xff]
      %v4084 = vld [vmem:[#allocation3 + $0xf9] sm:$0xff]
      %v4085 = vld [vmem:[#allocation3 + $0x109] sm:$0xff]
      %v4086 = vld [vmem:[#allocation3 + $0x111] sm:$0xff]
      %v4087 = vld [vmem:[#allocation3 + $0x121] sm:$0xff]
      %v4088 = vld [vmem:[#allocation3 + $0x129] sm:$0xff]
      %v4089 = vld [vmem:[#allocation3 + $0x139] sm:$0xff]
      %v4090 = vld [vmem:[#allocation3 + $0x141] sm:$0xff]
      %v4091 = vld [vmem:[#allocation3 + $0x151] sm:$0xff]
      %v4092 = vld [vmem:[#allocation3 + $0x159] sm:$0xff]
      %v4093 = vld [vmem:[#allocation3 + $0x169] sm:$0xff]
      %v4094 = vld [vmem:[#allocation3 + $0x171] sm:$0xff]
      %s4095 = scalar_lea.vmem %s3, 128
      %v4096 = vld [vmem:[%s4095] sm:$0xff]
      %v4097 = vld [vmem:[%s4095 + $0x8] sm:$0xff]
      %v4098 = vld [vmem:[%s4095 + $0x10] sm:$0xff]
      %v4099 = vld [vmem:[%s4095 + $0x18] sm:$0xff]
      %v4100 = vld [vmem:[%s4095 + $0x20] sm:$0xff]
      %v4101 = vld [vmem:[%s4095 + $0x28] sm:$0xff]
      %v4102 = vld [vmem:[%s4095 + $0x30] sm:$0xff]
      %v4103 = vld [vmem:[%s4095 + $0x38] sm:$0xff]
      %v4104 = vld [vmem:[%s4095 + $0x40] sm:$0xff]
      %v4105 = vld [vmem:[%s4095 + $0x48] sm:$0xff]
      %v4106 = vld [vmem:[%s4095 + $0x50] sm:$0xff]
      %v4107 = vld [vmem:[%s4095 + $0x58] sm:$0xff]
      %v4108 = vld [vmem:[%s4095 + $0x60] sm:$0xff]
      %v4109 = vld [vmem:[%s4095 + $0x68] sm:$0xff]
      %v4110 = vld [vmem:[%s4095 + $0x70] sm:$0xff]
      %v4111 = vld [vmem:[%s4095 + $0x78] sm:$0xff]
      %4112 = vmatprep.subr.mxu0 0.0
      %4113 = vmatpush1.msra.mxu0 %v4096
      %4114 = vmatprep.subr.mxu0 0.0
      %4115 = vmatpush1.msra.mxu0 %v4097
      %4116 = vmatprep.subr.mxu0 0.0
      %4117 = vmatpush1.msra.mxu0 %v4098
      %4118 = vmatprep.subr.mxu0 0.0
      %4119 = vmatpush1.msra.mxu0 %v4099
      %4120 = vmatprep.subr.mxu0 0.0
      %4121 = vmatpush1.msra.mxu0 %v4100
      %4122 = vmatprep.subr.mxu0 0.0
      %4123 = vmatpush1.msra.mxu0 %v4101
      %4124 = vmatprep.subr.mxu0 0.0
      %4125 = vmatpush1.msra.mxu0 %v4102
      %4126 = vmatprep.subr.mxu0 0.0
      %4127 = vmatpush1.msra.mxu0 %v4103
      %4128 = vmatprep.subr.mxu0 0.0
      %4129 = vmatpush1.msra.mxu0 %v4104
      %4130 = vmatprep.subr.mxu0 0.0
      %4131 = vmatpush1.msra.mxu0 %v4105
      %4132 = vmatprep.subr.mxu0 0.0
      %4133 = vmatpush1.msra.mxu0 %v4106
      %4134 = vmatprep.subr.mxu0 0.0
      %4135 = vmatpush1.msra.mxu0 %v4107
      %4136 = vmatprep.subr.mxu0 0.0
      %4137 = vmatpush1.msra.mxu0 %v4108
      %4138 = vmatprep.subr.mxu0 0.0
      %4139 = vmatpush1.msra.mxu0 %v4109
      %4140 = vmatprep.subr.mxu0 0.0
      %4141 = vmatpush1.msra.mxu0 %v4110
      %4142 = vmatprep.subr.mxu0 0.0
      %4143 = vmatpush1.msra.mxu0 %v4111
      %4144 = vmatprep.subr.mxu0 0.0
      %4145 = vmatpush1.msra.mxu0 0.0
      %4146 = vmatprep.subr.mxu0 0.0
      %4147 = vmatpush1.msra.mxu0 0.0
      %4148 = vmatprep.subr.mxu0 0.0
      %4149 = vmatpush1.msra.mxu0 0.0
      %4150 = vmatprep.subr.mxu0 0.0
      %4151 = vmatpush1.msra.mxu0 0.0
      %4152 = vmatprep.subr.mxu0 0.0
      %4153 = vmatpush1.msra.mxu0 0.0
      %4154 = vmatprep.subr.mxu0 0.0
      %4155 = vmatpush1.msra.mxu0 0.0
      %4156 = vmatprep.subr.mxu0 0.0
      %4157 = vmatpush1.msra.mxu0 0.0
      %4158 = vmatprep.subr.mxu0 0.0
      %4159 = vmatpush1.msra.mxu0 0.0
      %4160 = vmatprep.subr.mxu0 0.0
      %4161 = vmatpush1.msra.mxu0 0.0
      %4162 = vmatprep.subr.mxu0 0.0
      %4163 = vmatpush1.msra.mxu0 0.0
      %4164 = vmatprep.subr.mxu0 0.0
      %4165 = vmatpush1.msra.mxu0 0.0
      %4166 = vmatprep.subr.mxu0 0.0
      %4167 = vmatpush1.msra.mxu0 0.0
      %4168 = vmatprep.subr.mxu0 0.0
      %4169 = vmatpush1.msra.mxu0 0.0
      %4170 = vmatprep.subr.mxu0 0.0
      %4171 = vmatpush1.msra.mxu0 0.0
      %4172 = vmatprep.subr.mxu0 0.0
      %4173 = vmatpush1.msra.mxu0 0.0
      %4174 = vmatprep.subr.mxu0 0.0
      %4175 = vmatpush1.msra.mxu0 0.0
      %4176 = vmatprep.mubr.f32.mxu0 0.0
      %4177 = vmatmul.mubr.f32.gmra.mrb[0].mxu0 %v4063
      %v4178 = vpop.f32.mrb[0].mxu0
      %v4179 = vadd.f32 0.0, %v4178
      %v4180 = vpop.f32.mrb[0].mxu0
      %4181 = vmatprep.mubr.f32.mxu0 0.0
      %4182 = vmatmul.mubr.f32.gmra.mrb[0].mxu0 %v4064
      %v4183 = vpop.f32.mrb[0].mxu0
      %v4184 = vadd.f32 0.0, %v4183
      %v4185 = vpop.f32.mrb[0].mxu0
      %4186 = vmatprep.mubr.f32.mxu0 0.0
      %4187 = vmatmul.mubr.f32.gmra.mrb[0].mxu0 %v4065
      %v4188 = vpop.f32.mrb[0].mxu0
      %v4189 = vadd.f32 0.0, %v4188
      %v4190 = vpop.f32.mrb[0].mxu0
      %4191 = vmatprep.mubr.f32.mxu0 0.0
      %4192 = vmatmul.mubr.f32.gmra.mrb[0].mxu0 %v4066
      %v4193 = vpop.f32.mrb[0].mxu0
      %v4194 = vadd.f32 0.0, %v4193
      %v4195 = vpop.f32.mrb[0].mxu0
      %4196 = vmatprep.mubr.f32.mxu0 0.0
      %4197 = vmatmul.mubr.f32.gmra.mrb[0].mxu0 %v4067
      %v4198 = vpop.f32.mrb[0].mxu0
      %v4199 = vadd.f32 0.0, %v4198
      %v4200 = vpop.f32.mrb[0].mxu0
      %4201 = vmatprep.mubr.f32.mxu0 0.0
      %4202 = vmatmul.mubr.f32.gmra.mrb[0].mxu0 %v4068
      %v4203 = vpop.f32.mrb[0].mxu0
      %v4204 = vadd.f32 0.0, %v4203
      %v4205 = vpop.f32.mrb[0].mxu0
      %4206 = vmatprep.mubr.f32.mxu0 0.0
      %4207 = vmatmul.mubr.f32.gmra.mrb[0].mxu0 %v4069
      %v4208 = vpop.f32.mrb[0].mxu0
      %v4209 = vadd.f32 0.0, %v4208
      %v4210 = vpop.f32.mrb[0].mxu0
      %4211 = vmatprep.mubr.f32.mxu0 0.0
      %4212 = vmatmul.mubr.f32.gmra.mrb[0].mxu0 %v4070
      %v4213 = vpop.f32.mrb[0].mxu0
      %v4214 = vadd.f32 0.0, %v4213
      %v4215 = vpop.f32.mrb[0].mxu0
      %4216 = vmatprep.mubr.f32.mxu0 0.0
      %4217 = vmatmul.mubr.f32.gmra.mrb[0].mxu0 %v4071
      %v4218 = vpop.f32.mrb[0].mxu0
      %v4219 = vadd.f32 0.0, %v4218
      %v4220 = vpop.f32.mrb[0].mxu0
      %4221 = vmatprep.mubr.f32.mxu0 0.0
      %4222 = vmatmul.mubr.f32.gmra.mrb[0].mxu0 %v4072
      %v4223 = vpop.f32.mrb[0].mxu0
      %v4224 = vadd.f32 0.0, %v4223
      %v4225 = vpop.f32.mrb[0].mxu0
      %4226 = vmatprep.mubr.f32.mxu0 0.0
      %4227 = vmatmul.mubr.f32.gmra.mrb[0].mxu0 %v4073
      %v4228 = vpop.f32.mrb[0].mxu0
      %v4229 = vadd.f32 0.0, %v4228
      %v4230 = vpop.f32.mrb[0].mxu0
      %4231 = vmatprep.mubr.f32.mxu0 0.0
      %4232 = vmatmul.mubr.f32.gmra.mrb[0].mxu0 %v4074
      %v4233 = vpop.f32.mrb[0].mxu0
      %v4234 = vadd.f32 0.0, %v4233
      %v4235 = vpop.f32.mrb[0].mxu0
      %4236 = vmatprep.mubr.f32.mxu0 0.0
      %4237 = vmatmul.mubr.f32.gmra.mrb[0].mxu0 %v4075
      %v4238 = vpop.f32.mrb[0].mxu0
      %v4239 = vadd.f32 0.0, %v4238
      %v4240 = vpop.f32.mrb[0].mxu0
      %4241 = vmatprep.mubr.f32.mxu0 0.0
      %4242 = vmatmul.mubr.f32.gmra.mrb[0].mxu0 %v4076
      %v4243 = vpop.f32.mrb[0].mxu0
      %v4244 = vadd.f32 0.0, %v4243
      %v4245 = vpop.f32.mrb[0].mxu0
      %4246 = vmatprep.mubr.f32.mxu0 0.0
      %4247 = vmatmul.mubr.f32.gmra.mrb[0].mxu0 %v4077
      %v4248 = vpop.f32.mrb[0].mxu0
      %v4249 = vadd.f32 0.0, %v4248
      %v4250 = vpop.f32.mrb[0].mxu0
      %4251 = vmatprep.mubr.f32.mxu0 0.0
      %4252 = vmatmul.mubr.f32.gmra.mrb[0].mxu0 %v4078
      %v4253 = vpop.f32.mrb[0].mxu0
      %v4254 = vadd.f32 0.0, %v4253
      %v4255 = vpop.f32.mrb[0].mxu0
      %4256 = vmatprep.mubr.f32.mxu0 0.0
      %4257 = vmatmul.mubr.f32.gmra.mrb[0].mxu0 %v4079
      %v4258 = vpop.f32.mrb[0].mxu0
      %v4259 = vadd.f32 0.0, %v4258
      %v4260 = vpop.f32.mrb[0].mxu0
      %4261 = vmatprep.mubr.f32.mxu0 0.0
      %4262 = vmatmul.mubr.f32.gmra.mrb[0].mxu0 %v4080
      %v4263 = vpop.f32.mrb[0].mxu0
      %v4264 = vadd.f32 0.0, %v4263
      %v4265 = vpop.f32.mrb[0].mxu0
      %4266 = vmatprep.mubr.f32.mxu0 0.0
      %4267 = vmatmul.mubr.f32.gmra.mrb[0].mxu0 %v4081
      %v4268 = vpop.f32.mrb[0].mxu0
      %v4269 = vadd.f32 0.0, %v4268
      %v4270 = vpop.f32.mrb[0].mxu0
      %4271 = vmatprep.mubr.f32.mxu0 0.0
      %4272 = vmatmul.mubr.f32.gmra.mrb[0].mxu0 %v4082
      %v4273 = vpop.f32.mrb[0].mxu0
      %v4274 = vadd.f32 0.0, %v4273
      %v4275 = vpop.f32.mrb[0].mxu0
      %4276 = vmatprep.mubr.f32.mxu0 0.0
      %4277 = vmatmul.mubr.f32.gmra.mrb[0].mxu0 %v4083
      %v4278 = vpop.f32.mrb[0].mxu0
      %v4279 = vadd.f32 0.0, %v4278
      %v4280 = vpop.f32.mrb[0].mxu0
      %4281 = vmatprep.mubr.f32.mxu0 0.0
      %4282 = vmatmul.mubr.f32.gmra.mrb[0].mxu0 %v4084
      %v4283 = vpop.f32.mrb[0].mxu0
      %v4284 = vadd.f32 0.0, %v4283
      %v4285 = vpop.f32.mrb[0].mxu0
      %4286 = vmatprep.mubr.f32.mxu0 0.0
      %4287 = vmatmul.mubr.f32.gmra.mrb[0].mxu0 %v4085
      %v4288 = vpop.f32.mrb[0].mxu0
      %v4289 = vadd.f32 0.0, %v4288
      %v4290 = vpop.f32.mrb[0].mxu0
      %4291 = vmatprep.mubr.f32.mxu0 0.0
      %4292 = vmatmul.mubr.f32.gmra.mrb[0].mxu0 %v4086
      %v4293 = vpop.f32.mrb[0].mxu0
      %v4294 = vadd.f32 0.0, %v4293
      %v4295 = vpop.f32.mrb[0].mxu0
      %4296 = vmatprep.mubr.f32.mxu0 0.0
      %4297 = vmatmul.mubr.f32.gmra.mrb[0].mxu0 %v4087
      %v4298 = vpop.f32.mrb[0].mxu0
      %v4299 = vadd.f32 0.0, %v4298
      %v4300 = vpop.f32.mrb[0].mxu0
      %4301 = vmatprep.mubr.f32.mxu0 0.0
      %4302 = vmatmul.mubr.f32.gmra.mrb[0].mxu0 %v4088
      %v4303 = vpop.f32.mrb[0].mxu0
      %v4304 = vadd.f32 0.0, %v4303
      %v4305 = vpop.f32.mrb[0].mxu0
      %4306 = vmatprep.mubr.f32.mxu0 0.0
      %4307 = vmatmul.mubr.f32.gmra.mrb[0].mxu0 %v4089
      %v4308 = vpop.f32.mrb[0].mxu0
      %v4309 = vadd.f32 0.0, %v4308
      %v4310 = vpop.f32.mrb[0].mxu0
      %4311 = vmatprep.mubr.f32.mxu0 0.0
      %4312 = vmatmul.mubr.f32.gmra.mrb[0].mxu0 %v4090
      %v4313 = vpop.f32.mrb[0].mxu0
      %v4314 = vadd.f32 0.0, %v4313
      %v4315 = vpop.f32.mrb[0].mxu0
      %4316 = vmatprep.mubr.f32.mxu0 0.0
      %4317 = vmatmul.mubr.f32.gmra.mrb[0].mxu0 %v4091
      %v4318 = vpop.f32.mrb[0].mxu0
      %v4319 = vadd.f32 0.0, %v4318
      %v4320 = vpop.f32.mrb[0].mxu0
      %4321 = vmatprep.mubr.f32.mxu0 0.0
      %4322 = vmatmul.mubr.f32.gmra.mrb[0].mxu0 %v4092
      %v4323 = vpop.f32.mrb[0].mxu0
      %v4324 = vadd.f32 0.0, %v4323
      %v4325 = vpop.f32.mrb[0].mxu0
      %4326 = vmatprep.mubr.f32.mxu0 0.0
      %4327 = vmatmul.mubr.f32.gmra.mrb[0].mxu0 %v4093
      %v4328 = vpop.f32.mrb[0].mxu0
      %v4329 = vadd.f32 0.0, %v4328
      %v4330 = vpop.f32.mrb[0].mxu0
      %4331 = vmatprep.mubr.f32.mxu0 0.0
      %4332 = vmatmul.mubr.f32.gmra.mrb[0].mxu0 %v4094
      %v4333 = vpop.f32.mrb[0].mxu0
      %v4334 = vadd.f32 0.0, %v4333
      %v4335 = vpop.f32.mrb[0].mxu0
      %4336 = vdwg.mxu0
      %4337 = vmatprep.subr.mxu0 0.0
      %4338 = vmatpush1.msra.mxu0 %v4047
      %4339 = vmatprep.subr.mxu0 0.0
      %4340 = vmatpush1.msra.mxu0 %v4048
      %4341 = vmatprep.subr.mxu0 0.0
      %4342 = vmatpush1.msra.mxu0 %v4049
      %4343 = vmatprep.subr.mxu0 0.0
      %4344 = vmatpush1.msra.mxu0 %v4050
      %4345 = vmatprep.subr.mxu0 0.0
      %4346 = vmatpush1.msra.mxu0 %v4051
      %4347 = vmatprep.subr.mxu0 0.0
      %4348 = vmatpush1.msra.mxu0 %v4052
      %4349 = vmatprep.subr.mxu0 0.0
      %4350 = vmatpush1.msra.mxu0 %v4053
      %4351 = vmatprep.subr.mxu0 0.0
      %4352 = vmatpush1.msra.mxu0 %v4054
      %4353 = vmatprep.subr.mxu0 0.0
      %4354 = vmatpush1.msra.mxu0 %v4055
      %4355 = vmatprep.subr.mxu0 0.0
      %4356 = vmatpush1.msra.mxu0 %v4056
      %4357 = vmatprep.subr.mxu0 0.0
      %4358 = vmatpush1.msra.mxu0 %v4057
      %4359 = vmatprep.subr.mxu0 0.0
      %4360 = vmatpush1.msra.mxu0 %v4058
      %4361 = vmatprep.subr.mxu0 0.0
      %4362 = vmatpush1.msra.mxu0 %v4059
      %4363 = vmatprep.subr.mxu0 0.0
      %4364 = vmatpush1.msra.mxu0 %v4060
      %4365 = vmatprep.subr.mxu0 0.0
      %4366 = vmatpush1.msra.mxu0 %v4061
      %4367 = vmatprep.subr.mxu0 0.0
      %4368 = vmatpush1.msra.mxu0 %v4062
      %4369 = vmatprep.subr.mxu0 0.0
      %4370 = vmatpush1.msra.mxu0 0.0
      %4371 = vmatprep.subr.mxu0 0.0
      %4372 = vmatpush1.msra.mxu0 0.0
      %4373 = vmatprep.subr.mxu0 0.0
      %4374 = vmatpush1.msra.mxu0 0.0
      %4375 = vmatprep.subr.mxu0 0.0
      %4376 = vmatpush1.msra.mxu0 0.0
      %4377 = vmatprep.subr.mxu0 0.0
      %4378 = vmatpush1.msra.mxu0 0.0
      %4379 = vmatprep.subr.mxu0 0.0
      %4380 = vmatpush1.msra.mxu0 0.0
      %4381 = vmatprep.subr.mxu0 0.0
      %4382 = vmatpush1.msra.mxu0 0.0
      %4383 = vmatprep.subr.mxu0 0.0
      %4384 = vmatpush1.msra.mxu0 0.0
      %4385 = vmatprep.subr.mxu0 0.0
      %4386 = vmatpush1.msra.mxu0 0.0
      %4387 = vmatprep.subr.mxu0 0.0
      %4388 = vmatpush1.msra.mxu0 0.0
      %4389 = vmatprep.subr.mxu0 0.0
      %4390 = vmatpush1.msra.mxu0 0.0
      %4391 = vmatprep.subr.mxu0 0.0
      %4392 = vmatpush1.msra.mxu0 0.0
      %4393 = vmatprep.subr.mxu0 0.0
      %4394 = vmatpush1.msra.mxu0 0.0
      %4395 = vmatprep.subr.mxu0 0.0
      %4396 = vmatpush1.msra.mxu0 0.0
      %4397 = vmatprep.subr.mxu0 0.0
      %4398 = vmatpush1.msra.mxu0 0.0
      %4399 = vmatprep.subr.mxu0 0.0
      %4400 = vmatpush1.msra.mxu0 0.0
      %4401 = vmatprep.mubr.f32.mxu0 0.0
      %4402 = vmatmul.mubr.f32.gmra.mrb[0].mxu0 %v4015
      %v4403 = vpop.f32.mrb[0].mxu0
      %v4404 = vadd.f32 %v4179, %v4403
      %v4405 = vpop.f32.mrb[0].mxu0
      %4406 = vmatprep.mubr.f32.mxu0 0.0
      %4407 = vmatmul.mubr.f32.gmra.mrb[0].mxu0 %v4016
      %v4408 = vpop.f32.mrb[0].mxu0
      %v4409 = vadd.f32 %v4184, %v4408
      %v4410 = vpop.f32.mrb[0].mxu0
      %4411 = vmatprep.mubr.f32.mxu0 0.0
      %4412 = vmatmul.mubr.f32.gmra.mrb[0].mxu0 %v4017
      %v4413 = vpop.f32.mrb[0].mxu0
      %v4414 = vadd.f32 %v4189, %v4413
      %v4415 = vpop.f32.mrb[0].mxu0
      %4416 = vmatprep.mubr.f32.mxu0 0.0
      %4417 = vmatmul.mubr.f32.gmra.mrb[0].mxu0 %v4018
      %v4418 = vpop.f32.mrb[0].mxu0
      %v4419 = vadd.f32 %v4194, %v4418
      %v4420 = vpop.f32.mrb[0].mxu0
      %4421 = vmatprep.mubr.f32.mxu0 0.0
      %4422 = vmatmul.mubr.f32.gmra.mrb[0].mxu0 %v4019
      %v4423 = vpop.f32.mrb[0].mxu0
      %v4424 = vadd.f32 %v4199, %v4423
      %v4425 = vpop.f32.mrb[0].mxu0
      %4426 = vmatprep.mubr.f32.mxu0 0.0
      %4427 = vmatmul.mubr.f32.gmra.mrb[0].mxu0 %v4020
      %v4428 = vpop.f32.mrb[0].mxu0
      %v4429 = vadd.f32 %v4204, %v4428
      %v4430 = vpop.f32.mrb[0].mxu0
      %4431 = vmatprep.mubr.f32.mxu0 0.0
      %4432 = vmatmul.mubr.f32.gmra.mrb[0].mxu0 %v4021
      %v4433 = vpop.f32.mrb[0].mxu0
      %v4434 = vadd.f32 %v4209, %v4433
      %v4435 = vpop.f32.mrb[0].mxu0
      %4436 = vmatprep.mubr.f32.mxu0 0.0
      %4437 = vmatmul.mubr.f32.gmra.mrb[0].mxu0 %v4022
      %v4438 = vpop.f32.mrb[0].mxu0
      %v4439 = vadd.f32 %v4214, %v4438
      %v4440 = vpop.f32.mrb[0].mxu0
      %4441 = vmatprep.mubr.f32.mxu0 0.0
      %4442 = vmatmul.mubr.f32.gmra.mrb[0].mxu0 %v4023
      %v4443 = vpop.f32.mrb[0].mxu0
      %v4444 = vadd.f32 %v4219, %v4443
      %v4445 = vpop.f32.mrb[0].mxu0
      %4446 = vmatprep.mubr.f32.mxu0 0.0
      %4447 = vmatmul.mubr.f32.gmra.mrb[0].mxu0 %v4024
      %v4448 = vpop.f32.mrb[0].mxu0
      %v4449 = vadd.f32 %v4224, %v4448
      %v4450 = vpop.f32.mrb[0].mxu0
      %4451 = vmatprep.mubr.f32.mxu0 0.0
      %4452 = vmatmul.mubr.f32.gmra.mrb[0].mxu0 %v4025
      %v4453 = vpop.f32.mrb[0].mxu0
      %v4454 = vadd.f32 %v4229, %v4453
      %v4455 = vpop.f32.mrb[0].mxu0
      %4456 = vmatprep.mubr.f32.mxu0 0.0
      %4457 = vmatmul.mubr.f32.gmra.mrb[0].mxu0 %v4026
      %v4458 = vpop.f32.mrb[0].mxu0
      %v4459 = vadd.f32 %v4234, %v4458
      %v4460 = vpop.f32.mrb[0].mxu0
      %4461 = vmatprep.mubr.f32.mxu0 0.0
      %4462 = vmatmul.mubr.f32.gmra.mrb[0].mxu0 %v4027
      %v4463 = vpop.f32.mrb[0].mxu0
      %v4464 = vadd.f32 %v4239, %v4463
      %v4465 = vpop.f32.mrb[0].mxu0
      %4466 = vmatprep.mubr.f32.mxu0 0.0
      %4467 = vmatmul.mubr.f32.gmra.mrb[0].mxu0 %v4028
      %v4468 = vpop.f32.mrb[0].mxu0
      %v4469 = vadd.f32 %v4244, %v4468
      %v4470 = vpop.f32.mrb[0].mxu0
      %4471 = vmatprep.mubr.f32.mxu0 0.0
      %4472 = vmatmul.mubr.f32.gmra.mrb[0].mxu0 %v4029
      %v4473 = vpop.f32.mrb[0].mxu0
      %v4474 = vadd.f32 %v4249, %v4473
      %v4475 = vpop.f32.mrb[0].mxu0
      %4476 = vmatprep.mubr.f32.mxu0 0.0
      %4477 = vmatmul.mubr.f32.gmra.mrb[0].mxu0 %v4030
      %v4478 = vpop.f32.mrb[0].mxu0
      %v4479 = vadd.f32 %v4254, %v4478
      %v4480 = vpop.f32.mrb[0].mxu0
      %4481 = vmatprep.mubr.f32.mxu0 0.0
      %4482 = vmatmul.mubr.f32.gmra.mrb[0].mxu0 %v4031
      %v4483 = vpop.f32.mrb[0].mxu0
      %v4484 = vadd.f32 %v4259, %v4483
      %v4485 = vpop.f32.mrb[0].mxu0
      %4486 = vmatprep.mubr.f32.mxu0 0.0
      %4487 = vmatmul.mubr.f32.gmra.mrb[0].mxu0 %v4032
      %v4488 = vpop.f32.mrb[0].mxu0
      %v4489 = vadd.f32 %v4264, %v4488
      %v4490 = vpop.f32.mrb[0].mxu0
      %4491 = vmatprep.mubr.f32.mxu0 0.0
      %4492 = vmatmul.mubr.f32.gmra.mrb[0].mxu0 %v4033
      %v4493 = vpop.f32.mrb[0].mxu0
      %v4494 = vadd.f32 %v4269, %v4493
      %v4495 = vpop.f32.mrb[0].mxu0
      %4496 = vmatprep.mubr.f32.mxu0 0.0
      %4497 = vmatmul.mubr.f32.gmra.mrb[0].mxu0 %v4034
      %v4498 = vpop.f32.mrb[0].mxu0
      %v4499 = vadd.f32 %v4274, %v4498
      %v4500 = vpop.f32.mrb[0].mxu0
      %4501 = vmatprep.mubr.f32.mxu0 0.0
      %4502 = vmatmul.mubr.f32.gmra.mrb[0].mxu0 %v4035
      %v4503 = vpop.f32.mrb[0].mxu0
      %v4504 = vadd.f32 %v4279, %v4503
      %v4505 = vpop.f32.mrb[0].mxu0
      %4506 = vmatprep.mubr.f32.mxu0 0.0
      %4507 = vmatmul.mubr.f32.gmra.mrb[0].mxu0 %v4036
      %v4508 = vpop.f32.mrb[0].mxu0
      %v4509 = vadd.f32 %v4284, %v4508
      %v4510 = vpop.f32.mrb[0].mxu0
      %4511 = vmatprep.mubr.f32.mxu0 0.0
      %4512 = vmatmul.mubr.f32.gmra.mrb[0].mxu0 %v4037
      %v4513 = vpop.f32.mrb[0].mxu0
      %v4514 = vadd.f32 %v4289, %v4513
      %v4515 = vpop.f32.mrb[0].mxu0
      %4516 = vmatprep.mubr.f32.mxu0 0.0
      %4517 = vmatmul.mubr.f32.gmra.mrb[0].mxu0 %v4038
      %v4518 = vpop.f32.mrb[0].mxu0
      %v4519 = vadd.f32 %v4294, %v4518
      %v4520 = vpop.f32.mrb[0].mxu0
      %4521 = vmatprep.mubr.f32.mxu0 0.0
      %4522 = vmatmul.mubr.f32.gmra.mrb[0].mxu0 %v4039
      %v4523 = vpop.f32.mrb[0].mxu0
      %v4524 = vadd.f32 %v4299, %v4523
      %v4525 = vpop.f32.mrb[0].mxu0
      %4526 = vmatprep.mubr.f32.mxu0 0.0
      %4527 = vmatmul.mubr.f32.gmra.mrb[0].mxu0 %v4040
      %v4528 = vpop.f32.mrb[0].mxu0
      %v4529 = vadd.f32 %v4304, %v4528
      %v4530 = vpop.f32.mrb[0].mxu0
      %4531 = vmatprep.mubr.f32.mxu0 0.0
      %4532 = vmatmul.mubr.f32.gmra.mrb[0].mxu0 %v4041
      %v4533 = vpop.f32.mrb[0].mxu0
      %v4534 = vadd.f32 %v4309, %v4533
      %v4535 = vpop.f32.mrb[0].mxu0
      %4536 = vmatprep.mubr.f32.mxu0 0.0
      %4537 = vmatmul.mubr.f32.gmra.mrb[0].mxu0 %v4042
      %v4538 = vpop.f32.mrb[0].mxu0
      %v4539 = vadd.f32 %v4314, %v4538
      %v4540 = vpop.f32.mrb[0].mxu0
      %4541 = vmatprep.mubr.f32.mxu0 0.0
      %4542 = vmatmul.mubr.f32.gmra.mrb[0].mxu0 %v4043
      %v4543 = vpop.f32.mrb[0].mxu0
      %v4544 = vadd.f32 %v4319, %v4543
      %v4545 = vpop.f32.mrb[0].mxu0
      %4546 = vmatprep.mubr.f32.mxu0 0.0
      %4547 = vmatmul.mubr.f32.gmra.mrb[0].mxu0 %v4044
      %v4548 = vpop.f32.mrb[0].mxu0
      %v4549 = vadd.f32 %v4324, %v4548
      %v4550 = vpop.f32.mrb[0].mxu0
      %4551 = vmatprep.mubr.f32.mxu0 0.0
      %4552 = vmatmul.mubr.f32.gmra.mrb[0].mxu0 %v4045
      %v4553 = vpop.f32.mrb[0].mxu0
      %v4554 = vadd.f32 %v4329, %v4553
      %v4555 = vpop.f32.mrb[0].mxu0
      %4556 = vmatprep.mubr.f32.mxu0 0.0
      %4557 = vmatmul.mubr.f32.gmra.mrb[0].mxu0 %v4046
      %v4558 = vpop.f32.mrb[0].mxu0
      %v4559 = vadd.f32 %v4334, %v4558
      %v4560 = vpop.f32.mrb[0].mxu0
      %4561 = vdwg.mxu0
      %v4562 = vld [vmem:[#allocation3 + $0x2] sm:$0xff]
      %v4563 = vld [vmem:[#allocation3 + $0xa] sm:$0xff]
      %v4564 = vld [vmem:[#allocation3 + $0x1a] sm:$0xff]
      %v4565 = vld [vmem:[#allocation3 + $0x22] sm:$0xff]
      %v4566 = vld [vmem:[#allocation3 + $0x32] sm:$0xff]
      %v4567 = vld [vmem:[#allocation3 + $0x3a] sm:$0xff]
      %v4568 = vld [vmem:[#allocation3 + $0x4a] sm:$0xff]
      %v4569 = vld [vmem:[#allocation3 + $0x52] sm:$0xff]
      %v4570 = vld [vmem:[#allocation3 + $0x62] sm:$0xff]
      %v4571 = vld [vmem:[#allocation3 + $0x6a] sm:$0xff]
      %v4572 = vld [vmem:[#allocation3 + $0x7a] sm:$0xff]
      %v4573 = vld [vmem:[#allocation3 + $0x82] sm:$0xff]
      %v4574 = vld [vmem:[#allocation3 + $0x92] sm:$0xff]
      %v4575 = vld [vmem:[#allocation3 + $0x9a] sm:$0xff]
      %v4576 = vld [vmem:[#allocation3 + $0xaa] sm:$0xff]
      %v4577 = vld [vmem:[#allocation3 + $0xb2] sm:$0xff]
      %v4578 = vld [vmem:[#allocation3 + $0xc2] sm:$0xff]
      %v4579 = vld [vmem:[#allocation3 + $0xca] sm:$0xff]
      %v4580 = vld [vmem:[#allocation3 + $0xda] sm:$0xff]
      %v4581 = vld [vmem:[#allocation3 + $0xe2] sm:$0xff]
      %v4582 = vld [vmem:[#allocation3 + $0xf2] sm:$0xff]
      %v4583 = vld [vmem:[#allocation3 + $0xfa] sm:$0xff]
      %v4584 = vld [vmem:[#allocation3 + $0x10a] sm:$0xff]
      %v4585 = vld [vmem:[#allocation3 + $0x112] sm:$0xff]
      %v4586 = vld [vmem:[#allocation3 + $0x122] sm:$0xff]
      %v4587 = vld [vmem:[#allocation3 + $0x12a] sm:$0xff]
      %v4588 = vld [vmem:[#allocation3 + $0x13a] sm:$0xff]
      %v4589 = vld [vmem:[#allocation3 + $0x142] sm:$0xff]
      %v4590 = vld [vmem:[#allocation3 + $0x152] sm:$0xff]
      %v4591 = vld [vmem:[#allocation3 + $0x15a] sm:$0xff]
      %v4592 = vld [vmem:[#allocation3 + $0x16a] sm:$0xff]
      %v4593 = vld [vmem:[#allocation3 + $0x172] sm:$0xff]
      %s4594 = scalar_lea.vmem %s3, 256
      %v4595 = vld [vmem:[%s4594] sm:$0xff]
      %v4596 = vld [vmem:[%s4594 + $0x8] sm:$0xff]
      %v4597 = vld [vmem:[%s4594 + $0x10] sm:$0xff]
      %v4598 = vld [vmem:[%s4594 + $0x18] sm:$0xff]
      %v4599 = vld [vmem:[%s4594 + $0x20] sm:$0xff]
      %v4600 = vld [vmem:[%s4594 + $0x28] sm:$0xff]
      %v4601 = vld [vmem:[%s4594 + $0x30] sm:$0xff]
      %v4602 = vld [vmem:[%s4594 + $0x38] sm:$0xff]
      %v4603 = vld [vmem:[%s4594 + $0x40] sm:$0xff]
      %v4604 = vld [vmem:[%s4594 + $0x48] sm:$0xff]
      %v4605 = vld [vmem:[%s4594 + $0x50] sm:$0xff]
      %v4606 = vld [vmem:[%s4594 + $0x58] sm:$0xff]
      %v4607 = vld [vmem:[%s4594 + $0x60] sm:$0xff]
      %v4608 = vld [vmem:[%s4594 + $0x68] sm:$0xff]
      %v4609 = vld [vmem:[%s4594 + $0x70] sm:$0xff]
      %v4610 = vld [vmem:[%s4594 + $0x78] sm:$0xff]
      %4611 = vmatprep.subr.mxu0 0.0
      %4612 = vmatpush1.msra.mxu0 %v4595
      %4613 = vmatprep.subr.mxu0 0.0
      %4614 = vmatpush1.msra.mxu0 %v4596
      %4615 = vmatprep.subr.mxu0 0.0
      %4616 = vmatpush1.msra.mxu0 %v4597
      %4617 = vmatprep.subr.mxu0 0.0
      %4618 = vmatpush1.msra.mxu0 %v4598
      %4619 = vmatprep.subr.mxu0 0.0
      %4620 = vmatpush1.msra.mxu0 %v4599
      %4621 = vmatprep.subr.mxu0 0.0
      %4622 = vmatpush1.msra.mxu0 %v4600
      %4623 = vmatprep.subr.mxu0 0.0
      %4624 = vmatpush1.msra.mxu0 %v4601
      %4625 = vmatprep.subr.mxu0 0.0
      %4626 = vmatpush1.msra.mxu0 %v4602
      %4627 = vmatprep.subr.mxu0 0.0
      %4628 = vmatpush1.msra.mxu0 %v4603
      %4629 = vmatprep.subr.mxu0 0.0
      %4630 = vmatpush1.msra.mxu0 %v4604
      %4631 = vmatprep.subr.mxu0 0.0
      %4632 = vmatpush1.msra.mxu0 %v4605
      %4633 = vmatprep.subr.mxu0 0.0
      %4634 = vmatpush1.msra.mxu0 %v4606
      %4635 = vmatprep.subr.mxu0 0.0
      %4636 = vmatpush1.msra.mxu0 %v4607
      %4637 = vmatprep.subr.mxu0 0.0
      %4638 = vmatpush1.msra.mxu0 %v4608
      %4639 = vmatprep.subr.mxu0 0.0
      %4640 = vmatpush1.msra.mxu0 %v4609
      %4641 = vmatprep.subr.mxu0 0.0
      %4642 = vmatpush1.msra.mxu0 %v4610
      %4643 = vmatprep.subr.mxu0 0.0
      %4644 = vmatpush1.msra.mxu0 0.0
      %4645 = vmatprep.subr.mxu0 0.0
      %4646 = vmatpush1.msra.mxu0 0.0
      %4647 = vmatprep.subr.mxu0 0.0
      %4648 = vmatpush1.msra.mxu0 0.0
      %4649 = vmatprep.subr.mxu0 0.0
      %4650 = vmatpush1.msra.mxu0 0.0
      %4651 = vmatprep.subr.mxu0 0.0
      %4652 = vmatpush1.msra.mxu0 0.0
      %4653 = vmatprep.subr.mxu0 0.0
      %4654 = vmatpush1.msra.mxu0 0.0
      %4655 = vmatprep.subr.mxu0 0.0
      %4656 = vmatpush1.msra.mxu0 0.0
      %4657 = vmatprep.subr.mxu0 0.0
      %4658 = vmatpush1.msra.mxu0 0.0
      %4659 = vmatprep.subr.mxu0 0.0
      %4660 = vmatpush1.msra.mxu0 0.0
      %4661 = vmatprep.subr.mxu0 0.0
      %4662 = vmatpush1.msra.mxu0 0.0
      %4663 = vmatprep.subr.mxu0 0.0
      %4664 = vmatpush1.msra.mxu0 0.0
      %4665 = vmatprep.subr.mxu0 0.0
      %4666 = vmatpush1.msra.mxu0 0.0
      %4667 = vmatprep.subr.mxu0 0.0
      %4668 = vmatpush1.msra.mxu0 0.0
      %4669 = vmatprep.subr.mxu0 0.0
      %4670 = vmatpush1.msra.mxu0 0.0
      %4671 = vmatprep.subr.mxu0 0.0
      %4672 = vmatpush1.msra.mxu0 0.0
      %4673 = vmatprep.subr.mxu0 0.0
      %4674 = vmatpush1.msra.mxu0 0.0
      %4675 = vmatprep.mubr.f32.mxu0 0.0
      %4676 = vmatmul.mubr.f32.gmra.mrb[0].mxu0 %v4562
      %v4677 = vpop.f32.mrb[0].mxu0
      %v4678 = vadd.f32 0.0, %v4677
      %v4679 = vpop.f32.mrb[0].mxu0
      %4680 = vmatprep.mubr.f32.mxu0 0.0
      %4681 = vmatmul.mubr.f32.gmra.mrb[0].mxu0 %v4563
      %v4682 = vpop.f32.mrb[0].mxu0
      %v4683 = vadd.f32 0.0, %v4682
      %v4684 = vpop.f32.mrb[0].mxu0
      %4685 = vmatprep.mubr.f32.mxu0 0.0
      %4686 = vmatmul.mubr.f32.gmra.mrb[0].mxu0 %v4564
      %v4687 = vpop.f32.mrb[0].mxu0
      %v4688 = vadd.f32 0.0, %v4687
      %v4689 = vpop.f32.mrb[0].mxu0
      %4690 = vmatprep.mubr.f32.mxu0 0.0
      %4691 = vmatmul.mubr.f32.gmra.mrb[0].mxu0 %v4565
      %v4692 = vpop.f32.mrb[0].mxu0
      %v4693 = vadd.f32 0.0, %v4692
      %v4694 = vpop.f32.mrb[0].mxu0
      %4695 = vmatprep.mubr.f32.mxu0 0.0
      %4696 = vmatmul.mubr.f32.gmra.mrb[0].mxu0 %v4566
      %v4697 = vpop.f32.mrb[0].mxu0
      %v4698 = vadd.f32 0.0, %v4697
      %v4699 = vpop.f32.mrb[0].mxu0
      %4700 = vmatprep.mubr.f32.mxu0 0.0
      %4701 = vmatmul.mubr.f32.gmra.mrb[0].mxu0 %v4567
      %v4702 = vpop.f32.mrb[0].mxu0
      %v4703 = vadd.f32 0.0, %v4702
      %v4704 = vpop.f32.mrb[0].mxu0
      %4705 = vmatprep.mubr.f32.mxu0 0.0
      %4706 = vmatmul.mubr.f32.gmra.mrb[0].mxu0 %v4568
      %v4707 = vpop.f32.mrb[0].mxu0
      %v4708 = vadd.f32 0.0, %v4707
      %v4709 = vpop.f32.mrb[0].mxu0
      %4710 = vmatprep.mubr.f32.mxu0 0.0
      %4711 = vmatmul.mubr.f32.gmra.mrb[0].mxu0 %v4569
      %v4712 = vpop.f32.mrb[0].mxu0
      %v4713 = vadd.f32 0.0, %v4712
      %v4714 = vpop.f32.mrb[0].mxu0
      %4715 = vmatprep.mubr.f32.mxu0 0.0
      %4716 = vmatmul.mubr.f32.gmra.mrb[0].mxu0 %v4570
      %v4717 = vpop.f32.mrb[0].mxu0
      %v4718 = vadd.f32 0.0, %v4717
      %v4719 = vpop.f32.mrb[0].mxu0
      %4720 = vmatprep.mubr.f32.mxu0 0.0
      %4721 = vmatmul.mubr.f32.gmra.mrb[0].mxu0 %v4571
      %v4722 = vpop.f32.mrb[0].mxu0
      %v4723 = vadd.f32 0.0, %v4722
      %v4724 = vpop.f32.mrb[0].mxu0
      %4725 = vmatprep.mubr.f32.mxu0 0.0
      %4726 = vmatmul.mubr.f32.gmra.mrb[0].mxu0 %v4572
      %v4727 = vpop.f32.mrb[0].mxu0
      %v4728 = vadd.f32 0.0, %v4727
      %v4729 = vpop.f32.mrb[0].mxu0
      %4730 = vmatprep.mubr.f32.mxu0 0.0
      %4731 = vmatmul.mubr.f32.gmra.mrb[0].mxu0 %v4573
      %v4732 = vpop.f32.mrb[0].mxu0
      %v4733 = vadd.f32 0.0, %v4732
      %v4734 = vpop.f32.mrb[0].mxu0
      %4735 = vmatprep.mubr.f32.mxu0 0.0
      %4736 = vmatmul.mubr.f32.gmra.mrb[0].mxu0 %v4574
      %v4737 = vpop.f32.mrb[0].mxu0
      %v4738 = vadd.f32 0.0, %v4737
      %v4739 = vpop.f32.mrb[0].mxu0
      %4740 = vmatprep.mubr.f32.mxu0 0.0
      %4741 = vmatmul.mubr.f32.gmra.mrb[0].mxu0 %v4575
      %v4742 = vpop.f32.mrb[0].mxu0
      %v4743 = vadd.f32 0.0, %v4742
      %v4744 = vpop.f32.mrb[0].mxu0
      %4745 = vmatprep.mubr.f32.mxu0 0.0
      %4746 = vmatmul.mubr.f32.gmra.mrb[0].mxu0 %v4576
      %v4747 = vpop.f32.mrb[0].mxu0
      %v4748 = vadd.f32 0.0, %v4747
      %v4749 = vpop.f32.mrb[0].mxu0
      %4750 = vmatprep.mubr.f32.mxu0 0.0
      %4751 = vmatmul.mubr.f32.gmra.mrb[0].mxu0 %v4577
      %v4752 = vpop.f32.mrb[0].mxu0
      %v4753 = vadd.f32 0.0, %v4752
      %v4754 = vpop.f32.mrb[0].mxu0
      %4755 = vmatprep.mubr.f32.mxu0 0.0
      %4756 = vmatmul.mubr.f32.gmra.mrb[0].mxu0 %v4578
      %v4757 = vpop.f32.mrb[0].mxu0
      %v4758 = vadd.f32 0.0, %v4757
      %v4759 = vpop.f32.mrb[0].mxu0
      %4760 = vmatprep.mubr.f32.mxu0 0.0
      %4761 = vmatmul.mubr.f32.gmra.mrb[0].mxu0 %v4579
      %v4762 = vpop.f32.mrb[0].mxu0
      %v4763 = vadd.f32 0.0, %v4762
      %v4764 = vpop.f32.mrb[0].mxu0
      %4765 = vmatprep.mubr.f32.mxu0 0.0
      %4766 = vmatmul.mubr.f32.gmra.mrb[0].mxu0 %v4580
      %v4767 = vpop.f32.mrb[0].mxu0
      %v4768 = vadd.f32 0.0, %v4767
      %v4769 = vpop.f32.mrb[0].mxu0
      %4770 = vmatprep.mubr.f32.mxu0 0.0
      %4771 = vmatmul.mubr.f32.gmra.mrb[0].mxu0 %v4581
      %v4772 = vpop.f32.mrb[0].mxu0
      %v4773 = vadd.f32 0.0, %v4772
      %v4774 = vpop.f32.mrb[0].mxu0
      %4775 = vmatprep.mubr.f32.mxu0 0.0
      %4776 = vmatmul.mubr.f32.gmra.mrb[0].mxu0 %v4582
      %v4777 = vpop.f32.mrb[0].mxu0
      %v4778 = vadd.f32 0.0, %v4777
      %v4779 = vpop.f32.mrb[0].mxu0
      %4780 = vmatprep.mubr.f32.mxu0 0.0
      %4781 = vmatmul.mubr.f32.gmra.mrb[0].mxu0 %v4583
      %v4782 = vpop.f32.mrb[0].mxu0
      %v4783 = vadd.f32 0.0, %v4782
      %v4784 = vpop.f32.mrb[0].mxu0
      %4785 = vmatprep.mubr.f32.mxu0 0.0
      %4786 = vmatmul.mubr.f32.gmra.mrb[0].mxu0 %v4584
      %v4787 = vpop.f32.mrb[0].mxu0
      %v4788 = vadd.f32 0.0, %v4787
      %v4789 = vpop.f32.mrb[0].mxu0
      %4790 = vmatprep.mubr.f32.mxu0 0.0
      %4791 = vmatmul.mubr.f32.gmra.mrb[0].mxu0 %v4585
      %v4792 = vpop.f32.mrb[0].mxu0
      %v4793 = vadd.f32 0.0, %v4792
      %v4794 = vpop.f32.mrb[0].mxu0
      %4795 = vmatprep.mubr.f32.mxu0 0.0
      %4796 = vmatmul.mubr.f32.gmra.mrb[0].mxu0 %v4586
      %v4797 = vpop.f32.mrb[0].mxu0
      %v4798 = vadd.f32 0.0, %v4797
      %v4799 = vpop.f32.mrb[0].mxu0
      %4800 = vmatprep.mubr.f32.mxu0 0.0
      %4801 = vmatmul.mubr.f32.gmra.mrb[0].mxu0 %v4587
      %v4802 = vpop.f32.mrb[0].mxu0
      %v4803 = vadd.f32 0.0, %v4802
      %v4804 = vpop.f32.mrb[0].mxu0
      %4805 = vmatprep.mubr.f32.mxu0 0.0
      %4806 = vmatmul.mubr.f32.gmra.mrb[0].mxu0 %v4588
      %v4807 = vpop.f32.mrb[0].mxu0
      %v4808 = vadd.f32 0.0, %v4807
      %v4809 = vpop.f32.mrb[0].mxu0
      %4810 = vmatprep.mubr.f32.mxu0 0.0
      %4811 = vmatmul.mubr.f32.gmra.mrb[0].mxu0 %v4589
      %v4812 = vpop.f32.mrb[0].mxu0
      %v4813 = vadd.f32 0.0, %v4812
      %v4814 = vpop.f32.mrb[0].mxu0
      %4815 = vmatprep.mubr.f32.mxu0 0.0
      %4816 = vmatmul.mubr.f32.gmra.mrb[0].mxu0 %v4590
      %v4817 = vpop.f32.mrb[0].mxu0
      %v4818 = vadd.f32 0.0, %v4817
      %v4819 = vpop.f32.mrb[0].mxu0
      %4820 = vmatprep.mubr.f32.mxu0 0.0
      %4821 = vmatmul.mubr.f32.gmra.mrb[0].mxu0 %v4591
      %v4822 = vpop.f32.mrb[0].mxu0
      %v4823 = vadd.f32 0.0, %v4822
      %v4824 = vpop.f32.mrb[0].mxu0
      %4825 = vmatprep.mubr.f32.mxu0 0.0
      %4826 = vmatmul.mubr.f32.gmra.mrb[0].mxu0 %v4592
      %v4827 = vpop.f32.mrb[0].mxu0
      %v4828 = vadd.f32 0.0, %v4827
      %v4829 = vpop.f32.mrb[0].mxu0
      %4830 = vmatprep.mubr.f32.mxu0 0.0
      %4831 = vmatmul.mubr.f32.gmra.mrb[0].mxu0 %v4593
      %v4832 = vpop.f32.mrb[0].mxu0
      %v4833 = vadd.f32 0.0, %v4832
      %v4834 = vpop.f32.mrb[0].mxu0
      %4835 = vdwg.mxu0
      %v4836 = vadd.f32 %v4404, %v4678
      %v4837 = vadd.f32 %v4409, %v4683
      %v4838 = vadd.f32 %v4414, %v4688
      %v4839 = vadd.f32 %v4419, %v4693
      %v4840 = vadd.f32 %v4424, %v4698
      %v4841 = vadd.f32 %v4429, %v4703
      %v4842 = vadd.f32 %v4434, %v4708
      %v4843 = vadd.f32 %v4439, %v4713
      %v4844 = vadd.f32 %v4444, %v4718
      %v4845 = vadd.f32 %v4449, %v4723
      %v4846 = vadd.f32 %v4454, %v4728
      %v4847 = vadd.f32 %v4459, %v4733
      %v4848 = vadd.f32 %v4464, %v4738
      %v4849 = vadd.f32 %v4469, %v4743
      %v4850 = vadd.f32 %v4474, %v4748
      %v4851 = vadd.f32 %v4479, %v4753
      %v4852 = vadd.f32 %v4484, %v4758
      %v4853 = vadd.f32 %v4489, %v4763
      %v4854 = vadd.f32 %v4494, %v4768
      %v4855 = vadd.f32 %v4499, %v4773
      %v4856 = vadd.f32 %v4504, %v4778
      %v4857 = vadd.f32 %v4509, %v4783
      %v4858 = vadd.f32 %v4514, %v4788
      %v4859 = vadd.f32 %v4519, %v4793
      %v4860 = vadd.f32 %v4524, %v4798
      %v4861 = vadd.f32 %v4529, %v4803
      %v4862 = vadd.f32 %v4534, %v4808
      %v4863 = vadd.f32 %v4539, %v4813
      %v4864 = vadd.f32 %v4544, %v4818
      %v4865 = vadd.f32 %v4549, %v4823
      %v4866 = vadd.f32 %v4554, %v4828
      %v4867 = vadd.f32 %v4559, %v4833
      %v4868 = vld [vmem:[%s3982] sm:$0xff]
      %v4869 = vld [vmem:[%s3982 + $0x8] sm:$0xff]
      %v4870 = vld [vmem:[%s3982 + $0x18] sm:$0xff]
      %v4871 = vld [vmem:[%s3982 + $0x20] sm:$0xff]
      %v4872 = vld [vmem:[%s3982 + $0x30] sm:$0xff]
      %v4873 = vld [vmem:[%s3982 + $0x38] sm:$0xff]
      %v4874 = vld [vmem:[%s3982 + $0x48] sm:$0xff]
      %v4875 = vld [vmem:[%s3982 + $0x50] sm:$0xff]
      %v4876 = vld [vmem:[%s3982 + $0x60] sm:$0xff]
      %v4877 = vld [vmem:[%s3982 + $0x68] sm:$0xff]
      %v4878 = vld [vmem:[%s3982 + $0x78] sm:$0xff]
      %v4879 = vld [vmem:[%s3982 + $0x80] sm:$0xff]
      %v4880 = vld [vmem:[%s3982 + $0x90] sm:$0xff]
      %v4881 = vld [vmem:[%s3982 + $0x98] sm:$0xff]
      %v4882 = vld [vmem:[%s3982 + $0xa8] sm:$0xff]
      %v4883 = vld [vmem:[%s3982 + $0xb0] sm:$0xff]
      %v4884 = vld [vmem:[%s3982 + $0xc0] sm:$0xff]
      %v4885 = vld [vmem:[%s3982 + $0xc8] sm:$0xff]
      %v4886 = vld [vmem:[%s3982 + $0xd8] sm:$0xff]
      %v4887 = vld [vmem:[%s3982 + $0xe0] sm:$0xff]
      %v4888 = vld [vmem:[%s3982 + $0xf0] sm:$0xff]
      %v4889 = vld [vmem:[%s3982 + $0xf8] sm:$0xff]
      %v4890 = vld [vmem:[%s3982 + $0x108] sm:$0xff]
      %v4891 = vld [vmem:[%s3982 + $0x110] sm:$0xff]
      %v4892 = vld [vmem:[%s3982 + $0x120] sm:$0xff]
      %v4893 = vld [vmem:[%s3982 + $0x128] sm:$0xff]
      %v4894 = vld [vmem:[%s3982 + $0x138] sm:$0xff]
      %v4895 = vld [vmem:[%s3982 + $0x140] sm:$0xff]
      %v4896 = vld [vmem:[%s3982 + $0x150] sm:$0xff]
      %v4897 = vld [vmem:[%s3982 + $0x158] sm:$0xff]
      %v4898 = vld [vmem:[%s3982 + $0x168] sm:$0xff]
      %v4899 = vld [vmem:[%s3982 + $0x170] sm:$0xff]
      %s4900 = scalar_lea.vmem %s3, 384
      %v4901 = vld [vmem:[%s4900] sm:$0xff]
      %v4902 = vld [vmem:[%s4900 + $0x8] sm:$0xff]
      %v4903 = vld [vmem:[%s4900 + $0x10] sm:$0xff]
      %v4904 = vld [vmem:[%s4900 + $0x18] sm:$0xff]
      %v4905 = vld [vmem:[%s4900 + $0x20] sm:$0xff]
      %v4906 = vld [vmem:[%s4900 + $0x28] sm:$0xff]
      %v4907 = vld [vmem:[%s4900 + $0x30] sm:$0xff]
      %v4908 = vld [vmem:[%s4900 + $0x38] sm:$0xff]
      %v4909 = vld [vmem:[%s4900 + $0x40] sm:$0xff]
      %v4910 = vld [vmem:[%s4900 + $0x48] sm:$0xff]
      %v4911 = vld [vmem:[%s4900 + $0x50] sm:$0xff]
      %v4912 = vld [vmem:[%s4900 + $0x58] sm:$0xff]
      %v4913 = vld [vmem:[%s4900 + $0x60] sm:$0xff]
      %v4914 = vld [vmem:[%s4900 + $0x68] sm:$0xff]
      %v4915 = vld [vmem:[%s4900 + $0x70] sm:$0xff]
      %v4916 = vld [vmem:[%s4900 + $0x78] sm:$0xff]
      %4917 = vmatprep.subr.mxu0 0.0
      %4918 = vmatpush1.msra.mxu0 %v4901
      %4919 = vmatprep.subr.mxu0 0.0
      %4920 = vmatpush1.msra.mxu0 %v4902
      %4921 = vmatprep.subr.mxu0 0.0
      %4922 = vmatpush1.msra.mxu0 %v4903
      %4923 = vmatprep.subr.mxu0 0.0
      %4924 = vmatpush1.msra.mxu0 %v4904
      %4925 = vmatprep.subr.mxu0 0.0
      %4926 = vmatpush1.msra.mxu0 %v4905
      %4927 = vmatprep.subr.mxu0 0.0
      %4928 = vmatpush1.msra.mxu0 %v4906
      %4929 = vmatprep.subr.mxu0 0.0
      %4930 = vmatpush1.msra.mxu0 %v4907
      %4931 = vmatprep.subr.mxu0 0.0
      %4932 = vmatpush1.msra.mxu0 %v4908
      %4933 = vmatprep.subr.mxu0 0.0
      %4934 = vmatpush1.msra.mxu0 %v4909
      %4935 = vmatprep.subr.mxu0 0.0
      %4936 = vmatpush1.msra.mxu0 %v4910
      %4937 = vmatprep.subr.mxu0 0.0
      %4938 = vmatpush1.msra.mxu0 %v4911
      %4939 = vmatprep.subr.mxu0 0.0
      %4940 = vmatpush1.msra.mxu0 %v4912
      %4941 = vmatprep.subr.mxu0 0.0
      %4942 = vmatpush1.msra.mxu0 %v4913
      %4943 = vmatprep.subr.mxu0 0.0
      %4944 = vmatpush1.msra.mxu0 %v4914
      %4945 = vmatprep.subr.mxu0 0.0
      %4946 = vmatpush1.msra.mxu0 %v4915
      %4947 = vmatprep.subr.mxu0 0.0
      %4948 = vmatpush1.msra.mxu0 %v4916
      %4949 = vmatprep.subr.mxu0 0.0
      %4950 = vmatpush1.msra.mxu0 0.0
      %4951 = vmatprep.subr.mxu0 0.0
      %4952 = vmatpush1.msra.mxu0 0.0
      %4953 = vmatprep.subr.mxu0 0.0
      %4954 = vmatpush1.msra.mxu0 0.0
      %4955 = vmatprep.subr.mxu0 0.0
      %4956 = vmatpush1.msra.mxu0 0.0
      %4957 = vmatprep.subr.mxu0 0.0
      %4958 = vmatpush1.msra.mxu0 0.0
      %4959 = vmatprep.subr.mxu0 0.0
      %4960 = vmatpush1.msra.mxu0 0.0
      %4961 = vmatprep.subr.mxu0 0.0
      %4962 = vmatpush1.msra.mxu0 0.0
      %4963 = vmatprep.subr.mxu0 0.0
      %4964 = vmatpush1.msra.mxu0 0.0
      %4965 = vmatprep.subr.mxu0 0.0
      %4966 = vmatpush1.msra.mxu0 0.0
      %4967 = vmatprep.subr.mxu0 0.0
      %4968 = vmatpush1.msra.mxu0 0.0
      %4969 = vmatprep.subr.mxu0 0.0
      %4970 = vmatpush1.msra.mxu0 0.0
      %4971 = vmatprep.subr.mxu0 0.0
      %4972 = vmatpush1.msra.mxu0 0.0
      %4973 = vmatprep.subr.mxu0 0.0
      %4974 = vmatpush1.msra.mxu0 0.0
      %4975 = vmatprep.subr.mxu0 0.0
      %4976 = vmatpush1.msra.mxu0 0.0
      %4977 = vmatprep.subr.mxu0 0.0
      %4978 = vmatpush1.msra.mxu0 0.0
      %4979 = vmatprep.subr.mxu0 0.0
      %4980 = vmatpush1.msra.mxu0 0.0
      %4981 = vmatprep.mubr.f32.mxu0 0.0
      %4982 = vmatmul.mubr.f32.gmra.mrb[0].mxu0 %v4868
      %v4983 = vpop.f32.mrb[0].mxu0
      %v4984 = vadd.f32 0.0, %v4983
      %v4985 = vpop.f32.mrb[0].mxu0
      %4986 = vmatprep.mubr.f32.mxu0 0.0
      %4987 = vmatmul.mubr.f32.gmra.mrb[0].mxu0 %v4869
      %v4988 = vpop.f32.mrb[0].mxu0
      %v4989 = vadd.f32 0.0, %v4988
      %v4990 = vpop.f32.mrb[0].mxu0
      %4991 = vmatprep.mubr.f32.mxu0 0.0
      %4992 = vmatmul.mubr.f32.gmra.mrb[0].mxu0 %v4870
      %v4993 = vpop.f32.mrb[0].mxu0
      %v4994 = vadd.f32 0.0, %v4993
      %v4995 = vpop.f32.mrb[0].mxu0
      %4996 = vmatprep.mubr.f32.mxu0 0.0
      %4997 = vmatmul.mubr.f32.gmra.mrb[0].mxu0 %v4871
      %v4998 = vpop.f32.mrb[0].mxu0
      %v4999 = vadd.f32 0.0, %v4998
      %v5000 = vpop.f32.mrb[0].mxu0
      %5001 = vmatprep.mubr.f32.mxu0 0.0
      %5002 = vmatmul.mubr.f32.gmra.mrb[0].mxu0 %v4872
      %v5003 = vpop.f32.mrb[0].mxu0
      %v5004 = vadd.f32 0.0, %v5003
      %v5005 = vpop.f32.mrb[0].mxu0
      %5006 = vmatprep.mubr.f32.mxu0 0.0
      %5007 = vmatmul.mubr.f32.gmra.mrb[0].mxu0 %v4873
      %v5008 = vpop.f32.mrb[0].mxu0
      %v5009 = vadd.f32 0.0, %v5008
      %v5010 = vpop.f32.mrb[0].mxu0
      %5011 = vmatprep.mubr.f32.mxu0 0.0
      %5012 = vmatmul.mubr.f32.gmra.mrb[0].mxu0 %v4874
      %v5013 = vpop.f32.mrb[0].mxu0
      %v5014 = vadd.f32 0.0, %v5013
      %v5015 = vpop.f32.mrb[0].mxu0
      %5016 = vmatprep.mubr.f32.mxu0 0.0
      %5017 = vmatmul.mubr.f32.gmra.mrb[0].mxu0 %v4875
      %v5018 = vpop.f32.mrb[0].mxu0
      %v5019 = vadd.f32 0.0, %v5018
      %v5020 = vpop.f32.mrb[0].mxu0
      %5021 = vmatprep.mubr.f32.mxu0 0.0
      %5022 = vmatmul.mubr.f32.gmra.mrb[0].mxu0 %v4876
      %v5023 = vpop.f32.mrb[0].mxu0
      %v5024 = vadd.f32 0.0, %v5023
      %v5025 = vpop.f32.mrb[0].mxu0
      %5026 = vmatprep.mubr.f32.mxu0 0.0
      %5027 = vmatmul.mubr.f32.gmra.mrb[0].mxu0 %v4877
      %v5028 = vpop.f32.mrb[0].mxu0
      %v5029 = vadd.f32 0.0, %v5028
      %v5030 = vpop.f32.mrb[0].mxu0
      %5031 = vmatprep.mubr.f32.mxu0 0.0
      %5032 = vmatmul.mubr.f32.gmra.mrb[0].mxu0 %v4878
      %v5033 = vpop.f32.mrb[0].mxu0
      %v5034 = vadd.f32 0.0, %v5033
      %v5035 = vpop.f32.mrb[0].mxu0
      %5036 = vmatprep.mubr.f32.mxu0 0.0
      %5037 = vmatmul.mubr.f32.gmra.mrb[0].mxu0 %v4879
      %v5038 = vpop.f32.mrb[0].mxu0
      %v5039 = vadd.f32 0.0, %v5038
      %v5040 = vpop.f32.mrb[0].mxu0
      %5041 = vmatprep.mubr.f32.mxu0 0.0
      %5042 = vmatmul.mubr.f32.gmra.mrb[0].mxu0 %v4880
      %v5043 = vpop.f32.mrb[0].mxu0
      %v5044 = vadd.f32 0.0, %v5043
      %v5045 = vpop.f32.mrb[0].mxu0
      %5046 = vmatprep.mubr.f32.mxu0 0.0
      %5047 = vmatmul.mubr.f32.gmra.mrb[0].mxu0 %v4881
      %v5048 = vpop.f32.mrb[0].mxu0
      %v5049 = vadd.f32 0.0, %v5048
      %v5050 = vpop.f32.mrb[0].mxu0
      %5051 = vmatprep.mubr.f32.mxu0 0.0
      %5052 = vmatmul.mubr.f32.gmra.mrb[0].mxu0 %v4882
      %v5053 = vpop.f32.mrb[0].mxu0
      %v5054 = vadd.f32 0.0, %v5053
      %v5055 = vpop.f32.mrb[0].mxu0
      %5056 = vmatprep.mubr.f32.mxu0 0.0
      %5057 = vmatmul.mubr.f32.gmra.mrb[0].mxu0 %v4883
      %v5058 = vpop.f32.mrb[0].mxu0
      %v5059 = vadd.f32 0.0, %v5058
      %v5060 = vpop.f32.mrb[0].mxu0
      %5061 = vmatprep.mubr.f32.mxu0 0.0
      %5062 = vmatmul.mubr.f32.gmra.mrb[0].mxu0 %v4884
      %v5063 = vpop.f32.mrb[0].mxu0
      %v5064 = vadd.f32 0.0, %v5063
      %v5065 = vpop.f32.mrb[0].mxu0
      %5066 = vmatprep.mubr.f32.mxu0 0.0
      %5067 = vmatmul.mubr.f32.gmra.mrb[0].mxu0 %v4885
      %v5068 = vpop.f32.mrb[0].mxu0
      %v5069 = vadd.f32 0.0, %v5068
      %v5070 = vpop.f32.mrb[0].mxu0
      %5071 = vmatprep.mubr.f32.mxu0 0.0
      %5072 = vmatmul.mubr.f32.gmra.mrb[0].mxu0 %v4886
      %v5073 = vpop.f32.mrb[0].mxu0
      %v5074 = vadd.f32 0.0, %v5073
      %v5075 = vpop.f32.mrb[0].mxu0
      %5076 = vmatprep.mubr.f32.mxu0 0.0
      %5077 = vmatmul.mubr.f32.gmra.mrb[0].mxu0 %v4887
      %v5078 = vpop.f32.mrb[0].mxu0
      %v5079 = vadd.f32 0.0, %v5078
      %v5080 = vpop.f32.mrb[0].mxu0
      %5081 = vmatprep.mubr.f32.mxu0 0.0
      %5082 = vmatmul.mubr.f32.gmra.mrb[0].mxu0 %v4888
      %v5083 = vpop.f32.mrb[0].mxu0
      %v5084 = vadd.f32 0.0, %v5083
      %v5085 = vpop.f32.mrb[0].mxu0
      %5086 = vmatprep.mubr.f32.mxu0 0.0
      %5087 = vmatmul.mubr.f32.gmra.mrb[0].mxu0 %v4889
      %v5088 = vpop.f32.mrb[0].mxu0
      %v5089 = vadd.f32 0.0, %v5088
      %v5090 = vpop.f32.mrb[0].mxu0
      %5091 = vmatprep.mubr.f32.mxu0 0.0
      %5092 = vmatmul.mubr.f32.gmra.mrb[0].mxu0 %v4890
      %v5093 = vpop.f32.mrb[0].mxu0
      %v5094 = vadd.f32 0.0, %v5093
      %v5095 = vpop.f32.mrb[0].mxu0
      %5096 = vmatprep.mubr.f32.mxu0 0.0
      %5097 = vmatmul.mubr.f32.gmra.mrb[0].mxu0 %v4891
      %v5098 = vpop.f32.mrb[0].mxu0
      %v5099 = vadd.f32 0.0, %v5098
      %v5100 = vpop.f32.mrb[0].mxu0
      %5101 = vmatprep.mubr.f32.mxu0 0.0
      %5102 = vmatmul.mubr.f32.gmra.mrb[0].mxu0 %v4892
      %v5103 = vpop.f32.mrb[0].mxu0
      %v5104 = vadd.f32 0.0, %v5103
      %v5105 = vpop.f32.mrb[0].mxu0
      %5106 = vmatprep.mubr.f32.mxu0 0.0
      %5107 = vmatmul.mubr.f32.gmra.mrb[0].mxu0 %v4893
      %v5108 = vpop.f32.mrb[0].mxu0
      %v5109 = vadd.f32 0.0, %v5108
      %v5110 = vpop.f32.mrb[0].mxu0
      %5111 = vmatprep.mubr.f32.mxu0 0.0
      %5112 = vmatmul.mubr.f32.gmra.mrb[0].mxu0 %v4894
      %v5113 = vpop.f32.mrb[0].mxu0
      %v5114 = vadd.f32 0.0, %v5113
      %v5115 = vpop.f32.mrb[0].mxu0
      %5116 = vmatprep.mubr.f32.mxu0 0.0
      %5117 = vmatmul.mubr.f32.gmra.mrb[0].mxu0 %v4895
      %v5118 = vpop.f32.mrb[0].mxu0
      %v5119 = vadd.f32 0.0, %v5118
      %v5120 = vpop.f32.mrb[0].mxu0
      %5121 = vmatprep.mubr.f32.mxu0 0.0
      %5122 = vmatmul.mubr.f32.gmra.mrb[0].mxu0 %v4896
      %v5123 = vpop.f32.mrb[0].mxu0
      %v5124 = vadd.f32 0.0, %v5123
      %v5125 = vpop.f32.mrb[0].mxu0
      %5126 = vmatprep.mubr.f32.mxu0 0.0
      %5127 = vmatmul.mubr.f32.gmra.mrb[0].mxu0 %v4897
      %v5128 = vpop.f32.mrb[0].mxu0
      %v5129 = vadd.f32 0.0, %v5128
      %v5130 = vpop.f32.mrb[0].mxu0
      %5131 = vmatprep.mubr.f32.mxu0 0.0
      %5132 = vmatmul.mubr.f32.gmra.mrb[0].mxu0 %v4898
      %v5133 = vpop.f32.mrb[0].mxu0
      %v5134 = vadd.f32 0.0, %v5133
      %v5135 = vpop.f32.mrb[0].mxu0
      %5136 = vmatprep.mubr.f32.mxu0 0.0
      %5137 = vmatmul.mubr.f32.gmra.mrb[0].mxu0 %v4899
      %v5138 = vpop.f32.mrb[0].mxu0
      %v5139 = vadd.f32 0.0, %v5138
      %v5140 = vpop.f32.mrb[0].mxu0
      %5141 = vdwg.mxu0
      %v5142 = vadd.f32 %v4836, %v4984
      %v5143 = vadd.f32 %v4837, %v4989
      %v5144 = vadd.f32 %v4838, %v4994
      %v5145 = vadd.f32 %v4839, %v4999
      %v5146 = vadd.f32 %v4840, %v5004
      %v5147 = vadd.f32 %v4841, %v5009
      %v5148 = vadd.f32 %v4842, %v5014
      %v5149 = vadd.f32 %v4843, %v5019
      %v5150 = vadd.f32 %v4844, %v5024
      %v5151 = vadd.f32 %v4845, %v5029
      %v5152 = vadd.f32 %v4846, %v5034
      %v5153 = vadd.f32 %v4847, %v5039
      %v5154 = vadd.f32 %v4848, %v5044
      %v5155 = vadd.f32 %v4849, %v5049
      %v5156 = vadd.f32 %v4850, %v5054
      %v5157 = vadd.f32 %v4851, %v5059
      %v5158 = vadd.f32 %v4852, %v5064
      %v5159 = vadd.f32 %v4853, %v5069
      %v5160 = vadd.f32 %v4854, %v5074
      %v5161 = vadd.f32 %v4855, %v5079
      %v5162 = vadd.f32 %v4856, %v5084
      %v5163 = vadd.f32 %v4857, %v5089
      %v5164 = vadd.f32 %v4858, %v5094
      %v5165 = vadd.f32 %v4859, %v5099
      %v5166 = vadd.f32 %v4860, %v5104
      %v5167 = vadd.f32 %v4861, %v5109
      %v5168 = vadd.f32 %v4862, %v5114
      %v5169 = vadd.f32 %v4863, %v5119
      %v5170 = vadd.f32 %v4864, %v5124
      %v5171 = vadd.f32 %v4865, %v5129
      %v5172 = vadd.f32 %v4866, %v5134
      %v5173 = vadd.f32 %v4867, %v5139
      %v5174 = vld [vmem:[%s3982 + $0x1] sm:$0xff]
      %v5175 = vld [vmem:[%s3982 + $0x9] sm:$0xff]
      %v5176 = vld [vmem:[%s3982 + $0x19] sm:$0xff]
      %v5177 = vld [vmem:[%s3982 + $0x21] sm:$0xff]
      %v5178 = vld [vmem:[%s3982 + $0x31] sm:$0xff]
      %v5179 = vld [vmem:[%s3982 + $0x39] sm:$0xff]
      %v5180 = vld [vmem:[%s3982 + $0x49] sm:$0xff]
      %v5181 = vld [vmem:[%s3982 + $0x51] sm:$0xff]
      %v5182 = vld [vmem:[%s3982 + $0x61] sm:$0xff]
      %v5183 = vld [vmem:[%s3982 + $0x69] sm:$0xff]
      %v5184 = vld [vmem:[%s3982 + $0x79] sm:$0xff]
      %v5185 = vld [vmem:[%s3982 + $0x81] sm:$0xff]
      %v5186 = vld [vmem:[%s3982 + $0x91] sm:$0xff]
      %v5187 = vld [vmem:[%s3982 + $0x99] sm:$0xff]
      %v5188 = vld [vmem:[%s3982 + $0xa9] sm:$0xff]
      %v5189 = vld [vmem:[%s3982 + $0xb1] sm:$0xff]
      %v5190 = vld [vmem:[%s3982 + $0xc1] sm:$0xff]
      %v5191 = vld [vmem:[%s3982 + $0xc9] sm:$0xff]
      %v5192 = vld [vmem:[%s3982 + $0xd9] sm:$0xff]
      %v5193 = vld [vmem:[%s3982 + $0xe1] sm:$0xff]
      %v5194 = vld [vmem:[%s3982 + $0xf1] sm:$0xff]
      %v5195 = vld [vmem:[%s3982 + $0xf9] sm:$0xff]
      %v5196 = vld [vmem:[%s3982 + $0x109] sm:$0xff]
      %v5197 = vld [vmem:[%s3982 + $0x111] sm:$0xff]
      %v5198 = vld [vmem:[%s3982 + $0x121] sm:$0xff]
      %v5199 = vld [vmem:[%s3982 + $0x129] sm:$0xff]
      %v5200 = vld [vmem:[%s3982 + $0x139] sm:$0xff]
      %v5201 = vld [vmem:[%s3982 + $0x141] sm:$0xff]
      %v5202 = vld [vmem:[%s3982 + $0x151] sm:$0xff]
      %v5203 = vld [vmem:[%s3982 + $0x159] sm:$0xff]
      %v5204 = vld [vmem:[%s3982 + $0x169] sm:$0xff]
      %v5205 = vld [vmem:[%s3982 + $0x171] sm:$0xff]
      %s5206 = scalar_lea.vmem %s3, 512
      %v5207 = vld [vmem:[%s5206] sm:$0xff]
      %v5208 = vld [vmem:[%s5206 + $0x8] sm:$0xff]
      %v5209 = vld [vmem:[%s5206 + $0x10] sm:$0xff]
      %v5210 = vld [vmem:[%s5206 + $0x18] sm:$0xff]
      %v5211 = vld [vmem:[%s5206 + $0x20] sm:$0xff]
      %v5212 = vld [vmem:[%s5206 + $0x28] sm:$0xff]
      %v5213 = vld [vmem:[%s5206 + $0x30] sm:$0xff]
      %v5214 = vld [vmem:[%s5206 + $0x38] sm:$0xff]
      %v5215 = vld [vmem:[%s5206 + $0x40] sm:$0xff]
      %v5216 = vld [vmem:[%s5206 + $0x48] sm:$0xff]
      %v5217 = vld [vmem:[%s5206 + $0x50] sm:$0xff]
      %v5218 = vld [vmem:[%s5206 + $0x58] sm:$0xff]
      %v5219 = vld [vmem:[%s5206 + $0x60] sm:$0xff]
      %v5220 = vld [vmem:[%s5206 + $0x68] sm:$0xff]
      %v5221 = vld [vmem:[%s5206 + $0x70] sm:$0xff]
      %v5222 = vld [vmem:[%s5206 + $0x78] sm:$0xff]
      %5223 = vmatprep.subr.mxu0 0.0
      %5224 = vmatpush1.msra.mxu0 %v5207
      %5225 = vmatprep.subr.mxu0 0.0
      %5226 = vmatpush1.msra.mxu0 %v5208
      %5227 = vmatprep.subr.mxu0 0.0
      %5228 = vmatpush1.msra.mxu0 %v5209
      %5229 = vmatprep.subr.mxu0 0.0
      %5230 = vmatpush1.msra.mxu0 %v5210
      %5231 = vmatprep.subr.mxu0 0.0
      %5232 = vmatpush1.msra.mxu0 %v5211
      %5233 = vmatprep.subr.mxu0 0.0
      %5234 = vmatpush1.msra.mxu0 %v5212
      %5235 = vmatprep.subr.mxu0 0.0
      %5236 = vmatpush1.msra.mxu0 %v5213
      %5237 = vmatprep.subr.mxu0 0.0
      %5238 = vmatpush1.msra.mxu0 %v5214
      %5239 = vmatprep.subr.mxu0 0.0
      %5240 = vmatpush1.msra.mxu0 %v5215
      %5241 = vmatprep.subr.mxu0 0.0
      %5242 = vmatpush1.msra.mxu0 %v5216
      %5243 = vmatprep.subr.mxu0 0.0
      %5244 = vmatpush1.msra.mxu0 %v5217
      %5245 = vmatprep.subr.mxu0 0.0
      %5246 = vmatpush1.msra.mxu0 %v5218
      %5247 = vmatprep.subr.mxu0 0.0
      %5248 = vmatpush1.msra.mxu0 %v5219
      %5249 = vmatprep.subr.mxu0 0.0
      %5250 = vmatpush1.msra.mxu0 %v5220
      %5251 = vmatprep.subr.mxu0 0.0
      %5252 = vmatpush1.msra.mxu0 %v5221
      %5253 = vmatprep.subr.mxu0 0.0
      %5254 = vmatpush1.msra.mxu0 %v5222
      %5255 = vmatprep.subr.mxu0 0.0
      %5256 = vmatpush1.msra.mxu0 0.0
      %5257 = vmatprep.subr.mxu0 0.0
      %5258 = vmatpush1.msra.mxu0 0.0
      %5259 = vmatprep.subr.mxu0 0.0
      %5260 = vmatpush1.msra.mxu0 0.0
      %5261 = vmatprep.subr.mxu0 0.0
      %5262 = vmatpush1.msra.mxu0 0.0
      %5263 = vmatprep.subr.mxu0 0.0
      %5264 = vmatpush1.msra.mxu0 0.0
      %5265 = vmatprep.subr.mxu0 0.0
      %5266 = vmatpush1.msra.mxu0 0.0
      %5267 = vmatprep.subr.mxu0 0.0
      %5268 = vmatpush1.msra.mxu0 0.0
      %5269 = vmatprep.subr.mxu0 0.0
      %5270 = vmatpush1.msra.mxu0 0.0
      %5271 = vmatprep.subr.mxu0 0.0
      %5272 = vmatpush1.msra.mxu0 0.0
      %5273 = vmatprep.subr.mxu0 0.0
      %5274 = vmatpush1.msra.mxu0 0.0
      %5275 = vmatprep.subr.mxu0 0.0
      %5276 = vmatpush1.msra.mxu0 0.0
      %5277 = vmatprep.subr.mxu0 0.0
      %5278 = vmatpush1.msra.mxu0 0.0
      %5279 = vmatprep.subr.mxu0 0.0
      %5280 = vmatpush1.msra.mxu0 0.0
      %5281 = vmatprep.subr.mxu0 0.0
      %5282 = vmatpush1.msra.mxu0 0.0
      %5283 = vmatprep.subr.mxu0 0.0
      %5284 = vmatpush1.msra.mxu0 0.0
      %5285 = vmatprep.subr.mxu0 0.0
      %5286 = vmatpush1.msra.mxu0 0.0
      %5287 = vmatprep.mubr.f32.mxu0 0.0
      %5288 = vmatmul.mubr.f32.gmra.mrb[0].mxu0 %v5174
      %v5289 = vpop.f32.mrb[0].mxu0
      %v5290 = vadd.f32 0.0, %v5289
      %v5291 = vpop.f32.mrb[0].mxu0
      %5292 = vmatprep.mubr.f32.mxu0 0.0
      %5293 = vmatmul.mubr.f32.gmra.mrb[0].mxu0 %v5175
      %v5294 = vpop.f32.mrb[0].mxu0
      %v5295 = vadd.f32 0.0, %v5294
      %v5296 = vpop.f32.mrb[0].mxu0
      %5297 = vmatprep.mubr.f32.mxu0 0.0
      %5298 = vmatmul.mubr.f32.gmra.mrb[0].mxu0 %v5176
      %v5299 = vpop.f32.mrb[0].mxu0
      %v5300 = vadd.f32 0.0, %v5299
      %v5301 = vpop.f32.mrb[0].mxu0
      %5302 = vmatprep.mubr.f32.mxu0 0.0
      %5303 = vmatmul.mubr.f32.gmra.mrb[0].mxu0 %v5177
      %v5304 = vpop.f32.mrb[0].mxu0
      %v5305 = vadd.f32 0.0, %v5304
      %v5306 = vpop.f32.mrb[0].mxu0
      %5307 = vmatprep.mubr.f32.mxu0 0.0
      %5308 = vmatmul.mubr.f32.gmra.mrb[0].mxu0 %v5178
      %v5309 = vpop.f32.mrb[0].mxu0
      %v5310 = vadd.f32 0.0, %v5309
      %v5311 = vpop.f32.mrb[0].mxu0
      %5312 = vmatprep.mubr.f32.mxu0 0.0
      %5313 = vmatmul.mubr.f32.gmra.mrb[0].mxu0 %v5179
      %v5314 = vpop.f32.mrb[0].mxu0
      %v5315 = vadd.f32 0.0, %v5314
      %v5316 = vpop.f32.mrb[0].mxu0
      %5317 = vmatprep.mubr.f32.mxu0 0.0
      %5318 = vmatmul.mubr.f32.gmra.mrb[0].mxu0 %v5180
      %v5319 = vpop.f32.mrb[0].mxu0
      %v5320 = vadd.f32 0.0, %v5319
      %v5321 = vpop.f32.mrb[0].mxu0
      %5322 = vmatprep.mubr.f32.mxu0 0.0
      %5323 = vmatmul.mubr.f32.gmra.mrb[0].mxu0 %v5181
      %v5324 = vpop.f32.mrb[0].mxu0
      %v5325 = vadd.f32 0.0, %v5324
      %v5326 = vpop.f32.mrb[0].mxu0
      %5327 = vmatprep.mubr.f32.mxu0 0.0
      %5328 = vmatmul.mubr.f32.gmra.mrb[0].mxu0 %v5182
      %v5329 = vpop.f32.mrb[0].mxu0
      %v5330 = vadd.f32 0.0, %v5329
      %v5331 = vpop.f32.mrb[0].mxu0
      %5332 = vmatprep.mubr.f32.mxu0 0.0
      %5333 = vmatmul.mubr.f32.gmra.mrb[0].mxu0 %v5183
      %v5334 = vpop.f32.mrb[0].mxu0
      %v5335 = vadd.f32 0.0, %v5334
      %v5336 = vpop.f32.mrb[0].mxu0
      %5337 = vmatprep.mubr.f32.mxu0 0.0
      %5338 = vmatmul.mubr.f32.gmra.mrb[0].mxu0 %v5184
      %v5339 = vpop.f32.mrb[0].mxu0
      %v5340 = vadd.f32 0.0, %v5339
      %v5341 = vpop.f32.mrb[0].mxu0
      %5342 = vmatprep.mubr.f32.mxu0 0.0
      %5343 = vmatmul.mubr.f32.gmra.mrb[0].mxu0 %v5185
      %v5344 = vpop.f32.mrb[0].mxu0
      %v5345 = vadd.f32 0.0, %v5344
      %v5346 = vpop.f32.mrb[0].mxu0
      %5347 = vmatprep.mubr.f32.mxu0 0.0
      %5348 = vmatmul.mubr.f32.gmra.mrb[0].mxu0 %v5186
      %v5349 = vpop.f32.mrb[0].mxu0
      %v5350 = vadd.f32 0.0, %v5349
      %v5351 = vpop.f32.mrb[0].mxu0
      %5352 = vmatprep.mubr.f32.mxu0 0.0
      %5353 = vmatmul.mubr.f32.gmra.mrb[0].mxu0 %v5187
      %v5354 = vpop.f32.mrb[0].mxu0
      %v5355 = vadd.f32 0.0, %v5354
      %v5356 = vpop.f32.mrb[0].mxu0
      %5357 = vmatprep.mubr.f32.mxu0 0.0
      %5358 = vmatmul.mubr.f32.gmra.mrb[0].mxu0 %v5188
      %v5359 = vpop.f32.mrb[0].mxu0
      %v5360 = vadd.f32 0.0, %v5359
      %v5361 = vpop.f32.mrb[0].mxu0
      %5362 = vmatprep.mubr.f32.mxu0 0.0
      %5363 = vmatmul.mubr.f32.gmra.mrb[0].mxu0 %v5189
      %v5364 = vpop.f32.mrb[0].mxu0
      %v5365 = vadd.f32 0.0, %v5364
      %v5366 = vpop.f32.mrb[0].mxu0
      %5367 = vmatprep.mubr.f32.mxu0 0.0
      %5368 = vmatmul.mubr.f32.gmra.mrb[0].mxu0 %v5190
      %v5369 = vpop.f32.mrb[0].mxu0
      %v5370 = vadd.f32 0.0, %v5369
      %v5371 = vpop.f32.mrb[0].mxu0
      %5372 = vmatprep.mubr.f32.mxu0 0.0
      %5373 = vmatmul.mubr.f32.gmra.mrb[0].mxu0 %v5191
      %v5374 = vpop.f32.mrb[0].mxu0
      %v5375 = vadd.f32 0.0, %v5374
      %v5376 = vpop.f32.mrb[0].mxu0
      %5377 = vmatprep.mubr.f32.mxu0 0.0
      %5378 = vmatmul.mubr.f32.gmra.mrb[0].mxu0 %v5192
      %v5379 = vpop.f32.mrb[0].mxu0
      %v5380 = vadd.f32 0.0, %v5379
      %v5381 = vpop.f32.mrb[0].mxu0
      %5382 = vmatprep.mubr.f32.mxu0 0.0
      %5383 = vmatmul.mubr.f32.gmra.mrb[0].mxu0 %v5193
      %v5384 = vpop.f32.mrb[0].mxu0
      %v5385 = vadd.f32 0.0, %v5384
      %v5386 = vpop.f32.mrb[0].mxu0
      %5387 = vmatprep.mubr.f32.mxu0 0.0
      %5388 = vmatmul.mubr.f32.gmra.mrb[0].mxu0 %v5194
      %v5389 = vpop.f32.mrb[0].mxu0
      %v5390 = vadd.f32 0.0, %v5389
      %v5391 = vpop.f32.mrb[0].mxu0
      %5392 = vmatprep.mubr.f32.mxu0 0.0
      %5393 = vmatmul.mubr.f32.gmra.mrb[0].mxu0 %v5195
      %v5394 = vpop.f32.mrb[0].mxu0
      %v5395 = vadd.f32 0.0, %v5394
      %v5396 = vpop.f32.mrb[0].mxu0
      %5397 = vmatprep.mubr.f32.mxu0 0.0
      %5398 = vmatmul.mubr.f32.gmra.mrb[0].mxu0 %v5196
      %v5399 = vpop.f32.mrb[0].mxu0
      %v5400 = vadd.f32 0.0, %v5399
      %v5401 = vpop.f32.mrb[0].mxu0
      %5402 = vmatprep.mubr.f32.mxu0 0.0
      %5403 = vmatmul.mubr.f32.gmra.mrb[0].mxu0 %v5197
      %v5404 = vpop.f32.mrb[0].mxu0
      %v5405 = vadd.f32 0.0, %v5404
      %v5406 = vpop.f32.mrb[0].mxu0
      %5407 = vmatprep.mubr.f32.mxu0 0.0
      %5408 = vmatmul.mubr.f32.gmra.mrb[0].mxu0 %v5198
      %v5409 = vpop.f32.mrb[0].mxu0
      %v5410 = vadd.f32 0.0, %v5409
      %v5411 = vpop.f32.mrb[0].mxu0
      %5412 = vmatprep.mubr.f32.mxu0 0.0
      %5413 = vmatmul.mubr.f32.gmra.mrb[0].mxu0 %v5199
      %v5414 = vpop.f32.mrb[0].mxu0
      %v5415 = vadd.f32 0.0, %v5414
      %v5416 = vpop.f32.mrb[0].mxu0
      %5417 = vmatprep.mubr.f32.mxu0 0.0
      %5418 = vmatmul.mubr.f32.gmra.mrb[0].mxu0 %v5200
      %v5419 = vpop.f32.mrb[0].mxu0
      %v5420 = vadd.f32 0.0, %v5419
      %v5421 = vpop.f32.mrb[0].mxu0
      %5422 = vmatprep.mubr.f32.mxu0 0.0
      %5423 = vmatmul.mubr.f32.gmra.mrb[0].mxu0 %v5201
      %v5424 = vpop.f32.mrb[0].mxu0
      %v5425 = vadd.f32 0.0, %v5424
      %v5426 = vpop.f32.mrb[0].mxu0
      %5427 = vmatprep.mubr.f32.mxu0 0.0
      %5428 = vmatmul.mubr.f32.gmra.mrb[0].mxu0 %v5202
      %v5429 = vpop.f32.mrb[0].mxu0
      %v5430 = vadd.f32 0.0, %v5429
      %v5431 = vpop.f32.mrb[0].mxu0
      %5432 = vmatprep.mubr.f32.mxu0 0.0
      %5433 = vmatmul.mubr.f32.gmra.mrb[0].mxu0 %v5203
      %v5434 = vpop.f32.mrb[0].mxu0
      %v5435 = vadd.f32 0.0, %v5434
      %v5436 = vpop.f32.mrb[0].mxu0
      %5437 = vmatprep.mubr.f32.mxu0 0.0
      %5438 = vmatmul.mubr.f32.gmra.mrb[0].mxu0 %v5204
      %v5439 = vpop.f32.mrb[0].mxu0
      %v5440 = vadd.f32 0.0, %v5439
      %v5441 = vpop.f32.mrb[0].mxu0
      %5442 = vmatprep.mubr.f32.mxu0 0.0
      %5443 = vmatmul.mubr.f32.gmra.mrb[0].mxu0 %v5205
      %v5444 = vpop.f32.mrb[0].mxu0
      %v5445 = vadd.f32 0.0, %v5444
      %v5446 = vpop.f32.mrb[0].mxu0
      %5447 = vdwg.mxu0
      %v5448 = vadd.f32 %v5142, %v5290
      %v5449 = vadd.f32 %v5143, %v5295
      %v5450 = vadd.f32 %v5144, %v5300
      %v5451 = vadd.f32 %v5145, %v5305
      %v5452 = vadd.f32 %v5146, %v5310
      %v5453 = vadd.f32 %v5147, %v5315
      %v5454 = vadd.f32 %v5148, %v5320
      %v5455 = vadd.f32 %v5149, %v5325
      %v5456 = vadd.f32 %v5150, %v5330
      %v5457 = vadd.f32 %v5151, %v5335
      %v5458 = vadd.f32 %v5152, %v5340
      %v5459 = vadd.f32 %v5153, %v5345
      %v5460 = vadd.f32 %v5154, %v5350
      %v5461 = vadd.f32 %v5155, %v5355
      %v5462 = vadd.f32 %v5156, %v5360
      %v5463 = vadd.f32 %v5157, %v5365
      %v5464 = vadd.f32 %v5158, %v5370
      %v5465 = vadd.f32 %v5159, %v5375
      %v5466 = vadd.f32 %v5160, %v5380
      %v5467 = vadd.f32 %v5161, %v5385
      %v5468 = vadd.f32 %v5162, %v5390
      %v5469 = vadd.f32 %v5163, %v5395
      %v5470 = vadd.f32 %v5164, %v5400
      %v5471 = vadd.f32 %v5165, %v5405
      %v5472 = vadd.f32 %v5166, %v5410
      %v5473 = vadd.f32 %v5167, %v5415
      %v5474 = vadd.f32 %v5168, %v5420
      %v5475 = vadd.f32 %v5169, %v5425
      %v5476 = vadd.f32 %v5170, %v5430
      %v5477 = vadd.f32 %v5171, %v5435
      %v5478 = vadd.f32 %v5172, %v5440
      %v5479 = vadd.f32 %v5173, %v5445
      %v5480 = vld [vmem:[%s3982 + $0x2] sm:$0xff]
      %v5481 = vld [vmem:[%s3982 + $0xa] sm:$0xff]
      %v5482 = vld [vmem:[%s3982 + $0x1a] sm:$0xff]
      %v5483 = vld [vmem:[%s3982 + $0x22] sm:$0xff]
      %v5484 = vld [vmem:[%s3982 + $0x32] sm:$0xff]
      %v5485 = vld [vmem:[%s3982 + $0x3a] sm:$0xff]
      %v5486 = vld [vmem:[%s3982 + $0x4a] sm:$0xff]
      %v5487 = vld [vmem:[%s3982 + $0x52] sm:$0xff]
      %v5488 = vld [vmem:[%s3982 + $0x62] sm:$0xff]
      %v5489 = vld [vmem:[%s3982 + $0x6a] sm:$0xff]
      %v5490 = vld [vmem:[%s3982 + $0x7a] sm:$0xff]
      %v5491 = vld [vmem:[%s3982 + $0x82] sm:$0xff]
      %v5492 = vld [vmem:[%s3982 + $0x92] sm:$0xff]
      %v5493 = vld [vmem:[%s3982 + $0x9a] sm:$0xff]
      %v5494 = vld [vmem:[%s3982 + $0xaa] sm:$0xff]
      %v5495 = vld [vmem:[%s3982 + $0xb2] sm:$0xff]
      %v5496 = vld [vmem:[%s3982 + $0xc2] sm:$0xff]
      %v5497 = vld [vmem:[%s3982 + $0xca] sm:$0xff]
      %v5498 = vld [vmem:[%s3982 + $0xda] sm:$0xff]
      %v5499 = vld [vmem:[%s3982 + $0xe2] sm:$0xff]
      %v5500 = vld [vmem:[%s3982 + $0xf2] sm:$0xff]
      %v5501 = vld [vmem:[%s3982 + $0xfa] sm:$0xff]
      %v5502 = vld [vmem:[%s3982 + $0x10a] sm:$0xff]
      %v5503 = vld [vmem:[%s3982 + $0x112] sm:$0xff]
      %v5504 = vld [vmem:[%s3982 + $0x122] sm:$0xff]
      %v5505 = vld [vmem:[%s3982 + $0x12a] sm:$0xff]
      %v5506 = vld [vmem:[%s3982 + $0x13a] sm:$0xff]
      %v5507 = vld [vmem:[%s3982 + $0x142] sm:$0xff]
      %v5508 = vld [vmem:[%s3982 + $0x152] sm:$0xff]
      %v5509 = vld [vmem:[%s3982 + $0x15a] sm:$0xff]
      %v5510 = vld [vmem:[%s3982 + $0x16a] sm:$0xff]
      %v5511 = vld [vmem:[%s3982 + $0x172] sm:$0xff]
      %s5512 = scalar_lea.vmem %s3, 640
      %v5513 = vld [vmem:[%s5512] sm:$0xff]
      %v5514 = vld [vmem:[%s5512 + $0x8] sm:$0xff]
      %v5515 = vld [vmem:[%s5512 + $0x10] sm:$0xff]
      %v5516 = vld [vmem:[%s5512 + $0x18] sm:$0xff]
      %v5517 = vld [vmem:[%s5512 + $0x20] sm:$0xff]
      %v5518 = vld [vmem:[%s5512 + $0x28] sm:$0xff]
      %v5519 = vld [vmem:[%s5512 + $0x30] sm:$0xff]
      %v5520 = vld [vmem:[%s5512 + $0x38] sm:$0xff]
      %v5521 = vld [vmem:[%s5512 + $0x40] sm:$0xff]
      %v5522 = vld [vmem:[%s5512 + $0x48] sm:$0xff]
      %v5523 = vld [vmem:[%s5512 + $0x50] sm:$0xff]
      %v5524 = vld [vmem:[%s5512 + $0x58] sm:$0xff]
      %v5525 = vld [vmem:[%s5512 + $0x60] sm:$0xff]
      %v5526 = vld [vmem:[%s5512 + $0x68] sm:$0xff]
      %v5527 = vld [vmem:[%s5512 + $0x70] sm:$0xff]
      %v5528 = vld [vmem:[%s5512 + $0x78] sm:$0xff]
      %5529 = vmatprep.subr.mxu0 0.0
      %5530 = vmatpush1.msra.mxu0 %v5513
      %5531 = vmatprep.subr.mxu0 0.0
      %5532 = vmatpush1.msra.mxu0 %v5514
      %5533 = vmatprep.subr.mxu0 0.0
      %5534 = vmatpush1.msra.mxu0 %v5515
      %5535 = vmatprep.subr.mxu0 0.0
      %5536 = vmatpush1.msra.mxu0 %v5516
      %5537 = vmatprep.subr.mxu0 0.0
      %5538 = vmatpush1.msra.mxu0 %v5517
      %5539 = vmatprep.subr.mxu0 0.0
      %5540 = vmatpush1.msra.mxu0 %v5518
      %5541 = vmatprep.subr.mxu0 0.0
      %5542 = vmatpush1.msra.mxu0 %v5519
      %5543 = vmatprep.subr.mxu0 0.0
      %5544 = vmatpush1.msra.mxu0 %v5520
      %5545 = vmatprep.subr.mxu0 0.0
      %5546 = vmatpush1.msra.mxu0 %v5521
      %5547 = vmatprep.subr.mxu0 0.0
      %5548 = vmatpush1.msra.mxu0 %v5522
      %5549 = vmatprep.subr.mxu0 0.0
      %5550 = vmatpush1.msra.mxu0 %v5523
      %5551 = vmatprep.subr.mxu0 0.0
      %5552 = vmatpush1.msra.mxu0 %v5524
      %5553 = vmatprep.subr.mxu0 0.0
      %5554 = vmatpush1.msra.mxu0 %v5525
      %5555 = vmatprep.subr.mxu0 0.0
      %5556 = vmatpush1.msra.mxu0 %v5526
      %5557 = vmatprep.subr.mxu0 0.0
      %5558 = vmatpush1.msra.mxu0 %v5527
      %5559 = vmatprep.subr.mxu0 0.0
      %5560 = vmatpush1.msra.mxu0 %v5528
      %5561 = vmatprep.subr.mxu0 0.0
      %5562 = vmatpush1.msra.mxu0 0.0
      %5563 = vmatprep.subr.mxu0 0.0
      %5564 = vmatpush1.msra.mxu0 0.0
      %5565 = vmatprep.subr.mxu0 0.0
      %5566 = vmatpush1.msra.mxu0 0.0
      %5567 = vmatprep.subr.mxu0 0.0
      %5568 = vmatpush1.msra.mxu0 0.0
      %5569 = vmatprep.subr.mxu0 0.0
      %5570 = vmatpush1.msra.mxu0 0.0
      %5571 = vmatprep.subr.mxu0 0.0
      %5572 = vmatpush1.msra.mxu0 0.0
      %5573 = vmatprep.subr.mxu0 0.0
      %5574 = vmatpush1.msra.mxu0 0.0
      %5575 = vmatprep.subr.mxu0 0.0
      %5576 = vmatpush1.msra.mxu0 0.0
      %5577 = vmatprep.subr.mxu0 0.0
      %5578 = vmatpush1.msra.mxu0 0.0
      %5579 = vmatprep.subr.mxu0 0.0
      %5580 = vmatpush1.msra.mxu0 0.0
      %5581 = vmatprep.subr.mxu0 0.0
      %5582 = vmatpush1.msra.mxu0 0.0
      %5583 = vmatprep.subr.mxu0 0.0
      %5584 = vmatpush1.msra.mxu0 0.0
      %5585 = vmatprep.subr.mxu0 0.0
      %5586 = vmatpush1.msra.mxu0 0.0
      %5587 = vmatprep.subr.mxu0 0.0
      %5588 = vmatpush1.msra.mxu0 0.0
      %5589 = vmatprep.subr.mxu0 0.0
      %5590 = vmatpush1.msra.mxu0 0.0
      %5591 = vmatprep.subr.mxu0 0.0
      %5592 = vmatpush1.msra.mxu0 0.0
      %5593 = vmatprep.mubr.f32.mxu0 0.0
      %5594 = vmatmul.mubr.f32.gmra.mrb[0].mxu0 %v5480
      %v5595 = vpop.f32.mrb[0].mxu0
      %v5596 = vadd.f32 0.0, %v5595
      %v5597 = vpop.f32.mrb[0].mxu0
      %5598 = vmatprep.mubr.f32.mxu0 0.0
      %5599 = vmatmul.mubr.f32.gmra.mrb[0].mxu0 %v5481
      %v5600 = vpop.f32.mrb[0].mxu0
      %v5601 = vadd.f32 0.0, %v5600
      %v5602 = vpop.f32.mrb[0].mxu0
      %5603 = vmatprep.mubr.f32.mxu0 0.0
      %5604 = vmatmul.mubr.f32.gmra.mrb[0].mxu0 %v5482
      %v5605 = vpop.f32.mrb[0].mxu0
      %v5606 = vadd.f32 0.0, %v5605
      %v5607 = vpop.f32.mrb[0].mxu0
      %5608 = vmatprep.mubr.f32.mxu0 0.0
      %5609 = vmatmul.mubr.f32.gmra.mrb[0].mxu0 %v5483
      %v5610 = vpop.f32.mrb[0].mxu0
      %v5611 = vadd.f32 0.0, %v5610
      %v5612 = vpop.f32.mrb[0].mxu0
      %5613 = vmatprep.mubr.f32.mxu0 0.0
      %5614 = vmatmul.mubr.f32.gmra.mrb[0].mxu0 %v5484
      %v5615 = vpop.f32.mrb[0].mxu0
      %v5616 = vadd.f32 0.0, %v5615
      %v5617 = vpop.f32.mrb[0].mxu0
      %5618 = vmatprep.mubr.f32.mxu0 0.0
      %5619 = vmatmul.mubr.f32.gmra.mrb[0].mxu0 %v5485
      %v5620 = vpop.f32.mrb[0].mxu0
      %v5621 = vadd.f32 0.0, %v5620
      %v5622 = vpop.f32.mrb[0].mxu0
      %5623 = vmatprep.mubr.f32.mxu0 0.0
      %5624 = vmatmul.mubr.f32.gmra.mrb[0].mxu0 %v5486
      %v5625 = vpop.f32.mrb[0].mxu0
      %v5626 = vadd.f32 0.0, %v5625
      %v5627 = vpop.f32.mrb[0].mxu0
      %5628 = vmatprep.mubr.f32.mxu0 0.0
      %5629 = vmatmul.mubr.f32.gmra.mrb[0].mxu0 %v5487
      %v5630 = vpop.f32.mrb[0].mxu0
      %v5631 = vadd.f32 0.0, %v5630
      %v5632 = vpop.f32.mrb[0].mxu0
      %5633 = vmatprep.mubr.f32.mxu0 0.0
      %5634 = vmatmul.mubr.f32.gmra.mrb[0].mxu0 %v5488
      %v5635 = vpop.f32.mrb[0].mxu0
      %v5636 = vadd.f32 0.0, %v5635
      %v5637 = vpop.f32.mrb[0].mxu0
      %5638 = vmatprep.mubr.f32.mxu0 0.0
      %5639 = vmatmul.mubr.f32.gmra.mrb[0].mxu0 %v5489
      %v5640 = vpop.f32.mrb[0].mxu0
      %v5641 = vadd.f32 0.0, %v5640
      %v5642 = vpop.f32.mrb[0].mxu0
      %5643 = vmatprep.mubr.f32.mxu0 0.0
      %5644 = vmatmul.mubr.f32.gmra.mrb[0].mxu0 %v5490
      %v5645 = vpop.f32.mrb[0].mxu0
      %v5646 = vadd.f32 0.0, %v5645
      %v5647 = vpop.f32.mrb[0].mxu0
      %5648 = vmatprep.mubr.f32.mxu0 0.0
      %5649 = vmatmul.mubr.f32.gmra.mrb[0].mxu0 %v5491
      %v5650 = vpop.f32.mrb[0].mxu0
      %v5651 = vadd.f32 0.0, %v5650
      %v5652 = vpop.f32.mrb[0].mxu0
      %5653 = vmatprep.mubr.f32.mxu0 0.0
      %5654 = vmatmul.mubr.f32.gmra.mrb[0].mxu0 %v5492
      %v5655 = vpop.f32.mrb[0].mxu0
      %v5656 = vadd.f32 0.0, %v5655
      %v5657 = vpop.f32.mrb[0].mxu0
      %5658 = vmatprep.mubr.f32.mxu0 0.0
      %5659 = vmatmul.mubr.f32.gmra.mrb[0].mxu0 %v5493
      %v5660 = vpop.f32.mrb[0].mxu0
      %v5661 = vadd.f32 0.0, %v5660
      %v5662 = vpop.f32.mrb[0].mxu0
      %5663 = vmatprep.mubr.f32.mxu0 0.0
      %5664 = vmatmul.mubr.f32.gmra.mrb[0].mxu0 %v5494
      %v5665 = vpop.f32.mrb[0].mxu0
      %v5666 = vadd.f32 0.0, %v5665
      %v5667 = vpop.f32.mrb[0].mxu0
      %5668 = vmatprep.mubr.f32.mxu0 0.0
      %5669 = vmatmul.mubr.f32.gmra.mrb[0].mxu0 %v5495
      %v5670 = vpop.f32.mrb[0].mxu0
      %v5671 = vadd.f32 0.0, %v5670
      %v5672 = vpop.f32.mrb[0].mxu0
      %5673 = vmatprep.mubr.f32.mxu0 0.0
      %5674 = vmatmul.mubr.f32.gmra.mrb[0].mxu0 %v5496
      %v5675 = vpop.f32.mrb[0].mxu0
      %v5676 = vadd.f32 0.0, %v5675
      %v5677 = vpop.f32.mrb[0].mxu0
      %5678 = vmatprep.mubr.f32.mxu0 0.0
      %5679 = vmatmul.mubr.f32.gmra.mrb[0].mxu0 %v5497
      %v5680 = vpop.f32.mrb[0].mxu0
      %v5681 = vadd.f32 0.0, %v5680
      %v5682 = vpop.f32.mrb[0].mxu0
      %5683 = vmatprep.mubr.f32.mxu0 0.0
      %5684 = vmatmul.mubr.f32.gmra.mrb[0].mxu0 %v5498
      %v5685 = vpop.f32.mrb[0].mxu0
      %v5686 = vadd.f32 0.0, %v5685
      %v5687 = vpop.f32.mrb[0].mxu0
      %5688 = vmatprep.mubr.f32.mxu0 0.0
      %5689 = vmatmul.mubr.f32.gmra.mrb[0].mxu0 %v5499
      %v5690 = vpop.f32.mrb[0].mxu0
      %v5691 = vadd.f32 0.0, %v5690
      %v5692 = vpop.f32.mrb[0].mxu0
      %5693 = vmatprep.mubr.f32.mxu0 0.0
      %5694 = vmatmul.mubr.f32.gmra.mrb[0].mxu0 %v5500
      %v5695 = vpop.f32.mrb[0].mxu0
      %v5696 = vadd.f32 0.0, %v5695
      %v5697 = vpop.f32.mrb[0].mxu0
      %5698 = vmatprep.mubr.f32.mxu0 0.0
      %5699 = vmatmul.mubr.f32.gmra.mrb[0].mxu0 %v5501
      %v5700 = vpop.f32.mrb[0].mxu0
      %v5701 = vadd.f32 0.0, %v5700
      %v5702 = vpop.f32.mrb[0].mxu0
      %5703 = vmatprep.mubr.f32.mxu0 0.0
      %5704 = vmatmul.mubr.f32.gmra.mrb[0].mxu0 %v5502
      %v5705 = vpop.f32.mrb[0].mxu0
      %v5706 = vadd.f32 0.0, %v5705
      %v5707 = vpop.f32.mrb[0].mxu0
      %5708 = vmatprep.mubr.f32.mxu0 0.0
      %5709 = vmatmul.mubr.f32.gmra.mrb[0].mxu0 %v5503
      %v5710 = vpop.f32.mrb[0].mxu0
      %v5711 = vadd.f32 0.0, %v5710
      %v5712 = vpop.f32.mrb[0].mxu0
      %5713 = vmatprep.mubr.f32.mxu0 0.0
      %5714 = vmatmul.mubr.f32.gmra.mrb[0].mxu0 %v5504
      %v5715 = vpop.f32.mrb[0].mxu0
      %v5716 = vadd.f32 0.0, %v5715
      %v5717 = vpop.f32.mrb[0].mxu0
      %5718 = vmatprep.mubr.f32.mxu0 0.0
      %5719 = vmatmul.mubr.f32.gmra.mrb[0].mxu0 %v5505
      %v5720 = vpop.f32.mrb[0].mxu0
      %v5721 = vadd.f32 0.0, %v5720
      %v5722 = vpop.f32.mrb[0].mxu0
      %5723 = vmatprep.mubr.f32.mxu0 0.0
      %5724 = vmatmul.mubr.f32.gmra.mrb[0].mxu0 %v5506
      %v5725 = vpop.f32.mrb[0].mxu0
      %v5726 = vadd.f32 0.0, %v5725
      %v5727 = vpop.f32.mrb[0].mxu0
      %5728 = vmatprep.mubr.f32.mxu0 0.0
      %5729 = vmatmul.mubr.f32.gmra.mrb[0].mxu0 %v5507
      %v5730 = vpop.f32.mrb[0].mxu0
      %v5731 = vadd.f32 0.0, %v5730
      %v5732 = vpop.f32.mrb[0].mxu0
      %5733 = vmatprep.mubr.f32.mxu0 0.0
      %5734 = vmatmul.mubr.f32.gmra.mrb[0].mxu0 %v5508
      %v5735 = vpop.f32.mrb[0].mxu0
      %v5736 = vadd.f32 0.0, %v5735
      %v5737 = vpop.f32.mrb[0].mxu0
      %5738 = vmatprep.mubr.f32.mxu0 0.0
      %5739 = vmatmul.mubr.f32.gmra.mrb[0].mxu0 %v5509
      %v5740 = vpop.f32.mrb[0].mxu0
      %v5741 = vadd.f32 0.0, %v5740
      %v5742 = vpop.f32.mrb[0].mxu0
      %5743 = vmatprep.mubr.f32.mxu0 0.0
      %5744 = vmatmul.mubr.f32.gmra.mrb[0].mxu0 %v5510
      %v5745 = vpop.f32.mrb[0].mxu0
      %v5746 = vadd.f32 0.0, %v5745
      %v5747 = vpop.f32.mrb[0].mxu0
      %5748 = vmatprep.mubr.f32.mxu0 0.0
      %5749 = vmatmul.mubr.f32.gmra.mrb[0].mxu0 %v5511
      %v5750 = vpop.f32.mrb[0].mxu0
      %v5751 = vadd.f32 0.0, %v5750
      %v5752 = vpop.f32.mrb[0].mxu0
      %5753 = vdwg.mxu0
      %v5754 = vadd.f32 %v5448, %v5596
      %v5755 = vadd.f32 %v5449, %v5601
      %v5756 = vadd.f32 %v5450, %v5606
      %v5757 = vadd.f32 %v5451, %v5611
      %v5758 = vadd.f32 %v5452, %v5616
      %v5759 = vadd.f32 %v5453, %v5621
      %v5760 = vadd.f32 %v5454, %v5626
      %v5761 = vadd.f32 %v5455, %v5631
      %v5762 = vadd.f32 %v5456, %v5636
      %v5763 = vadd.f32 %v5457, %v5641
      %v5764 = vadd.f32 %v5458, %v5646
      %v5765 = vadd.f32 %v5459, %v5651
      %v5766 = vadd.f32 %v5460, %v5656
      %v5767 = vadd.f32 %v5461, %v5661
      %v5768 = vadd.f32 %v5462, %v5666
      %v5769 = vadd.f32 %v5463, %v5671
      %v5770 = vadd.f32 %v5464, %v5676
      %v5771 = vadd.f32 %v5465, %v5681
      %v5772 = vadd.f32 %v5466, %v5686
      %v5773 = vadd.f32 %v5467, %v5691
      %v5774 = vadd.f32 %v5468, %v5696
      %v5775 = vadd.f32 %v5469, %v5701
      %v5776 = vadd.f32 %v5470, %v5706
      %v5777 = vadd.f32 %v5471, %v5711
      %v5778 = vadd.f32 %v5472, %v5716
      %v5779 = vadd.f32 %v5473, %v5721
      %v5780 = vadd.f32 %v5474, %v5726
      %v5781 = vadd.f32 %v5475, %v5731
      %v5782 = vadd.f32 %v5476, %v5736
      %v5783 = vadd.f32 %v5477, %v5741
      %v5784 = vadd.f32 %v5478, %v5746
      %v5785 = vadd.f32 %v5479, %v5751
      %s5786 = scalar_lea.vmem [#allocation3], 48
      %v5787 = vld [vmem:[%s5786] sm:$0xff]
      %v5788 = vld [vmem:[%s5786 + $0x8] sm:$0xff]
      %v5789 = vld [vmem:[%s5786 + $0x18] sm:$0xff]
      %v5790 = vld [vmem:[%s5786 + $0x20] sm:$0xff]
      %v5791 = vld [vmem:[%s5786 + $0x30] sm:$0xff]
      %v5792 = vld [vmem:[%s5786 + $0x38] sm:$0xff]
      %v5793 = vld [vmem:[%s5786 + $0x48] sm:$0xff]
      %v5794 = vld [vmem:[%s5786 + $0x50] sm:$0xff]
      %v5795 = vld [vmem:[%s5786 + $0x60] sm:$0xff]
      %v5796 = vld [vmem:[%s5786 + $0x68] sm:$0xff]
      %v5797 = vld [vmem:[%s5786 + $0x78] sm:$0xff]
      %v5798 = vld [vmem:[%s5786 + $0x80] sm:$0xff]
      %v5799 = vld [vmem:[%s5786 + $0x90] sm:$0xff]
      %v5800 = vld [vmem:[%s5786 + $0x98] sm:$0xff]
      %v5801 = vld [vmem:[%s5786 + $0xa8] sm:$0xff]
      %v5802 = vld [vmem:[%s5786 + $0xb0] sm:$0xff]
      %v5803 = vld [vmem:[%s5786 + $0xc0] sm:$0xff]
      %v5804 = vld [vmem:[%s5786 + $0xc8] sm:$0xff]
      %v5805 = vld [vmem:[%s5786 + $0xd8] sm:$0xff]
      %v5806 = vld [vmem:[%s5786 + $0xe0] sm:$0xff]
      %v5807 = vld [vmem:[%s5786 + $0xf0] sm:$0xff]
      %v5808 = vld [vmem:[%s5786 + $0xf8] sm:$0xff]
      %v5809 = vld [vmem:[%s5786 + $0x108] sm:$0xff]
      %v5810 = vld [vmem:[%s5786 + $0x110] sm:$0xff]
      %v5811 = vld [vmem:[%s5786 + $0x120] sm:$0xff]
      %v5812 = vld [vmem:[%s5786 + $0x128] sm:$0xff]
      %v5813 = vld [vmem:[%s5786 + $0x138] sm:$0xff]
      %v5814 = vld [vmem:[%s5786 + $0x140] sm:$0xff]
      %v5815 = vld [vmem:[%s5786 + $0x150] sm:$0xff]
      %v5816 = vld [vmem:[%s5786 + $0x158] sm:$0xff]
      %v5817 = vld [vmem:[%s5786 + $0x168] sm:$0xff]
      %v5818 = vld [vmem:[%s5786 + $0x170] sm:$0xff]
      %s5819 = scalar_lea.vmem %s3, 768
      %v5820 = vld [vmem:[%s5819] sm:$0xff]
      %v5821 = vld [vmem:[%s5819 + $0x8] sm:$0xff]
      %v5822 = vld [vmem:[%s5819 + $0x10] sm:$0xff]
      %v5823 = vld [vmem:[%s5819 + $0x18] sm:$0xff]
      %v5824 = vld [vmem:[%s5819 + $0x20] sm:$0xff]
      %v5825 = vld [vmem:[%s5819 + $0x28] sm:$0xff]
      %v5826 = vld [vmem:[%s5819 + $0x30] sm:$0xff]
      %v5827 = vld [vmem:[%s5819 + $0x38] sm:$0xff]
      %v5828 = vld [vmem:[%s5819 + $0x40] sm:$0xff]
      %v5829 = vld [vmem:[%s5819 + $0x48] sm:$0xff]
      %v5830 = vld [vmem:[%s5819 + $0x50] sm:$0xff]
      %v5831 = vld [vmem:[%s5819 + $0x58] sm:$0xff]
      %v5832 = vld [vmem:[%s5819 + $0x60] sm:$0xff]
      %v5833 = vld [vmem:[%s5819 + $0x68] sm:$0xff]
      %v5834 = vld [vmem:[%s5819 + $0x70] sm:$0xff]
      %v5835 = vld [vmem:[%s5819 + $0x78] sm:$0xff]
      %5836 = vmatprep.subr.mxu0 0.0
      %5837 = vmatpush1.msra.mxu0 %v5820
      %5838 = vmatprep.subr.mxu0 0.0
      %5839 = vmatpush1.msra.mxu0 %v5821
      %5840 = vmatprep.subr.mxu0 0.0
      %5841 = vmatpush1.msra.mxu0 %v5822
      %5842 = vmatprep.subr.mxu0 0.0
      %5843 = vmatpush1.msra.mxu0 %v5823
      %5844 = vmatprep.subr.mxu0 0.0
      %5845 = vmatpush1.msra.mxu0 %v5824
      %5846 = vmatprep.subr.mxu0 0.0
      %5847 = vmatpush1.msra.mxu0 %v5825
      %5848 = vmatprep.subr.mxu0 0.0
      %5849 = vmatpush1.msra.mxu0 %v5826
      %5850 = vmatprep.subr.mxu0 0.0
      %5851 = vmatpush1.msra.mxu0 %v5827
      %5852 = vmatprep.subr.mxu0 0.0
      %5853 = vmatpush1.msra.mxu0 %v5828
      %5854 = vmatprep.subr.mxu0 0.0
      %5855 = vmatpush1.msra.mxu0 %v5829
      %5856 = vmatprep.subr.mxu0 0.0
      %5857 = vmatpush1.msra.mxu0 %v5830
      %5858 = vmatprep.subr.mxu0 0.0
      %5859 = vmatpush1.msra.mxu0 %v5831
      %5860 = vmatprep.subr.mxu0 0.0
      %5861 = vmatpush1.msra.mxu0 %v5832
      %5862 = vmatprep.subr.mxu0 0.0
      %5863 = vmatpush1.msra.mxu0 %v5833
      %5864 = vmatprep.subr.mxu0 0.0
      %5865 = vmatpush1.msra.mxu0 %v5834
      %5866 = vmatprep.subr.mxu0 0.0
      %5867 = vmatpush1.msra.mxu0 %v5835
      %5868 = vmatprep.subr.mxu0 0.0
      %5869 = vmatpush1.msra.mxu0 0.0
      %5870 = vmatprep.subr.mxu0 0.0
      %5871 = vmatpush1.msra.mxu0 0.0
      %5872 = vmatprep.subr.mxu0 0.0
      %5873 = vmatpush1.msra.mxu0 0.0
      %5874 = vmatprep.subr.mxu0 0.0
      %5875 = vmatpush1.msra.mxu0 0.0
      %5876 = vmatprep.subr.mxu0 0.0
      %5877 = vmatpush1.msra.mxu0 0.0
      %5878 = vmatprep.subr.mxu0 0.0
      %5879 = vmatpush1.msra.mxu0 0.0
      %5880 = vmatprep.subr.mxu0 0.0
      %5881 = vmatpush1.msra.mxu0 0.0
      %5882 = vmatprep.subr.mxu0 0.0
      %5883 = vmatpush1.msra.mxu0 0.0
      %5884 = vmatprep.subr.mxu0 0.0
      %5885 = vmatpush1.msra.mxu0 0.0
      %5886 = vmatprep.subr.mxu0 0.0
      %5887 = vmatpush1.msra.mxu0 0.0
      %5888 = vmatprep.subr.mxu0 0.0
      %5889 = vmatpush1.msra.mxu0 0.0
      %5890 = vmatprep.subr.mxu0 0.0
      %5891 = vmatpush1.msra.mxu0 0.0
      %5892 = vmatprep.subr.mxu0 0.0
      %5893 = vmatpush1.msra.mxu0 0.0
      %5894 = vmatprep.subr.mxu0 0.0
      %5895 = vmatpush1.msra.mxu0 0.0
      %5896 = vmatprep.subr.mxu0 0.0
      %5897 = vmatpush1.msra.mxu0 0.0
      %5898 = vmatprep.subr.mxu0 0.0
      %5899 = vmatpush1.msra.mxu0 0.0
      %5900 = vmatprep.mubr.f32.mxu0 0.0
      %5901 = vmatmul.mubr.f32.gmra.mrb[0].mxu0 %v5787
      %v5902 = vpop.f32.mrb[0].mxu0
      %v5903 = vadd.f32 0.0, %v5902
      %v5904 = vpop.f32.mrb[0].mxu0
      %5905 = vmatprep.mubr.f32.mxu0 0.0
      %5906 = vmatmul.mubr.f32.gmra.mrb[0].mxu0 %v5788
      %v5907 = vpop.f32.mrb[0].mxu0
      %v5908 = vadd.f32 0.0, %v5907
      %v5909 = vpop.f32.mrb[0].mxu0
      %5910 = vmatprep.mubr.f32.mxu0 0.0
      %5911 = vmatmul.mubr.f32.gmra.mrb[0].mxu0 %v5789
      %v5912 = vpop.f32.mrb[0].mxu0
      %v5913 = vadd.f32 0.0, %v5912
      %v5914 = vpop.f32.mrb[0].mxu0
      %5915 = vmatprep.mubr.f32.mxu0 0.0
      %5916 = vmatmul.mubr.f32.gmra.mrb[0].mxu0 %v5790
      %v5917 = vpop.f32.mrb[0].mxu0
      %v5918 = vadd.f32 0.0, %v5917
      %v5919 = vpop.f32.mrb[0].mxu0
      %5920 = vmatprep.mubr.f32.mxu0 0.0
      %5921 = vmatmul.mubr.f32.gmra.mrb[0].mxu0 %v5791
      %v5922 = vpop.f32.mrb[0].mxu0
      %v5923 = vadd.f32 0.0, %v5922
      %v5924 = vpop.f32.mrb[0].mxu0
      %5925 = vmatprep.mubr.f32.mxu0 0.0
      %5926 = vmatmul.mubr.f32.gmra.mrb[0].mxu0 %v5792
      %v5927 = vpop.f32.mrb[0].mxu0
      %v5928 = vadd.f32 0.0, %v5927
      %v5929 = vpop.f32.mrb[0].mxu0
      %5930 = vmatprep.mubr.f32.mxu0 0.0
      %5931 = vmatmul.mubr.f32.gmra.mrb[0].mxu0 %v5793
      %v5932 = vpop.f32.mrb[0].mxu0
      %v5933 = vadd.f32 0.0, %v5932
      %v5934 = vpop.f32.mrb[0].mxu0
      %5935 = vmatprep.mubr.f32.mxu0 0.0
      %5936 = vmatmul.mubr.f32.gmra.mrb[0].mxu0 %v5794
      %v5937 = vpop.f32.mrb[0].mxu0
      %v5938 = vadd.f32 0.0, %v5937
      %v5939 = vpop.f32.mrb[0].mxu0
      %5940 = vmatprep.mubr.f32.mxu0 0.0
      %5941 = vmatmul.mubr.f32.gmra.mrb[0].mxu0 %v5795
      %v5942 = vpop.f32.mrb[0].mxu0
      %v5943 = vadd.f32 0.0, %v5942
      %v5944 = vpop.f32.mrb[0].mxu0
      %5945 = vmatprep.mubr.f32.mxu0 0.0
      %5946 = vmatmul.mubr.f32.gmra.mrb[0].mxu0 %v5796
      %v5947 = vpop.f32.mrb[0].mxu0
      %v5948 = vadd.f32 0.0, %v5947
      %v5949 = vpop.f32.mrb[0].mxu0
      %5950 = vmatprep.mubr.f32.mxu0 0.0
      %5951 = vmatmul.mubr.f32.gmra.mrb[0].mxu0 %v5797
      %v5952 = vpop.f32.mrb[0].mxu0
      %v5953 = vadd.f32 0.0, %v5952
      %v5954 = vpop.f32.mrb[0].mxu0
      %5955 = vmatprep.mubr.f32.mxu0 0.0
      %5956 = vmatmul.mubr.f32.gmra.mrb[0].mxu0 %v5798
      %v5957 = vpop.f32.mrb[0].mxu0
      %v5958 = vadd.f32 0.0, %v5957
      %v5959 = vpop.f32.mrb[0].mxu0
      %5960 = vmatprep.mubr.f32.mxu0 0.0
      %5961 = vmatmul.mubr.f32.gmra.mrb[0].mxu0 %v5799
      %v5962 = vpop.f32.mrb[0].mxu0
      %v5963 = vadd.f32 0.0, %v5962
      %v5964 = vpop.f32.mrb[0].mxu0
      %5965 = vmatprep.mubr.f32.mxu0 0.0
      %5966 = vmatmul.mubr.f32.gmra.mrb[0].mxu0 %v5800
      %v5967 = vpop.f32.mrb[0].mxu0
      %v5968 = vadd.f32 0.0, %v5967
      %v5969 = vpop.f32.mrb[0].mxu0
      %5970 = vmatprep.mubr.f32.mxu0 0.0
      %5971 = vmatmul.mubr.f32.gmra.mrb[0].mxu0 %v5801
      %v5972 = vpop.f32.mrb[0].mxu0
      %v5973 = vadd.f32 0.0, %v5972
      %v5974 = vpop.f32.mrb[0].mxu0
      %5975 = vmatprep.mubr.f32.mxu0 0.0
      %5976 = vmatmul.mubr.f32.gmra.mrb[0].mxu0 %v5802
      %v5977 = vpop.f32.mrb[0].mxu0
      %v5978 = vadd.f32 0.0, %v5977
      %v5979 = vpop.f32.mrb[0].mxu0
      %5980 = vmatprep.mubr.f32.mxu0 0.0
      %5981 = vmatmul.mubr.f32.gmra.mrb[0].mxu0 %v5803
      %v5982 = vpop.f32.mrb[0].mxu0
      %v5983 = vadd.f32 0.0, %v5982
      %v5984 = vpop.f32.mrb[0].mxu0
      %5985 = vmatprep.mubr.f32.mxu0 0.0
      %5986 = vmatmul.mubr.f32.gmra.mrb[0].mxu0 %v5804
      %v5987 = vpop.f32.mrb[0].mxu0
      %v5988 = vadd.f32 0.0, %v5987
      %v5989 = vpop.f32.mrb[0].mxu0
      %5990 = vmatprep.mubr.f32.mxu0 0.0
      %5991 = vmatmul.mubr.f32.gmra.mrb[0].mxu0 %v5805
      %v5992 = vpop.f32.mrb[0].mxu0
      %v5993 = vadd.f32 0.0, %v5992
      %v5994 = vpop.f32.mrb[0].mxu0
      %5995 = vmatprep.mubr.f32.mxu0 0.0
      %5996 = vmatmul.mubr.f32.gmra.mrb[0].mxu0 %v5806
      %v5997 = vpop.f32.mrb[0].mxu0
      %v5998 = vadd.f32 0.0, %v5997
      %v5999 = vpop.f32.mrb[0].mxu0
      %6000 = vmatprep.mubr.f32.mxu0 0.0
      %6001 = vmatmul.mubr.f32.gmra.mrb[0].mxu0 %v5807
      %v6002 = vpop.f32.mrb[0].mxu0
      %v6003 = vadd.f32 0.0, %v6002
      %v6004 = vpop.f32.mrb[0].mxu0
      %6005 = vmatprep.mubr.f32.mxu0 0.0
      %6006 = vmatmul.mubr.f32.gmra.mrb[0].mxu0 %v5808
      %v6007 = vpop.f32.mrb[0].mxu0
      %v6008 = vadd.f32 0.0, %v6007
      %v6009 = vpop.f32.mrb[0].mxu0
      %6010 = vmatprep.mubr.f32.mxu0 0.0
      %6011 = vmatmul.mubr.f32.gmra.mrb[0].mxu0 %v5809
      %v6012 = vpop.f32.mrb[0].mxu0
      %v6013 = vadd.f32 0.0, %v6012
      %v6014 = vpop.f32.mrb[0].mxu0
      %6015 = vmatprep.mubr.f32.mxu0 0.0
      %6016 = vmatmul.mubr.f32.gmra.mrb[0].mxu0 %v5810
      %v6017 = vpop.f32.mrb[0].mxu0
      %v6018 = vadd.f32 0.0, %v6017
      %v6019 = vpop.f32.mrb[0].mxu0
      %6020 = vmatprep.mubr.f32.mxu0 0.0
      %6021 = vmatmul.mubr.f32.gmra.mrb[0].mxu0 %v5811
      %v6022 = vpop.f32.mrb[0].mxu0
      %v6023 = vadd.f32 0.0, %v6022
      %v6024 = vpop.f32.mrb[0].mxu0
      %6025 = vmatprep.mubr.f32.mxu0 0.0
      %6026 = vmatmul.mubr.f32.gmra.mrb[0].mxu0 %v5812
      %v6027 = vpop.f32.mrb[0].mxu0
      %v6028 = vadd.f32 0.0, %v6027
      %v6029 = vpop.f32.mrb[0].mxu0
      %6030 = vmatprep.mubr.f32.mxu0 0.0
      %6031 = vmatmul.mubr.f32.gmra.mrb[0].mxu0 %v5813
      %v6032 = vpop.f32.mrb[0].mxu0
      %v6033 = vadd.f32 0.0, %v6032
      %v6034 = vpop.f32.mrb[0].mxu0
      %6035 = vmatprep.mubr.f32.mxu0 0.0
      %6036 = vmatmul.mubr.f32.gmra.mrb[0].mxu0 %v5814
      %v6037 = vpop.f32.mrb[0].mxu0
      %v6038 = vadd.f32 0.0, %v6037
      %v6039 = vpop.f32.mrb[0].mxu0
      %6040 = vmatprep.mubr.f32.mxu0 0.0
      %6041 = vmatmul.mubr.f32.gmra.mrb[0].mxu0 %v5815
      %v6042 = vpop.f32.mrb[0].mxu0
      %v6043 = vadd.f32 0.0, %v6042
      %v6044 = vpop.f32.mrb[0].mxu0
      %6045 = vmatprep.mubr.f32.mxu0 0.0
      %6046 = vmatmul.mubr.f32.gmra.mrb[0].mxu0 %v5816
      %v6047 = vpop.f32.mrb[0].mxu0
      %v6048 = vadd.f32 0.0, %v6047
      %v6049 = vpop.f32.mrb[0].mxu0
      %6050 = vmatprep.mubr.f32.mxu0 0.0
      %6051 = vmatmul.mubr.f32.gmra.mrb[0].mxu0 %v5817
      %v6052 = vpop.f32.mrb[0].mxu0
      %v6053 = vadd.f32 0.0, %v6052
      %v6054 = vpop.f32.mrb[0].mxu0
      %6055 = vmatprep.mubr.f32.mxu0 0.0
      %6056 = vmatmul.mubr.f32.gmra.mrb[0].mxu0 %v5818
      %v6057 = vpop.f32.mrb[0].mxu0
      %v6058 = vadd.f32 0.0, %v6057
      %v6059 = vpop.f32.mrb[0].mxu0
      %6060 = vdwg.mxu0
      %v6061 = vadd.f32 %v5754, %v5903
      %v6062 = vadd.f32 %v5755, %v5908
      %v6063 = vadd.f32 %v5756, %v5913
      %v6064 = vadd.f32 %v5757, %v5918
      %v6065 = vadd.f32 %v5758, %v5923
      %v6066 = vadd.f32 %v5759, %v5928
      %v6067 = vadd.f32 %v5760, %v5933
      %v6068 = vadd.f32 %v5761, %v5938
      %v6069 = vadd.f32 %v5762, %v5943
      %v6070 = vadd.f32 %v5763, %v5948
      %v6071 = vadd.f32 %v5764, %v5953
      %v6072 = vadd.f32 %v5765, %v5958
      %v6073 = vadd.f32 %v5766, %v5963
      %v6074 = vadd.f32 %v5767, %v5968
      %v6075 = vadd.f32 %v5768, %v5973
      %v6076 = vadd.f32 %v5769, %v5978
      %v6077 = vadd.f32 %v5770, %v5983
      %v6078 = vadd.f32 %v5771, %v5988
      %v6079 = vadd.f32 %v5772, %v5993
      %v6080 = vadd.f32 %v5773, %v5998
      %v6081 = vadd.f32 %v5774, %v6003
      %v6082 = vadd.f32 %v5775, %v6008
      %v6083 = vadd.f32 %v5776, %v6013
      %v6084 = vadd.f32 %v5777, %v6018
      %v6085 = vadd.f32 %v5778, %v6023
      %v6086 = vadd.f32 %v5779, %v6028
      %v6087 = vadd.f32 %v5780, %v6033
      %v6088 = vadd.f32 %v5781, %v6038
      %v6089 = vadd.f32 %v5782, %v6043
      %v6090 = vadd.f32 %v5783, %v6048
      %v6091 = vadd.f32 %v5784, %v6053
      %v6092 = vadd.f32 %v5785, %v6058
      %v6093 = vld [vmem:[%s5786 + $0x1] sm:$0xff]
      %v6094 = vld [vmem:[%s5786 + $0x9] sm:$0xff]
      %v6095 = vld [vmem:[%s5786 + $0x19] sm:$0xff]
      %v6096 = vld [vmem:[%s5786 + $0x21] sm:$0xff]
      %v6097 = vld [vmem:[%s5786 + $0x31] sm:$0xff]
      %v6098 = vld [vmem:[%s5786 + $0x39] sm:$0xff]
      %v6099 = vld [vmem:[%s5786 + $0x49] sm:$0xff]
      %v6100 = vld [vmem:[%s5786 + $0x51] sm:$0xff]
      %v6101 = vld [vmem:[%s5786 + $0x61] sm:$0xff]
      %v6102 = vld [vmem:[%s5786 + $0x69] sm:$0xff]
      %v6103 = vld [vmem:[%s5786 + $0x79] sm:$0xff]
      %v6104 = vld [vmem:[%s5786 + $0x81] sm:$0xff]
      %v6105 = vld [vmem:[%s5786 + $0x91] sm:$0xff]
      %v6106 = vld [vmem:[%s5786 + $0x99] sm:$0xff]
      %v6107 = vld [vmem:[%s5786 + $0xa9] sm:$0xff]
      %v6108 = vld [vmem:[%s5786 + $0xb1] sm:$0xff]
      %v6109 = vld [vmem:[%s5786 + $0xc1] sm:$0xff]
      %v6110 = vld [vmem:[%s5786 + $0xc9] sm:$0xff]
      %v6111 = vld [vmem:[%s5786 + $0xd9] sm:$0xff]
      %v6112 = vld [vmem:[%s5786 + $0xe1] sm:$0xff]
      %v6113 = vld [vmem:[%s5786 + $0xf1] sm:$0xff]
      %v6114 = vld [vmem:[%s5786 + $0xf9] sm:$0xff]
      %v6115 = vld [vmem:[%s5786 + $0x109] sm:$0xff]
      %v6116 = vld [vmem:[%s5786 + $0x111] sm:$0xff]
      %v6117 = vld [vmem:[%s5786 + $0x121] sm:$0xff]
      %v6118 = vld [vmem:[%s5786 + $0x129] sm:$0xff]
      %v6119 = vld [vmem:[%s5786 + $0x139] sm:$0xff]
      %v6120 = vld [vmem:[%s5786 + $0x141] sm:$0xff]
      %v6121 = vld [vmem:[%s5786 + $0x151] sm:$0xff]
      %v6122 = vld [vmem:[%s5786 + $0x159] sm:$0xff]
      %v6123 = vld [vmem:[%s5786 + $0x169] sm:$0xff]
      %v6124 = vld [vmem:[%s5786 + $0x171] sm:$0xff]
      %s6125 = scalar_lea.vmem %s3, 896
      %v6126 = vld [vmem:[%s6125] sm:$0xff]
      %v6127 = vld [vmem:[%s6125 + $0x8] sm:$0xff]
      %v6128 = vld [vmem:[%s6125 + $0x10] sm:$0xff]
      %v6129 = vld [vmem:[%s6125 + $0x18] sm:$0xff]
      %v6130 = vld [vmem:[%s6125 + $0x20] sm:$0xff]
      %v6131 = vld [vmem:[%s6125 + $0x28] sm:$0xff]
      %v6132 = vld [vmem:[%s6125 + $0x30] sm:$0xff]
      %v6133 = vld [vmem:[%s6125 + $0x38] sm:$0xff]
      %v6134 = vld [vmem:[%s6125 + $0x40] sm:$0xff]
      %v6135 = vld [vmem:[%s6125 + $0x48] sm:$0xff]
      %v6136 = vld [vmem:[%s6125 + $0x50] sm:$0xff]
      %v6137 = vld [vmem:[%s6125 + $0x58] sm:$0xff]
      %v6138 = vld [vmem:[%s6125 + $0x60] sm:$0xff]
      %v6139 = vld [vmem:[%s6125 + $0x68] sm:$0xff]
      %v6140 = vld [vmem:[%s6125 + $0x70] sm:$0xff]
      %v6141 = vld [vmem:[%s6125 + $0x78] sm:$0xff]
      %6142 = vmatprep.subr.mxu0 0.0
      %6143 = vmatpush1.msra.mxu0 %v6126
      %6144 = vmatprep.subr.mxu0 0.0
      %6145 = vmatpush1.msra.mxu0 %v6127
      %6146 = vmatprep.subr.mxu0 0.0
      %6147 = vmatpush1.msra.mxu0 %v6128
      %6148 = vmatprep.subr.mxu0 0.0
      %6149 = vmatpush1.msra.mxu0 %v6129
      %6150 = vmatprep.subr.mxu0 0.0
      %6151 = vmatpush1.msra.mxu0 %v6130
      %6152 = vmatprep.subr.mxu0 0.0
      %6153 = vmatpush1.msra.mxu0 %v6131
      %6154 = vmatprep.subr.mxu0 0.0
      %6155 = vmatpush1.msra.mxu0 %v6132
      %6156 = vmatprep.subr.mxu0 0.0
      %6157 = vmatpush1.msra.mxu0 %v6133
      %6158 = vmatprep.subr.mxu0 0.0
      %6159 = vmatpush1.msra.mxu0 %v6134
      %6160 = vmatprep.subr.mxu0 0.0
      %6161 = vmatpush1.msra.mxu0 %v6135
      %6162 = vmatprep.subr.mxu0 0.0
      %6163 = vmatpush1.msra.mxu0 %v6136
      %6164 = vmatprep.subr.mxu0 0.0
      %6165 = vmatpush1.msra.mxu0 %v6137
      %6166 = vmatprep.subr.mxu0 0.0
      %6167 = vmatpush1.msra.mxu0 %v6138
      %6168 = vmatprep.subr.mxu0 0.0
      %6169 = vmatpush1.msra.mxu0 %v6139
      %6170 = vmatprep.subr.mxu0 0.0
      %6171 = vmatpush1.msra.mxu0 %v6140
      %6172 = vmatprep.subr.mxu0 0.0
      %6173 = vmatpush1.msra.mxu0 %v6141
      %6174 = vmatprep.subr.mxu0 0.0
      %6175 = vmatpush1.msra.mxu0 0.0
      %6176 = vmatprep.subr.mxu0 0.0
      %6177 = vmatpush1.msra.mxu0 0.0
      %6178 = vmatprep.subr.mxu0 0.0
      %6179 = vmatpush1.msra.mxu0 0.0
      %6180 = vmatprep.subr.mxu0 0.0
      %6181 = vmatpush1.msra.mxu0 0.0
      %6182 = vmatprep.subr.mxu0 0.0
      %6183 = vmatpush1.msra.mxu0 0.0
      %6184 = vmatprep.subr.mxu0 0.0
      %6185 = vmatpush1.msra.mxu0 0.0
      %6186 = vmatprep.subr.mxu0 0.0
      %6187 = vmatpush1.msra.mxu0 0.0
      %6188 = vmatprep.subr.mxu0 0.0
      %6189 = vmatpush1.msra.mxu0 0.0
      %6190 = vmatprep.subr.mxu0 0.0
      %6191 = vmatpush1.msra.mxu0 0.0
      %6192 = vmatprep.subr.mxu0 0.0
      %6193 = vmatpush1.msra.mxu0 0.0
      %6194 = vmatprep.subr.mxu0 0.0
      %6195 = vmatpush1.msra.mxu0 0.0
      %6196 = vmatprep.subr.mxu0 0.0
      %6197 = vmatpush1.msra.mxu0 0.0
      %6198 = vmatprep.subr.mxu0 0.0
      %6199 = vmatpush1.msra.mxu0 0.0
      %6200 = vmatprep.subr.mxu0 0.0
      %6201 = vmatpush1.msra.mxu0 0.0
      %6202 = vmatprep.subr.mxu0 0.0
      %6203 = vmatpush1.msra.mxu0 0.0
      %6204 = vmatprep.subr.mxu0 0.0
      %6205 = vmatpush1.msra.mxu0 0.0
      %6206 = vmatprep.mubr.f32.mxu0 0.0
      %6207 = vmatmul.mubr.f32.gmra.mrb[0].mxu0 %v6093
      %v6208 = vpop.f32.mrb[0].mxu0
      %v6209 = vadd.f32 0.0, %v6208
      %v6210 = vpop.f32.mrb[0].mxu0
      %6211 = vmatprep.mubr.f32.mxu0 0.0
      %6212 = vmatmul.mubr.f32.gmra.mrb[0].mxu0 %v6094
      %v6213 = vpop.f32.mrb[0].mxu0
      %v6214 = vadd.f32 0.0, %v6213
      %v6215 = vpop.f32.mrb[0].mxu0
      %6216 = vmatprep.mubr.f32.mxu0 0.0
      %6217 = vmatmul.mubr.f32.gmra.mrb[0].mxu0 %v6095
      %v6218 = vpop.f32.mrb[0].mxu0
      %v6219 = vadd.f32 0.0, %v6218
      %v6220 = vpop.f32.mrb[0].mxu0
      %6221 = vmatprep.mubr.f32.mxu0 0.0
      %6222 = vmatmul.mubr.f32.gmra.mrb[0].mxu0 %v6096
      %v6223 = vpop.f32.mrb[0].mxu0
      %v6224 = vadd.f32 0.0, %v6223
      %v6225 = vpop.f32.mrb[0].mxu0
      %6226 = vmatprep.mubr.f32.mxu0 0.0
      %6227 = vmatmul.mubr.f32.gmra.mrb[0].mxu0 %v6097
      %v6228 = vpop.f32.mrb[0].mxu0
      %v6229 = vadd.f32 0.0, %v6228
      %v6230 = vpop.f32.mrb[0].mxu0
      %6231 = vmatprep.mubr.f32.mxu0 0.0
      %6232 = vmatmul.mubr.f32.gmra.mrb[0].mxu0 %v6098
      %v6233 = vpop.f32.mrb[0].mxu0
      %v6234 = vadd.f32 0.0, %v6233
      %v6235 = vpop.f32.mrb[0].mxu0
      %6236 = vmatprep.mubr.f32.mxu0 0.0
      %6237 = vmatmul.mubr.f32.gmra.mrb[0].mxu0 %v6099
      %v6238 = vpop.f32.mrb[0].mxu0
      %v6239 = vadd.f32 0.0, %v6238
      %v6240 = vpop.f32.mrb[0].mxu0
      %6241 = vmatprep.mubr.f32.mxu0 0.0
      %6242 = vmatmul.mubr.f32.gmra.mrb[0].mxu0 %v6100
      %v6243 = vpop.f32.mrb[0].mxu0
      %v6244 = vadd.f32 0.0, %v6243
      %v6245 = vpop.f32.mrb[0].mxu0
      %6246 = vmatprep.mubr.f32.mxu0 0.0
      %6247 = vmatmul.mubr.f32.gmra.mrb[0].mxu0 %v6101
      %v6248 = vpop.f32.mrb[0].mxu0
      %v6249 = vadd.f32 0.0, %v6248
      %v6250 = vpop.f32.mrb[0].mxu0
      %6251 = vmatprep.mubr.f32.mxu0 0.0
      %6252 = vmatmul.mubr.f32.gmra.mrb[0].mxu0 %v6102
      %v6253 = vpop.f32.mrb[0].mxu0
      %v6254 = vadd.f32 0.0, %v6253
      %v6255 = vpop.f32.mrb[0].mxu0
      %6256 = vmatprep.mubr.f32.mxu0 0.0
      %6257 = vmatmul.mubr.f32.gmra.mrb[0].mxu0 %v6103
      %v6258 = vpop.f32.mrb[0].mxu0
      %v6259 = vadd.f32 0.0, %v6258
      %v6260 = vpop.f32.mrb[0].mxu0
      %6261 = vmatprep.mubr.f32.mxu0 0.0
      %6262 = vmatmul.mubr.f32.gmra.mrb[0].mxu0 %v6104
      %v6263 = vpop.f32.mrb[0].mxu0
      %v6264 = vadd.f32 0.0, %v6263
      %v6265 = vpop.f32.mrb[0].mxu0
      %6266 = vmatprep.mubr.f32.mxu0 0.0
      %6267 = vmatmul.mubr.f32.gmra.mrb[0].mxu0 %v6105
      %v6268 = vpop.f32.mrb[0].mxu0
      %v6269 = vadd.f32 0.0, %v6268
      %v6270 = vpop.f32.mrb[0].mxu0
      %6271 = vmatprep.mubr.f32.mxu0 0.0
      %6272 = vmatmul.mubr.f32.gmra.mrb[0].mxu0 %v6106
      %v6273 = vpop.f32.mrb[0].mxu0
      %v6274 = vadd.f32 0.0, %v6273
      %v6275 = vpop.f32.mrb[0].mxu0
      %6276 = vmatprep.mubr.f32.mxu0 0.0
      %6277 = vmatmul.mubr.f32.gmra.mrb[0].mxu0 %v6107
      %v6278 = vpop.f32.mrb[0].mxu0
      %v6279 = vadd.f32 0.0, %v6278
      %v6280 = vpop.f32.mrb[0].mxu0
      %6281 = vmatprep.mubr.f32.mxu0 0.0
      %6282 = vmatmul.mubr.f32.gmra.mrb[0].mxu0 %v6108
      %v6283 = vpop.f32.mrb[0].mxu0
      %v6284 = vadd.f32 0.0, %v6283
      %v6285 = vpop.f32.mrb[0].mxu0
      %6286 = vmatprep.mubr.f32.mxu0 0.0
      %6287 = vmatmul.mubr.f32.gmra.mrb[0].mxu0 %v6109
      %v6288 = vpop.f32.mrb[0].mxu0
      %v6289 = vadd.f32 0.0, %v6288
      %v6290 = vpop.f32.mrb[0].mxu0
      %6291 = vmatprep.mubr.f32.mxu0 0.0
      %6292 = vmatmul.mubr.f32.gmra.mrb[0].mxu0 %v6110
      %v6293 = vpop.f32.mrb[0].mxu0
      %v6294 = vadd.f32 0.0, %v6293
      %v6295 = vpop.f32.mrb[0].mxu0
      %6296 = vmatprep.mubr.f32.mxu0 0.0
      %6297 = vmatmul.mubr.f32.gmra.mrb[0].mxu0 %v6111
      %v6298 = vpop.f32.mrb[0].mxu0
      %v6299 = vadd.f32 0.0, %v6298
      %v6300 = vpop.f32.mrb[0].mxu0
      %6301 = vmatprep.mubr.f32.mxu0 0.0
      %6302 = vmatmul.mubr.f32.gmra.mrb[0].mxu0 %v6112
      %v6303 = vpop.f32.mrb[0].mxu0
      %v6304 = vadd.f32 0.0, %v6303
      %v6305 = vpop.f32.mrb[0].mxu0
      %6306 = vmatprep.mubr.f32.mxu0 0.0
      %6307 = vmatmul.mubr.f32.gmra.mrb[0].mxu0 %v6113
      %v6308 = vpop.f32.mrb[0].mxu0
      %v6309 = vadd.f32 0.0, %v6308
      %v6310 = vpop.f32.mrb[0].mxu0
      %6311 = vmatprep.mubr.f32.mxu0 0.0
      %6312 = vmatmul.mubr.f32.gmra.mrb[0].mxu0 %v6114
      %v6313 = vpop.f32.mrb[0].mxu0
      %v6314 = vadd.f32 0.0, %v6313
      %v6315 = vpop.f32.mrb[0].mxu0
      %6316 = vmatprep.mubr.f32.mxu0 0.0
      %6317 = vmatmul.mubr.f32.gmra.mrb[0].mxu0 %v6115
      %v6318 = vpop.f32.mrb[0].mxu0
      %v6319 = vadd.f32 0.0, %v6318
      %v6320 = vpop.f32.mrb[0].mxu0
      %6321 = vmatprep.mubr.f32.mxu0 0.0
      %6322 = vmatmul.mubr.f32.gmra.mrb[0].mxu0 %v6116
      %v6323 = vpop.f32.mrb[0].mxu0
      %v6324 = vadd.f32 0.0, %v6323
      %v6325 = vpop.f32.mrb[0].mxu0
      %6326 = vmatprep.mubr.f32.mxu0 0.0
      %6327 = vmatmul.mubr.f32.gmra.mrb[0].mxu0 %v6117
      %v6328 = vpop.f32.mrb[0].mxu0
      %v6329 = vadd.f32 0.0, %v6328
      %v6330 = vpop.f32.mrb[0].mxu0
      %6331 = vmatprep.mubr.f32.mxu0 0.0
      %6332 = vmatmul.mubr.f32.gmra.mrb[0].mxu0 %v6118
      %v6333 = vpop.f32.mrb[0].mxu0
      %v6334 = vadd.f32 0.0, %v6333
      %v6335 = vpop.f32.mrb[0].mxu0
      %6336 = vmatprep.mubr.f32.mxu0 0.0
      %6337 = vmatmul.mubr.f32.gmra.mrb[0].mxu0 %v6119
      %v6338 = vpop.f32.mrb[0].mxu0
      %v6339 = vadd.f32 0.0, %v6338
      %v6340 = vpop.f32.mrb[0].mxu0
      %6341 = vmatprep.mubr.f32.mxu0 0.0
      %6342 = vmatmul.mubr.f32.gmra.mrb[0].mxu0 %v6120
      %v6343 = vpop.f32.mrb[0].mxu0
      %v6344 = vadd.f32 0.0, %v6343
      %v6345 = vpop.f32.mrb[0].mxu0
      %6346 = vmatprep.mubr.f32.mxu0 0.0
      %6347 = vmatmul.mubr.f32.gmra.mrb[0].mxu0 %v6121
      %v6348 = vpop.f32.mrb[0].mxu0
      %v6349 = vadd.f32 0.0, %v6348
      %v6350 = vpop.f32.mrb[0].mxu0
      %6351 = vmatprep.mubr.f32.mxu0 0.0
      %6352 = vmatmul.mubr.f32.gmra.mrb[0].mxu0 %v6122
      %v6353 = vpop.f32.mrb[0].mxu0
      %v6354 = vadd.f32 0.0, %v6353
      %v6355 = vpop.f32.mrb[0].mxu0
      %6356 = vmatprep.mubr.f32.mxu0 0.0
      %6357 = vmatmul.mubr.f32.gmra.mrb[0].mxu0 %v6123
      %v6358 = vpop.f32.mrb[0].mxu0
      %v6359 = vadd.f32 0.0, %v6358
      %v6360 = vpop.f32.mrb[0].mxu0
      %6361 = vmatprep.mubr.f32.mxu0 0.0
      %6362 = vmatmul.mubr.f32.gmra.mrb[0].mxu0 %v6124
      %v6363 = vpop.f32.mrb[0].mxu0
      %v6364 = vadd.f32 0.0, %v6363
      %v6365 = vpop.f32.mrb[0].mxu0
      %6366 = vdwg.mxu0
      %v6367 = vadd.f32 %v6061, %v6209
      %v6368 = vadd.f32 %v6062, %v6214
      %v6369 = vadd.f32 %v6063, %v6219
      %v6370 = vadd.f32 %v6064, %v6224
      %v6371 = vadd.f32 %v6065, %v6229
      %v6372 = vadd.f32 %v6066, %v6234
      %v6373 = vadd.f32 %v6067, %v6239
      %v6374 = vadd.f32 %v6068, %v6244
      %v6375 = vadd.f32 %v6069, %v6249
      %v6376 = vadd.f32 %v6070, %v6254
      %v6377 = vadd.f32 %v6071, %v6259
      %v6378 = vadd.f32 %v6072, %v6264
      %v6379 = vadd.f32 %v6073, %v6269
      %v6380 = vadd.f32 %v6074, %v6274
      %v6381 = vadd.f32 %v6075, %v6279
      %v6382 = vadd.f32 %v6076, %v6284
      %v6383 = vadd.f32 %v6077, %v6289
      %v6384 = vadd.f32 %v6078, %v6294
      %v6385 = vadd.f32 %v6079, %v6299
      %v6386 = vadd.f32 %v6080, %v6304
      %v6387 = vadd.f32 %v6081, %v6309
      %v6388 = vadd.f32 %v6082, %v6314
      %v6389 = vadd.f32 %v6083, %v6319
      %v6390 = vadd.f32 %v6084, %v6324
      %v6391 = vadd.f32 %v6085, %v6329
      %v6392 = vadd.f32 %v6086, %v6334
      %v6393 = vadd.f32 %v6087, %v6339
      %v6394 = vadd.f32 %v6088, %v6344
      %v6395 = vadd.f32 %v6089, %v6349
      %v6396 = vadd.f32 %v6090, %v6354
      %v6397 = vadd.f32 %v6091, %v6359
      %v6398 = vadd.f32 %v6092, %v6364
      %v6399 = vld [vmem:[%s5786 + $0x2] sm:$0xff]
      %v6400 = vld [vmem:[%s5786 + $0xa] sm:$0xff]
      %v6401 = vld [vmem:[%s5786 + $0x1a] sm:$0xff]
      %v6402 = vld [vmem:[%s5786 + $0x22] sm:$0xff]
      %v6403 = vld [vmem:[%s5786 + $0x32] sm:$0xff]
      %v6404 = vld [vmem:[%s5786 + $0x3a] sm:$0xff]
      %v6405 = vld [vmem:[%s5786 + $0x4a] sm:$0xff]
      %v6406 = vld [vmem:[%s5786 + $0x52] sm:$0xff]
      %v6407 = vld [vmem:[%s5786 + $0x62] sm:$0xff]
      %v6408 = vld [vmem:[%s5786 + $0x6a] sm:$0xff]
      %v6409 = vld [vmem:[%s5786 + $0x7a] sm:$0xff]
      %v6410 = vld [vmem:[%s5786 + $0x82] sm:$0xff]
      %v6411 = vld [vmem:[%s5786 + $0x92] sm:$0xff]
      %v6412 = vld [vmem:[%s5786 + $0x9a] sm:$0xff]
      %v6413 = vld [vmem:[%s5786 + $0xaa] sm:$0xff]
      %v6414 = vld [vmem:[%s5786 + $0xb2] sm:$0xff]
      %v6415 = vld [vmem:[%s5786 + $0xc2] sm:$0xff]
      %v6416 = vld [vmem:[%s5786 + $0xca] sm:$0xff]
      %v6417 = vld [vmem:[%s5786 + $0xda] sm:$0xff]
      %v6418 = vld [vmem:[%s5786 + $0xe2] sm:$0xff]
      %v6419 = vld [vmem:[%s5786 + $0xf2] sm:$0xff]
      %v6420 = vld [vmem:[%s5786 + $0xfa] sm:$0xff]
      %v6421 = vld [vmem:[%s5786 + $0x10a] sm:$0xff]
      %v6422 = vld [vmem:[%s5786 + $0x112] sm:$0xff]
      %v6423 = vld [vmem:[%s5786 + $0x122] sm:$0xff]
      %v6424 = vld [vmem:[%s5786 + $0x12a] sm:$0xff]
      %v6425 = vld [vmem:[%s5786 + $0x13a] sm:$0xff]
      %v6426 = vld [vmem:[%s5786 + $0x142] sm:$0xff]
      %v6427 = vld [vmem:[%s5786 + $0x152] sm:$0xff]
      %v6428 = vld [vmem:[%s5786 + $0x15a] sm:$0xff]
      %v6429 = vld [vmem:[%s5786 + $0x16a] sm:$0xff]
      %v6430 = vld [vmem:[%s5786 + $0x172] sm:$0xff]
      %s6431 = scalar_lea.vmem %s3, 1024
      %v6432 = vld [vmem:[%s6431] sm:$0xff]
      %v6433 = vld [vmem:[%s6431 + $0x8] sm:$0xff]
      %v6434 = vld [vmem:[%s6431 + $0x10] sm:$0xff]
      %v6435 = vld [vmem:[%s6431 + $0x18] sm:$0xff]
      %v6436 = vld [vmem:[%s6431 + $0x20] sm:$0xff]
      %v6437 = vld [vmem:[%s6431 + $0x28] sm:$0xff]
      %v6438 = vld [vmem:[%s6431 + $0x30] sm:$0xff]
      %v6439 = vld [vmem:[%s6431 + $0x38] sm:$0xff]
      %v6440 = vld [vmem:[%s6431 + $0x40] sm:$0xff]
      %v6441 = vld [vmem:[%s6431 + $0x48] sm:$0xff]
      %v6442 = vld [vmem:[%s6431 + $0x50] sm:$0xff]
      %v6443 = vld [vmem:[%s6431 + $0x58] sm:$0xff]
      %v6444 = vld [vmem:[%s6431 + $0x60] sm:$0xff]
      %v6445 = vld [vmem:[%s6431 + $0x68] sm:$0xff]
      %v6446 = vld [vmem:[%s6431 + $0x70] sm:$0xff]
      %v6447 = vld [vmem:[%s6431 + $0x78] sm:$0xff]
      %6448 = vmatprep.subr.mxu0 0.0
      %6449 = vmatpush1.msra.mxu0 %v6432
      %6450 = vmatprep.subr.mxu0 0.0
      %6451 = vmatpush1.msra.mxu0 %v6433
      %6452 = vmatprep.subr.mxu0 0.0
      %6453 = vmatpush1.msra.mxu0 %v6434
      %6454 = vmatprep.subr.mxu0 0.0
      %6455 = vmatpush1.msra.mxu0 %v6435
      %6456 = vmatprep.subr.mxu0 0.0
      %6457 = vmatpush1.msra.mxu0 %v6436
      %6458 = vmatprep.subr.mxu0 0.0
      %6459 = vmatpush1.msra.mxu0 %v6437
      %6460 = vmatprep.subr.mxu0 0.0
      %6461 = vmatpush1.msra.mxu0 %v6438
      %6462 = vmatprep.subr.mxu0 0.0
      %6463 = vmatpush1.msra.mxu0 %v6439
      %6464 = vmatprep.subr.mxu0 0.0
      %6465 = vmatpush1.msra.mxu0 %v6440
      %6466 = vmatprep.subr.mxu0 0.0
      %6467 = vmatpush1.msra.mxu0 %v6441
      %6468 = vmatprep.subr.mxu0 0.0
      %6469 = vmatpush1.msra.mxu0 %v6442
      %6470 = vmatprep.subr.mxu0 0.0
      %6471 = vmatpush1.msra.mxu0 %v6443
      %6472 = vmatprep.subr.mxu0 0.0
      %6473 = vmatpush1.msra.mxu0 %v6444
      %6474 = vmatprep.subr.mxu0 0.0
      %6475 = vmatpush1.msra.mxu0 %v6445
      %6476 = vmatprep.subr.mxu0 0.0
      %6477 = vmatpush1.msra.mxu0 %v6446
      %6478 = vmatprep.subr.mxu0 0.0
      %6479 = vmatpush1.msra.mxu0 %v6447
      %6480 = vmatprep.subr.mxu0 0.0
      %6481 = vmatpush1.msra.mxu0 0.0
      %6482 = vmatprep.subr.mxu0 0.0
      %6483 = vmatpush1.msra.mxu0 0.0
      %6484 = vmatprep.subr.mxu0 0.0
      %6485 = vmatpush1.msra.mxu0 0.0
      %6486 = vmatprep.subr.mxu0 0.0
      %6487 = vmatpush1.msra.mxu0 0.0
      %6488 = vmatprep.subr.mxu0 0.0
      %6489 = vmatpush1.msra.mxu0 0.0
      %6490 = vmatprep.subr.mxu0 0.0
      %6491 = vmatpush1.msra.mxu0 0.0
      %6492 = vmatprep.subr.mxu0 0.0
      %6493 = vmatpush1.msra.mxu0 0.0
      %6494 = vmatprep.subr.mxu0 0.0
      %6495 = vmatpush1.msra.mxu0 0.0
      %6496 = vmatprep.subr.mxu0 0.0
      %6497 = vmatpush1.msra.mxu0 0.0
      %6498 = vmatprep.subr.mxu0 0.0
      %6499 = vmatpush1.msra.mxu0 0.0
      %6500 = vmatprep.subr.mxu0 0.0
      %6501 = vmatpush1.msra.mxu0 0.0
      %6502 = vmatprep.subr.mxu0 0.0
      %6503 = vmatpush1.msra.mxu0 0.0
      %6504 = vmatprep.subr.mxu0 0.0
      %6505 = vmatpush1.msra.mxu0 0.0
      %6506 = vmatprep.subr.mxu0 0.0
      %6507 = vmatpush1.msra.mxu0 0.0
      %6508 = vmatprep.subr.mxu0 0.0
      %6509 = vmatpush1.msra.mxu0 0.0
      %6510 = vmatprep.subr.mxu0 0.0
      %6511 = vmatpush1.msra.mxu0 0.0
      %6512 = vmatprep.mubr.f32.mxu0 0.0
      %6513 = vmatmul.mubr.f32.gmra.mrb[0].mxu0 %v6399
      %v6514 = vpop.f32.mrb[0].mxu0
      %v6515 = vadd.f32 0.0, %v6514
      %v6516 = vpop.f32.mrb[0].mxu0
      %6517 = vmatprep.mubr.f32.mxu0 0.0
      %6518 = vmatmul.mubr.f32.gmra.mrb[0].mxu0 %v6400
      %v6519 = vpop.f32.mrb[0].mxu0
      %v6520 = vadd.f32 0.0, %v6519
      %v6521 = vpop.f32.mrb[0].mxu0
      %6522 = vmatprep.mubr.f32.mxu0 0.0
      %6523 = vmatmul.mubr.f32.gmra.mrb[0].mxu0 %v6401
      %v6524 = vpop.f32.mrb[0].mxu0
      %v6525 = vadd.f32 0.0, %v6524
      %v6526 = vpop.f32.mrb[0].mxu0
      %6527 = vmatprep.mubr.f32.mxu0 0.0
      %6528 = vmatmul.mubr.f32.gmra.mrb[0].mxu0 %v6402
      %v6529 = vpop.f32.mrb[0].mxu0
      %v6530 = vadd.f32 0.0, %v6529
      %v6531 = vpop.f32.mrb[0].mxu0
      %6532 = vmatprep.mubr.f32.mxu0 0.0
      %6533 = vmatmul.mubr.f32.gmra.mrb[0].mxu0 %v6403
      %v6534 = vpop.f32.mrb[0].mxu0
      %v6535 = vadd.f32 0.0, %v6534
      %v6536 = vpop.f32.mrb[0].mxu0
      %6537 = vmatprep.mubr.f32.mxu0 0.0
      %6538 = vmatmul.mubr.f32.gmra.mrb[0].mxu0 %v6404
      %v6539 = vpop.f32.mrb[0].mxu0
      %v6540 = vadd.f32 0.0, %v6539
      %v6541 = vpop.f32.mrb[0].mxu0
      %6542 = vmatprep.mubr.f32.mxu0 0.0
      %6543 = vmatmul.mubr.f32.gmra.mrb[0].mxu0 %v6405
      %v6544 = vpop.f32.mrb[0].mxu0
      %v6545 = vadd.f32 0.0, %v6544
      %v6546 = vpop.f32.mrb[0].mxu0
      %6547 = vmatprep.mubr.f32.mxu0 0.0
      %6548 = vmatmul.mubr.f32.gmra.mrb[0].mxu0 %v6406
      %v6549 = vpop.f32.mrb[0].mxu0
      %v6550 = vadd.f32 0.0, %v6549
      %v6551 = vpop.f32.mrb[0].mxu0
      %6552 = vmatprep.mubr.f32.mxu0 0.0
      %6553 = vmatmul.mubr.f32.gmra.mrb[0].mxu0 %v6407
      %v6554 = vpop.f32.mrb[0].mxu0
      %v6555 = vadd.f32 0.0, %v6554
      %v6556 = vpop.f32.mrb[0].mxu0
      %6557 = vmatprep.mubr.f32.mxu0 0.0
      %6558 = vmatmul.mubr.f32.gmra.mrb[0].mxu0 %v6408
      %v6559 = vpop.f32.mrb[0].mxu0
      %v6560 = vadd.f32 0.0, %v6559
      %v6561 = vpop.f32.mrb[0].mxu0
      %6562 = vmatprep.mubr.f32.mxu0 0.0
      %6563 = vmatmul.mubr.f32.gmra.mrb[0].mxu0 %v6409
      %v6564 = vpop.f32.mrb[0].mxu0
      %v6565 = vadd.f32 0.0, %v6564
      %v6566 = vpop.f32.mrb[0].mxu0
      %6567 = vmatprep.mubr.f32.mxu0 0.0
      %6568 = vmatmul.mubr.f32.gmra.mrb[0].mxu0 %v6410
      %v6569 = vpop.f32.mrb[0].mxu0
      %v6570 = vadd.f32 0.0, %v6569
      %v6571 = vpop.f32.mrb[0].mxu0
      %6572 = vmatprep.mubr.f32.mxu0 0.0
      %6573 = vmatmul.mubr.f32.gmra.mrb[0].mxu0 %v6411
      %v6574 = vpop.f32.mrb[0].mxu0
      %v6575 = vadd.f32 0.0, %v6574
      %v6576 = vpop.f32.mrb[0].mxu0
      %6577 = vmatprep.mubr.f32.mxu0 0.0
      %6578 = vmatmul.mubr.f32.gmra.mrb[0].mxu0 %v6412
      %v6579 = vpop.f32.mrb[0].mxu0
      %v6580 = vadd.f32 0.0, %v6579
      %v6581 = vpop.f32.mrb[0].mxu0
      %6582 = vmatprep.mubr.f32.mxu0 0.0
      %6583 = vmatmul.mubr.f32.gmra.mrb[0].mxu0 %v6413
      %v6584 = vpop.f32.mrb[0].mxu0
      %v6585 = vadd.f32 0.0, %v6584
      %v6586 = vpop.f32.mrb[0].mxu0
      %6587 = vmatprep.mubr.f32.mxu0 0.0
      %6588 = vmatmul.mubr.f32.gmra.mrb[0].mxu0 %v6414
      %v6589 = vpop.f32.mrb[0].mxu0
      %v6590 = vadd.f32 0.0, %v6589
      %v6591 = vpop.f32.mrb[0].mxu0
      %6592 = vmatprep.mubr.f32.mxu0 0.0
      %6593 = vmatmul.mubr.f32.gmra.mrb[0].mxu0 %v6415
      %v6594 = vpop.f32.mrb[0].mxu0
      %v6595 = vadd.f32 0.0, %v6594
      %v6596 = vpop.f32.mrb[0].mxu0
      %6597 = vmatprep.mubr.f32.mxu0 0.0
      %6598 = vmatmul.mubr.f32.gmra.mrb[0].mxu0 %v6416
      %v6599 = vpop.f32.mrb[0].mxu0
      %v6600 = vadd.f32 0.0, %v6599
      %v6601 = vpop.f32.mrb[0].mxu0
      %6602 = vmatprep.mubr.f32.mxu0 0.0
      %6603 = vmatmul.mubr.f32.gmra.mrb[0].mxu0 %v6417
      %v6604 = vpop.f32.mrb[0].mxu0
      %v6605 = vadd.f32 0.0, %v6604
      %v6606 = vpop.f32.mrb[0].mxu0
      %6607 = vmatprep.mubr.f32.mxu0 0.0
      %6608 = vmatmul.mubr.f32.gmra.mrb[0].mxu0 %v6418
      %v6609 = vpop.f32.mrb[0].mxu0
      %v6610 = vadd.f32 0.0, %v6609
      %v6611 = vpop.f32.mrb[0].mxu0
      %6612 = vmatprep.mubr.f32.mxu0 0.0
      %6613 = vmatmul.mubr.f32.gmra.mrb[0].mxu0 %v6419
      %v6614 = vpop.f32.mrb[0].mxu0
      %v6615 = vadd.f32 0.0, %v6614
      %v6616 = vpop.f32.mrb[0].mxu0
      %6617 = vmatprep.mubr.f32.mxu0 0.0
      %6618 = vmatmul.mubr.f32.gmra.mrb[0].mxu0 %v6420
      %v6619 = vpop.f32.mrb[0].mxu0
      %v6620 = vadd.f32 0.0, %v6619
      %v6621 = vpop.f32.mrb[0].mxu0
      %6622 = vmatprep.mubr.f32.mxu0 0.0
      %6623 = vmatmul.mubr.f32.gmra.mrb[0].mxu0 %v6421
      %v6624 = vpop.f32.mrb[0].mxu0
      %v6625 = vadd.f32 0.0, %v6624
      %v6626 = vpop.f32.mrb[0].mxu0
      %6627 = vmatprep.mubr.f32.mxu0 0.0
      %6628 = vmatmul.mubr.f32.gmra.mrb[0].mxu0 %v6422
      %v6629 = vpop.f32.mrb[0].mxu0
      %v6630 = vadd.f32 0.0, %v6629
      %v6631 = vpop.f32.mrb[0].mxu0
      %6632 = vmatprep.mubr.f32.mxu0 0.0
      %6633 = vmatmul.mubr.f32.gmra.mrb[0].mxu0 %v6423
      %v6634 = vpop.f32.mrb[0].mxu0
      %v6635 = vadd.f32 0.0, %v6634
      %v6636 = vpop.f32.mrb[0].mxu0
      %6637 = vmatprep.mubr.f32.mxu0 0.0
      %6638 = vmatmul.mubr.f32.gmra.mrb[0].mxu0 %v6424
      %v6639 = vpop.f32.mrb[0].mxu0
      %v6640 = vadd.f32 0.0, %v6639
      %v6641 = vpop.f32.mrb[0].mxu0
      %6642 = vmatprep.mubr.f32.mxu0 0.0
      %6643 = vmatmul.mubr.f32.gmra.mrb[0].mxu0 %v6425
      %v6644 = vpop.f32.mrb[0].mxu0
      %v6645 = vadd.f32 0.0, %v6644
      %v6646 = vpop.f32.mrb[0].mxu0
      %6647 = vmatprep.mubr.f32.mxu0 0.0
      %6648 = vmatmul.mubr.f32.gmra.mrb[0].mxu0 %v6426
      %v6649 = vpop.f32.mrb[0].mxu0
      %v6650 = vadd.f32 0.0, %v6649
      %v6651 = vpop.f32.mrb[0].mxu0
      %6652 = vmatprep.mubr.f32.mxu0 0.0
      %6653 = vmatmul.mubr.f32.gmra.mrb[0].mxu0 %v6427
      %v6654 = vpop.f32.mrb[0].mxu0
      %v6655 = vadd.f32 0.0, %v6654
      %v6656 = vpop.f32.mrb[0].mxu0
      %6657 = vmatprep.mubr.f32.mxu0 0.0
      %6658 = vmatmul.mubr.f32.gmra.mrb[0].mxu0 %v6428
      %v6659 = vpop.f32.mrb[0].mxu0
      %v6660 = vadd.f32 0.0, %v6659
      %v6661 = vpop.f32.mrb[0].mxu0
      %6662 = vmatprep.mubr.f32.mxu0 0.0
      %6663 = vmatmul.mubr.f32.gmra.mrb[0].mxu0 %v6429
      %v6664 = vpop.f32.mrb[0].mxu0
      %v6665 = vadd.f32 0.0, %v6664
      %v6666 = vpop.f32.mrb[0].mxu0
      %6667 = vmatprep.mubr.f32.mxu0 0.0
      %6668 = vmatmul.mubr.f32.gmra.mrb[0].mxu0 %v6430
      %v6669 = vpop.f32.mrb[0].mxu0
      %v6670 = vadd.f32 0.0, %v6669
      %v6671 = vpop.f32.mrb[0].mxu0
      %6672 = vdwg.mxu0
      %v6673 = vadd.f32 %v6367, %v6515
      %v6674 = vadd.f32 %v6368, %v6520
      %v6675 = vadd.f32 %v6369, %v6525
      %v6676 = vadd.f32 %v6370, %v6530
      %v6677 = vadd.f32 %v6371, %v6535
      %v6678 = vadd.f32 %v6372, %v6540
      %v6679 = vadd.f32 %v6373, %v6545
      %v6680 = vadd.f32 %v6374, %v6550
      %v6681 = vadd.f32 %v6375, %v6555
      %v6682 = vadd.f32 %v6376, %v6560
      %v6683 = vadd.f32 %v6377, %v6565
      %v6684 = vadd.f32 %v6378, %v6570
      %v6685 = vadd.f32 %v6379, %v6575
      %v6686 = vadd.f32 %v6380, %v6580
      %v6687 = vadd.f32 %v6381, %v6585
      %v6688 = vadd.f32 %v6382, %v6590
      %v6689 = vadd.f32 %v6383, %v6595
      %v6690 = vadd.f32 %v6384, %v6600
      %v6691 = vadd.f32 %v6385, %v6605
      %v6692 = vadd.f32 %v6386, %v6610
      %v6693 = vadd.f32 %v6387, %v6615
      %v6694 = vadd.f32 %v6388, %v6620
      %v6695 = vadd.f32 %v6389, %v6625
      %v6696 = vadd.f32 %v6390, %v6630
      %v6697 = vadd.f32 %v6391, %v6635
      %v6698 = vadd.f32 %v6392, %v6640
      %v6699 = vadd.f32 %v6393, %v6645
      %v6700 = vadd.f32 %v6394, %v6650
      %v6701 = vadd.f32 %v6395, %v6655
      %v6702 = vadd.f32 %v6396, %v6660
      %v6703 = vadd.f32 %v6397, %v6665
      %v6704 = vadd.f32 %v6398, %v6670
      %v6705 = vld [vmem:[%s4] sm:$0x1]
      %v6707 = vlaneseq
      %v6708 = vshrl.u32 %v6707, 7
      %v6709 = vsub.s32 0, %v6708
      %v6710 = vrot.slane %v6705, %v6709
      %v6712 = vadd.f32 %v6673, %v6710
      %v6713 = vadd.f32 %v6674, %v6710
      %v6714 = vadd.f32 %v6675, %v6710
      %v6715 = vadd.f32 %v6676, %v6710
      %v6716 = vadd.f32 %v6677, %v6710
      %v6717 = vadd.f32 %v6678, %v6710
      %v6718 = vadd.f32 %v6679, %v6710
      %v6719 = vadd.f32 %v6680, %v6710
      %v6720 = vadd.f32 %v6681, %v6710
      %v6721 = vadd.f32 %v6682, %v6710
      %v6722 = vadd.f32 %v6683, %v6710
      %v6723 = vadd.f32 %v6684, %v6710
      %v6724 = vadd.f32 %v6685, %v6710
      %v6725 = vadd.f32 %v6686, %v6710
      %v6726 = vadd.f32 %v6687, %v6710
      %v6727 = vadd.f32 %v6688, %v6710
      %v6728 = vadd.f32 %v6689, %v6710
      %v6729 = vadd.f32 %v6690, %v6710
      %v6730 = vadd.f32 %v6691, %v6710
      %v6731 = vadd.f32 %v6692, %v6710
      %v6732 = vadd.f32 %v6693, %v6710
      %v6733 = vadd.f32 %v6694, %v6710
      %v6734 = vadd.f32 %v6695, %v6710
      %v6735 = vadd.f32 %v6696, %v6710
      %v6736 = vadd.f32 %v6697, %v6710
      %v6737 = vadd.f32 %v6698, %v6710
      %v6738 = vadd.f32 %v6699, %v6710
      %v6739 = vadd.f32 %v6700, %v6710
      %v6740 = vadd.f32 %v6701, %v6710
      %v6741 = vadd.f32 %v6702, %v6710
      %v6742 = vadd.f32 %v6703, %v6710
      %v6743 = vadd.f32 %v6704, %v6710
      %vm6744 = vcmp.ge.f32.partialorder %v6712, 0.0
      %vm6745 = vcmp.ge.f32.partialorder %v6713, 0.0
      %vm6746 = vcmp.ge.f32.partialorder %v6714, 0.0
      %vm6747 = vcmp.ge.f32.partialorder %v6715, 0.0
      %vm6748 = vcmp.ge.f32.partialorder %v6716, 0.0
      %vm6749 = vcmp.ge.f32.partialorder %v6717, 0.0
      %vm6750 = vcmp.ge.f32.partialorder %v6718, 0.0
      %vm6751 = vcmp.ge.f32.partialorder %v6719, 0.0
      %vm6752 = vcmp.ge.f32.partialorder %v6720, 0.0
      %vm6753 = vcmp.ge.f32.partialorder %v6721, 0.0
      %vm6754 = vcmp.ge.f32.partialorder %v6722, 0.0
      %vm6755 = vcmp.ge.f32.partialorder %v6723, 0.0
      %vm6756 = vcmp.ge.f32.partialorder %v6724, 0.0
      %vm6757 = vcmp.ge.f32.partialorder %v6725, 0.0
      %vm6758 = vcmp.ge.f32.partialorder %v6726, 0.0
      %vm6759 = vcmp.ge.f32.partialorder %v6727, 0.0
      %vm6760 = vcmp.ge.f32.partialorder %v6728, 0.0
      %vm6761 = vcmp.ge.f32.partialorder %v6729, 0.0
      %vm6762 = vcmp.ge.f32.partialorder %v6730, 0.0
      %vm6763 = vcmp.ge.f32.partialorder %v6731, 0.0
      %vm6764 = vcmp.ge.f32.partialorder %v6732, 0.0
      %vm6765 = vcmp.ge.f32.partialorder %v6733, 0.0
      %vm6766 = vcmp.ge.f32.partialorder %v6734, 0.0
      %vm6767 = vcmp.ge.f32.partialorder %v6735, 0.0
      %vm6768 = vcmp.ge.f32.partialorder %v6736, 0.0
      %vm6769 = vcmp.ge.f32.partialorder %v6737, 0.0
      %vm6770 = vcmp.ge.f32.partialorder %v6738, 0.0
      %vm6771 = vcmp.ge.f32.partialorder %v6739, 0.0
      %vm6772 = vcmp.ge.f32.partialorder %v6740, 0.0
      %vm6773 = vcmp.ge.f32.partialorder %v6741, 0.0
      %vm6774 = vcmp.ge.f32.partialorder %v6742, 0.0
      %vm6775 = vcmp.ge.f32.partialorder %v6743, 0.0
      %v6776 = vmul.f32 %v6712, 0.1
      %v6777 = vmul.f32 %v6713, 0.1
      %v6778 = vmul.f32 %v6714, 0.1
      %v6779 = vmul.f32 %v6715, 0.1
      %v6780 = vmul.f32 %v6716, 0.1
      %v6781 = vmul.f32 %v6717, 0.1
      %v6782 = vmul.f32 %v6718, 0.1
      %v6783 = vmul.f32 %v6719, 0.1
      %v6784 = vmul.f32 %v6720, 0.1
      %v6785 = vmul.f32 %v6721, 0.1
      %v6786 = vmul.f32 %v6722, 0.1
      %v6787 = vmul.f32 %v6723, 0.1
      %v6788 = vmul.f32 %v6724, 0.1
      %v6789 = vmul.f32 %v6725, 0.1
      %v6790 = vmul.f32 %v6726, 0.1
      %v6791 = vmul.f32 %v6727, 0.1
      %v6792 = vmul.f32 %v6728, 0.1
      %v6793 = vmul.f32 %v6729, 0.1
      %v6794 = vmul.f32 %v6730, 0.1
      %v6795 = vmul.f32 %v6731, 0.1
      %v6796 = vmul.f32 %v6732, 0.1
      %v6797 = vmul.f32 %v6733, 0.1
      %v6798 = vmul.f32 %v6734, 0.1
      %v6799 = vmul.f32 %v6735, 0.1
      %v6800 = vmul.f32 %v6736, 0.1
      %v6801 = vmul.f32 %v6737, 0.1
      %v6802 = vmul.f32 %v6738, 0.1
      %v6803 = vmul.f32 %v6739, 0.1
      %v6804 = vmul.f32 %v6740, 0.1
      %v6805 = vmul.f32 %v6741, 0.1
      %v6806 = vmul.f32 %v6742, 0.1
      %v6807 = vmul.f32 %v6743, 0.1
      %v6808 = vsel %vm6744, %v6712, %v6776
      %v6809 = vsel %vm6745, %v6713, %v6777
      %v6810 = vsel %vm6746, %v6714, %v6778
      %v6811 = vsel %vm6747, %v6715, %v6779
      %v6812 = vsel %vm6748, %v6716, %v6780
      %v6813 = vsel %vm6749, %v6717, %v6781
      %v6814 = vsel %vm6750, %v6718, %v6782
      %v6815 = vsel %vm6751, %v6719, %v6783
      %v6816 = vsel %vm6752, %v6720, %v6784
      %v6817 = vsel %vm6753, %v6721, %v6785
      %v6818 = vsel %vm6754, %v6722, %v6786
      %v6819 = vsel %vm6755, %v6723, %v6787
      %v6820 = vsel %vm6756, %v6724, %v6788
      %v6821 = vsel %vm6757, %v6725, %v6789
      %v6822 = vsel %vm6758, %v6726, %v6790
      %v6823 = vsel %vm6759, %v6727, %v6791
      %v6824 = vsel %vm6760, %v6728, %v6792
      %v6825 = vsel %vm6761, %v6729, %v6793
      %v6826 = vsel %vm6762, %v6730, %v6794
      %v6827 = vsel %vm6763, %v6731, %v6795
      %v6828 = vsel %vm6764, %v6732, %v6796
      %v6829 = vsel %vm6765, %v6733, %v6797
      %v6830 = vsel %vm6766, %v6734, %v6798
      %v6831 = vsel %vm6767, %v6735, %v6799
      %v6832 = vsel %vm6768, %v6736, %v6800
      %v6833 = vsel %vm6769, %v6737, %v6801
      %v6834 = vsel %vm6770, %v6738, %v6802
      %v6835 = vsel %vm6771, %v6739, %v6803
      %v6836 = vsel %vm6772, %v6740, %v6804
      %v6837 = vsel %vm6773, %v6741, %v6805
      %v6838 = vsel %vm6774, %v6742, %v6806
      %v6839 = vsel %vm6775, %v6743, %v6807
      %6840 = vst [vmem:[%s224] sm:$0xff] %v6808
      %6841 = vst [vmem:[%s224 + $0x8] sm:$0xff] %v6809
      %6842 = vst [vmem:[%s224 + $0x10] sm:$0xff] %v6810
      %6843 = vst [vmem:[%s224 + $0x18] sm:$0xff] %v6811
      %6844 = vst [vmem:[%s224 + $0x20] sm:$0xff] %v6812
      %6845 = vst [vmem:[%s224 + $0x28] sm:$0xff] %v6813
      %6846 = vst [vmem:[%s224 + $0x30] sm:$0xff] %v6814
      %6847 = vst [vmem:[%s224 + $0x38] sm:$0xff] %v6815
      %6848 = vst [vmem:[%s224 + $0x40] sm:$0xff] %v6816
      %6849 = vst [vmem:[%s224 + $0x48] sm:$0xff] %v6817
      %6850 = vst [vmem:[%s224 + $0x50] sm:$0xff] %v6818
      %6851 = vst [vmem:[%s224 + $0x58] sm:$0xff] %v6819
      %6852 = vst [vmem:[%s224 + $0x60] sm:$0xff] %v6820
      %6853 = vst [vmem:[%s224 + $0x68] sm:$0xff] %v6821
      %6854 = vst [vmem:[%s224 + $0x70] sm:$0xff] %v6822
      %6855 = vst [vmem:[%s224 + $0x78] sm:$0xff] %v6823
      %6856 = vst [vmem:[%s224 + $0x80] sm:$0xff] %v6824
      %6857 = vst [vmem:[%s224 + $0x88] sm:$0xff] %v6825
      %6858 = vst [vmem:[%s224 + $0x90] sm:$0xff] %v6826
      %6859 = vst [vmem:[%s224 + $0x98] sm:$0xff] %v6827
      %6860 = vst [vmem:[%s224 + $0xa0] sm:$0xff] %v6828
      %6861 = vst [vmem:[%s224 + $0xa8] sm:$0xff] %v6829
      %6862 = vst [vmem:[%s224 + $0xb0] sm:$0xff] %v6830
      %6863 = vst [vmem:[%s224 + $0xb8] sm:$0xff] %v6831
      %6864 = vst [vmem:[%s224 + $0xc0] sm:$0xff] %v6832
      %6865 = vst [vmem:[%s224 + $0xc8] sm:$0xff] %v6833
      %6866 = vst [vmem:[%s224 + $0xd0] sm:$0xff] %v6834
      %6867 = vst [vmem:[%s224 + $0xd8] sm:$0xff] %v6835
      %6868 = vst [vmem:[%s224 + $0xe0] sm:$0xff] %v6836
      %6869 = vst [vmem:[%s224 + $0xe8] sm:$0xff] %v6837
      %6870 = vst [vmem:[%s224 + $0xf0] sm:$0xff] %v6838
      %6871 = vst [vmem:[%s224 + $0xf8] sm:$0xff] %v6839
      %p6872 = scmp.lt.s32.totalorder %s16, 1
      %s6873 = scalar_select %p6872, %s16, 1
      %s6874 = smul.addr %s6873, 32
      %s6875 = smul.addr %s6874, 8
      %s6876 = scalar_lea.vmem %s5, %s6875
      // Predicated region
      $region41: #{double_convolution.1} parent=39 // pred_check
        %p6877 = pneg %p144
      $region42: #{double_convolution.1} parent=39 // pred_check_branch
        %6879 = sbr.rel (%p6877) target = $region44
      $region43: #{double_convolution.1} parent=39 // pred_region
        _
      $region44: #{double_convolution.1} parent=39 // pred_fallthru
        _
    $region40: #{double_convolution.1} parent=5 // pred_fallthru
      _
    %p6880 = scmp.le.s32.totalorder 2, %s11
    // Predicated region
    $region45: #{double_convolution.1} parent=5 // pred_check
      %p6881 = pneg %p6880
    $region46: #{double_convolution.1} parent=5 // pred_check_branch
      %6883 = sbr.rel (%p6881) target = $region48
    $region47: #{double_convolution.1} parent=5 // pred_region
      %s6884 = ssub.s32 %s11, 2
      // Predicated region
      $region49: #{double_convolution.1} parent=47 // pred_check
        %p6885 = pneg %p150
      $region50: #{double_convolution.1} parent=47 // pred_check_branch
        %6887 = sbr.rel (%p6885) target = $region52
      $region51: #{double_convolution.1} parent=47 // pred_region
        %p6888 = scmp.lt.s32.totalorder %s17, 1
        %s6889 = scalar_select %p6888, %s17, 1
        %s6890 = smul.addr %s6889, 32
        %s6891 = smul.addr %s6890, 8
        %s6892 = scalar_lea.vmem %s5, %s6891
      $region52: #{double_convolution.1} parent=47 // pred_fallthru
        _
    $region48: #{double_convolution.1} parent=5 // pred_fallthru
      _
  $region6: #{double_convolution.1} parent=0 // loop_footer
    %s15 = sadd.s32 1, %s11
  $region7: #{double_convolution.1} parent=0 // loop_footer_branch
    %10 = sbr.rel target = $region3
  $region8: #{double_convolution.1} parent=0 // loop_exit
    _

</llo_original>
